<compile_context>
chip_gen: v6e
topology: v6e:2x2x1
jax: 0.10.0
libtpu: 0.0.40
codegen_flags: <defaults>
</compile_context>

<pallas_src>
import functools

import numpy as np

import jax
import jax.numpy as jnp
from jax.experimental import pallas as pl
from jax.experimental.pallas import tpu as pltpu


CPAD = 128               # padded channel count for encoder features (lane-dense, K=128)
CD_PAD = 32              # padded decoder/class channels (sublane-aligned for f32)
VMEM_LIMIT = 32 * 1024 * 1024   # safe scoped-VMEM budget on v5e / v6e / v7x


# ---------------------------------------------------------------------------
# Fused 3x3 / stride-2 conv + bias + ReLU  (patches built in VMEM, no HBM im2col)
# ---------------------------------------------------------------------------

def _conv3x3_s2_kernel(p00_ref, p01_ref, p10_ref, p11_ref, w_ref, b_ref, o_ref,
                       *, th, wo, cpad):
    # p??_ref : (1, th+1, Wo+1, Cin)  bf16   2x2 phase split of the padded input
    # w_ref   : (3, 3, Cin, cpad)     bf16
    # b_ref   : (1, cpad)             f32
    # o_ref   : (1, th*wo, cpad)      bf16
    phases = ((p00_ref, p01_ref), (p10_ref, p11_ref))
    acc = jnp.zeros((th * wo, cpad), jnp.float32)
    for dy in range(3):
        for dx in range(3):
            ph = phases[dy % 2][dx % 2]
            dy2, dx2 = dy // 2, dx // 2
            xs = ph[0, dy2:dy2 + th, dx2:dx2 + wo, :]          # (th, wo, cin), unit-stride
            acc += jnp.dot(xs.reshape(th * wo, -1), w_ref[dy, dx],
                           preferred_element_type=jnp.float32)
    y = jnp.maximum(acc + b_ref[...], 0.0)
    o_ref[0] = y.astype(o_ref.dtype)


def _pick_row_tile(ho, wo, cin, cpad, max_bytes=4 * 1024 * 1024, max_rows=64):
    """Largest divisor of Ho so the double-buffered block stays well under VMEM."""
    for th in range(min(ho, max_rows), 0, -1):
        if ho % th:
            continue
        in_bytes = 4 * (th + 1) * (wo + 1) * cin * 2           # 4 phase windows, bf16
        out_bytes = th * wo * cpad * 2
        if 2 * (in_bytes + out_bytes) <= max_bytes:
            return th
    return 1


def _row_windows(ph, n_t, th):
    """(B, Ho+1, Wo+1, C) -> (B*n_t, th+1, Wo+1, C): overlapping (1-row halo) windows."""
    B, Hp, Wp, C = ph.shape
    if n_t == 1:
        return ph[:, :th + 1]
    idx = jnp.arange(n_t)[:, None] * th + jnp.arange(th + 1)[None, :]
    win = jnp.take(ph, idx, axis=1)                            # (B, n_t, th+1, Wp, C)
    return win.reshape(B * n_t, th + 1, Wp, C)


def conv3x3_s2_relu(x, w, b):
    """3x3 stride-2 'same' conv + bias + ReLU on NHWC; output channels padded to CPAD."""
    B, H, W, Cin = x.shape
    kh, kw, cin_w, cout = w.shape
    assert (kh, kw) == (3, 3) and H % 2 == 0 and W % 2 == 0 and cin_w <= Cin
    Ho, Wo = H // 2, W // 2

    # Pad weights: extra input channels multiply zero features, extra outputs stay 0 (ReLU(0)=0).
    wp = jnp.zeros((3, 3, Cin, CPAD), jnp.bfloat16)
    wp = wp.at[:, :, :cin_w, :cout].set(w.astype(jnp.bfloat16))
    bp = jnp.zeros((1, CPAD), jnp.float32).at[0, :cout].set(b)

    # 'same' spatial padding + 2x2 phase split => every in-kernel slice is unit-stride.
    xp = jnp.pad(x, ((0, 0), (1, 1), (1, 1), (0, 0))).astype(jnp.bfloat16)
    phases = [xp[:, p::2, q::2, :] for p in (0, 1) for q in (0, 1)]   # each (B, Ho+1, Wo+1, Cin)

    th = _pick_row_tile(Ho, Wo, Cin, CPAD)
    n_t = Ho // th
    wins = [_row_windows(ph, n_t, th) for ph in phases]               # (B*n_t, th+1, Wo+1, Cin)

    flops = 2 * B * Ho * Wo * 9 * Cin * CPAD
    bytes_acc = (sum(int(wn.size) * wn.dtype.itemsize for wn in wins)
                 + int(wp.size) * 2 + int(bp.size) * 4
                 + B * Ho * Wo * CPAD * 2)

    out = pl.pallas_call(
        functools.partial(_conv3x3_s2_kernel, th=th, wo=Wo, cpad=CPAD),
        out_shape=jax.ShapeDtypeStruct((B * n_t, th * Wo, CPAD), jnp.bfloat16),
        grid=(B * n_t,),
        in_specs=[pl.BlockSpec((1, th + 1, Wo + 1, Cin), lambda g: (g, 0, 0, 0))] * 4
                 + [pl.BlockSpec((3, 3, Cin, CPAD), lambda g: (0, 0, 0, 0)),
                    pl.BlockSpec((1, CPAD), lambda g: (0, 0))],
        out_specs=pl.BlockSpec((1, th * Wo, CPAD), lambda g: (g, 0, 0)),
        compiler_params=pltpu.CompilerParams(
            dimension_semantics=("parallel",),
            vmem_limit_bytes=VMEM_LIMIT),
        cost_estimate=pl.CostEstimate(flops=int(flops), transcendentals=0,
                                      bytes_accessed=int(bytes_acc)),
    )(*wins, wp, bp)
    return out.reshape(B, Ho, Wo, CPAD)                               # free (contiguous) reshape


# ---------------------------------------------------------------------------
# Fused 1x1 decoder conv + exact separable bilinear upsample (NCHW output)
# ---------------------------------------------------------------------------

def _dec_resize_kernel(f_ref, wd_ref, b_ref, a_ref, bw_ref, o_ref, zscr,
                       *, h, w, cd, ho, wo):
    # f_ref  : (1, h, w, C) bf16     encoder features (C=CPAD)
    # wd_ref : (cd, C)      bf16     decoder weight, transposed  (classes x channels)
    # b_ref  : (cd, 1)      f32      decoder bias
    # a_ref  : (ho, h)      bf16     H-interp matrix (align_corners=False)
    # bw_ref : (wo, w)      bf16     W-interp matrix
    # o_ref  : (1, cd, ho, wo) f32   NCHW logits (lanes = wo)
    # zscr   : (h, cd, wo)  f32      per-input-row decoded + W-resized rows
    for y in range(h):
        fy = f_ref[0, y].astype(jnp.bfloat16)                            # (w, C)
        zy = jax.lax.dot_general(wd_ref[...], fy, (((1,), (1,)), ((), ())),
                                 preferred_element_type=jnp.float32)     # (cd, w)
        zy = zy + b_ref[...]
        ry = jax.lax.dot_general(zy.astype(jnp.bfloat16), bw_ref[...],
                                 (((1,), (1,)), ((), ())),
                                 preferred_element_type=jnp.float32)     # (cd, wo)
        zscr[y] = ry
    for c in range(cd):
        o_ref[0, c] = jnp.dot(a_ref[...], zscr[:, c, :].astype(jnp.bfloat16),
                              preferred_element_type=jnp.float32)        # (ho, wo)


@functools.lru_cache(maxsize=None)
def _interp_matrix(n_out, n_in):
    """Row-stochastic bilinear weights, PyTorch align_corners=False (built once, numpy)."""
    scale = n_in / n_out
    src = (np.arange(n_out, dtype=np.float64) + 0.5) * scale - 0.5
    src = np.maximum(src, 0.0)
    i0 = np.minimum(np.floor(src).astype(np.int64), n_in - 1)
    i1 = np.minimum(i0 + 1, n_in - 1)
    w1 = (src - i0).astype(np.float32)
    m = np.zeros((n_out, n_in), np.float32)
    np.add.at(m, (np.arange(n_out), i0), 1.0 - w1)
    np.add.at(m, (np.arange(n_out), i1), w1)
    return m


def decode_and_upsample(f, w_dec, b_dec, out_hw, num_classes):
    """Fused 1x1-conv decoder + separable bilinear upsample; emits NCHW directly."""
    B, h, w, C = f.shape
    Ho, Wo = out_hw
    cin_w, cout = w_dec.shape[-2], w_dec.shape[-1]
    assert cout <= CD_PAD and cin_w <= C

    wd_t = jnp.zeros((CD_PAD, C), jnp.bfloat16)
    wd_t = wd_t.at[:cout, :cin_w].set(w_dec.reshape(cin_w, cout).T.astype(jnp.bfloat16))
    bp = jnp.zeros((CD_PAD, 1), jnp.float32).at[:cout, 0].set(b_dec)
    A = jnp.asarray(_interp_matrix(Ho, h), jnp.bfloat16)                 # (Ho, h)
    Bw = jnp.asarray(_interp_matrix(Wo, w), jnp.bfloat16)                # (Wo, w)

    flops = 2 * B * (h * w * C * CD_PAD + h * CD_PAD * w * Wo + CD_PAD * Ho * h * Wo)
    bytes_acc = (int(f.size) * f.dtype.itemsize + B * CD_PAD * Ho * Wo * 4
                 + int(wd_t.size) * 2 + int(A.size) * 2 + int(Bw.size) * 2)

    # TODO(synk): at very large decoder resolutions the per-batch block should also be
    # tiled over rows (same windowing as the conv); unnecessary at these feature sizes.
    out = pl.pallas_call(
        functools.partial(_dec_resize_kernel, h=h, w=w, cd=CD_PAD, ho=Ho, wo=Wo),
        out_shape=jax.ShapeDtypeStruct((B, CD_PAD, Ho, Wo), jnp.float32),
        grid=(B,),
        in_specs=[pl.BlockSpec((1, h, w, C), lambda b: (b, 0, 0, 0)),
                  pl.BlockSpec((CD_PAD, C), lambda b: (0, 0)),
                  pl.BlockSpec((CD_PAD, 1), lambda b: (0, 0)),
                  pl.BlockSpec((Ho, h), lambda b: (0, 0)),
                  pl.BlockSpec((Wo, w), lambda b: (0, 0))],
        out_specs=pl.BlockSpec((1, CD_PAD, Ho, Wo), lambda b: (b, 0, 0, 0)),
        scratch_shapes=[pltpu.VMEM((h, CD_PAD, Wo), jnp.float32)],
        compiler_params=pltpu.CompilerParams(
            dimension_semantics=("parallel",),
            vmem_limit_bytes=VMEM_LIMIT),
        cost_estimate=pl.CostEstimate(flops=int(flops), transcendentals=0,
                                      bytes_accessed=int(bytes_acc)),
    )(f, wd_t, bp, A, Bw)
    return out[:, :num_classes]                                          # (B, classes, H, W)


# ---------------------------------------------------------------------------
# JetSeg model
# ---------------------------------------------------------------------------

def init_params(key, in_ch=4, num_classes=19):
    ks = jax.random.split(key, 6)

    def conv_init(k, kh, kw, cin, cout):
        scale = (kh * kw * cin) ** -0.5
        return jax.random.uniform(k, (kh, kw, cin, cout), jnp.float32, -scale, scale)

    return {
        "enc1_w": conv_init(ks[0], 3, 3, in_ch, 16),
        "enc1_b": jax.random.uniform(ks[1], (16,), jnp.float32, -0.1, 0.1),
        "enc2_w": conv_init(ks[2], 3, 3, 16, 32),
        "enc2_b": jax.random.uniform(ks[3], (32,), jnp.float32, -0.1, 0.1),
        "dec_w": conv_init(ks[4], 1, 1, 32, num_classes),
        "dec_b": jax.random.uniform(ks[5], (num_classes,), jnp.float32, -0.1, 0.1),
    }


def jetseg_forward(params, x_nchw):
    x = jnp.transpose(x_nchw, (0, 2, 3, 1))                              # NCHW -> NHWC
    f = conv3x3_s2_relu(x, params["enc1_w"], params["enc1_b"])           # (B, H/2, W/2, 128)
    f = conv3x3_s2_relu(f, params["enc2_w"], params["enc2_b"])           # (B, H/4, W/4, 128)
    return decode_and_upsample(f, params["dec_w"], params["dec_b"],
                               out_hw=x_nchw.shape[-2:],
                               num_classes=params["dec_b"].shape[0])     # NCHW already


if __name__ == "__main__":
    key = jax.random.PRNGKey(0)
    kx, kp = jax.random.split(key)
    x = jax.random.normal(kx, (2, 4, 16, 16), jnp.float32)               # NCHW like PyTorch
    params = init_params(kp, in_ch=4, num_classes=19)

    out = jax.jit(jetseg_forward)(params, x)
    out = jax.block_until_ready(out)
    assert out.shape == (2, 19, 16, 16), out.shape
    assert bool(jnp.all(jnp.isfinite(out)))
    print("KERNEL_OK")
</pallas_src>

<mosaic_0001>
module attributes {stable_mosaic.version = 11 : i64} {
  func.func @_conv3x3_s2_kernel(%arg0: i32, %arg1: memref<1x9x9x4xbf16, #tpu.memory_space<vmem>>, %arg2: memref<1x9x9x4xbf16, #tpu.memory_space<vmem>>, %arg3: memref<1x9x9x4xbf16, #tpu.memory_space<vmem>>, %arg4: memref<1x9x9x4xbf16, #tpu.memory_space<vmem>>, %arg5: memref<3x3x4x128xbf16, #tpu.memory_space<vmem>>, %arg6: memref<1x128xf32, #tpu.memory_space<vmem>>, %arg7: memref<1x64x128xbf16, #tpu.memory_space<vmem>>) attributes {dimension_semantics = [#tpu.dimension_semantics<parallel>], iteration_bounds = array<i64: 2>, scalar_prefetch = 0 : i64, scratch_operands = 0 : i64, tpu.core_type = #tpu.core_type<tc>, window_params = [{transform_indices = @transform_0, window_bounds = array<i64: 1, 9, 9, 4>}, {transform_indices = @transform_1, window_bounds = array<i64: 1, 9, 9, 4>}, {transform_indices = @transform_2, window_bounds = array<i64: 1, 9, 9, 4>}, {transform_indices = @transform_3, window_bounds = array<i64: 1, 9, 9, 4>}, {pipeline_mode = #tpu.pipeline_mode<synchronous>, transform_indices = @transform_4, window_bounds = array<i64: 3, 3, 4, 128>}, {pipeline_mode = #tpu.pipeline_mode<synchronous>, transform_indices = @transform_5, window_bounds = array<i64: 1, 128>}, {transform_indices = @transform_6, window_bounds = array<i64: 1, 64, 128>}]} {
    %cst = arith.constant 0.000000e+00 : f32
    %0 = vector.broadcast %cst : f32 to vector<64x128xf32>
    %c0 = arith.constant 0 : index
    %c0_0 = arith.constant 0 : index
    %c0_1 = arith.constant 0 : index
    %c0_2 = arith.constant 0 : index
    %1 = vector.load %arg1[%c0, %c0_0, %c0_1, %c0_2] : memref<1x9x9x4xbf16, #tpu.memory_space<vmem>>, vector<1x8x8x4xbf16>
    %2 = vector.shape_cast %1 : vector<1x8x8x4xbf16> to vector<8x8x4xbf16>
    %3 = vector.shape_cast %2 : vector<8x8x4xbf16> to vector<64x4xbf16>
    %c0_3 = arith.constant 0 : index
    %c0_4 = arith.constant 0 : index
    %c0_5 = arith.constant 0 : index
    %c0_6 = arith.constant 0 : index
    %4 = vector.load %arg5[%c0_3, %c0_4, %c0_5, %c0_6] : memref<3x3x4x128xbf16, #tpu.memory_space<vmem>>, vector<1x1x4x128xbf16>
    %5 = vector.shape_cast %4 : vector<1x1x4x128xbf16> to vector<4x128xbf16>
    %cst_7 = arith.constant dense<0.000000e+00> : vector<64x128xf32>
    %6 = tpu.matmul %3, %5, %cst_7 {dimension_numbers = #tpu.dot_dimension_numbers<[1], [0], [0], [1], [0, 0, 1, 1], [], []>} : vector<64x4xbf16>, vector<4x128xbf16>, vector<64x128xf32> -> vector<64x128xf32>
    %7 = arith.addf %0, %6 : vector<64x128xf32>
    %c0_8 = arith.constant 0 : index
    %c0_9 = arith.constant 0 : index
    %c0_10 = arith.constant 0 : index
    %c0_11 = arith.constant 0 : index
    %8 = vector.load %arg2[%c0_8, %c0_9, %c0_10, %c0_11] : memref<1x9x9x4xbf16, #tpu.memory_space<vmem>>, vector<1x8x8x4xbf16>
    %9 = vector.shape_cast %8 : vector<1x8x8x4xbf16> to vector<8x8x4xbf16>
    %10 = vector.shape_cast %9 : vector<8x8x4xbf16> to vector<64x4xbf16>
    %c0_12 = arith.constant 0 : index
    %c1 = arith.constant 1 : index
    %c0_13 = arith.constant 0 : index
    %c0_14 = arith.constant 0 : index
    %11 = vector.load %arg5[%c0_12, %c1, %c0_13, %c0_14] : memref<3x3x4x128xbf16, #tpu.memory_space<vmem>>, vector<1x1x4x128xbf16>
    %12 = vector.shape_cast %11 : vector<1x1x4x128xbf16> to vector<4x128xbf16>
    %cst_15 = arith.constant dense<0.000000e+00> : vector<64x128xf32>
    %13 = tpu.matmul %10, %12, %cst_15 {dimension_numbers = #tpu.dot_dimension_numbers<[1], [0], [0], [1], [0, 0, 1, 1], [], []>} : vector<64x4xbf16>, vector<4x128xbf16>, vector<64x128xf32> -> vector<64x128xf32>
    %14 = arith.addf %7, %13 : vector<64x128xf32>
    %c0_16 = arith.constant 0 : index
    %c0_17 = arith.constant 0 : index
    %c1_18 = arith.constant 1 : index
    %c0_19 = arith.constant 0 : index
    %15 = vector.load %arg1[%c0_16, %c0_17, %c1_18, %c0_19] : memref<1x9x9x4xbf16, #tpu.memory_space<vmem>>, vector<1x8x8x4xbf16>
    %16 = vector.shape_cast %15 : vector<1x8x8x4xbf16> to vector<8x8x4xbf16>
    %17 = vector.shape_cast %16 : vector<8x8x4xbf16> to vector<64x4xbf16>
    %c0_20 = arith.constant 0 : index
    %c2 = arith.constant 2 : index
    %c0_21 = arith.constant 0 : index
    %c0_22 = arith.constant 0 : index
    %18 = vector.load %arg5[%c0_20, %c2, %c0_21, %c0_22] : memref<3x3x4x128xbf16, #tpu.memory_space<vmem>>, vector<1x1x4x128xbf16>
    %19 = vector.shape_cast %18 : vector<1x1x4x128xbf16> to vector<4x128xbf16>
    %cst_23 = arith.constant dense<0.000000e+00> : vector<64x128xf32>
    %20 = tpu.matmul %17, %19, %cst_23 {dimension_numbers = #tpu.dot_dimension_numbers<[1], [0], [0], [1], [0, 0, 1, 1], [], []>} : vector<64x4xbf16>, vector<4x128xbf16>, vector<64x128xf32> -> vector<64x128xf32>
    %21 = arith.addf %14, %20 : vector<64x128xf32>
    %c0_24 = arith.constant 0 : index
    %c0_25 = arith.constant 0 : index
    %c0_26 = arith.constant 0 : index
    %c0_27 = arith.constant 0 : index
    %22 = vector.load %arg3[%c0_24, %c0_25, %c0_26, %c0_27] : memref<1x9x9x4xbf16, #tpu.memory_space<vmem>>, vector<1x8x8x4xbf16>
    %23 = vector.shape_cast %22 : vector<1x8x8x4xbf16> to vector<8x8x4xbf16>
    %24 = vector.shape_cast %23 : vector<8x8x4xbf16> to vector<64x4xbf16>
    %c1_28 = arith.constant 1 : index
    %c0_29 = arith.constant 0 : index
    %c0_30 = arith.constant 0 : index
    %c0_31 = arith.constant 0 : index
    %25 = vector.load %arg5[%c1_28, %c0_29, %c0_30, %c0_31] : memref<3x3x4x128xbf16, #tpu.memory_space<vmem>>, vector<1x1x4x128xbf16>
    %26 = vector.shape_cast %25 : vector<1x1x4x128xbf16> to vector<4x128xbf16>
    %cst_32 = arith.constant dense<0.000000e+00> : vector<64x128xf32>
    %27 = tpu.matmul %24, %26, %cst_32 {dimension_numbers = #tpu.dot_dimension_numbers<[1], [0], [0], [1], [0, 0, 1, 1], [], []>} : vector<64x4xbf16>, vector<4x128xbf16>, vector<64x128xf32> -> vector<64x128xf32>
    %28 = arith.addf %21, %27 : vector<64x128xf32>
    %c0_33 = arith.constant 0 : index
    %c0_34 = arith.constant 0 : index
    %c0_35 = arith.constant 0 : index
    %c0_36 = arith.constant 0 : index
    %29 = vector.load %arg4[%c0_33, %c0_34, %c0_35, %c0_36] : memref<1x9x9x4xbf16, #tpu.memory_space<vmem>>, vector<1x8x8x4xbf16>
    %30 = vector.shape_cast %29 : vector<1x8x8x4xbf16> to vector<8x8x4xbf16>
    %31 = vector.shape_cast %30 : vector<8x8x4xbf16> to vector<64x4xbf16>
    %c1_37 = arith.constant 1 : index
    %c1_38 = arith.constant 1 : index
    %c0_39 = arith.constant 0 : index
    %c0_40 = arith.constant 0 : index
    %32 = vector.load %arg5[%c1_37, %c1_38, %c0_39, %c0_40] : memref<3x3x4x128xbf16, #tpu.memory_space<vmem>>, vector<1x1x4x128xbf16>
    %33 = vector.shape_cast %32 : vector<1x1x4x128xbf16> to vector<4x128xbf16>
    %cst_41 = arith.constant dense<0.000000e+00> : vector<64x128xf32>
    %34 = tpu.matmul %31, %33, %cst_41 {dimension_numbers = #tpu.dot_dimension_numbers<[1], [0], [0], [1], [0, 0, 1, 1], [], []>} : vector<64x4xbf16>, vector<4x128xbf16>, vector<64x128xf32> -> vector<64x128xf32>
    %35 = arith.addf %28, %34 : vector<64x128xf32>
    %c0_42 = arith.constant 0 : index
    %c0_43 = arith.constant 0 : index
    %c1_44 = arith.constant 1 : index
    %c0_45 = arith.constant 0 : index
    %36 = vector.load %arg3[%c0_42, %c0_43, %c1_44, %c0_45] : memref<1x9x9x4xbf16, #tpu.memory_space<vmem>>, vector<1x8x8x4xbf16>
    %37 = vector.shape_cast %36 : vector<1x8x8x4xbf16> to vector<8x8x4xbf16>
    %38 = vector.shape_cast %37 : vector<8x8x4xbf16> to vector<64x4xbf16>
    %c1_46 = arith.constant 1 : index
    %c2_47 = arith.constant 2 : index
    %c0_48 = arith.constant 0 : index
    %c0_49 = arith.constant 0 : index
    %39 = vector.load %arg5[%c1_46, %c2_47, %c0_48, %c0_49] : memref<3x3x4x128xbf16, #tpu.memory_space<vmem>>, vector<1x1x4x128xbf16>
    %40 = vector.shape_cast %39 : vector<1x1x4x128xbf16> to vector<4x128xbf16>
    %cst_50 = arith.constant dense<0.000000e+00> : vector<64x128xf32>
    %41 = tpu.matmul %38, %40, %cst_50 {dimension_numbers = #tpu.dot_dimension_numbers<[1], [0], [0], [1], [0, 0, 1, 1], [], []>} : vector<64x4xbf16>, vector<4x128xbf16>, vector<64x128xf32> -> vector<64x128xf32>
    %42 = arith.addf %35, %41 : vector<64x128xf32>
    %c0_51 = arith.constant 0 : index
    %c1_52 = arith.constant 1 : index
    %c0_53 = arith.constant 0 : index
    %c0_54 = arith.constant 0 : index
    %43 = vector.load %arg1[%c0_51, %c1_52, %c0_53, %c0_54] : memref<1x9x9x4xbf16, #tpu.memory_space<vmem>>, vector<1x8x8x4xbf16>
    %44 = vector.shape_cast %43 : vector<1x8x8x4xbf16> to vector<8x8x4xbf16>
    %45 = vector.shape_cast %44 : vector<8x8x4xbf16> to vector<64x4xbf16>
    %c2_55 = arith.constant 2 : index
    %c0_56 = arith.constant 0 : index
    %c0_57 = arith.constant 0 : index
    %c0_58 = arith.constant 0 : index
    %46 = vector.load %arg5[%c2_55, %c0_56, %c0_57, %c0_58] : memref<3x3x4x128xbf16, #tpu.memory_space<vmem>>, vector<1x1x4x128xbf16>
    %47 = vector.shape_cast %46 : vector<1x1x4x128xbf16> to vector<4x128xbf16>
    %cst_59 = arith.constant dense<0.000000e+00> : vector<64x128xf32>
    %48 = tpu.matmul %45, %47, %cst_59 {dimension_numbers = #tpu.dot_dimension_numbers<[1], [0], [0], [1], [0, 0, 1, 1], [], []>} : vector<64x4xbf16>, vector<4x128xbf16>, vector<64x128xf32> -> vector<64x128xf32>
    %49 = arith.addf %42, %48 : vector<64x128xf32>
    %c0_60 = arith.constant 0 : index
    %c1_61 = arith.constant 1 : index
    %c0_62 = arith.constant 0 : index
    %c0_63 = arith.constant 0 : index
    %50 = vector.load %arg2[%c0_60, %c1_61, %c0_62, %c0_63] : memref<1x9x9x4xbf16, #tpu.memory_space<vmem>>, vector<1x8x8x4xbf16>
    %51 = vector.shape_cast %50 : vector<1x8x8x4xbf16> to vector<8x8x4xbf16>
    %52 = vector.shape_cast %51 : vector<8x8x4xbf16> to vector<64x4xbf16>
    %c2_64 = arith.constant 2 : index
    %c1_65 = arith.constant 1 : index
    %c0_66 = arith.constant 0 : index
    %c0_67 = arith.constant 0 : index
    %53 = vector.load %arg5[%c2_64, %c1_65, %c0_66, %c0_67] : memref<3x3x4x128xbf16, #tpu.memory_space<vmem>>, vector<1x1x4x128xbf16>
    %54 = vector.shape_cast %53 : vector<1x1x4x128xbf16> to vector<4x128xbf16>
    %cst_68 = arith.constant dense<0.000000e+00> : vector<64x128xf32>
    %55 = tpu.matmul %52, %54, %cst_68 {dimension_numbers = #tpu.dot_dimension_numbers<[1], [0], [0], [1], [0, 0, 1, 1], [], []>} : vector<64x4xbf16>, vector<4x128xbf16>, vector<64x128xf32> -> vector<64x128xf32>
    %56 = arith.addf %49, %55 : vector<64x128xf32>
    %c0_69 = arith.constant 0 : index
    %c1_70 = arith.constant 1 : index
    %c1_71 = arith.constant 1 : index
    %c0_72 = arith.constant 0 : index
    %57 = vector.load %arg1[%c0_69, %c1_70, %c1_71, %c0_72] : memref<1x9x9x4xbf16, #tpu.memory_space<vmem>>, vector<1x8x8x4xbf16>
    %58 = vector.shape_cast %57 : vector<1x8x8x4xbf16> to vector<8x8x4xbf16>
    %59 = vector.shape_cast %58 : vector<8x8x4xbf16> to vector<64x4xbf16>
    %c2_73 = arith.constant 2 : index
    %c2_74 = arith.constant 2 : index
    %c0_75 = arith.constant 0 : index
    %c0_76 = arith.constant 0 : index
    %60 = vector.load %arg5[%c2_73, %c2_74, %c0_75, %c0_76] : memref<3x3x4x128xbf16, #tpu.memory_space<vmem>>, vector<1x1x4x128xbf16>
    %61 = vector.shape_cast %60 : vector<1x1x4x128xbf16> to vector<4x128xbf16>
    %cst_77 = arith.constant dense<0.000000e+00> : vector<64x128xf32>
    %62 = tpu.matmul %59, %61, %cst_77 {dimension_numbers = #tpu.dot_dimension_numbers<[1], [0], [0], [1], [0, 0, 1, 1], [], []>} : vector<64x4xbf16>, vector<4x128xbf16>, vector<64x128xf32> -> vector<64x128xf32>
    %63 = arith.addf %56, %62 : vector<64x128xf32>
    %c0_78 = arith.constant 0 : index
    %c0_79 = arith.constant 0 : index
    %64 = vector.load %arg6[%c0_78, %c0_79] : memref<1x128xf32, #tpu.memory_space<vmem>>, vector<1x128xf32>
    %65 = vector.broadcast %64 : vector<1x128xf32> to vector<64x128xf32>
    %66 = arith.addf %63, %65 : vector<64x128xf32>
    %cst_80 = arith.constant 0.000000e+00 : f32
    %67 = vector.broadcast %cst_80 : f32 to vector<64x128xf32>
    %68 = arith.maximumf %66, %67 : vector<64x128xf32>
    %69 = arith.truncf %68 : vector<64x128xf32> to vector<64x128xbf16>
    %c0_81 = arith.constant 0 : index
    %c0_82 = arith.constant 0 : index
    %c0_83 = arith.constant 0 : index
    %70 = vector.load %arg7[%c0_81, %c0_82, %c0_83] : memref<1x64x128xbf16, #tpu.memory_space<vmem>>, vector<1x64x128xbf16>
    %71 = vector.shape_cast %70 : vector<1x64x128xbf16> to vector<64x128xbf16>
    %72 = vector.shape_cast %69 : vector<64x128xbf16> to vector<1x64x128xbf16>
    tpu.vector_store %arg7[%c0_81, %c0_82, %c0_83], %72 {strides = array<i32>} : memref<1x64x128xbf16, #tpu.memory_space<vmem>>, vector<1x64x128xbf16>,
    return
  }
  func.func @transform_0(%arg0: i32) -> (i32, i32, i32, i32) {
    %c0_i32 = arith.constant 0 : i32
    %c0_i32_0 = arith.constant 0 : i32
    %c0_i32_1 = arith.constant 0 : i32
    %c0_i32_2 = arith.constant 0 : i32
    return %arg0, %c0_i32, %c0_i32_0, %c0_i32_1 : i32, i32, i32, i32
  }
  func.func @transform_1(%arg0: i32) -> (i32, i32, i32, i32) {
    %c0_i32 = arith.constant 0 : i32
    %c0_i32_0 = arith.constant 0 : i32
    %c0_i32_1 = arith.constant 0 : i32
    %c0_i32_2 = arith.constant 0 : i32
    return %arg0, %c0_i32, %c0_i32_0, %c0_i32_1 : i32, i32, i32, i32
  }
  func.func @transform_2(%arg0: i32) -> (i32, i32, i32, i32) {
    %c0_i32 = arith.constant 0 : i32
    %c0_i32_0 = arith.constant 0 : i32
    %c0_i32_1 = arith.constant 0 : i32
    %c0_i32_2 = arith.constant 0 : i32
    return %arg0, %c0_i32, %c0_i32_0, %c0_i32_1 : i32, i32, i32, i32
  }
  func.func @transform_3(%arg0: i32) -> (i32, i32, i32, i32) {
    %c0_i32 = arith.constant 0 : i32
    %c0_i32_0 = arith.constant 0 : i32
    %c0_i32_1 = arith.constant 0 : i32
    %c0_i32_2 = arith.constant 0 : i32
    return %arg0, %c0_i32, %c0_i32_0, %c0_i32_1 : i32, i32, i32, i32
  }
  func.func @transform_4(%arg0: i32) -> (i32, i32, i32, i32) {
    %c0_i32 = arith.constant 0 : i32
    %c0_i32_0 = arith.constant 0 : i32
    %c0_i32_1 = arith.constant 0 : i32
    %c0_i32_2 = arith.constant 0 : i32
    %c0_i32_3 = arith.constant 0 : i32
    return %c0_i32, %c0_i32_0, %c0_i32_1, %c0_i32_2 : i32, i32, i32, i32
  }
  func.func @transform_5(%arg0: i32) -> (i32, i32) {
    %c0_i32 = arith.constant 0 : i32
    %c0_i32_0 = arith.constant 0 : i32
    %c0_i32_1 = arith.constant 0 : i32
    return %c0_i32, %c0_i32_0 : i32, i32
  }
  func.func @transform_6(%arg0: i32) -> (i32, i32, i32) {
    %c0_i32 = arith.constant 0 : i32
    %c0_i32_0 = arith.constant 0 : i32
    %c0_i32_1 = arith.constant 0 : i32
    return %arg0, %c0_i32, %c0_i32_0 : i32, i32, i32
  }
}

module attributes {stable_mosaic.version = 11 : i64} {
  func.func @_conv3x3_s2_kernel(%arg0: i32, %arg1: memref<1x5x5x128xbf16, #tpu.memory_space<vmem>>, %arg2: memref<1x5x5x128xbf16, #tpu.memory_space<vmem>>, %arg3: memref<1x5x5x128xbf16, #tpu.memory_space<vmem>>, %arg4: memref<1x5x5x128xbf16, #tpu.memory_space<vmem>>, %arg5: memref<3x3x128x128xbf16, #tpu.memory_space<vmem>>, %arg6: memref<1x128xf32, #tpu.memory_space<vmem>>, %arg7: memref<1x16x128xbf16, #tpu.memory_space<vmem>>) attributes {dimension_semantics = [#tpu.dimension_semantics<parallel>], iteration_bounds = array<i64: 2>, scalar_prefetch = 0 : i64, scratch_operands = 0 : i64, tpu.core_type = #tpu.core_type<tc>, window_params = [{transform_indices = @transform_0, window_bounds = array<i64: 1, 5, 5, 128>}, {transform_indices = @transform_1, window_bounds = array<i64: 1, 5, 5, 128>}, {transform_indices = @transform_2, window_bounds = array<i64: 1, 5, 5, 128>}, {transform_indices = @transform_3, window_bounds = array<i64: 1, 5, 5, 128>}, {pipeline_mode = #tpu.pipeline_mode<synchronous>, transform_indices = @transform_4, window_bounds = array<i64: 3, 3, 128, 128>}, {pipeline_mode = #tpu.pipeline_mode<synchronous>, transform_indices = @transform_5, window_bounds = array<i64: 1, 128>}, {transform_indices = @transform_6, window_bounds = array<i64: 1, 16, 128>}]} {
    %cst = arith.constant 0.000000e+00 : f32
    %0 = vector.broadcast %cst : f32 to vector<16x128xf32>
    %c0 = arith.constant 0 : index
    %c0_0 = arith.constant 0 : index
    %c0_1 = arith.constant 0 : index
    %c0_2 = arith.constant 0 : index
    %1 = vector.load %arg1[%c0, %c0_0, %c0_1, %c0_2] : memref<1x5x5x128xbf16, #tpu.memory_space<vmem>>, vector<1x4x4x128xbf16>
    %2 = vector.shape_cast %1 : vector<1x4x4x128xbf16> to vector<4x4x128xbf16>
    %3 = vector.shape_cast %2 : vector<4x4x128xbf16> to vector<16x128xbf16>
    %c0_3 = arith.constant 0 : index
    %c0_4 = arith.constant 0 : index
    %c0_5 = arith.constant 0 : index
    %c0_6 = arith.constant 0 : index
    %4 = vector.load %arg5[%c0_3, %c0_4, %c0_5, %c0_6] : memref<3x3x128x128xbf16, #tpu.memory_space<vmem>>, vector<1x1x128x128xbf16>
    %5 = vector.shape_cast %4 : vector<1x1x128x128xbf16> to vector<128x128xbf16>
    %cst_7 = arith.constant dense<0.000000e+00> : vector<16x128xf32>
    %6 = tpu.matmul %3, %5, %cst_7 {dimension_numbers = #tpu.dot_dimension_numbers<[1], [0], [0], [1], [0, 0, 1, 1], [], []>} : vector<16x128xbf16>, vector<128x128xbf16>, vector<16x128xf32> -> vector<16x128xf32>
    %7 = arith.addf %0, %6 : vector<16x128xf32>
    %c0_8 = arith.constant 0 : index
    %c0_9 = arith.constant 0 : index
    %c0_10 = arith.constant 0 : index
    %c0_11 = arith.constant 0 : index
    %8 = vector.load %arg2[%c0_8, %c0_9, %c0_10, %c0_11] : memref<1x5x5x128xbf16, #tpu.memory_space<vmem>>, vector<1x4x4x128xbf16>
    %9 = vector.shape_cast %8 : vector<1x4x4x128xbf16> to vector<4x4x128xbf16>
    %10 = vector.shape_cast %9 : vector<4x4x128xbf16> to vector<16x128xbf16>
    %c0_12 = arith.constant 0 : index
    %c1 = arith.constant 1 : index
    %c0_13 = arith.constant 0 : index
    %c0_14 = arith.constant 0 : index
    %11 = vector.load %arg5[%c0_12, %c1, %c0_13, %c0_14] : memref<3x3x128x128xbf16, #tpu.memory_space<vmem>>, vector<1x1x128x128xbf16>
    %12 = vector.shape_cast %11 : vector<1x1x128x128xbf16> to vector<128x128xbf16>
    %cst_15 = arith.constant dense<0.000000e+00> : vector<16x128xf32>
    %13 = tpu.matmul %10, %12, %cst_15 {dimension_numbers = #tpu.dot_dimension_numbers<[1], [0], [0], [1], [0, 0, 1, 1], [], []>} : vector<16x128xbf16>, vector<128x128xbf16>, vector<16x128xf32> -> vector<16x128xf32>
    %14 = arith.addf %7, %13 : vector<16x128xf32>
    %c0_16 = arith.constant 0 : index
    %c0_17 = arith.constant 0 : index
    %c1_18 = arith.constant 1 : index
    %c0_19 = arith.constant 0 : index
    %15 = vector.load %arg1[%c0_16, %c0_17, %c1_18, %c0_19] : memref<1x5x5x128xbf16, #tpu.memory_space<vmem>>, vector<1x4x4x128xbf16>
    %16 = vector.shape_cast %15 : vector<1x4x4x128xbf16> to vector<4x4x128xbf16>
    %17 = vector.shape_cast %16 : vector<4x4x128xbf16> to vector<16x128xbf16>
    %c0_20 = arith.constant 0 : index
    %c2 = arith.constant 2 : index
    %c0_21 = arith.constant 0 : index
    %c0_22 = arith.constant 0 : index
    %18 = vector.load %arg5[%c0_20, %c2, %c0_21, %c0_22] : memref<3x3x128x128xbf16, #tpu.memory_space<vmem>>, vector<1x1x128x128xbf16>
    %19 = vector.shape_cast %18 : vector<1x1x128x128xbf16> to vector<128x128xbf16>
    %cst_23 = arith.constant dense<0.000000e+00> : vector<16x128xf32>
    %20 = tpu.matmul %17, %19, %cst_23 {dimension_numbers = #tpu.dot_dimension_numbers<[1], [0], [0], [1], [0, 0, 1, 1], [], []>} : vector<16x128xbf16>, vector<128x128xbf16>, vector<16x128xf32> -> vector<16x128xf32>
    %21 = arith.addf %14, %20 : vector<16x128xf32>
    %c0_24 = arith.constant 0 : index
    %c0_25 = arith.constant 0 : index
    %c0_26 = arith.constant 0 : index
    %c0_27 = arith.constant 0 : index
    %22 = vector.load %arg3[%c0_24, %c0_25, %c0_26, %c0_27] : memref<1x5x5x128xbf16, #tpu.memory_space<vmem>>, vector<1x4x4x128xbf16>
    %23 = vector.shape_cast %22 : vector<1x4x4x128xbf16> to vector<4x4x128xbf16>
    %24 = vector.shape_cast %23 : vector<4x4x128xbf16> to vector<16x128xbf16>
    %c1_28 = arith.constant 1 : index
    %c0_29 = arith.constant 0 : index
    %c0_30 = arith.constant 0 : index
    %c0_31 = arith.constant 0 : index
    %25 = vector.load %arg5[%c1_28, %c0_29, %c0_30, %c0_31] : memref<3x3x128x128xbf16, #tpu.memory_space<vmem>>, vector<1x1x128x128xbf16>
    %26 = vector.shape_cast %25 : vector<1x1x128x128xbf16> to vector<128x128xbf16>
    %cst_32 = arith.constant dense<0.000000e+00> : vector<16x128xf32>
    %27 = tpu.matmul %24, %26, %cst_32 {dimension_numbers = #tpu.dot_dimension_numbers<[1], [0], [0], [1], [0, 0, 1, 1], [], []>} : vector<16x128xbf16>, vector<128x128xbf16>, vector<16x128xf32> -> vector<16x128xf32>
    %28 = arith.addf %21, %27 : vector<16x128xf32>
    %c0_33 = arith.constant 0 : index
    %c0_34 = arith.constant 0 : index
    %c0_35 = arith.constant 0 : index
    %c0_36 = arith.constant 0 : index
    %29 = vector.load %arg4[%c0_33, %c0_34, %c0_35, %c0_36] : memref<1x5x5x128xbf16, #tpu.memory_space<vmem>>, vector<1x4x4x128xbf16>
    %30 = vector.shape_cast %29 : vector<1x4x4x128xbf16> to vector<4x4x128xbf16>
    %31 = vector.shape_cast %30 : vector<4x4x128xbf16> to vector<16x128xbf16>
    %c1_37 = arith.constant 1 : index
    %c1_38 = arith.constant 1 : index
    %c0_39 = arith.constant 0 : index
    %c0_40 = arith.constant 0 : index
    %32 = vector.load %arg5[%c1_37, %c1_38, %c0_39, %c0_40] : memref<3x3x128x128xbf16, #tpu.memory_space<vmem>>, vector<1x1x128x128xbf16>
    %33 = vector.shape_cast %32 : vector<1x1x128x128xbf16> to vector<128x128xbf16>
    %cst_41 = arith.constant dense<0.000000e+00> : vector<16x128xf32>
    %34 = tpu.matmul %31, %33, %cst_41 {dimension_numbers = #tpu.dot_dimension_numbers<[1], [0], [0], [1], [0, 0, 1, 1], [], []>} : vector<16x128xbf16>, vector<128x128xbf16>, vector<16x128xf32> -> vector<16x128xf32>
    %35 = arith.addf %28, %34 : vector<16x128xf32>
    %c0_42 = arith.constant 0 : index
    %c0_43 = arith.constant 0 : index
    %c1_44 = arith.constant 1 : index
    %c0_45 = arith.constant 0 : index
    %36 = vector.load %arg3[%c0_42, %c0_43, %c1_44, %c0_45] : memref<1x5x5x128xbf16, #tpu.memory_space<vmem>>, vector<1x4x4x128xbf16>
    %37 = vector.shape_cast %36 : vector<1x4x4x128xbf16> to vector<4x4x128xbf16>
    %38 = vector.shape_cast %37 : vector<4x4x128xbf16> to vector<16x128xbf16>
    %c1_46 = arith.constant 1 : index
    %c2_47 = arith.constant 2 : index
    %c0_48 = arith.constant 0 : index
    %c0_49 = arith.constant 0 : index
    %39 = vector.load %arg5[%c1_46, %c2_47, %c0_48, %c0_49] : memref<3x3x128x128xbf16, #tpu.memory_space<vmem>>, vector<1x1x128x128xbf16>
    %40 = vector.shape_cast %39 : vector<1x1x128x128xbf16> to vector<128x128xbf16>
    %cst_50 = arith.constant dense<0.000000e+00> : vector<16x128xf32>
    %41 = tpu.matmul %38, %40, %cst_50 {dimension_numbers = #tpu.dot_dimension_numbers<[1], [0], [0], [1], [0, 0, 1, 1], [], []>} : vector<16x128xbf16>, vector<128x128xbf16>, vector<16x128xf32> -> vector<16x128xf32>
    %42 = arith.addf %35, %41 : vector<16x128xf32>
    %c0_51 = arith.constant 0 : index
    %c1_52 = arith.constant 1 : index
    %c0_53 = arith.constant 0 : index
    %c0_54 = arith.constant 0 : index
    %43 = vector.load %arg1[%c0_51, %c1_52, %c0_53, %c0_54] : memref<1x5x5x128xbf16, #tpu.memory_space<vmem>>, vector<1x4x4x128xbf16>
    %44 = vector.shape_cast %43 : vector<1x4x4x128xbf16> to vector<4x4x128xbf16>
    %45 = vector.shape_cast %44 : vector<4x4x128xbf16> to vector<16x128xbf16>
    %c2_55 = arith.constant 2 : index
    %c0_56 = arith.constant 0 : index
    %c0_57 = arith.constant 0 : index
    %c0_58 = arith.constant 0 : index
    %46 = vector.load %arg5[%c2_55, %c0_56, %c0_57, %c0_58] : memref<3x3x128x128xbf16, #tpu.memory_space<vmem>>, vector<1x1x128x128xbf16>
    %47 = vector.shape_cast %46 : vector<1x1x128x128xbf16> to vector<128x128xbf16>
    %cst_59 = arith.constant dense<0.000000e+00> : vector<16x128xf32>
    %48 = tpu.matmul %45, %47, %cst_59 {dimension_numbers = #tpu.dot_dimension_numbers<[1], [0], [0], [1], [0, 0, 1, 1], [], []>} : vector<16x128xbf16>, vector<128x128xbf16>, vector<16x128xf32> -> vector<16x128xf32>
    %49 = arith.addf %42, %48 : vector<16x128xf32>
    %c0_60 = arith.constant 0 : index
    %c1_61 = arith.constant 1 : index
    %c0_62 = arith.constant 0 : index
    %c0_63 = arith.constant 0 : index
    %50 = vector.load %arg2[%c0_60, %c1_61, %c0_62, %c0_63] : memref<1x5x5x128xbf16, #tpu.memory_space<vmem>>, vector<1x4x4x128xbf16>
    %51 = vector.shape_cast %50 : vector<1x4x4x128xbf16> to vector<4x4x128xbf16>
    %52 = vector.shape_cast %51 : vector<4x4x128xbf16> to vector<16x128xbf16>
    %c2_64 = arith.constant 2 : index
    %c1_65 = arith.constant 1 : index
    %c0_66 = arith.constant 0 : index
    %c0_67 = arith.constant 0 : index
    %53 = vector.load %arg5[%c2_64, %c1_65, %c0_66, %c0_67] : memref<3x3x128x128xbf16, #tpu.memory_space<vmem>>, vector<1x1x128x128xbf16>
    %54 = vector.shape_cast %53 : vector<1x1x128x128xbf16> to vector<128x128xbf16>
    %cst_68 = arith.constant dense<0.000000e+00> : vector<16x128xf32>
    %55 = tpu.matmul %52, %54, %cst_68 {dimension_numbers = #tpu.dot_dimension_numbers<[1], [0], [0], [1], [0, 0, 1, 1], [], []>} : vector<16x128xbf16>, vector<128x128xbf16>, vector<16x128xf32> -> vector<16x128xf32>
    %56 = arith.addf %49, %55 : vector<16x128xf32>
    %c0_69 = arith.constant 0 : index
    %c1_70 = arith.constant 1 : index
    %c1_71 = arith.constant 1 : index
    %c0_72 = arith.constant 0 : index
    %57 = vector.load %arg1[%c0_69, %c1_70, %c1_71, %c0_72] : memref<1x5x5x128xbf16, #tpu.memory_space<vmem>>, vector<1x4x4x128xbf16>
    %58 = vector.shape_cast %57 : vector<1x4x4x128xbf16> to vector<4x4x128xbf16>
    %59 = vector.shape_cast %58 : vector<4x4x128xbf16> to vector<16x128xbf16>
    %c2_73 = arith.constant 2 : index
    %c2_74 = arith.constant 2 : index
    %c0_75 = arith.constant 0 : index
    %c0_76 = arith.constant 0 : index
    %60 = vector.load %arg5[%c2_73, %c2_74, %c0_75, %c0_76] : memref<3x3x128x128xbf16, #tpu.memory_space<vmem>>, vector<1x1x128x128xbf16>
    %61 = vector.shape_cast %60 : vector<1x1x128x128xbf16> to vector<128x128xbf16>
    %cst_77 = arith.constant dense<0.000000e+00> : vector<16x128xf32>
    %62 = tpu.matmul %59, %61, %cst_77 {dimension_numbers = #tpu.dot_dimension_numbers<[1], [0], [0], [1], [0, 0, 1, 1], [], []>} : vector<16x128xbf16>, vector<128x128xbf16>, vector<16x128xf32> -> vector<16x128xf32>
    %63 = arith.addf %56, %62 : vector<16x128xf32>
    %c0_78 = arith.constant 0 : index
    %c0_79 = arith.constant 0 : index
    %64 = vector.load %arg6[%c0_78, %c0_79] : memref<1x128xf32, #tpu.memory_space<vmem>>, vector<1x128xf32>
    %65 = vector.broadcast %64 : vector<1x128xf32> to vector<16x128xf32>
    %66 = arith.addf %63, %65 : vector<16x128xf32>
    %cst_80 = arith.constant 0.000000e+00 : f32
    %67 = vector.broadcast %cst_80 : f32 to vector<16x128xf32>
    %68 = arith.maximumf %66, %67 : vector<16x128xf32>
    %69 = arith.truncf %68 : vector<16x128xf32> to vector<16x128xbf16>
    %c0_81 = arith.constant 0 : index
    %c0_82 = arith.constant 0 : index
    %c0_83 = arith.constant 0 : index
    %70 = vector.load %arg7[%c0_81, %c0_82, %c0_83] : memref<1x16x128xbf16, #tpu.memory_space<vmem>>, vector<1x16x128xbf16>
    %71 = vector.shape_cast %70 : vector<1x16x128xbf16> to vector<16x128xbf16>
    %72 = vector.shape_cast %69 : vector<16x128xbf16> to vector<1x16x128xbf16>
    tpu.vector_store %arg7[%c0_81, %c0_82, %c0_83], %72 {strides = array<i32>} : memref<1x16x128xbf16, #tpu.memory_space<vmem>>, vector<1x16x128xbf16>,
    return
  }
  func.func @transform_0(%arg0: i32) -> (i32, i32, i32, i32) {
    %c0_i32 = arith.constant 0 : i32
    %c0_i32_0 = arith.constant 0 : i32
    %c0_i32_1 = arith.constant 0 : i32
    %c0_i32_2 = arith.constant 0 : i32
    return %arg0, %c0_i32, %c0_i32_0, %c0_i32_1 : i32, i32, i32, i32
  }
  func.func @transform_1(%arg0: i32) -> (i32, i32, i32, i32) {
    %c0_i32 = arith.constant 0 : i32
    %c0_i32_0 = arith.constant 0 : i32
    %c0_i32_1 = arith.constant 0 : i32
    %c0_i32_2 = arith.constant 0 : i32
    return %arg0, %c0_i32, %c0_i32_0, %c0_i32_1 : i32, i32, i32, i32
  }
  func.func @transform_2(%arg0: i32) -> (i32, i32, i32, i32) {
    %c0_i32 = arith.constant 0 : i32
    %c0_i32_0 = arith.constant 0 : i32
    %c0_i32_1 = arith.constant 0 : i32
    %c0_i32_2 = arith.constant 0 : i32
    return %arg0, %c0_i32, %c0_i32_0, %c0_i32_1 : i32, i32, i32, i32
  }
  func.func @transform_3(%arg0: i32) -> (i32, i32, i32, i32) {
    %c0_i32 = arith.constant 0 : i32
    %c0_i32_0 = arith.constant 0 : i32
    %c0_i32_1 = arith.constant 0 : i32
    %c0_i32_2 = arith.constant 0 : i32
    return %arg0, %c0_i32, %c0_i32_0, %c0_i32_1 : i32, i32, i32, i32
  }
  func.func @transform_4(%arg0: i32) -> (i32, i32, i32, i32) {
    %c0_i32 = arith.constant 0 : i32
    %c0_i32_0 = arith.constant 0 : i32
    %c0_i32_1 = arith.constant 0 : i32
    %c0_i32_2 = arith.constant 0 : i32
    %c0_i32_3 = arith.constant 0 : i32
    return %c0_i32, %c0_i32_0, %c0_i32_1, %c0_i32_2 : i32, i32, i32, i32
  }
  func.func @transform_5(%arg0: i32) -> (i32, i32) {
    %c0_i32 = arith.constant 0 : i32
    %c0_i32_0 = arith.constant 0 : i32
    %c0_i32_1 = arith.constant 0 : i32
    return %c0_i32, %c0_i32_0 : i32, i32
  }
  func.func @transform_6(%arg0: i32) -> (i32, i32, i32) {
    %c0_i32 = arith.constant 0 : i32
    %c0_i32_0 = arith.constant 0 : i32
    %c0_i32_1 = arith.constant 0 : i32
    return %arg0, %c0_i32, %c0_i32_0 : i32, i32, i32
  }
}

module attributes {stable_mosaic.version = 11 : i64} {
  func.func @_dec_resize_kernel(%arg0: i32, %arg1: memref<1x4x4x128xbf16, #tpu.memory_space<vmem>>, %arg2: memref<32x128xbf16, #tpu.memory_space<vmem>>, %arg3: memref<32x1xf32, #tpu.memory_space<vmem>>, %arg4: memref<16x4xbf16, #tpu.memory_space<vmem>>, %arg5: memref<16x4xbf16, #tpu.memory_space<vmem>>, %arg6: memref<1x32x16x16xf32, #tpu.memory_space<vmem>>, %arg7: memref<4x32x16xf32, #tpu.memory_space<vmem>>) attributes {dimension_semantics = [#tpu.dimension_semantics<parallel>], iteration_bounds = array<i64: 2>, scalar_prefetch = 0 : i64, scratch_operands = 1 : i64, tpu.core_type = #tpu.core_type<tc>, window_params = [{transform_indices = @transform_0, window_bounds = array<i64: 1, 4, 4, 128>}, {pipeline_mode = #tpu.pipeline_mode<synchronous>, transform_indices = @transform_1, window_bounds = array<i64: 32, 128>}, {pipeline_mode = #tpu.pipeline_mode<synchronous>, transform_indices = @transform_2, window_bounds = array<i64: 32, 1>}, {pipeline_mode = #tpu.pipeline_mode<synchronous>, transform_indices = @transform_3, window_bounds = array<i64: 16, 4>}, {pipeline_mode = #tpu.pipeline_mode<synchronous>, transform_indices = @transform_4, window_bounds = array<i64: 16, 4>}, {transform_indices = @transform_5, window_bounds = array<i64: 1, 32, 16, 16>}]} {
    %c0 = arith.constant 0 : index
    %c0_0 = arith.constant 0 : index
    %c0_1 = arith.constant 0 : index
    %c0_2 = arith.constant 0 : index
    %0 = vector.load %arg1[%c0, %c0_0, %c0_1, %c0_2] : memref<1x4x4x128xbf16, #tpu.memory_space<vmem>>, vector<1x1x4x128xbf16>
    %1 = vector.shape_cast %0 : vector<1x1x4x128xbf16> to vector<4x128xbf16>
    %c0_3 = arith.constant 0 : index
    %c0_4 = arith.constant 0 : index
    %2 = vector.load %arg2[%c0_3, %c0_4] : memref<32x128xbf16, #tpu.memory_space<vmem>>, vector<32x128xbf16>
    %cst = arith.constant dense<0.000000e+00> : vector<32x4xf32>
    %3 = tpu.matmul %2, %1, %cst {dimension_numbers = #tpu.dot_dimension_numbers<[1], [1], [0], [0], [0, 0, 1, 0], [], []>} : vector<32x128xbf16>, vector<4x128xbf16>, vector<32x4xf32> -> vector<32x4xf32>
    %c0_5 = arith.constant 0 : index
    %c0_6 = arith.constant 0 : index
    %4 = vector.load %arg3[%c0_5, %c0_6] : memref<32x1xf32, #tpu.memory_space<vmem>>, vector<32x1xf32>
    %5 = vector.broadcast %4 : vector<32x1xf32> to vector<32x4xf32>
    %6 = arith.addf %3, %5 : vector<32x4xf32>
    %7 = arith.truncf %6 : vector<32x4xf32> to vector<32x4xbf16>
    %c0_7 = arith.constant 0 : index
    %c0_8 = arith.constant 0 : index
    %8 = vector.load %arg5[%c0_7, %c0_8] : memref<16x4xbf16, #tpu.memory_space<vmem>>, vector<16x4xbf16>
    %cst_9 = arith.constant dense<0.000000e+00> : vector<32x16xf32>
    %9 = tpu.matmul %7, %8, %cst_9 {dimension_numbers = #tpu.dot_dimension_numbers<[1], [1], [0], [0], [0, 0, 1, 0], [], []>} : vector<32x4xbf16>, vector<16x4xbf16>, vector<32x16xf32> -> vector<32x16xf32>
    %c0_10 = arith.constant 0 : index
    %c0_11 = arith.constant 0 : index
    %c0_12 = arith.constant 0 : index
    %10 = vector.load %arg7[%c0_10, %c0_11, %c0_12] : memref<4x32x16xf32, #tpu.memory_space<vmem>>, vector<1x32x16xf32>
    %11 = vector.shape_cast %10 : vector<1x32x16xf32> to vector<32x16xf32>
    %12 = vector.shape_cast %9 : vector<32x16xf32> to vector<1x32x16xf32>
    tpu.vector_store %arg7[%c0_10, %c0_11, %c0_12], %12 {strides = array<i32>} : memref<4x32x16xf32, #tpu.memory_space<vmem>>, vector<1x32x16xf32>,
    %c0_13 = arith.constant 0 : index
    %c1 = arith.constant 1 : index
    %c0_14 = arith.constant 0 : index
    %c0_15 = arith.constant 0 : index
    %13 = vector.load %arg1[%c0_13, %c1, %c0_14, %c0_15] : memref<1x4x4x128xbf16, #tpu.memory_space<vmem>>, vector<1x1x4x128xbf16>
    %14 = vector.shape_cast %13 : vector<1x1x4x128xbf16> to vector<4x128xbf16>
    %c0_16 = arith.constant 0 : index
    %c0_17 = arith.constant 0 : index
    %15 = vector.load %arg2[%c0_16, %c0_17] : memref<32x128xbf16, #tpu.memory_space<vmem>>, vector<32x128xbf16>
    %cst_18 = arith.constant dense<0.000000e+00> : vector<32x4xf32>
    %16 = tpu.matmul %15, %14, %cst_18 {dimension_numbers = #tpu.dot_dimension_numbers<[1], [1], [0], [0], [0, 0, 1, 0], [], []>} : vector<32x128xbf16>, vector<4x128xbf16>, vector<32x4xf32> -> vector<32x4xf32>
    %c0_19 = arith.constant 0 : index
    %c0_20 = arith.constant 0 : index
    %17 = vector.load %arg3[%c0_19, %c0_20] : memref<32x1xf32, #tpu.memory_space<vmem>>, vector<32x1xf32>
    %18 = vector.broadcast %17 : vector<32x1xf32> to vector<32x4xf32>
    %19 = arith.addf %16, %18 : vector<32x4xf32>
    %20 = arith.truncf %19 : vector<32x4xf32> to vector<32x4xbf16>
    %c0_21 = arith.constant 0 : index
    %c0_22 = arith.constant 0 : index
    %21 = vector.load %arg5[%c0_21, %c0_22] : memref<16x4xbf16, #tpu.memory_space<vmem>>, vector<16x4xbf16>
    %cst_23 = arith.constant dense<0.000000e+00> : vector<32x16xf32>
    %22 = tpu.matmul %20, %21, %cst_23 {dimension_numbers = #tpu.dot_dimension_numbers<[1], [1], [0], [0], [0, 0, 1, 0], [], []>} : vector<32x4xbf16>, vector<16x4xbf16>, vector<32x16xf32> -> vector<32x16xf32>
    %c1_24 = arith.constant 1 : index
    %c0_25 = arith.constant 0 : index
    %c0_26 = arith.constant 0 : index
    %23 = vector.load %arg7[%c1_24, %c0_25, %c0_26] : memref<4x32x16xf32, #tpu.memory_space<vmem>>, vector<1x32x16xf32>
    %24 = vector.shape_cast %23 : vector<1x32x16xf32> to vector<32x16xf32>
    %25 = vector.shape_cast %22 : vector<32x16xf32> to vector<1x32x16xf32>
    tpu.vector_store %arg7[%c1_24, %c0_25, %c0_26], %25 {strides = array<i32>} : memref<4x32x16xf32, #tpu.memory_space<vmem>>, vector<1x32x16xf32>,
    %c0_27 = arith.constant 0 : index
    %c2 = arith.constant 2 : index
    %c0_28 = arith.constant 0 : index
    %c0_29 = arith.constant 0 : index
    %26 = vector.load %arg1[%c0_27, %c2, %c0_28, %c0_29] : memref<1x4x4x128xbf16, #tpu.memory_space<vmem>>, vector<1x1x4x128xbf16>
    %27 = vector.shape_cast %26 : vector<1x1x4x128xbf16> to vector<4x128xbf16>
    %c0_30 = arith.constant 0 : index
    %c0_31 = arith.constant 0 : index
    %28 = vector.load %arg2[%c0_30, %c0_31] : memref<32x128xbf16, #tpu.memory_space<vmem>>, vector<32x128xbf16>
    %cst_32 = arith.constant dense<0.000000e+00> : vector<32x4xf32>
    %29 = tpu.matmul %28, %27, %cst_32 {dimension_numbers = #tpu.dot_dimension_numbers<[1], [1], [0], [0], [0, 0, 1, 0], [], []>} : vector<32x128xbf16>, vector<4x128xbf16>, vector<32x4xf32> -> vector<32x4xf32>
    %c0_33 = arith.constant 0 : index
    %c0_34 = arith.constant 0 : index
    %30 = vector.load %arg3[%c0_33, %c0_34] : memref<32x1xf32, #tpu.memory_space<vmem>>, vector<32x1xf32>
    %31 = vector.broadcast %30 : vector<32x1xf32> to vector<32x4xf32>
    %32 = arith.addf %29, %31 : vector<32x4xf32>
    %33 = arith.truncf %32 : vector<32x4xf32> to vector<32x4xbf16>
    %c0_35 = arith.constant 0 : index
    %c0_36 = arith.constant 0 : index
    %34 = vector.load %arg5[%c0_35, %c0_36] : memref<16x4xbf16, #tpu.memory_space<vmem>>, vector<16x4xbf16>
    %cst_37 = arith.constant dense<0.000000e+00> : vector<32x16xf32>
    %35 = tpu.matmul %33, %34, %cst_37 {dimension_numbers = #tpu.dot_dimension_numbers<[1], [1], [0], [0], [0, 0, 1, 0], [], []>} : vector<32x4xbf16>, vector<16x4xbf16>, vector<32x16xf32> -> vector<32x16xf32>
    %c2_38 = arith.constant 2 : index
    %c0_39 = arith.constant 0 : index
    %c0_40 = arith.constant 0 : index
    %36 = vector.load %arg7[%c2_38, %c0_39, %c0_40] : memref<4x32x16xf32, #tpu.memory_space<vmem>>, vector<1x32x16xf32>
    %37 = vector.shape_cast %36 : vector<1x32x16xf32> to vector<32x16xf32>
    %38 = vector.shape_cast %35 : vector<32x16xf32> to vector<1x32x16xf32>
    tpu.vector_store %arg7[%c2_38, %c0_39, %c0_40], %38 {strides = array<i32>} : memref<4x32x16xf32, #tpu.memory_space<vmem>>, vector<1x32x16xf32>,
    %c0_41 = arith.constant 0 : index
    %c3 = arith.constant 3 : index
    %c0_42 = arith.constant 0 : index
    %c0_43 = arith.constant 0 : index
    %39 = vector.load %arg1[%c0_41, %c3, %c0_42, %c0_43] : memref<1x4x4x128xbf16, #tpu.memory_space<vmem>>, vector<1x1x4x128xbf16>
    %40 = vector.shape_cast %39 : vector<1x1x4x128xbf16> to vector<4x128xbf16>
    %c0_44 = arith.constant 0 : index
    %c0_45 = arith.constant 0 : index
    %41 = vector.load %arg2[%c0_44, %c0_45] : memref<32x128xbf16, #tpu.memory_space<vmem>>, vector<32x128xbf16>
    %cst_46 = arith.constant dense<0.000000e+00> : vector<32x4xf32>
    %42 = tpu.matmul %41, %40, %cst_46 {dimension_numbers = #tpu.dot_dimension_numbers<[1], [1], [0], [0], [0, 0, 1, 0], [], []>} : vector<32x128xbf16>, vector<4x128xbf16>, vector<32x4xf32> -> vector<32x4xf32>
    %c0_47 = arith.constant 0 : index
    %c0_48 = arith.constant 0 : index
    %43 = vector.load %arg3[%c0_47, %c0_48] : memref<32x1xf32, #tpu.memory_space<vmem>>, vector<32x1xf32>
    %44 = vector.broadcast %43 : vector<32x1xf32> to vector<32x4xf32>
    %45 = arith.addf %42, %44 : vector<32x4xf32>
    %46 = arith.truncf %45 : vector<32x4xf32> to vector<32x4xbf16>
    %c0_49 = arith.constant 0 : index
    %c0_50 = arith.constant 0 : index
    %47 = vector.load %arg5[%c0_49, %c0_50] : memref<16x4xbf16, #tpu.memory_space<vmem>>, vector<16x4xbf16>
    %cst_51 = arith.constant dense<0.000000e+00> : vector<32x16xf32>
    %48 = tpu.matmul %46, %47, %cst_51 {dimension_numbers = #tpu.dot_dimension_numbers<[1], [1], [0], [0], [0, 0, 1, 0], [], []>} : vector<32x4xbf16>, vector<16x4xbf16>, vector<32x16xf32> -> vector<32x16xf32>
    %c3_52 = arith.constant 3 : index
    %c0_53 = arith.constant 0 : index
    %c0_54 = arith.constant 0 : index
    %49 = vector.load %arg7[%c3_52, %c0_53, %c0_54] : memref<4x32x16xf32, #tpu.memory_space<vmem>>, vector<1x32x16xf32>
    %50 = vector.shape_cast %49 : vector<1x32x16xf32> to vector<32x16xf32>
    %51 = vector.shape_cast %48 : vector<32x16xf32> to vector<1x32x16xf32>
    tpu.vector_store %arg7[%c3_52, %c0_53, %c0_54], %51 {strides = array<i32>} : memref<4x32x16xf32, #tpu.memory_space<vmem>>, vector<1x32x16xf32>,
    %c0_55 = arith.constant 0 : index
    %c0_56 = arith.constant 0 : index
    %52 = vector.load %arg4[%c0_55, %c0_56] : memref<16x4xbf16, #tpu.memory_space<vmem>>, vector<16x4xbf16>
    %c0_57 = arith.constant 0 : index
    %c0_58 = arith.constant 0 : index
    %c0_59 = arith.constant 0 : index
    %53 = vector.load %arg7[%c0_57, %c0_58, %c0_59] : memref<4x32x16xf32, #tpu.memory_space<vmem>>, vector<4x1x16xf32>
    %54 = vector.shape_cast %53 : vector<4x1x16xf32> to vector<4x16xf32>
    %55 = arith.truncf %54 : vector<4x16xf32> to vector<4x16xbf16>
    %cst_60 = arith.constant dense<0.000000e+00> : vector<16x16xf32>
    %56 = tpu.matmul %52, %55, %cst_60 {dimension_numbers = #tpu.dot_dimension_numbers<[1], [0], [0], [1], [0, 0, 1, 1], [], []>} : vector<16x4xbf16>, vector<4x16xbf16>, vector<16x16xf32> -> vector<16x16xf32>
    %c0_61 = arith.constant 0 : index
    %c0_62 = arith.constant 0 : index
    %c0_63 = arith.constant 0 : index
    %c0_64 = arith.constant 0 : index
    %57 = vector.load %arg6[%c0_61, %c0_62, %c0_63, %c0_64] : memref<1x32x16x16xf32, #tpu.memory_space<vmem>>, vector<1x1x16x16xf32>
    %58 = vector.shape_cast %57 : vector<1x1x16x16xf32> to vector<16x16xf32>
    %59 = vector.shape_cast %56 : vector<16x16xf32> to vector<1x1x16x16xf32>
    tpu.vector_store %arg6[%c0_61, %c0_62, %c0_63, %c0_64], %59 {strides = array<i32>} : memref<1x32x16x16xf32, #tpu.memory_space<vmem>>, vector<1x1x16x16xf32>,
    %c0_65 = arith.constant 0 : index
    %c0_66 = arith.constant 0 : index
    %60 = vector.load %arg4[%c0_65, %c0_66] : memref<16x4xbf16, #tpu.memory_space<vmem>>, vector<16x4xbf16>
    %c0_67 = arith.constant 0 : index
    %c1_68 = arith.constant 1 : index
    %c0_69 = arith.constant 0 : index
    %61 = vector.load %arg7[%c0_67, %c1_68, %c0_69] : memref<4x32x16xf32, #tpu.memory_space<vmem>>, vector<4x1x16xf32>
    %62 = vector.shape_cast %61 : vector<4x1x16xf32> to vector<4x16xf32>
    %63 = arith.truncf %62 : vector<4x16xf32> to vector<4x16xbf16>
    %cst_70 = arith.constant dense<0.000000e+00> : vector<16x16xf32>
    %64 = tpu.matmul %60, %63, %cst_70 {dimension_numbers = #tpu.dot_dimension_numbers<[1], [0], [0], [1], [0, 0, 1, 1], [], []>} : vector<16x4xbf16>, vector<4x16xbf16>, vector<16x16xf32> -> vector<16x16xf32>
    %c0_71 = arith.constant 0 : index
    %c1_72 = arith.constant 1 : index
    %c0_73 = arith.constant 0 : index
    %c0_74 = arith.constant 0 : index
    %65 = vector.load %arg6[%c0_71, %c1_72, %c0_73, %c0_74] : memref<1x32x16x16xf32, #tpu.memory_space<vmem>>, vector<1x1x16x16xf32>
    %66 = vector.shape_cast %65 : vector<1x1x16x16xf32> to vector<16x16xf32>
    %67 = vector.shape_cast %64 : vector<16x16xf32> to vector<1x1x16x16xf32>
    tpu.vector_store %arg6[%c0_71, %c1_72, %c0_73, %c0_74], %67 {strides = array<i32>} : memref<1x32x16x16xf32, #tpu.memory_space<vmem>>, vector<1x1x16x16xf32>,
    %c0_75 = arith.constant 0 : index
    %c0_76 = arith.constant 0 : index
    %68 = vector.load %arg4[%c0_75, %c0_76] : memref<16x4xbf16, #tpu.memory_space<vmem>>, vector<16x4xbf16>
    %c0_77 = arith.constant 0 : index
    %c2_78 = arith.constant 2 : index
    %c0_79 = arith.constant 0 : index
    %69 = vector.load %arg7[%c0_77, %c2_78, %c0_79] : memref<4x32x16xf32, #tpu.memory_space<vmem>>, vector<4x1x16xf32>
    %70 = vector.shape_cast %69 : vector<4x1x16xf32> to vector<4x16xf32>
    %71 = arith.truncf %70 : vector<4x16xf32> to vector<4x16xbf16>
    %cst_80 = arith.constant dense<0.000000e+00> : vector<16x16xf32>
    %72 = tpu.matmul %68, %71, %cst_80 {dimension_numbers = #tpu.dot_dimension_numbers<[1], [0], [0], [1], [0, 0, 1, 1], [], []>} : vector<16x4xbf16>, vector<4x16xbf16>, vector<16x16xf32> -> vector<16x16xf32>
    %c0_81 = arith.constant 0 : index
    %c2_82 = arith.constant 2 : index
    %c0_83 = arith.constant 0 : index
    %c0_84 = arith.constant 0 : index
    %73 = vector.load %arg6[%c0_81, %c2_82, %c0_83, %c0_84] : memref<1x32x16x16xf32, #tpu.memory_space<vmem>>, vector<1x1x16x16xf32>
    %74 = vector.shape_cast %73 : vector<1x1x16x16xf32> to vector<16x16xf32>
    %75 = vector.shape_cast %72 : vector<16x16xf32> to vector<1x1x16x16xf32>
    tpu.vector_store %arg6[%c0_81, %c2_82, %c0_83, %c0_84], %75 {strides = array<i32>} : memref<1x32x16x16xf32, #tpu.memory_space<vmem>>, vector<1x1x16x16xf32>,
    %c0_85 = arith.constant 0 : index
    %c0_86 = arith.constant 0 : index
    %76 = vector.load %arg4[%c0_85, %c0_86] : memref<16x4xbf16, #tpu.memory_space<vmem>>, vector<16x4xbf16>
    %c0_87 = arith.constant 0 : index
    %c3_88 = arith.constant 3 : index
    %c0_89 = arith.constant 0 : index
    %77 = vector.load %arg7[%c0_87, %c3_88, %c0_89] : memref<4x32x16xf32, #tpu.memory_space<vmem>>, vector<4x1x16xf32>
    %78 = vector.shape_cast %77 : vector<4x1x16xf32> to vector<4x16xf32>
    %79 = arith.truncf %78 : vector<4x16xf32> to vector<4x16xbf16>
    %cst_90 = arith.constant dense<0.000000e+00> : vector<16x16xf32>
    %80 = tpu.matmul %76, %79, %cst_90 {dimension_numbers = #tpu.dot_dimension_numbers<[1], [0], [0], [1], [0, 0, 1, 1], [], []>} : vector<16x4xbf16>, vector<4x16xbf16>, vector<16x16xf32> -> vector<16x16xf32>
    %c0_91 = arith.constant 0 : index
    %c3_92 = arith.constant 3 : index
    %c0_93 = arith.constant 0 : index
    %c0_94 = arith.constant 0 : index
    %81 = vector.load %arg6[%c0_91, %c3_92, %c0_93, %c0_94] : memref<1x32x16x16xf32, #tpu.memory_space<vmem>>, vector<1x1x16x16xf32>
    %82 = vector.shape_cast %81 : vector<1x1x16x16xf32> to vector<16x16xf32>
    %83 = vector.shape_cast %80 : vector<16x16xf32> to vector<1x1x16x16xf32>
    tpu.vector_store %arg6[%c0_91, %c3_92, %c0_93, %c0_94], %83 {strides = array<i32>} : memref<1x32x16x16xf32, #tpu.memory_space<vmem>>, vector<1x1x16x16xf32>,
    %c0_95 = arith.constant 0 : index
    %c0_96 = arith.constant 0 : index
    %84 = vector.load %arg4[%c0_95, %c0_96] : memref<16x4xbf16, #tpu.memory_space<vmem>>, vector<16x4xbf16>
    %c0_97 = arith.constant 0 : index
    %c4 = arith.constant 4 : index
    %c0_98 = arith.constant 0 : index
    %85 = vector.load %arg7[%c0_97, %c4, %c0_98] : memref<4x32x16xf32, #tpu.memory_space<vmem>>, vector<4x1x16xf32>
    %86 = vector.shape_cast %85 : vector<4x1x16xf32> to vector<4x16xf32>
    %87 = arith.truncf %86 : vector<4x16xf32> to vector<4x16xbf16>
    %cst_99 = arith.constant dense<0.000000e+00> : vector<16x16xf32>
    %88 = tpu.matmul %84, %87, %cst_99 {dimension_numbers = #tpu.dot_dimension_numbers<[1], [0], [0], [1], [0, 0, 1, 1], [], []>} : vector<16x4xbf16>, vector<4x16xbf16>, vector<16x16xf32> -> vector<16x16xf32>
    %c0_100 = arith.constant 0 : index
    %c4_101 = arith.constant 4 : index
    %c0_102 = arith.constant 0 : index
    %c0_103 = arith.constant 0 : index
    %89 = vector.load %arg6[%c0_100, %c4_101, %c0_102, %c0_103] : memref<1x32x16x16xf32, #tpu.memory_space<vmem>>, vector<1x1x16x16xf32>
    %90 = vector.shape_cast %89 : vector<1x1x16x16xf32> to vector<16x16xf32>
    %91 = vector.shape_cast %88 : vector<16x16xf32> to vector<1x1x16x16xf32>
    tpu.vector_store %arg6[%c0_100, %c4_101, %c0_102, %c0_103], %91 {strides = array<i32>} : memref<1x32x16x16xf32, #tpu.memory_space<vmem>>, vector<1x1x16x16xf32>,
    %c0_104 = arith.constant 0 : index
    %c0_105 = arith.constant 0 : index
    %92 = vector.load %arg4[%c0_104, %c0_105] : memref<16x4xbf16, #tpu.memory_space<vmem>>, vector<16x4xbf16>
    %c0_106 = arith.constant 0 : index
    %c5 = arith.constant 5 : index
    %c0_107 = arith.constant 0 : index
    %93 = vector.load %arg7[%c0_106, %c5, %c0_107] : memref<4x32x16xf32, #tpu.memory_space<vmem>>, vector<4x1x16xf32>
    %94 = vector.shape_cast %93 : vector<4x1x16xf32> to vector<4x16xf32>
    %95 = arith.truncf %94 : vector<4x16xf32> to vector<4x16xbf16>
    %cst_108 = arith.constant dense<0.000000e+00> : vector<16x16xf32>
    %96 = tpu.matmul %92, %95, %cst_108 {dimension_numbers = #tpu.dot_dimension_numbers<[1], [0], [0], [1], [0, 0, 1, 1], [], []>} : vector<16x4xbf16>, vector<4x16xbf16>, vector<16x16xf32> -> vector<16x16xf32>
    %c0_109 = arith.constant 0 : index
    %c5_110 = arith.constant 5 : index
    %c0_111 = arith.constant 0 : index
    %c0_112 = arith.constant 0 : index
    %97 = vector.load %arg6[%c0_109, %c5_110, %c0_111, %c0_112] : memref<1x32x16x16xf32, #tpu.memory_space<vmem>>, vector<1x1x16x16xf32>
    %98 = vector.shape_cast %97 : vector<1x1x16x16xf32> to vector<16x16xf32>
    %99 = vector.shape_cast %96 : vector<16x16xf32> to vector<1x1x16x16xf32>
    tpu.vector_store %arg6[%c0_109, %c5_110, %c0_111, %c0_112], %99 {strides = array<i32>} : memref<1x32x16x16xf32, #tpu.memory_space<vmem>>, vector<1x1x16x16xf32>,
    %c0_113 = arith.constant 0 : index
    %c0_114 = arith.constant 0 : index
    %100 = vector.load %arg4[%c0_113, %c0_114] : memref<16x4xbf16, #tpu.memory_space<vmem>>, vector<16x4xbf16>
    %c0_115 = arith.constant 0 : index
    %c6 = arith.constant 6 : index
    %c0_116 = arith.constant 0 : index
    %101 = vector.load %arg7[%c0_115, %c6, %c0_116] : memref<4x32x16xf32, #tpu.memory_space<vmem>>, vector<4x1x16xf32>
    %102 = vector.shape_cast %101 : vector<4x1x16xf32> to vector<4x16xf32>
    %103 = arith.truncf %102 : vector<4x16xf32> to vector<4x16xbf16>
    %cst_117 = arith.constant dense<0.000000e+00> : vector<16x16xf32>
    %104 = tpu.matmul %100, %103, %cst_117 {dimension_numbers = #tpu.dot_dimension_numbers<[1], [0], [0], [1], [0, 0, 1, 1], [], []>} : vector<16x4xbf16>, vector<4x16xbf16>, vector<16x16xf32> -> vector<16x16xf32>
    %c0_118 = arith.constant 0 : index
    %c6_119 = arith.constant 6 : index
    %c0_120 = arith.constant 0 : index
    %c0_121 = arith.constant 0 : index
    %105 = vector.load %arg6[%c0_118, %c6_119, %c0_120, %c0_121] : memref<1x32x16x16xf32, #tpu.memory_space<vmem>>, vector<1x1x16x16xf32>
    %106 = vector.shape_cast %105 : vector<1x1x16x16xf32> to vector<16x16xf32>
    %107 = vector.shape_cast %104 : vector<16x16xf32> to vector<1x1x16x16xf32>
    tpu.vector_store %arg6[%c0_118, %c6_119, %c0_120, %c0_121], %107 {strides = array<i32>} : memref<1x32x16x16xf32, #tpu.memory_space<vmem>>, vector<1x1x16x16xf32>,
    %c0_122 = arith.constant 0 : index
    %c0_123 = arith.constant 0 : index
    %108 = vector.load %arg4[%c0_122, %c0_123] : memref<16x4xbf16, #tpu.memory_space<vmem>>, vector<16x4xbf16>
    %c0_124 = arith.constant 0 : index
    %c7 = arith.constant 7 : index
    %c0_125 = arith.constant 0 : index
    %109 = vector.load %arg7[%c0_124, %c7, %c0_125] : memref<4x32x16xf32, #tpu.memory_space<vmem>>, vector<4x1x16xf32>
    %110 = vector.shape_cast %109 : vector<4x1x16xf32> to vector<4x16xf32>
    %111 = arith.truncf %110 : vector<4x16xf32> to vector<4x16xbf16>
    %cst_126 = arith.constant dense<0.000000e+00> : vector<16x16xf32>
    %112 = tpu.matmul %108, %111, %cst_126 {dimension_numbers = #tpu.dot_dimension_numbers<[1], [0], [0], [1], [0, 0, 1, 1], [], []>} : vector<16x4xbf16>, vector<4x16xbf16>, vector<16x16xf32> -> vector<16x16xf32>
    %c0_127 = arith.constant 0 : index
    %c7_128 = arith.constant 7 : index
    %c0_129 = arith.constant 0 : index
    %c0_130 = arith.constant 0 : index
    %113 = vector.load %arg6[%c0_127, %c7_128, %c0_129, %c0_130] : memref<1x32x16x16xf32, #tpu.memory_space<vmem>>, vector<1x1x16x16xf32>
    %114 = vector.shape_cast %113 : vector<1x1x16x16xf32> to vector<16x16xf32>
    %115 = vector.shape_cast %112 : vector<16x16xf32> to vector<1x1x16x16xf32>
    tpu.vector_store %arg6[%c0_127, %c7_128, %c0_129, %c0_130], %115 {strides = array<i32>} : memref<1x32x16x16xf32, #tpu.memory_space<vmem>>, vector<1x1x16x16xf32>,
    %c0_131 = arith.constant 0 : index
    %c0_132 = arith.constant 0 : index
    %116 = vector.load %arg4[%c0_131, %c0_132] : memref<16x4xbf16, #tpu.memory_space<vmem>>, vector<16x4xbf16>
    %c0_133 = arith.constant 0 : index
    %c8 = arith.constant 8 : index
    %c0_134 = arith.constant 0 : index
    %117 = vector.load %arg7[%c0_133, %c8, %c0_134] : memref<4x32x16xf32, #tpu.memory_space<vmem>>, vector<4x1x16xf32>
    %118 = vector.shape_cast %117 : vector<4x1x16xf32> to vector<4x16xf32>
    %119 = arith.truncf %118 : vector<4x16xf32> to vector<4x16xbf16>
    %cst_135 = arith.constant dense<0.000000e+00> : vector<16x16xf32>
    %120 = tpu.matmul %116, %119, %cst_135 {dimension_numbers = #tpu.dot_dimension_numbers<[1], [0], [0], [1], [0, 0, 1, 1], [], []>} : vector<16x4xbf16>, vector<4x16xbf16>, vector<16x16xf32> -> vector<16x16xf32>
    %c0_136 = arith.constant 0 : index
    %c8_137 = arith.constant 8 : index
    %c0_138 = arith.constant 0 : index
    %c0_139 = arith.constant 0 : index
    %121 = vector.load %arg6[%c0_136, %c8_137, %c0_138, %c0_139] : memref<1x32x16x16xf32, #tpu.memory_space<vmem>>, vector<1x1x16x16xf32>
    %122 = vector.shape_cast %121 : vector<1x1x16x16xf32> to vector<16x16xf32>
    %123 = vector.shape_cast %120 : vector<16x16xf32> to vector<1x1x16x16xf32>
    tpu.vector_store %arg6[%c0_136, %c8_137, %c0_138, %c0_139], %123 {strides = array<i32>} : memref<1x32x16x16xf32, #tpu.memory_space<vmem>>, vector<1x1x16x16xf32>,
    %c0_140 = arith.constant 0 : index
    %c0_141 = arith.constant 0 : index
    %124 = vector.load %arg4[%c0_140, %c0_141] : memref<16x4xbf16, #tpu.memory_space<vmem>>, vector<16x4xbf16>
    %c0_142 = arith.constant 0 : index
    %c9 = arith.constant 9 : index
    %c0_143 = arith.constant 0 : index
    %125 = vector.load %arg7[%c0_142, %c9, %c0_143] : memref<4x32x16xf32, #tpu.memory_space<vmem>>, vector<4x1x16xf32>
    %126 = vector.shape_cast %125 : vector<4x1x16xf32> to vector<4x16xf32>
    %127 = arith.truncf %126 : vector<4x16xf32> to vector<4x16xbf16>
    %cst_144 = arith.constant dense<0.000000e+00> : vector<16x16xf32>
    %128 = tpu.matmul %124, %127, %cst_144 {dimension_numbers = #tpu.dot_dimension_numbers<[1], [0], [0], [1], [0, 0, 1, 1], [], []>} : vector<16x4xbf16>, vector<4x16xbf16>, vector<16x16xf32> -> vector<16x16xf32>
    %c0_145 = arith.constant 0 : index
    %c9_146 = arith.constant 9 : index
    %c0_147 = arith.constant 0 : index
    %c0_148 = arith.constant 0 : index
    %129 = vector.load %arg6[%c0_145, %c9_146, %c0_147, %c0_148] : memref<1x32x16x16xf32, #tpu.memory_space<vmem>>, vector<1x1x16x16xf32>
    %130 = vector.shape_cast %129 : vector<1x1x16x16xf32> to vector<16x16xf32>
    %131 = vector.shape_cast %128 : vector<16x16xf32> to vector<1x1x16x16xf32>
    tpu.vector_store %arg6[%c0_145, %c9_146, %c0_147, %c0_148], %131 {strides = array<i32>} : memref<1x32x16x16xf32, #tpu.memory_space<vmem>>, vector<1x1x16x16xf32>,
    %c0_149 = arith.constant 0 : index
    %c0_150 = arith.constant 0 : index
    %132 = vector.load %arg4[%c0_149, %c0_150] : memref<16x4xbf16, #tpu.memory_space<vmem>>, vector<16x4xbf16>
    %c0_151 = arith.constant 0 : index
    %c10 = arith.constant 10 : index
    %c0_152 = arith.constant 0 : index
    %133 = vector.load %arg7[%c0_151, %c10, %c0_152] : memref<4x32x16xf32, #tpu.memory_space<vmem>>, vector<4x1x16xf32>
    %134 = vector.shape_cast %133 : vector<4x1x16xf32> to vector<4x16xf32>
    %135 = arith.truncf %134 : vector<4x16xf32> to vector<4x16xbf16>
    %cst_153 = arith.constant dense<0.000000e+00> : vector<16x16xf32>
    %136 = tpu.matmul %132, %135, %cst_153 {dimension_numbers = #tpu.dot_dimension_numbers<[1], [0], [0], [1], [0, 0, 1, 1], [], []>} : vector<16x4xbf16>, vector<4x16xbf16>, vector<16x16xf32> -> vector<16x16xf32>
    %c0_154 = arith.constant 0 : index
    %c10_155 = arith.constant 10 : index
    %c0_156 = arith.constant 0 : index
    %c0_157 = arith.constant 0 : index
    %137 = vector.load %arg6[%c0_154, %c10_155, %c0_156, %c0_157] : memref<1x32x16x16xf32, #tpu.memory_space<vmem>>, vector<1x1x16x16xf32>
    %138 = vector.shape_cast %137 : vector<1x1x16x16xf32> to vector<16x16xf32>
    %139 = vector.shape_cast %136 : vector<16x16xf32> to vector<1x1x16x16xf32>
    tpu.vector_store %arg6[%c0_154, %c10_155, %c0_156, %c0_157], %139 {strides = array<i32>} : memref<1x32x16x16xf32, #tpu.memory_space<vmem>>, vector<1x1x16x16xf32>,
    %c0_158 = arith.constant 0 : index
    %c0_159 = arith.constant 0 : index
    %140 = vector.load %arg4[%c0_158, %c0_159] : memref<16x4xbf16, #tpu.memory_space<vmem>>, vector<16x4xbf16>
    %c0_160 = arith.constant 0 : index
    %c11 = arith.constant 11 : index
    %c0_161 = arith.constant 0 : index
    %141 = vector.load %arg7[%c0_160, %c11, %c0_161] : memref<4x32x16xf32, #tpu.memory_space<vmem>>, vector<4x1x16xf32>
    %142 = vector.shape_cast %141 : vector<4x1x16xf32> to vector<4x16xf32>
    %143 = arith.truncf %142 : vector<4x16xf32> to vector<4x16xbf16>
    %cst_162 = arith.constant dense<0.000000e+00> : vector<16x16xf32>
    %144 = tpu.matmul %140, %143, %cst_162 {dimension_numbers = #tpu.dot_dimension_numbers<[1], [0], [0], [1], [0, 0, 1, 1], [], []>} : vector<16x4xbf16>, vector<4x16xbf16>, vector<16x16xf32> -> vector<16x16xf32>
    %c0_163 = arith.constant 0 : index
    %c11_164 = arith.constant 11 : index
    %c0_165 = arith.constant 0 : index
    %c0_166 = arith.constant 0 : index
    %145 = vector.load %arg6[%c0_163, %c11_164, %c0_165, %c0_166] : memref<1x32x16x16xf32, #tpu.memory_space<vmem>>, vector<1x1x16x16xf32>
    %146 = vector.shape_cast %145 : vector<1x1x16x16xf32> to vector<16x16xf32>
    %147 = vector.shape_cast %144 : vector<16x16xf32> to vector<1x1x16x16xf32>
    tpu.vector_store %arg6[%c0_163, %c11_164, %c0_165, %c0_166], %147 {strides = array<i32>} : memref<1x32x16x16xf32, #tpu.memory_space<vmem>>, vector<1x1x16x16xf32>,
    %c0_167 = arith.constant 0 : index
    %c0_168 = arith.constant 0 : index
    %148 = vector.load %arg4[%c0_167, %c0_168] : memref<16x4xbf16, #tpu.memory_space<vmem>>, vector<16x4xbf16>
    %c0_169 = arith.constant 0 : index
    %c12 = arith.constant 12 : index
    %c0_170 = arith.constant 0 : index
    %149 = vector.load %arg7[%c0_169, %c12, %c0_170] : memref<4x32x16xf32, #tpu.memory_space<vmem>>, vector<4x1x16xf32>
    %150 = vector.shape_cast %149 : vector<4x1x16xf32> to vector<4x16xf32>
    %151 = arith.truncf %150 : vector<4x16xf32> to vector<4x16xbf16>
    %cst_171 = arith.constant dense<0.000000e+00> : vector<16x16xf32>
    %152 = tpu.matmul %148, %151, %cst_171 {dimension_numbers = #tpu.dot_dimension_numbers<[1], [0], [0], [1], [0, 0, 1, 1], [], []>} : vector<16x4xbf16>, vector<4x16xbf16>, vector<16x16xf32> -> vector<16x16xf32>
    %c0_172 = arith.constant 0 : index
    %c12_173 = arith.constant 12 : index
    %c0_174 = arith.constant 0 : index
    %c0_175 = arith.constant 0 : index
    %153 = vector.load %arg6[%c0_172, %c12_173, %c0_174, %c0_175] : memref<1x32x16x16xf32, #tpu.memory_space<vmem>>, vector<1x1x16x16xf32>
    %154 = vector.shape_cast %153 : vector<1x1x16x16xf32> to vector<16x16xf32>
    %155 = vector.shape_cast %152 : vector<16x16xf32> to vector<1x1x16x16xf32>
    tpu.vector_store %arg6[%c0_172, %c12_173, %c0_174, %c0_175], %155 {strides = array<i32>} : memref<1x32x16x16xf32, #tpu.memory_space<vmem>>, vector<1x1x16x16xf32>,
    %c0_176 = arith.constant 0 : index
    %c0_177 = arith.constant 0 : index
    %156 = vector.load %arg4[%c0_176, %c0_177] : memref<16x4xbf16, #tpu.memory_space<vmem>>, vector<16x4xbf16>
    %c0_178 = arith.constant 0 : index
    %c13 = arith.constant 13 : index
    %c0_179 = arith.constant 0 : index
    %157 = vector.load %arg7[%c0_178, %c13, %c0_179] : memref<4x32x16xf32, #tpu.memory_space<vmem>>, vector<4x1x16xf32>
    %158 = vector.shape_cast %157 : vector<4x1x16xf32> to vector<4x16xf32>
    %159 = arith.truncf %158 : vector<4x16xf32> to vector<4x16xbf16>
    %cst_180 = arith.constant dense<0.000000e+00> : vector<16x16xf32>
    %160 = tpu.matmul %156, %159, %cst_180 {dimension_numbers = #tpu.dot_dimension_numbers<[1], [0], [0], [1], [0, 0, 1, 1], [], []>} : vector<16x4xbf16>, vector<4x16xbf16>, vector<16x16xf32> -> vector<16x16xf32>
    %c0_181 = arith.constant 0 : index
    %c13_182 = arith.constant 13 : index
    %c0_183 = arith.constant 0 : index
    %c0_184 = arith.constant 0 : index
    %161 = vector.load %arg6[%c0_181, %c13_182, %c0_183, %c0_184] : memref<1x32x16x16xf32, #tpu.memory_space<vmem>>, vector<1x1x16x16xf32>
    %162 = vector.shape_cast %161 : vector<1x1x16x16xf32> to vector<16x16xf32>
    %163 = vector.shape_cast %160 : vector<16x16xf32> to vector<1x1x16x16xf32>
    tpu.vector_store %arg6[%c0_181, %c13_182, %c0_183, %c0_184], %163 {strides = array<i32>} : memref<1x32x16x16xf32, #tpu.memory_space<vmem>>, vector<1x1x16x16xf32>,
    %c0_185 = arith.constant 0 : index
    %c0_186 = arith.constant 0 : index
    %164 = vector.load %arg4[%c0_185, %c0_186] : memref<16x4xbf16, #tpu.memory_space<vmem>>, vector<16x4xbf16>
    %c0_187 = arith.constant 0 : index
    %c14 = arith.constant 14 : index
    %c0_188 = arith.constant 0 : index
    %165 = vector.load %arg7[%c0_187, %c14, %c0_188] : memref<4x32x16xf32, #tpu.memory_space<vmem>>, vector<4x1x16xf32>
    %166 = vector.shape_cast %165 : vector<4x1x16xf32> to vector<4x16xf32>
    %167 = arith.truncf %166 : vector<4x16xf32> to vector<4x16xbf16>
    %cst_189 = arith.constant dense<0.000000e+00> : vector<16x16xf32>
    %168 = tpu.matmul %164, %167, %cst_189 {dimension_numbers = #tpu.dot_dimension_numbers<[1], [0], [0], [1], [0, 0, 1, 1], [], []>} : vector<16x4xbf16>, vector<4x16xbf16>, vector<16x16xf32> -> vector<16x16xf32>
    %c0_190 = arith.constant 0 : index
    %c14_191 = arith.constant 14 : index
    %c0_192 = arith.constant 0 : index
    %c0_193 = arith.constant 0 : index
    %169 = vector.load %arg6[%c0_190, %c14_191, %c0_192, %c0_193] : memref<1x32x16x16xf32, #tpu.memory_space<vmem>>, vector<1x1x16x16xf32>
    %170 = vector.shape_cast %169 : vector<1x1x16x16xf32> to vector<16x16xf32>
    %171 = vector.shape_cast %168 : vector<16x16xf32> to vector<1x1x16x16xf32>
    tpu.vector_store %arg6[%c0_190, %c14_191, %c0_192, %c0_193], %171 {strides = array<i32>} : memref<1x32x16x16xf32, #tpu.memory_space<vmem>>, vector<1x1x16x16xf32>,
    %c0_194 = arith.constant 0 : index
    %c0_195 = arith.constant 0 : index
    %172 = vector.load %arg4[%c0_194, %c0_195] : memref<16x4xbf16, #tpu.memory_space<vmem>>, vector<16x4xbf16>
    %c0_196 = arith.constant 0 : index
    %c15 = arith.constant 15 : index
    %c0_197 = arith.constant 0 : index
    %173 = vector.load %arg7[%c0_196, %c15, %c0_197] : memref<4x32x16xf32, #tpu.memory_space<vmem>>, vector<4x1x16xf32>
    %174 = vector.shape_cast %173 : vector<4x1x16xf32> to vector<4x16xf32>
    %175 = arith.truncf %174 : vector<4x16xf32> to vector<4x16xbf16>
    %cst_198 = arith.constant dense<0.000000e+00> : vector<16x16xf32>
    %176 = tpu.matmul %172, %175, %cst_198 {dimension_numbers = #tpu.dot_dimension_numbers<[1], [0], [0], [1], [0, 0, 1, 1], [], []>} : vector<16x4xbf16>, vector<4x16xbf16>, vector<16x16xf32> -> vector<16x16xf32>
    %c0_199 = arith.constant 0 : index
    %c15_200 = arith.constant 15 : index
    %c0_201 = arith.constant 0 : index
    %c0_202 = arith.constant 0 : index
    %177 = vector.load %arg6[%c0_199, %c15_200, %c0_201, %c0_202] : memref<1x32x16x16xf32, #tpu.memory_space<vmem>>, vector<1x1x16x16xf32>
    %178 = vector.shape_cast %177 : vector<1x1x16x16xf32> to vector<16x16xf32>
    %179 = vector.shape_cast %176 : vector<16x16xf32> to vector<1x1x16x16xf32>
    tpu.vector_store %arg6[%c0_199, %c15_200, %c0_201, %c0_202], %179 {strides = array<i32>} : memref<1x32x16x16xf32, #tpu.memory_space<vmem>>, vector<1x1x16x16xf32>,
    %c0_203 = arith.constant 0 : index
    %c0_204 = arith.constant 0 : index
    %180 = vector.load %arg4[%c0_203, %c0_204] : memref<16x4xbf16, #tpu.memory_space<vmem>>, vector<16x4xbf16>
    %c0_205 = arith.constant 0 : index
    %c16 = arith.constant 16 : index
    %c0_206 = arith.constant 0 : index
    %181 = vector.load %arg7[%c0_205, %c16, %c0_206] : memref<4x32x16xf32, #tpu.memory_space<vmem>>, vector<4x1x16xf32>
    %182 = vector.shape_cast %181 : vector<4x1x16xf32> to vector<4x16xf32>
    %183 = arith.truncf %182 : vector<4x16xf32> to vector<4x16xbf16>
    %cst_207 = arith.constant dense<0.000000e+00> : vector<16x16xf32>
    %184 = tpu.matmul %180, %183, %cst_207 {dimension_numbers = #tpu.dot_dimension_numbers<[1], [0], [0], [1], [0, 0, 1, 1], [], []>} : vector<16x4xbf16>, vector<4x16xbf16>, vector<16x16xf32> -> vector<16x16xf32>
    %c0_208 = arith.constant 0 : index
    %c16_209 = arith.constant 16 : index
    %c0_210 = arith.constant 0 : index
    %c0_211 = arith.constant 0 : index
    %185 = vector.load %arg6[%c0_208, %c16_209, %c0_210, %c0_211] : memref<1x32x16x16xf32, #tpu.memory_space<vmem>>, vector<1x1x16x16xf32>
    %186 = vector.shape_cast %185 : vector<1x1x16x16xf32> to vector<16x16xf32>
    %187 = vector.shape_cast %184 : vector<16x16xf32> to vector<1x1x16x16xf32>
    tpu.vector_store %arg6[%c0_208, %c16_209, %c0_210, %c0_211], %187 {strides = array<i32>} : memref<1x32x16x16xf32, #tpu.memory_space<vmem>>, vector<1x1x16x16xf32>,
    %c0_212 = arith.constant 0 : index
    %c0_213 = arith.constant 0 : index
    %188 = vector.load %arg4[%c0_212, %c0_213] : memref<16x4xbf16, #tpu.memory_space<vmem>>, vector<16x4xbf16>
    %c0_214 = arith.constant 0 : index
    %c17 = arith.constant 17 : index
    %c0_215 = arith.constant 0 : index
    %189 = vector.load %arg7[%c0_214, %c17, %c0_215] : memref<4x32x16xf32, #tpu.memory_space<vmem>>, vector<4x1x16xf32>
    %190 = vector.shape_cast %189 : vector<4x1x16xf32> to vector<4x16xf32>
    %191 = arith.truncf %190 : vector<4x16xf32> to vector<4x16xbf16>
    %cst_216 = arith.constant dense<0.000000e+00> : vector<16x16xf32>
    %192 = tpu.matmul %188, %191, %cst_216 {dimension_numbers = #tpu.dot_dimension_numbers<[1], [0], [0], [1], [0, 0, 1, 1], [], []>} : vector<16x4xbf16>, vector<4x16xbf16>, vector<16x16xf32> -> vector<16x16xf32>
    %c0_217 = arith.constant 0 : index
    %c17_218 = arith.constant 17 : index
    %c0_219 = arith.constant 0 : index
    %c0_220 = arith.constant 0 : index
    %193 = vector.load %arg6[%c0_217, %c17_218, %c0_219, %c0_220] : memref<1x32x16x16xf32, #tpu.memory_space<vmem>>, vector<1x1x16x16xf32>
    %194 = vector.shape_cast %193 : vector<1x1x16x16xf32> to vector<16x16xf32>
    %195 = vector.shape_cast %192 : vector<16x16xf32> to vector<1x1x16x16xf32>
    tpu.vector_store %arg6[%c0_217, %c17_218, %c0_219, %c0_220], %195 {strides = array<i32>} : memref<1x32x16x16xf32, #tpu.memory_space<vmem>>, vector<1x1x16x16xf32>,
    %c0_221 = arith.constant 0 : index
    %c0_222 = arith.constant 0 : index
    %196 = vector.load %arg4[%c0_221, %c0_222] : memref<16x4xbf16, #tpu.memory_space<vmem>>, vector<16x4xbf16>
    %c0_223 = arith.constant 0 : index
    %c18 = arith.constant 18 : index
    %c0_224 = arith.constant 0 : index
    %197 = vector.load %arg7[%c0_223, %c18, %c0_224] : memref<4x32x16xf32, #tpu.memory_space<vmem>>, vector<4x1x16xf32>
    %198 = vector.shape_cast %197 : vector<4x1x16xf32> to vector<4x16xf32>
    %199 = arith.truncf %198 : vector<4x16xf32> to vector<4x16xbf16>
    %cst_225 = arith.constant dense<0.000000e+00> : vector<16x16xf32>
    %200 = tpu.matmul %196, %199, %cst_225 {dimension_numbers = #tpu.dot_dimension_numbers<[1], [0], [0], [1], [0, 0, 1, 1], [], []>} : vector<16x4xbf16>, vector<4x16xbf16>, vector<16x16xf32> -> vector<16x16xf32>
    %c0_226 = arith.constant 0 : index
    %c18_227 = arith.constant 18 : index
    %c0_228 = arith.constant 0 : index
    %c0_229 = arith.constant 0 : index
    %201 = vector.load %arg6[%c0_226, %c18_227, %c0_228, %c0_229] : memref<1x32x16x16xf32, #tpu.memory_space<vmem>>, vector<1x1x16x16xf32>
    %202 = vector.shape_cast %201 : vector<1x1x16x16xf32> to vector<16x16xf32>
    %203 = vector.shape_cast %200 : vector<16x16xf32> to vector<1x1x16x16xf32>
    tpu.vector_store %arg6[%c0_226, %c18_227, %c0_228, %c0_229], %203 {strides = array<i32>} : memref<1x32x16x16xf32, #tpu.memory_space<vmem>>, vector<1x1x16x16xf32>,
    %c0_230 = arith.constant 0 : index
    %c0_231 = arith.constant 0 : index
    %204 = vector.load %arg4[%c0_230, %c0_231] : memref<16x4xbf16, #tpu.memory_space<vmem>>, vector<16x4xbf16>
    %c0_232 = arith.constant 0 : index
    %c19 = arith.constant 19 : index
    %c0_233 = arith.constant 0 : index
    %205 = vector.load %arg7[%c0_232, %c19, %c0_233] : memref<4x32x16xf32, #tpu.memory_space<vmem>>, vector<4x1x16xf32>
    %206 = vector.shape_cast %205 : vector<4x1x16xf32> to vector<4x16xf32>
    %207 = arith.truncf %206 : vector<4x16xf32> to vector<4x16xbf16>
    %cst_234 = arith.constant dense<0.000000e+00> : vector<16x16xf32>
    %208 = tpu.matmul %204, %207, %cst_234 {dimension_numbers = #tpu.dot_dimension_numbers<[1], [0], [0], [1], [0, 0, 1, 1], [], []>} : vector<16x4xbf16>, vector<4x16xbf16>, vector<16x16xf32> -> vector<16x16xf32>
    %c0_235 = arith.constant 0 : index
    %c19_236 = arith.constant 19 : index
    %c0_237 = arith.constant 0 : index
    %c0_238 = arith.constant 0 : index
    %209 = vector.load %arg6[%c0_235, %c19_236, %c0_237, %c0_238] : memref<1x32x16x16xf32, #tpu.memory_space<vmem>>, vector<1x1x16x16xf32>
    %210 = vector.shape_cast %209 : vector<1x1x16x16xf32> to vector<16x16xf32>
    %211 = vector.shape_cast %208 : vector<16x16xf32> to vector<1x1x16x16xf32>
    tpu.vector_store %arg6[%c0_235, %c19_236, %c0_237, %c0_238], %211 {strides = array<i32>} : memref<1x32x16x16xf32, #tpu.memory_space<vmem>>, vector<1x1x16x16xf32>,
    %c0_239 = arith.constant 0 : index
    %c0_240 = arith.constant 0 : index
    %212 = vector.load %arg4[%c0_239, %c0_240] : memref<16x4xbf16, #tpu.memory_space<vmem>>, vector<16x4xbf16>
    %c0_241 = arith.constant 0 : index
    %c20 = arith.constant 20 : index
    %c0_242 = arith.constant 0 : index
    %213 = vector.load %arg7[%c0_241, %c20, %c0_242] : memref<4x32x16xf32, #tpu.memory_space<vmem>>, vector<4x1x16xf32>
    %214 = vector.shape_cast %213 : vector<4x1x16xf32> to vector<4x16xf32>
    %215 = arith.truncf %214 : vector<4x16xf32> to vector<4x16xbf16>
    %cst_243 = arith.constant dense<0.000000e+00> : vector<16x16xf32>
    %216 = tpu.matmul %212, %215, %cst_243 {dimension_numbers = #tpu.dot_dimension_numbers<[1], [0], [0], [1], [0, 0, 1, 1], [], []>} : vector<16x4xbf16>, vector<4x16xbf16>, vector<16x16xf32> -> vector<16x16xf32>
    %c0_244 = arith.constant 0 : index
    %c20_245 = arith.constant 20 : index
    %c0_246 = arith.constant 0 : index
    %c0_247 = arith.constant 0 : index
    %217 = vector.load %arg6[%c0_244, %c20_245, %c0_246, %c0_247] : memref<1x32x16x16xf32, #tpu.memory_space<vmem>>, vector<1x1x16x16xf32>
    %218 = vector.shape_cast %217 : vector<1x1x16x16xf32> to vector<16x16xf32>
    %219 = vector.shape_cast %216 : vector<16x16xf32> to vector<1x1x16x16xf32>
    tpu.vector_store %arg6[%c0_244, %c20_245, %c0_246, %c0_247], %219 {strides = array<i32>} : memref<1x32x16x16xf32, #tpu.memory_space<vmem>>, vector<1x1x16x16xf32>,
    %c0_248 = arith.constant 0 : index
    %c0_249 = arith.constant 0 : index
    %220 = vector.load %arg4[%c0_248, %c0_249] : memref<16x4xbf16, #tpu.memory_space<vmem>>, vector<16x4xbf16>
    %c0_250 = arith.constant 0 : index
    %c21 = arith.constant 21 : index
    %c0_251 = arith.constant 0 : index
    %221 = vector.load %arg7[%c0_250, %c21, %c0_251] : memref<4x32x16xf32, #tpu.memory_space<vmem>>, vector<4x1x16xf32>
    %222 = vector.shape_cast %221 : vector<4x1x16xf32> to vector<4x16xf32>
    %223 = arith.truncf %222 : vector<4x16xf32> to vector<4x16xbf16>
    %cst_252 = arith.constant dense<0.000000e+00> : vector<16x16xf32>
    %224 = tpu.matmul %220, %223, %cst_252 {dimension_numbers = #tpu.dot_dimension_numbers<[1], [0], [0], [1], [0, 0, 1, 1], [], []>} : vector<16x4xbf16>, vector<4x16xbf16>, vector<16x16xf32> -> vector<16x16xf32>
    %c0_253 = arith.constant 0 : index
    %c21_254 = arith.constant 21 : index
    %c0_255 = arith.constant 0 : index
    %c0_256 = arith.constant 0 : index
    %225 = vector.load %arg6[%c0_253, %c21_254, %c0_255, %c0_256] : memref<1x32x16x16xf32, #tpu.memory_space<vmem>>, vector<1x1x16x16xf32>
    %226 = vector.shape_cast %225 : vector<1x1x16x16xf32> to vector<16x16xf32>
    %227 = vector.shape_cast %224 : vector<16x16xf32> to vector<1x1x16x16xf32>
    tpu.vector_store %arg6[%c0_253, %c21_254, %c0_255, %c0_256], %227 {strides = array<i32>} : memref<1x32x16x16xf32, #tpu.memory_space<vmem>>, vector<1x1x16x16xf32>,
    %c0_257 = arith.constant 0 : index
    %c0_258 = arith.constant 0 : index
    %228 = vector.load %arg4[%c0_257, %c0_258] : memref<16x4xbf16, #tpu.memory_space<vmem>>, vector<16x4xbf16>
    %c0_259 = arith.constant 0 : index
    %c22 = arith.constant 22 : index
    %c0_260 = arith.constant 0 : index
    %229 = vector.load %arg7[%c0_259, %c22, %c0_260] : memref<4x32x16xf32, #tpu.memory_space<vmem>>, vector<4x1x16xf32>
    %230 = vector.shape_cast %229 : vector<4x1x16xf32> to vector<4x16xf32>
    %231 = arith.truncf %230 : vector<4x16xf32> to vector<4x16xbf16>
    %cst_261 = arith.constant dense<0.000000e+00> : vector<16x16xf32>
    %232 = tpu.matmul %228, %231, %cst_261 {dimension_numbers = #tpu.dot_dimension_numbers<[1], [0], [0], [1], [0, 0, 1, 1], [], []>} : vector<16x4xbf16>, vector<4x16xbf16>, vector<16x16xf32> -> vector<16x16xf32>
    %c0_262 = arith.constant 0 : index
    %c22_263 = arith.constant 22 : index
    %c0_264 = arith.constant 0 : index
    %c0_265 = arith.constant 0 : index
    %233 = vector.load %arg6[%c0_262, %c22_263, %c0_264, %c0_265] : memref<1x32x16x16xf32, #tpu.memory_space<vmem>>, vector<1x1x16x16xf32>
    %234 = vector.shape_cast %233 : vector<1x1x16x16xf32> to vector<16x16xf32>
    %235 = vector.shape_cast %232 : vector<16x16xf32> to vector<1x1x16x16xf32>
    tpu.vector_store %arg6[%c0_262, %c22_263, %c0_264, %c0_265], %235 {strides = array<i32>} : memref<1x32x16x16xf32, #tpu.memory_space<vmem>>, vector<1x1x16x16xf32>,
    %c0_266 = arith.constant 0 : index
    %c0_267 = arith.constant 0 : index
    %236 = vector.load %arg4[%c0_266, %c0_267] : memref<16x4xbf16, #tpu.memory_space<vmem>>, vector<16x4xbf16>
    %c0_268 = arith.constant 0 : index
    %c23 = arith.constant 23 : index
    %c0_269 = arith.constant 0 : index
    %237 = vector.load %arg7[%c0_268, %c23, %c0_269] : memref<4x32x16xf32, #tpu.memory_space<vmem>>, vector<4x1x16xf32>
    %238 = vector.shape_cast %237 : vector<4x1x16xf32> to vector<4x16xf32>
    %239 = arith.truncf %238 : vector<4x16xf32> to vector<4x16xbf16>
    %cst_270 = arith.constant dense<0.000000e+00> : vector<16x16xf32>
    %240 = tpu.matmul %236, %239, %cst_270 {dimension_numbers = #tpu.dot_dimension_numbers<[1], [0], [0], [1], [0, 0, 1, 1], [], []>} : vector<16x4xbf16>, vector<4x16xbf16>, vector<16x16xf32> -> vector<16x16xf32>
    %c0_271 = arith.constant 0 : index
    %c23_272 = arith.constant 23 : index
    %c0_273 = arith.constant 0 : index
    %c0_274 = arith.constant 0 : index
    %241 = vector.load %arg6[%c0_271, %c23_272, %c0_273, %c0_274] : memref<1x32x16x16xf32, #tpu.memory_space<vmem>>, vector<1x1x16x16xf32>
    %242 = vector.shape_cast %241 : vector<1x1x16x16xf32> to vector<16x16xf32>
    %243 = vector.shape_cast %240 : vector<16x16xf32> to vector<1x1x16x16xf32>
    tpu.vector_store %arg6[%c0_271, %c23_272, %c0_273, %c0_274], %243 {strides = array<i32>} : memref<1x32x16x16xf32, #tpu.memory_space<vmem>>, vector<1x1x16x16xf32>,
    %c0_275 = arith.constant 0 : index
    %c0_276 = arith.constant 0 : index
    %244 = vector.load %arg4[%c0_275, %c0_276] : memref<16x4xbf16, #tpu.memory_space<vmem>>, vector<16x4xbf16>
    %c0_277 = arith.constant 0 : index
    %c24 = arith.constant 24 : index
    %c0_278 = arith.constant 0 : index
    %245 = vector.load %arg7[%c0_277, %c24, %c0_278] : memref<4x32x16xf32, #tpu.memory_space<vmem>>, vector<4x1x16xf32>
    %246 = vector.shape_cast %245 : vector<4x1x16xf32> to vector<4x16xf32>
    %247 = arith.truncf %246 : vector<4x16xf32> to vector<4x16xbf16>
    %cst_279 = arith.constant dense<0.000000e+00> : vector<16x16xf32>
    %248 = tpu.matmul %244, %247, %cst_279 {dimension_numbers = #tpu.dot_dimension_numbers<[1], [0], [0], [1], [0, 0, 1, 1], [], []>} : vector<16x4xbf16>, vector<4x16xbf16>, vector<16x16xf32> -> vector<16x16xf32>
    %c0_280 = arith.constant 0 : index
    %c24_281 = arith.constant 24 : index
    %c0_282 = arith.constant 0 : index
    %c0_283 = arith.constant 0 : index
    %249 = vector.load %arg6[%c0_280, %c24_281, %c0_282, %c0_283] : memref<1x32x16x16xf32, #tpu.memory_space<vmem>>, vector<1x1x16x16xf32>
    %250 = vector.shape_cast %249 : vector<1x1x16x16xf32> to vector<16x16xf32>
    %251 = vector.shape_cast %248 : vector<16x16xf32> to vector<1x1x16x16xf32>
    tpu.vector_store %arg6[%c0_280, %c24_281, %c0_282, %c0_283], %251 {strides = array<i32>} : memref<1x32x16x16xf32, #tpu.memory_space<vmem>>, vector<1x1x16x16xf32>,
    %c0_284 = arith.constant 0 : index
    %c0_285 = arith.constant 0 : index
    %252 = vector.load %arg4[%c0_284, %c0_285] : memref<16x4xbf16, #tpu.memory_space<vmem>>, vector<16x4xbf16>
    %c0_286 = arith.constant 0 : index
    %c25 = arith.constant 25 : index
    %c0_287 = arith.constant 0 : index
    %253 = vector.load %arg7[%c0_286, %c25, %c0_287] : memref<4x32x16xf32, #tpu.memory_space<vmem>>, vector<4x1x16xf32>
    %254 = vector.shape_cast %253 : vector<4x1x16xf32> to vector<4x16xf32>
    %255 = arith.truncf %254 : vector<4x16xf32> to vector<4x16xbf16>
    %cst_288 = arith.constant dense<0.000000e+00> : vector<16x16xf32>
    %256 = tpu.matmul %252, %255, %cst_288 {dimension_numbers = #tpu.dot_dimension_numbers<[1], [0], [0], [1], [0, 0, 1, 1], [], []>} : vector<16x4xbf16>, vector<4x16xbf16>, vector<16x16xf32> -> vector<16x16xf32>
    %c0_289 = arith.constant 0 : index
    %c25_290 = arith.constant 25 : index
    %c0_291 = arith.constant 0 : index
    %c0_292 = arith.constant 0 : index
    %257 = vector.load %arg6[%c0_289, %c25_290, %c0_291, %c0_292] : memref<1x32x16x16xf32, #tpu.memory_space<vmem>>, vector<1x1x16x16xf32>
    %258 = vector.shape_cast %257 : vector<1x1x16x16xf32> to vector<16x16xf32>
    %259 = vector.shape_cast %256 : vector<16x16xf32> to vector<1x1x16x16xf32>
    tpu.vector_store %arg6[%c0_289, %c25_290, %c0_291, %c0_292], %259 {strides = array<i32>} : memref<1x32x16x16xf32, #tpu.memory_space<vmem>>, vector<1x1x16x16xf32>,
    %c0_293 = arith.constant 0 : index
    %c0_294 = arith.constant 0 : index
    %260 = vector.load %arg4[%c0_293, %c0_294] : memref<16x4xbf16, #tpu.memory_space<vmem>>, vector<16x4xbf16>
    %c0_295 = arith.constant 0 : index
    %c26 = arith.constant 26 : index
    %c0_296 = arith.constant 0 : index
    %261 = vector.load %arg7[%c0_295, %c26, %c0_296] : memref<4x32x16xf32, #tpu.memory_space<vmem>>, vector<4x1x16xf32>
    %262 = vector.shape_cast %261 : vector<4x1x16xf32> to vector<4x16xf32>
    %263 = arith.truncf %262 : vector<4x16xf32> to vector<4x16xbf16>
    %cst_297 = arith.constant dense<0.000000e+00> : vector<16x16xf32>
    %264 = tpu.matmul %260, %263, %cst_297 {dimension_numbers = #tpu.dot_dimension_numbers<[1], [0], [0], [1], [0, 0, 1, 1], [], []>} : vector<16x4xbf16>, vector<4x16xbf16>, vector<16x16xf32> -> vector<16x16xf32>
    %c0_298 = arith.constant 0 : index
    %c26_299 = arith.constant 26 : index
    %c0_300 = arith.constant 0 : index
    %c0_301 = arith.constant 0 : index
    %265 = vector.load %arg6[%c0_298, %c26_299, %c0_300, %c0_301] : memref<1x32x16x16xf32, #tpu.memory_space<vmem>>, vector<1x1x16x16xf32>
    %266 = vector.shape_cast %265 : vector<1x1x16x16xf32> to vector<16x16xf32>
    %267 = vector.shape_cast %264 : vector<16x16xf32> to vector<1x1x16x16xf32>
    tpu.vector_store %arg6[%c0_298, %c26_299, %c0_300, %c0_301], %267 {strides = array<i32>} : memref<1x32x16x16xf32, #tpu.memory_space<vmem>>, vector<1x1x16x16xf32>,
    %c0_302 = arith.constant 0 : index
    %c0_303 = arith.constant 0 : index
    %268 = vector.load %arg4[%c0_302, %c0_303] : memref<16x4xbf16, #tpu.memory_space<vmem>>, vector<16x4xbf16>
    %c0_304 = arith.constant 0 : index
    %c27 = arith.constant 27 : index
    %c0_305 = arith.constant 0 : index
    %269 = vector.load %arg7[%c0_304, %c27, %c0_305] : memref<4x32x16xf32, #tpu.memory_space<vmem>>, vector<4x1x16xf32>
    %270 = vector.shape_cast %269 : vector<4x1x16xf32> to vector<4x16xf32>
    %271 = arith.truncf %270 : vector<4x16xf32> to vector<4x16xbf16>
    %cst_306 = arith.constant dense<0.000000e+00> : vector<16x16xf32>
    %272 = tpu.matmul %268, %271, %cst_306 {dimension_numbers = #tpu.dot_dimension_numbers<[1], [0], [0], [1], [0, 0, 1, 1], [], []>} : vector<16x4xbf16>, vector<4x16xbf16>, vector<16x16xf32> -> vector<16x16xf32>
    %c0_307 = arith.constant 0 : index
    %c27_308 = arith.constant 27 : index
    %c0_309 = arith.constant 0 : index
    %c0_310 = arith.constant 0 : index
    %273 = vector.load %arg6[%c0_307, %c27_308, %c0_309, %c0_310] : memref<1x32x16x16xf32, #tpu.memory_space<vmem>>, vector<1x1x16x16xf32>
    %274 = vector.shape_cast %273 : vector<1x1x16x16xf32> to vector<16x16xf32>
    %275 = vector.shape_cast %272 : vector<16x16xf32> to vector<1x1x16x16xf32>
    tpu.vector_store %arg6[%c0_307, %c27_308, %c0_309, %c0_310], %275 {strides = array<i32>} : memref<1x32x16x16xf32, #tpu.memory_space<vmem>>, vector<1x1x16x16xf32>,
    %c0_311 = arith.constant 0 : index
    %c0_312 = arith.constant 0 : index
    %276 = vector.load %arg4[%c0_311, %c0_312] : memref<16x4xbf16, #tpu.memory_space<vmem>>, vector<16x4xbf16>
    %c0_313 = arith.constant 0 : index
    %c28 = arith.constant 28 : index
    %c0_314 = arith.constant 0 : index
    %277 = vector.load %arg7[%c0_313, %c28, %c0_314] : memref<4x32x16xf32, #tpu.memory_space<vmem>>, vector<4x1x16xf32>
    %278 = vector.shape_cast %277 : vector<4x1x16xf32> to vector<4x16xf32>
    %279 = arith.truncf %278 : vector<4x16xf32> to vector<4x16xbf16>
    %cst_315 = arith.constant dense<0.000000e+00> : vector<16x16xf32>
    %280 = tpu.matmul %276, %279, %cst_315 {dimension_numbers = #tpu.dot_dimension_numbers<[1], [0], [0], [1], [0, 0, 1, 1], [], []>} : vector<16x4xbf16>, vector<4x16xbf16>, vector<16x16xf32> -> vector<16x16xf32>
    %c0_316 = arith.constant 0 : index
    %c28_317 = arith.constant 28 : index
    %c0_318 = arith.constant 0 : index
    %c0_319 = arith.constant 0 : index
    %281 = vector.load %arg6[%c0_316, %c28_317, %c0_318, %c0_319] : memref<1x32x16x16xf32, #tpu.memory_space<vmem>>, vector<1x1x16x16xf32>
    %282 = vector.shape_cast %281 : vector<1x1x16x16xf32> to vector<16x16xf32>
    %283 = vector.shape_cast %280 : vector<16x16xf32> to vector<1x1x16x16xf32>
    tpu.vector_store %arg6[%c0_316, %c28_317, %c0_318, %c0_319], %283 {strides = array<i32>} : memref<1x32x16x16xf32, #tpu.memory_space<vmem>>, vector<1x1x16x16xf32>,
    %c0_320 = arith.constant 0 : index
    %c0_321 = arith.constant 0 : index
    %284 = vector.load %arg4[%c0_320, %c0_321] : memref<16x4xbf16, #tpu.memory_space<vmem>>, vector<16x4xbf16>
    %c0_322 = arith.constant 0 : index
    %c29 = arith.constant 29 : index
    %c0_323 = arith.constant 0 : index
    %285 = vector.load %arg7[%c0_322, %c29, %c0_323] : memref<4x32x16xf32, #tpu.memory_space<vmem>>, vector<4x1x16xf32>
    %286 = vector.shape_cast %285 : vector<4x1x16xf32> to vector<4x16xf32>
    %287 = arith.truncf %286 : vector<4x16xf32> to vector<4x16xbf16>
    %cst_324 = arith.constant dense<0.000000e+00> : vector<16x16xf32>
    %288 = tpu.matmul %284, %287, %cst_324 {dimension_numbers = #tpu.dot_dimension_numbers<[1], [0], [0], [1], [0, 0, 1, 1], [], []>} : vector<16x4xbf16>, vector<4x16xbf16>, vector<16x16xf32> -> vector<16x16xf32>
    %c0_325 = arith.constant 0 : index
    %c29_326 = arith.constant 29 : index
    %c0_327 = arith.constant 0 : index
    %c0_328 = arith.constant 0 : index
    %289 = vector.load %arg6[%c0_325, %c29_326, %c0_327, %c0_328] : memref<1x32x16x16xf32, #tpu.memory_space<vmem>>, vector<1x1x16x16xf32>
    %290 = vector.shape_cast %289 : vector<1x1x16x16xf32> to vector<16x16xf32>
    %291 = vector.shape_cast %288 : vector<16x16xf32> to vector<1x1x16x16xf32>
    tpu.vector_store %arg6[%c0_325, %c29_326, %c0_327, %c0_328], %291 {strides = array<i32>} : memref<1x32x16x16xf32, #tpu.memory_space<vmem>>, vector<1x1x16x16xf32>,
    %c0_329 = arith.constant 0 : index
    %c0_330 = arith.constant 0 : index
    %292 = vector.load %arg4[%c0_329, %c0_330] : memref<16x4xbf16, #tpu.memory_space<vmem>>, vector<16x4xbf16>
    %c0_331 = arith.constant 0 : index
    %c30 = arith.constant 30 : index
    %c0_332 = arith.constant 0 : index
    %293 = vector.load %arg7[%c0_331, %c30, %c0_332] : memref<4x32x16xf32, #tpu.memory_space<vmem>>, vector<4x1x16xf32>
    %294 = vector.shape_cast %293 : vector<4x1x16xf32> to vector<4x16xf32>
    %295 = arith.truncf %294 : vector<4x16xf32> to vector<4x16xbf16>
    %cst_333 = arith.constant dense<0.000000e+00> : vector<16x16xf32>
    %296 = tpu.matmul %292, %295, %cst_333 {dimension_numbers = #tpu.dot_dimension_numbers<[1], [0], [0], [1], [0, 0, 1, 1], [], []>} : vector<16x4xbf16>, vector<4x16xbf16>, vector<16x16xf32> -> vector<16x16xf32>
    %c0_334 = arith.constant 0 : index
    %c30_335 = arith.constant 30 : index
    %c0_336 = arith.constant 0 : index
    %c0_337 = arith.constant 0 : index
    %297 = vector.load %arg6[%c0_334, %c30_335, %c0_336, %c0_337] : memref<1x32x16x16xf32, #tpu.memory_space<vmem>>, vector<1x1x16x16xf32>
    %298 = vector.shape_cast %297 : vector<1x1x16x16xf32> to vector<16x16xf32>
    %299 = vector.shape_cast %296 : vector<16x16xf32> to vector<1x1x16x16xf32>
    tpu.vector_store %arg6[%c0_334, %c30_335, %c0_336, %c0_337], %299 {strides = array<i32>} : memref<1x32x16x16xf32, #tpu.memory_space<vmem>>, vector<1x1x16x16xf32>,
    %c0_338 = arith.constant 0 : index
    %c0_339 = arith.constant 0 : index
    %300 = vector.load %arg4[%c0_338, %c0_339] : memref<16x4xbf16, #tpu.memory_space<vmem>>, vector<16x4xbf16>
    %c0_340 = arith.constant 0 : index
    %c31 = arith.constant 31 : index
    %c0_341 = arith.constant 0 : index
    %301 = vector.load %arg7[%c0_340, %c31, %c0_341] : memref<4x32x16xf32, #tpu.memory_space<vmem>>, vector<4x1x16xf32>
    %302 = vector.shape_cast %301 : vector<4x1x16xf32> to vector<4x16xf32>
    %303 = arith.truncf %302 : vector<4x16xf32> to vector<4x16xbf16>
    %cst_342 = arith.constant dense<0.000000e+00> : vector<16x16xf32>
    %304 = tpu.matmul %300, %303, %cst_342 {dimension_numbers = #tpu.dot_dimension_numbers<[1], [0], [0], [1], [0, 0, 1, 1], [], []>} : vector<16x4xbf16>, vector<4x16xbf16>, vector<16x16xf32> -> vector<16x16xf32>
    %c0_343 = arith.constant 0 : index
    %c31_344 = arith.constant 31 : index
    %c0_345 = arith.constant 0 : index
    %c0_346 = arith.constant 0 : index
    %305 = vector.load %arg6[%c0_343, %c31_344, %c0_345, %c0_346] : memref<1x32x16x16xf32, #tpu.memory_space<vmem>>, vector<1x1x16x16xf32>
    %306 = vector.shape_cast %305 : vector<1x1x16x16xf32> to vector<16x16xf32>
    %307 = vector.shape_cast %304 : vector<16x16xf32> to vector<1x1x16x16xf32>
    tpu.vector_store %arg6[%c0_343, %c31_344, %c0_345, %c0_346], %307 {strides = array<i32>} : memref<1x32x16x16xf32, #tpu.memory_space<vmem>>, vector<1x1x16x16xf32>,
    return
  }
  func.func @transform_0(%arg0: i32) -> (i32, i32, i32, i32) {
    %c0_i32 = arith.constant 0 : i32
    %c0_i32_0 = arith.constant 0 : i32
    %c0_i32_1 = arith.constant 0 : i32
    %c0_i32_2 = arith.constant 0 : i32
    return %arg0, %c0_i32, %c0_i32_0, %c0_i32_1 : i32, i32, i32, i32
  }
  func.func @transform_1(%arg0: i32) -> (i32, i32) {
    %c0_i32 = arith.constant 0 : i32
    %c0_i32_0 = arith.constant 0 : i32
    %c0_i32_1 = arith.constant 0 : i32
    return %c0_i32, %c0_i32_0 : i32, i32
  }
  func.func @transform_2(%arg0: i32) -> (i32, i32) {
    %c0_i32 = arith.constant 0 : i32
    %c0_i32_0 = arith.constant 0 : i32
    %c0_i32_1 = arith.constant 0 : i32
    return %c0_i32, %c0_i32_0 : i32, i32
  }
  func.func @transform_3(%arg0: i32) -> (i32, i32) {
    %c0_i32 = arith.constant 0 : i32
    %c0_i32_0 = arith.constant 0 : i32
    %c0_i32_1 = arith.constant 0 : i32
    return %c0_i32, %c0_i32_0 : i32, i32
  }
  func.func @transform_4(%arg0: i32) -> (i32, i32) {
    %c0_i32 = arith.constant 0 : i32
    %c0_i32_0 = arith.constant 0 : i32
    %c0_i32_1 = arith.constant 0 : i32
    return %c0_i32, %c0_i32_0 : i32, i32
  }
  func.func @transform_5(%arg0: i32) -> (i32, i32, i32, i32) {
    %c0_i32 = arith.constant 0 : i32
    %c0_i32_0 = arith.constant 0 : i32
    %c0_i32_1 = arith.constant 0 : i32
    %c0_i32_2 = arith.constant 0 : i32
    return %arg0, %c0_i32, %c0_i32_0, %c0_i32_1 : i32, i32, i32, i32
  }
}

</mosaic_0001>

<llo_original>
// kernel: jetseg_forward.3
$region0: #{jetseg_forward.3}
  #allocation0 [shape = 'u32[]', space=smem, size = 0x4, offset = 0x4, fixed_abs, tag = 'smem constant byte address 0x4 - core index']
  #allocation1 [shape = 'u32[144,128]{1,0:T(1,128)}', space=vmem, size = 0x12000, scoped, tag = 'internal scratch']
  %s0 = inlined_call_operand.vmem [shape: bf16[2,9,9,4], index: 0, kind: input, shape index: {}]
  %s1 = inlined_call_operand.vmem [shape: bf16[2,9,9,4], index: 1, kind: input, shape index: {}]
  %s2 = inlined_call_operand.vmem [shape: bf16[2,9,9,4], index: 2, kind: input, shape index: {}]
  %s3 = inlined_call_operand.vmem [shape: bf16[2,9,9,4], index: 3, kind: input, shape index: {}]
  %s4 = inlined_call_operand.vmem [shape: bf16[3,3,4,128], index: 4, kind: input, shape index: {}]
  %s5 = inlined_call_operand.vmem [shape: f32[1,128], index: 5, kind: input, shape index: {}]
  %s6 = inlined_call_operand.vmem [shape: bf16[2,64,128], index: 6, kind: output, shape index: {}]
  %s7 = sld [smem:[#allocation0]]
  $region57: #{jetseg_forward.3} parent=0
    _
  %s9 = ssub.s32 1, %s7
  %s10 = scalar_select 0, %s9, %s7
  loop: start=0, step=1, limit=4
  $region2: #{jetseg_forward.3} parent=0 // loop_pre_header
    _
  $region3: #{jetseg_forward.3} parent=0 // loop_header
    %s12 = sphi 0, %s16
    %p13 = scmp.ge.s32.totalorder %s12, 4
    %s22 = sphi 0, %s24
    %s25 = sphi 0, %s22
    %s26 = sphi 0, %s25
    %s42 = sphi 0, %s26
    %s48 = sphi 0, %s50
    %s51 = sphi 0, %s48
    %s52 = sphi 0, %s51
    %s68 = sphi 0, %s52
    %s74 = sphi 0, %s76
    %s77 = sphi 0, %s74
    %s78 = sphi 0, %s77
    %s94 = sphi 0, %s78
    %s100 = sphi 0, %s102
    %s103 = sphi 0, %s100
    %s104 = sphi 0, %s103
    %s120 = sphi 0, %s104
    %s124 = sphi 0, %s124
    %s126 = sphi 0, %s124
    %s127 = sphi 0, %s126
    %s141 = sphi 0, %s127
    %s145 = sphi 0, %s145
    %s147 = sphi 0, %s145
    %s148 = sphi 0, %s147
    %s162 = sphi 0, %s148
    %s168 = sphi 0, %s170
    %s171 = sphi 0, %s168
    %s172 = sphi 0, %s171
    %s188 = sphi 0, %s172
  $region4: #{jetseg_forward.3} parent=0 // loop_header_branch
    %15 = sbr.rel (%p13) target = $region8
  $region5: #{jetseg_forward.3} parent=0 // loop_body
    %s17 = ssub.s32 %s12, 1
    %s18 = ssub.s32 %s12, 2
    %s19 = sadd.s32 %s12, 1
    %s20 = ssub.s32 %s12, %s19
    %p21 = scmp.eq.s32.totalorder %s20, 0
    %s23 = sadd.s32 %s22, 1
    %s24 = scalar_select %p21, %s22, %s23
    %p27 = pneg %p21
    %p28 = scmp.eq.s32.totalorder %s12, 1
    %p29 = por %p27, %p28
    %p30 = scmp.ne.s32.totalorder %s22, %s25
    %p31 = scmp.eq.s32.totalorder %s12, 0
    %p32 = por %p30, %p31
    %p33 = scmp.ne.s32.totalorder %s22, %s25
    %p34 = scmp.eq.s32.totalorder %s17, 1
    %p35 = por %p33, %p34
    %p36 = scmp.ne.s32.totalorder %s25, %s26
    %p37 = scmp.eq.s32.totalorder %s17, 0
    %p38 = por %p36, %p37
    %p39 = scmp.ne.s32.totalorder %s25, %s26
    %p40 = scmp.eq.s32.totalorder %s18, 1
    %p41 = por %p39, %p40
    %p43 = scmp.ne.s32.totalorder %s26, %s42
    %p44 = scmp.eq.s32.totalorder %s18, 0
    %p45 = por %p43, %p44
    %s46 = ssub.s32 %s12, %s19
    %p47 = scmp.eq.s32.totalorder %s46, 0
    %s49 = sadd.s32 %s48, 1
    %s50 = scalar_select %p47, %s48, %s49
    %p53 = pneg %p47
    %p54 = scmp.eq.s32.totalorder %s12, 1
    %p55 = por %p53, %p54
    %p56 = scmp.ne.s32.totalorder %s48, %s51
    %p57 = scmp.eq.s32.totalorder %s12, 0
    %p58 = por %p56, %p57
    %p59 = scmp.ne.s32.totalorder %s48, %s51
    %p60 = scmp.eq.s32.totalorder %s17, 1
    %p61 = por %p59, %p60
    %p62 = scmp.ne.s32.totalorder %s51, %s52
    %p63 = scmp.eq.s32.totalorder %s17, 0
    %p64 = por %p62, %p63
    %p65 = scmp.ne.s32.totalorder %s51, %s52
    %p66 = scmp.eq.s32.totalorder %s18, 1
    %p67 = por %p65, %p66
    %p69 = scmp.ne.s32.totalorder %s52, %s68
    %p70 = scmp.eq.s32.totalorder %s18, 0
    %p71 = por %p69, %p70
    %s72 = ssub.s32 %s12, %s19
    %p73 = scmp.eq.s32.totalorder %s72, 0
    %s75 = sadd.s32 %s74, 1
    %s76 = scalar_select %p73, %s74, %s75
    %p79 = pneg %p73
    %p80 = scmp.eq.s32.totalorder %s12, 1
    %p81 = por %p79, %p80
    %p82 = scmp.ne.s32.totalorder %s74, %s77
    %p83 = scmp.eq.s32.totalorder %s12, 0
    %p84 = por %p82, %p83
    %p85 = scmp.ne.s32.totalorder %s74, %s77
    %p86 = scmp.eq.s32.totalorder %s17, 1
    %p87 = por %p85, %p86
    %p88 = scmp.ne.s32.totalorder %s77, %s78
    %p89 = scmp.eq.s32.totalorder %s17, 0
    %p90 = por %p88, %p89
    %p91 = scmp.ne.s32.totalorder %s77, %s78
    %p92 = scmp.eq.s32.totalorder %s18, 1
    %p93 = por %p91, %p92
    %p95 = scmp.ne.s32.totalorder %s78, %s94
    %p96 = scmp.eq.s32.totalorder %s18, 0
    %p97 = por %p95, %p96
    %s98 = ssub.s32 %s12, %s19
    %p99 = scmp.eq.s32.totalorder %s98, 0
    %s101 = sadd.s32 %s100, 1
    %s102 = scalar_select %p99, %s100, %s101
    %p105 = pneg %p99
    %p106 = scmp.eq.s32.totalorder %s12, 1
    %p107 = por %p105, %p106
    %p108 = scmp.ne.s32.totalorder %s100, %s103
    %p109 = scmp.eq.s32.totalorder %s12, 0
    %p110 = por %p108, %p109
    %p111 = scmp.ne.s32.totalorder %s100, %s103
    %p112 = scmp.eq.s32.totalorder %s17, 1
    %p113 = por %p111, %p112
    %p114 = scmp.ne.s32.totalorder %s103, %s104
    %p115 = scmp.eq.s32.totalorder %s17, 0
    %p116 = por %p114, %p115
    %p117 = scmp.ne.s32.totalorder %s103, %s104
    %p118 = scmp.eq.s32.totalorder %s18, 1
    %p119 = por %p117, %p118
    %p121 = scmp.ne.s32.totalorder %s104, %s120
    %p122 = scmp.eq.s32.totalorder %s18, 0
    %p123 = por %p121, %p122
    %s125 = sadd.s32 %s124, 1
    %p128 = scmp.eq.s32.totalorder %s12, 1
    %p129 = scmp.ne.s32.totalorder %s124, %s126
    %p130 = scmp.eq.s32.totalorder %s12, 0
    %p131 = por %p129, %p130
    %p132 = scmp.ne.s32.totalorder %s124, %s126
    %p133 = scmp.eq.s32.totalorder %s17, 1
    %p134 = por %p132, %p133
    %p135 = scmp.ne.s32.totalorder %s126, %s127
    %p136 = scmp.eq.s32.totalorder %s17, 0
    %p137 = por %p135, %p136
    %p138 = scmp.ne.s32.totalorder %s126, %s127
    %p139 = scmp.eq.s32.totalorder %s18, 1
    %p140 = por %p138, %p139
    %p142 = scmp.ne.s32.totalorder %s127, %s141
    %p143 = scmp.eq.s32.totalorder %s18, 0
    %p144 = por %p142, %p143
    %s146 = sadd.s32 %s145, 1
    %p149 = scmp.eq.s32.totalorder %s12, 1
    %p150 = scmp.ne.s32.totalorder %s145, %s147
    %p151 = scmp.eq.s32.totalorder %s12, 0
    %p152 = por %p150, %p151
    %p153 = scmp.ne.s32.totalorder %s145, %s147
    %p154 = scmp.eq.s32.totalorder %s17, 1
    %p155 = por %p153, %p154
    %p156 = scmp.ne.s32.totalorder %s147, %s148
    %p157 = scmp.eq.s32.totalorder %s17, 0
    %p158 = por %p156, %p157
    %p159 = scmp.ne.s32.totalorder %s147, %s148
    %p160 = scmp.eq.s32.totalorder %s18, 1
    %p161 = por %p159, %p160
    %p163 = scmp.ne.s32.totalorder %s148, %s162
    %p164 = scmp.eq.s32.totalorder %s18, 0
    %p165 = por %p163, %p164
    %s166 = ssub.s32 %s12, %s19
    %p167 = scmp.eq.s32.totalorder %s166, 0
    %s169 = sadd.s32 %s168, 1
    %s170 = scalar_select %p167, %s168, %s169
    %p173 = pneg %p167
    %p174 = scmp.eq.s32.totalorder %s12, 1
    %p175 = por %p173, %p174
    %p176 = scmp.ne.s32.totalorder %s168, %s171
    %p177 = scmp.eq.s32.totalorder %s12, 0
    %p178 = por %p176, %p177
    %p179 = scmp.ne.s32.totalorder %s168, %s171
    %p180 = scmp.eq.s32.totalorder %s17, 1
    %p181 = por %p179, %p180
    %p182 = scmp.ne.s32.totalorder %s171, %s172
    %p183 = scmp.eq.s32.totalorder %s17, 0
    %p184 = por %p182, %p183
    %p185 = scmp.ne.s32.totalorder %s171, %s172
    %p186 = scmp.eq.s32.totalorder %s18, 1
    %p187 = por %p185, %p186
    %p189 = scmp.ne.s32.totalorder %s172, %s188
    %p190 = scmp.eq.s32.totalorder %s18, 0
    %p191 = por %p189, %p190
    %p192 = scmp.le.s32.totalorder 1, %s12
    %p193 = scmp.lt.s32.totalorder %s12, 3
    %p194 = pnand %p192, %p193
    %p195 = pneg %p194
    // Predicated region
    $region9: #{jetseg_forward.3} parent=5 // pred_check
      _
    $region10: #{jetseg_forward.3} parent=5 // pred_check_branch
      %197 = sbr.rel (%p194) target = $region12
    $region11: #{jetseg_forward.3} parent=5 // pred_region
      %s198 = ssub.s32 %s12, 1
      // Predicated region
      $region13: #{jetseg_forward.3} parent=11 // pred_check
        %p199 = pneg %p137
      $region14: #{jetseg_forward.3} parent=11 // pred_check_branch
        %201 = sbr.rel (%p199) target = $region16
      $region15: #{jetseg_forward.3} parent=11 // pred_region
        _
      $region16: #{jetseg_forward.3} parent=11 // pred_fallthru
        _
      // Predicated region
      $region17: #{jetseg_forward.3} parent=11 // pred_check
        %p202 = pneg %p158
      $region18: #{jetseg_forward.3} parent=11 // pred_check_branch
        %204 = sbr.rel (%p202) target = $region20
      $region19: #{jetseg_forward.3} parent=11 // pred_region
        _
      $region20: #{jetseg_forward.3} parent=11 // pred_fallthru
        _
    $region12: #{jetseg_forward.3} parent=5 // pred_fallthru
      _
    %p205 = scmp.lt.s32.totalorder %s12, 2
    // Predicated region
    $region21: #{jetseg_forward.3} parent=5 // pred_check
      %p206 = pneg %p205
    $region22: #{jetseg_forward.3} parent=5 // pred_check_branch
      %208 = sbr.rel (%p206) target = $region24
    $region23: #{jetseg_forward.3} parent=5 // pred_region
      // Predicated region
      $region25: #{jetseg_forward.3} parent=23 // pred_check
        %p209 = pneg %p32
      $region26: #{jetseg_forward.3} parent=23 // pred_check_branch
        %211 = sbr.rel (%p209) target = $region28
      $region27: #{jetseg_forward.3} parent=23 // pred_region
        %p212 = scmp.lt.s32.totalorder %s12, 1
        %s213 = scalar_select %p212, %s12, 1
        %s214 = smul.addr %s213, 18
        %s215 = smul.addr %s214, 4
        %s216 = scalar_lea.vmem %s0, %s215
      $region28: #{jetseg_forward.3} parent=23 // pred_fallthru
        _
      // Predicated region
      $region29: #{jetseg_forward.3} parent=23 // pred_check
        %p217 = pneg %p58
      $region30: #{jetseg_forward.3} parent=23 // pred_check_branch
        %219 = sbr.rel (%p217) target = $region32
      $region31: #{jetseg_forward.3} parent=23 // pred_region
        %p220 = scmp.lt.s32.totalorder %s12, 1
        %s221 = scalar_select %p220, %s12, 1
        %s222 = smul.addr %s221, 18
        %s223 = smul.addr %s222, 4
        %s224 = scalar_lea.vmem %s1, %s223
      $region32: #{jetseg_forward.3} parent=23 // pred_fallthru
        _
      // Predicated region
      $region33: #{jetseg_forward.3} parent=23 // pred_check
        %p225 = pneg %p84
      $region34: #{jetseg_forward.3} parent=23 // pred_check_branch
        %227 = sbr.rel (%p225) target = $region36
      $region35: #{jetseg_forward.3} parent=23 // pred_region
        %p228 = scmp.lt.s32.totalorder %s12, 1
        %s229 = scalar_select %p228, %s12, 1
        %s230 = smul.addr %s229, 18
        %s231 = smul.addr %s230, 4
        %s232 = scalar_lea.vmem %s2, %s231
      $region36: #{jetseg_forward.3} parent=23 // pred_fallthru
        _
      // Predicated region
      $region37: #{jetseg_forward.3} parent=23 // pred_check
        %p233 = pneg %p110
      $region38: #{jetseg_forward.3} parent=23 // pred_check_branch
        %235 = sbr.rel (%p233) target = $region40
      $region39: #{jetseg_forward.3} parent=23 // pred_region
        %p236 = scmp.lt.s32.totalorder %s12, 1
        %s237 = scalar_select %p236, %s12, 1
        %s238 = smul.addr %s237, 18
        %s239 = smul.addr %s238, 4
        %s240 = scalar_lea.vmem %s3, %s239
      $region40: #{jetseg_forward.3} parent=23 // pred_fallthru
        _
    $region24: #{jetseg_forward.3} parent=5 // pred_fallthru
      _
    %p241 = scmp.le.s32.totalorder 1, %s12
    %p242 = scmp.lt.s32.totalorder %s12, 3
    %p243 = pnand %p241, %p242
    %p244 = pneg %p243
    // Predicated region
    $region41: #{jetseg_forward.3} parent=5 // pred_check
      _
    $region42: #{jetseg_forward.3} parent=5 // pred_check_branch
      %246 = sbr.rel (%p243) target = $region44
    $region43: #{jetseg_forward.3} parent=5 // pred_region
      %s247 = ssub.s32 %s12, 1
      %p248 = scmp.lt.s32.totalorder %s17, 1
      %s249 = scalar_select %p248, %s17, 1
      %s250 = smul.addr %s249, 18
      %s251 = smul.addr %s250, 4
      %s252 = scalar_lea.vmem %s0, %s251
      %p253 = pneg %p38
      %p254 = pneg %p35
      %p255 = scmp.lt.s32.totalorder %s17, 1
      %s256 = scalar_select %p255, %s17, 1
      %s257 = smul.addr %s256, 18
      %s258 = smul.addr %s257, 4
      %s259 = scalar_lea.vmem %s1, %s258
      %p260 = pneg %p64
      %p261 = pneg %p61
      %p262 = scmp.lt.s32.totalorder %s17, 1
      %s263 = scalar_select %p262, %s17, 1
      %s264 = smul.addr %s263, 18
      %s265 = smul.addr %s264, 4
      %s266 = scalar_lea.vmem %s2, %s265
      %p267 = pneg %p90
      %p268 = pneg %p87
      %p269 = scmp.lt.s32.totalorder %s17, 1
      %s270 = scalar_select %p269, %s17, 1
      %s271 = smul.addr %s270, 18
      %s272 = smul.addr %s271, 4
      %s273 = scalar_lea.vmem %s3, %s272
      %p274 = pneg %p116
      %p275 = pneg %p113
      %p276 = pneg %p137
      %p277 = pneg %p134
      %p278 = pneg %p158
      %p279 = pneg %p155
      %p280 = pneg %p184
      %p281 = pneg %p181
      %p282 = scmp.lt.s32.totalorder %s17, 1
      %s283 = scalar_select %p282, %s17, 1
      %s284 = smul.addr %s283, 8
      %s285 = smul.addr %s284, 4
      %s286 = scalar_lea.vmem %s6, %s285
      %p287 = scmp.lt.s32.totalorder %s17, 1
      %s288 = scalar_select %p287, %s17, 1
      %s289 = smul.addr %s288, 18
      %s290 = smul.addr %s289, 4
      %s291 = scalar_lea.vmem %s0, %s290
      %p292 = scmp.lt.s32.totalorder %s17, 1
      %s293 = scalar_select %p292, %s17, 1
      %s294 = smul.addr %s293, 18
      %s295 = smul.addr %s294, 4
      %s296 = scalar_lea.vmem %s1, %s295
      %p297 = scmp.lt.s32.totalorder %s17, 1
      %s298 = scalar_select %p297, %s17, 1
      %s299 = smul.addr %s298, 18
      %s300 = smul.addr %s299, 4
      %s301 = scalar_lea.vmem %s2, %s300
      %p302 = scmp.lt.s32.totalorder %s17, 1
      %s303 = scalar_select %p302, %s17, 1
      %s304 = smul.addr %s303, 18
      %s305 = smul.addr %s304, 4
      %s306 = scalar_lea.vmem %s3, %s305
      %p307 = scmp.lt.s32.totalorder %s17, 1
      %s308 = scalar_select %p307, %s17, 1
      %s309 = smul.addr %s308, 8
      %s310 = smul.addr %s309, 4
      %s311 = scalar_lea.vmem %s6, %s310
      %v313 = vld [vmem:[%s291] sm:$0xf]
      %v314 = vld [vmem:[%s291 + $0x8] sm:$0xf]
      %v315 = vld [vmem:[%s291 + $0x10] sm:$0xf]
      %v316 = vld [vmem:[%s291 + $0x18] sm:$0xf]
      %v317 = vld [vmem:[%s291 + $0x20] sm:$0xf]
      %v318 = vld [vmem:[%s291 + $0x28] sm:$0xf]
      %v319 = vld [vmem:[%s291 + $0x30] sm:$0xf]
      %v320 = vld [vmem:[%s291 + $0x38] sm:$0xf]
      %v321 = vld [vmem:[%s4] sm:$0x3]
      %v322 = vld [vmem:[%s296] sm:$0xf]
      %v323 = vld [vmem:[%s296 + $0x8] sm:$0xf]
      %v324 = vld [vmem:[%s296 + $0x10] sm:$0xf]
      %v325 = vld [vmem:[%s296 + $0x18] sm:$0xf]
      %v326 = vld [vmem:[%s296 + $0x20] sm:$0xf]
      %v327 = vld [vmem:[%s296 + $0x28] sm:$0xf]
      %v328 = vld [vmem:[%s296 + $0x30] sm:$0xf]
      %v329 = vld [vmem:[%s296 + $0x38] sm:$0xf]
      %s330 = scalar_lea.vmem %s4, 2
      %v331 = vld [vmem:[%s330] sm:$0x3]
      %v340 = vunpack.c.l.b16 %v322
      %v341 = vunpack.c.l.b16 %v323
      %v342 = vunpack.c.l.b16 %v324
      %v343 = vunpack.c.l.b16 %v325
      %v344 = vunpack.c.l.b16 %v326
      %v345 = vunpack.c.l.b16 %v327
      %v346 = vunpack.c.l.b16 %v328
      %v347 = vunpack.c.l.b16 %v329
      %v348 = vpack.c.b16 %v341, %v340
      %v349 = vpack.c.b16 %v343, %v342
      %v350 = vpack.c.b16 %v345, %v344
      %v351 = vpack.c.b16 %v347, %v346
      %vm352 = vcmask 31744
      %v354 = vsel %vm352, %v348, 0
      %v357 = vsel %vm352, %v349, 0
      %v360 = vsel %vm352, %v350, 0
      %v363 = vsel %vm352, %v351, 0
      %vm365 = vcmask 1041408
      %v367 = vsel %vm365, %v331, 0
      %369 = vmatprep.subr.bf16.mxu0 0
      %370 = vmatpush1.bf16.msra.mxu0 0
      %371 = vmatprep.subr.bf16.mxu0 0
      %372 = vmatpush1.bf16.msra.mxu0 0
      %373 = vmatprep.subr.bf16.mxu0 0
      %374 = vmatpush1.bf16.msra.mxu0 0
      %375 = vmatprep.subr.bf16.mxu0 0
      %376 = vmatpush1.bf16.msra.mxu0 0
      %377 = vmatprep.subr.bf16.mxu0 0
      %378 = vmatpush1.bf16.msra.mxu0 0
      %379 = vmatprep.subr.bf16.mxu0 0
      %380 = vmatpush1.bf16.msra.mxu0 0
      %381 = vmatprep.subr.bf16.mxu0 0
      %382 = vmatpush1.bf16.msra.mxu0 0
      %383 = vmatprep.subr.bf16.mxu0 0
      %384 = vmatpush1.bf16.msra.mxu0 %v367
      %385 = vmatprep.subr.bf16.mxu0 0
      %386 = vmatpush2.bf16.msra.mxu0 0
      %387 = vmatprep.subr.bf16.mxu0 0
      %388 = vmatpush2.bf16.msra.mxu0 0
      %389 = vmatprep.subr.bf16.mxu0 0
      %390 = vmatpush2.bf16.msra.mxu0 0
      %391 = vmatprep.subr.bf16.mxu0 0
      %392 = vmatpush2.bf16.msra.mxu0 0
      %393 = vmatprep.subr.bf16.mxu0 0
      %394 = vmatpush2.bf16.msra.mxu0 0
      %395 = vmatprep.subr.bf16.mxu0 0
      %396 = vmatpush2.bf16.msra.mxu0 0
      %397 = vmatprep.subr.bf16.mxu0 0
      %398 = vmatpush2.bf16.msra.mxu0 0
      %399 = vmatprep.subr.bf16.mxu0 0
      %400 = vmatpush2.bf16.msra.mxu0 0
      %401 = vmatprep.mubr.bf16.mxu0 0
      %402 = vmatmul.mubr.bf16.gmra.mxu0 %v354
      %v403 = vpop.f32.mrf.mxu0
      %v404 = vadd.f32 0.0, %v403
      %v405 = vpop.f32.mrf.mxu0
      %v406 = vpop.f32.mrf.mxu0
      %v407 = vadd.f32 0.0, %v406
      %v408 = vpop.f32.mrf.mxu0
      %409 = vmatprep.mubr.bf16.mxu0 0
      %410 = vmatmul.mubr.bf16.gmra.mxu0 %v357
      %v411 = vpop.f32.mrf.mxu0
      %v412 = vadd.f32 0.0, %v411
      %v413 = vpop.f32.mrf.mxu0
      %v414 = vpop.f32.mrf.mxu0
      %v415 = vadd.f32 0.0, %v414
      %v416 = vpop.f32.mrf.mxu0
      %417 = vmatprep.mubr.bf16.mxu0 0
      %418 = vmatmul.mubr.bf16.gmra.mxu0 %v360
      %v419 = vpop.f32.mrf.mxu0
      %v420 = vadd.f32 0.0, %v419
      %v421 = vpop.f32.mrf.mxu0
      %v422 = vpop.f32.mrf.mxu0
      %v423 = vadd.f32 0.0, %v422
      %v424 = vpop.f32.mrf.mxu0
      %425 = vmatprep.mubr.bf16.mxu0 0
      %426 = vmatmul.mubr.bf16.gmra.mxu0 %v363
      %v427 = vpop.f32.mrf.mxu0
      %v428 = vadd.f32 0.0, %v427
      %v429 = vpop.f32.mrf.mxu0
      %v430 = vpop.f32.mrf.mxu0
      %v431 = vadd.f32 0.0, %v430
      %v432 = vpop.f32.mrf.mxu0
      %433 = vdwg.mxu0
      %v442 = vunpack.c.l.b16 %v313
      %v443 = vunpack.c.l.b16 %v314
      %v444 = vunpack.c.l.b16 %v315
      %v445 = vunpack.c.l.b16 %v316
      %v446 = vunpack.c.l.b16 %v317
      %v447 = vunpack.c.l.b16 %v318
      %v448 = vunpack.c.l.b16 %v319
      %v449 = vunpack.c.l.b16 %v320
      %v450 = vpack.c.b16 %v443, %v442
      %v451 = vpack.c.b16 %v445, %v444
      %v452 = vpack.c.b16 %v447, %v446
      %v453 = vpack.c.b16 %v449, %v448
      %v455 = vsel %vm352, %v450, 0
      %v458 = vsel %vm352, %v451, 0
      %v461 = vsel %vm352, %v452, 0
      %v464 = vsel %vm352, %v453, 0
      %v467 = vsel %vm365, %v321, 0
      %469 = vmatprep.subr.bf16.mxu0 0
      %470 = vmatpush1.bf16.msra.mxu0 0
      %471 = vmatprep.subr.bf16.mxu0 0
      %472 = vmatpush1.bf16.msra.mxu0 0
      %473 = vmatprep.subr.bf16.mxu0 0
      %474 = vmatpush1.bf16.msra.mxu0 0
      %475 = vmatprep.subr.bf16.mxu0 0
      %476 = vmatpush1.bf16.msra.mxu0 0
      %477 = vmatprep.subr.bf16.mxu0 0
      %478 = vmatpush1.bf16.msra.mxu0 0
      %479 = vmatprep.subr.bf16.mxu0 0
      %480 = vmatpush1.bf16.msra.mxu0 0
      %481 = vmatprep.subr.bf16.mxu0 0
      %482 = vmatpush1.bf16.msra.mxu0 0
      %483 = vmatprep.subr.bf16.mxu0 0
      %484 = vmatpush1.bf16.msra.mxu0 %v467
      %485 = vmatprep.subr.bf16.mxu0 0
      %486 = vmatpush2.bf16.msra.mxu0 0
      %487 = vmatprep.subr.bf16.mxu0 0
      %488 = vmatpush2.bf16.msra.mxu0 0
      %489 = vmatprep.subr.bf16.mxu0 0
      %490 = vmatpush2.bf16.msra.mxu0 0
      %491 = vmatprep.subr.bf16.mxu0 0
      %492 = vmatpush2.bf16.msra.mxu0 0
      %493 = vmatprep.subr.bf16.mxu0 0
      %494 = vmatpush2.bf16.msra.mxu0 0
      %495 = vmatprep.subr.bf16.mxu0 0
      %496 = vmatpush2.bf16.msra.mxu0 0
      %497 = vmatprep.subr.bf16.mxu0 0
      %498 = vmatpush2.bf16.msra.mxu0 0
      %499 = vmatprep.subr.bf16.mxu0 0
      %500 = vmatpush2.bf16.msra.mxu0 0
      %501 = vmatprep.mubr.bf16.mxu0 0
      %502 = vmatmul.mubr.bf16.gmra.mxu0 %v455
      %v503 = vpop.f32.mrf.mxu0
      %v504 = vadd.f32 %v404, %v503
      %v505 = vpop.f32.mrf.mxu0
      %v506 = vpop.f32.mrf.mxu0
      %v507 = vadd.f32 %v407, %v506
      %v508 = vpop.f32.mrf.mxu0
      %509 = vmatprep.mubr.bf16.mxu0 0
      %510 = vmatmul.mubr.bf16.gmra.mxu0 %v458
      %v511 = vpop.f32.mrf.mxu0
      %v512 = vadd.f32 %v412, %v511
      %v513 = vpop.f32.mrf.mxu0
      %v514 = vpop.f32.mrf.mxu0
      %v515 = vadd.f32 %v415, %v514
      %v516 = vpop.f32.mrf.mxu0
      %517 = vmatprep.mubr.bf16.mxu0 0
      %518 = vmatmul.mubr.bf16.gmra.mxu0 %v461
      %v519 = vpop.f32.mrf.mxu0
      %v520 = vadd.f32 %v420, %v519
      %v521 = vpop.f32.mrf.mxu0
      %v522 = vpop.f32.mrf.mxu0
      %v523 = vadd.f32 %v423, %v522
      %v524 = vpop.f32.mrf.mxu0
      %525 = vmatprep.mubr.bf16.mxu0 0
      %526 = vmatmul.mubr.bf16.gmra.mxu0 %v464
      %v527 = vpop.f32.mrf.mxu0
      %v528 = vadd.f32 %v428, %v527
      %v529 = vpop.f32.mrf.mxu0
      %v530 = vpop.f32.mrf.mxu0
      %v531 = vadd.f32 %v431, %v530
      %v532 = vpop.f32.mrf.mxu0
      %533 = vdwg.mxu0
      %v534 = vld [vmem:[%s291] sm:$0xf]
      %v535 = vld [vmem:[%s291 + $0x4] sm:$0x1]
      %v536 = vld [vmem:[%s291 + $0x8] sm:$0xf]
      %v537 = vld [vmem:[%s291 + $0xc] sm:$0x1]
      %v538 = vld [vmem:[%s291 + $0x10] sm:$0xf]
      %v539 = vld [vmem:[%s291 + $0x14] sm:$0x1]
      %v540 = vld [vmem:[%s291 + $0x18] sm:$0xf]
      %v541 = vld [vmem:[%s291 + $0x1c] sm:$0x1]
      %v542 = vld [vmem:[%s291 + $0x20] sm:$0xf]
      %v543 = vld [vmem:[%s291 + $0x24] sm:$0x1]
      %v544 = vld [vmem:[%s291 + $0x28] sm:$0xf]
      %v545 = vld [vmem:[%s291 + $0x2c] sm:$0x1]
      %v546 = vld [vmem:[%s291 + $0x30] sm:$0xf]
      %v547 = vld [vmem:[%s291 + $0x34] sm:$0x1]
      %v548 = vld [vmem:[%s291 + $0x38] sm:$0xf]
      %v549 = vld [vmem:[%s291 + $0x3c] sm:$0x1]
      %vm550 = vsmask.f32 3328
      %vm551 = vsmask.f32 7440
      %vm552 = vmor %vm550, %vm551
      %v554 = vshrl.u32 %v534, 16
      %v556 = vrot.slane %v554, 4
      %v557 = vshll.u32 %v534, 16
      %v559 = vrot.slane %v557, 5
      %v560 = vor.u32 %v556, %v559
      %v561 = vrot.slane %v560, 4
      %v563 = vshll.u32 %v535, 16
      %v565 = vrot.slane %v563, 5
      %v566 = vsel %vm552, %v561, %v565
      %v568 = vshrl.u32 %v536, 16
      %v570 = vrot.slane %v568, 4
      %v571 = vshll.u32 %v536, 16
      %v573 = vrot.slane %v571, 5
      %v574 = vor.u32 %v570, %v573
      %v575 = vrot.slane %v574, 4
      %v577 = vshll.u32 %v537, 16
      %v579 = vrot.slane %v577, 5
      %v580 = vsel %vm552, %v575, %v579
      %v582 = vshrl.u32 %v538, 16
      %v584 = vrot.slane %v582, 4
      %v585 = vshll.u32 %v538, 16
      %v587 = vrot.slane %v585, 5
      %v588 = vor.u32 %v584, %v587
      %v589 = vrot.slane %v588, 4
      %v591 = vshll.u32 %v539, 16
      %v593 = vrot.slane %v591, 5
      %v594 = vsel %vm552, %v589, %v593
      %v596 = vshrl.u32 %v540, 16
      %v598 = vrot.slane %v596, 4
      %v599 = vshll.u32 %v540, 16
      %v601 = vrot.slane %v599, 5
      %v602 = vor.u32 %v598, %v601
      %v603 = vrot.slane %v602, 4
      %v605 = vshll.u32 %v541, 16
      %v607 = vrot.slane %v605, 5
      %v608 = vsel %vm552, %v603, %v607
      %v610 = vshrl.u32 %v542, 16
      %v612 = vrot.slane %v610, 4
      %v613 = vshll.u32 %v542, 16
      %v615 = vrot.slane %v613, 5
      %v616 = vor.u32 %v612, %v615
      %v617 = vrot.slane %v616, 4
      %v619 = vshll.u32 %v543, 16
      %v621 = vrot.slane %v619, 5
      %v622 = vsel %vm552, %v617, %v621
      %v624 = vshrl.u32 %v544, 16
      %v626 = vrot.slane %v624, 4
      %v627 = vshll.u32 %v544, 16
      %v629 = vrot.slane %v627, 5
      %v630 = vor.u32 %v626, %v629
      %v631 = vrot.slane %v630, 4
      %v633 = vshll.u32 %v545, 16
      %v635 = vrot.slane %v633, 5
      %v636 = vsel %vm552, %v631, %v635
      %v638 = vshrl.u32 %v546, 16
      %v640 = vrot.slane %v638, 4
      %v641 = vshll.u32 %v546, 16
      %v643 = vrot.slane %v641, 5
      %v644 = vor.u32 %v640, %v643
      %v645 = vrot.slane %v644, 4
      %v647 = vshll.u32 %v547, 16
      %v649 = vrot.slane %v647, 5
      %v650 = vsel %vm552, %v645, %v649
      %v652 = vshrl.u32 %v548, 16
      %v654 = vrot.slane %v652, 4
      %v655 = vshll.u32 %v548, 16
      %v657 = vrot.slane %v655, 5
      %v658 = vor.u32 %v654, %v657
      %v659 = vrot.slane %v658, 4
      %v661 = vshll.u32 %v549, 16
      %v663 = vrot.slane %v661, 5
      %v664 = vsel %vm552, %v659, %v663
      %s665 = scalar_lea.vmem %s4, 4
      %v666 = vld [vmem:[%s665] sm:$0x3]
      %v667 = vunpack.c.l.b16 %v566
      %v668 = vunpack.c.l.b16 %v580
      %v669 = vunpack.c.l.b16 %v594
      %v670 = vunpack.c.l.b16 %v608
      %v671 = vunpack.c.l.b16 %v622
      %v672 = vunpack.c.l.b16 %v636
      %v673 = vunpack.c.l.b16 %v650
      %v674 = vunpack.c.l.b16 %v664
      %v675 = vpack.c.b16 %v668, %v667
      %v676 = vpack.c.b16 %v670, %v669
      %v677 = vpack.c.b16 %v672, %v671
      %v678 = vpack.c.b16 %v674, %v673
      %v680 = vsel %vm352, %v675, 0
      %v683 = vsel %vm352, %v676, 0
      %v686 = vsel %vm352, %v677, 0
      %v689 = vsel %vm352, %v678, 0
      %v692 = vsel %vm365, %v666, 0
      %694 = vmatprep.subr.bf16.mxu0 0
      %695 = vmatpush1.bf16.msra.mxu0 0
      %696 = vmatprep.subr.bf16.mxu0 0
      %697 = vmatpush1.bf16.msra.mxu0 0
      %698 = vmatprep.subr.bf16.mxu0 0
      %699 = vmatpush1.bf16.msra.mxu0 0
      %700 = vmatprep.subr.bf16.mxu0 0
      %701 = vmatpush1.bf16.msra.mxu0 0
      %702 = vmatprep.subr.bf16.mxu0 0
      %703 = vmatpush1.bf16.msra.mxu0 0
      %704 = vmatprep.subr.bf16.mxu0 0
      %705 = vmatpush1.bf16.msra.mxu0 0
      %706 = vmatprep.subr.bf16.mxu0 0
      %707 = vmatpush1.bf16.msra.mxu0 0
      %708 = vmatprep.subr.bf16.mxu0 0
      %709 = vmatpush1.bf16.msra.mxu0 %v692
      %710 = vmatprep.subr.bf16.mxu0 0
      %711 = vmatpush2.bf16.msra.mxu0 0
      %712 = vmatprep.subr.bf16.mxu0 0
      %713 = vmatpush2.bf16.msra.mxu0 0
      %714 = vmatprep.subr.bf16.mxu0 0
      %715 = vmatpush2.bf16.msra.mxu0 0
      %716 = vmatprep.subr.bf16.mxu0 0
      %717 = vmatpush2.bf16.msra.mxu0 0
      %718 = vmatprep.subr.bf16.mxu0 0
      %719 = vmatpush2.bf16.msra.mxu0 0
      %720 = vmatprep.subr.bf16.mxu0 0
      %721 = vmatpush2.bf16.msra.mxu0 0
      %722 = vmatprep.subr.bf16.mxu0 0
      %723 = vmatpush2.bf16.msra.mxu0 0
      %724 = vmatprep.subr.bf16.mxu0 0
      %725 = vmatpush2.bf16.msra.mxu0 0
      %726 = vmatprep.mubr.bf16.mxu0 0
      %727 = vmatmul.mubr.bf16.gmra.mxu0 %v680
      %v728 = vpop.f32.mrf.mxu0
      %v729 = vadd.f32 0.0, %v728
      %v730 = vpop.f32.mrf.mxu0
      %v731 = vpop.f32.mrf.mxu0
      %v732 = vadd.f32 0.0, %v731
      %v733 = vpop.f32.mrf.mxu0
      %734 = vmatprep.mubr.bf16.mxu0 0
      %735 = vmatmul.mubr.bf16.gmra.mxu0 %v683
      %v736 = vpop.f32.mrf.mxu0
      %v737 = vadd.f32 0.0, %v736
      %v738 = vpop.f32.mrf.mxu0
      %v739 = vpop.f32.mrf.mxu0
      %v740 = vadd.f32 0.0, %v739
      %v741 = vpop.f32.mrf.mxu0
      %742 = vmatprep.mubr.bf16.mxu0 0
      %743 = vmatmul.mubr.bf16.gmra.mxu0 %v686
      %v744 = vpop.f32.mrf.mxu0
      %v745 = vadd.f32 0.0, %v744
      %v746 = vpop.f32.mrf.mxu0
      %v747 = vpop.f32.mrf.mxu0
      %v748 = vadd.f32 0.0, %v747
      %v749 = vpop.f32.mrf.mxu0
      %750 = vmatprep.mubr.bf16.mxu0 0
      %751 = vmatmul.mubr.bf16.gmra.mxu0 %v689
      %v752 = vpop.f32.mrf.mxu0
      %v753 = vadd.f32 0.0, %v752
      %v754 = vpop.f32.mrf.mxu0
      %v755 = vpop.f32.mrf.mxu0
      %v756 = vadd.f32 0.0, %v755
      %v757 = vpop.f32.mrf.mxu0
      %758 = vdwg.mxu0
      %v759 = vadd.f32 %v504, %v729
      %v760 = vadd.f32 %v507, %v732
      %v761 = vadd.f32 %v512, %v737
      %v762 = vadd.f32 %v515, %v740
      %v763 = vadd.f32 %v520, %v745
      %v764 = vadd.f32 %v523, %v748
      %v765 = vadd.f32 %v528, %v753
      %v766 = vadd.f32 %v531, %v756
      %v767 = vld [vmem:[%s301] sm:$0xf]
      %v768 = vld [vmem:[%s301 + $0x8] sm:$0xf]
      %v769 = vld [vmem:[%s301 + $0x10] sm:$0xf]
      %v770 = vld [vmem:[%s301 + $0x18] sm:$0xf]
      %v771 = vld [vmem:[%s301 + $0x20] sm:$0xf]
      %v772 = vld [vmem:[%s301 + $0x28] sm:$0xf]
      %v773 = vld [vmem:[%s301 + $0x30] sm:$0xf]
      %v774 = vld [vmem:[%s301 + $0x38] sm:$0xf]
      %s775 = scalar_lea.vmem %s4, 6
      %v776 = vld [vmem:[%s775] sm:$0x3]
      %v785 = vunpack.c.l.b16 %v767
      %v786 = vunpack.c.l.b16 %v768
      %v787 = vunpack.c.l.b16 %v769
      %v788 = vunpack.c.l.b16 %v770
      %v789 = vunpack.c.l.b16 %v771
      %v790 = vunpack.c.l.b16 %v772
      %v791 = vunpack.c.l.b16 %v773
      %v792 = vunpack.c.l.b16 %v774
      %v793 = vpack.c.b16 %v786, %v785
      %v794 = vpack.c.b16 %v788, %v787
      %v795 = vpack.c.b16 %v790, %v789
      %v796 = vpack.c.b16 %v792, %v791
      %v798 = vsel %vm352, %v793, 0
      %v801 = vsel %vm352, %v794, 0
      %v804 = vsel %vm352, %v795, 0
      %v807 = vsel %vm352, %v796, 0
      %v810 = vsel %vm365, %v776, 0
      %812 = vmatprep.subr.bf16.mxu0 0
      %813 = vmatpush1.bf16.msra.mxu0 0
      %814 = vmatprep.subr.bf16.mxu0 0
      %815 = vmatpush1.bf16.msra.mxu0 0
      %816 = vmatprep.subr.bf16.mxu0 0
      %817 = vmatpush1.bf16.msra.mxu0 0
      %818 = vmatprep.subr.bf16.mxu0 0
      %819 = vmatpush1.bf16.msra.mxu0 0
      %820 = vmatprep.subr.bf16.mxu0 0
      %821 = vmatpush1.bf16.msra.mxu0 0
      %822 = vmatprep.subr.bf16.mxu0 0
      %823 = vmatpush1.bf16.msra.mxu0 0
      %824 = vmatprep.subr.bf16.mxu0 0
      %825 = vmatpush1.bf16.msra.mxu0 0
      %826 = vmatprep.subr.bf16.mxu0 0
      %827 = vmatpush1.bf16.msra.mxu0 %v810
      %828 = vmatprep.subr.bf16.mxu0 0
      %829 = vmatpush2.bf16.msra.mxu0 0
      %830 = vmatprep.subr.bf16.mxu0 0
      %831 = vmatpush2.bf16.msra.mxu0 0
      %832 = vmatprep.subr.bf16.mxu0 0
      %833 = vmatpush2.bf16.msra.mxu0 0
      %834 = vmatprep.subr.bf16.mxu0 0
      %835 = vmatpush2.bf16.msra.mxu0 0
      %836 = vmatprep.subr.bf16.mxu0 0
      %837 = vmatpush2.bf16.msra.mxu0 0
      %838 = vmatprep.subr.bf16.mxu0 0
      %839 = vmatpush2.bf16.msra.mxu0 0
      %840 = vmatprep.subr.bf16.mxu0 0
      %841 = vmatpush2.bf16.msra.mxu0 0
      %842 = vmatprep.subr.bf16.mxu0 0
      %843 = vmatpush2.bf16.msra.mxu0 0
      %844 = vmatprep.mubr.bf16.mxu0 0
      %845 = vmatmul.mubr.bf16.gmra.mxu0 %v798
      %v846 = vpop.f32.mrf.mxu0
      %v847 = vadd.f32 0.0, %v846
      %v848 = vpop.f32.mrf.mxu0
      %v849 = vpop.f32.mrf.mxu0
      %v850 = vadd.f32 0.0, %v849
      %v851 = vpop.f32.mrf.mxu0
      %852 = vmatprep.mubr.bf16.mxu0 0
      %853 = vmatmul.mubr.bf16.gmra.mxu0 %v801
      %v854 = vpop.f32.mrf.mxu0
      %v855 = vadd.f32 0.0, %v854
      %v856 = vpop.f32.mrf.mxu0
      %v857 = vpop.f32.mrf.mxu0
      %v858 = vadd.f32 0.0, %v857
      %v859 = vpop.f32.mrf.mxu0
      %860 = vmatprep.mubr.bf16.mxu0 0
      %861 = vmatmul.mubr.bf16.gmra.mxu0 %v804
      %v862 = vpop.f32.mrf.mxu0
      %v863 = vadd.f32 0.0, %v862
      %v864 = vpop.f32.mrf.mxu0
      %v865 = vpop.f32.mrf.mxu0
      %v866 = vadd.f32 0.0, %v865
      %v867 = vpop.f32.mrf.mxu0
      %868 = vmatprep.mubr.bf16.mxu0 0
      %869 = vmatmul.mubr.bf16.gmra.mxu0 %v807
      %v870 = vpop.f32.mrf.mxu0
      %v871 = vadd.f32 0.0, %v870
      %v872 = vpop.f32.mrf.mxu0
      %v873 = vpop.f32.mrf.mxu0
      %v874 = vadd.f32 0.0, %v873
      %v875 = vpop.f32.mrf.mxu0
      %876 = vdwg.mxu0
      %v877 = vadd.f32 %v759, %v847
      %v878 = vadd.f32 %v760, %v850
      %v879 = vadd.f32 %v761, %v855
      %v880 = vadd.f32 %v762, %v858
      %v881 = vadd.f32 %v763, %v863
      %v882 = vadd.f32 %v764, %v866
      %v883 = vadd.f32 %v765, %v871
      %v884 = vadd.f32 %v766, %v874
      %v885 = vld [vmem:[%s306] sm:$0xf]
      %v886 = vld [vmem:[%s306 + $0x8] sm:$0xf]
      %v887 = vld [vmem:[%s306 + $0x10] sm:$0xf]
      %v888 = vld [vmem:[%s306 + $0x18] sm:$0xf]
      %v889 = vld [vmem:[%s306 + $0x20] sm:$0xf]
      %v890 = vld [vmem:[%s306 + $0x28] sm:$0xf]
      %v891 = vld [vmem:[%s306 + $0x30] sm:$0xf]
      %v892 = vld [vmem:[%s306 + $0x38] sm:$0xf]
      %s893 = scalar_lea.vmem %s4, 8
      %v894 = vld [vmem:[%s893] sm:$0x3]
      %v903 = vunpack.c.l.b16 %v885
      %v904 = vunpack.c.l.b16 %v886
      %v905 = vunpack.c.l.b16 %v887
      %v906 = vunpack.c.l.b16 %v888
      %v907 = vunpack.c.l.b16 %v889
      %v908 = vunpack.c.l.b16 %v890
      %v909 = vunpack.c.l.b16 %v891
      %v910 = vunpack.c.l.b16 %v892
      %v911 = vpack.c.b16 %v904, %v903
      %v912 = vpack.c.b16 %v906, %v905
      %v913 = vpack.c.b16 %v908, %v907
      %v914 = vpack.c.b16 %v910, %v909
      %v916 = vsel %vm352, %v911, 0
      %v919 = vsel %vm352, %v912, 0
      %v922 = vsel %vm352, %v913, 0
      %v925 = vsel %vm352, %v914, 0
      %v928 = vsel %vm365, %v894, 0
      %930 = vmatprep.subr.bf16.mxu0 0
      %931 = vmatpush1.bf16.msra.mxu0 0
      %932 = vmatprep.subr.bf16.mxu0 0
      %933 = vmatpush1.bf16.msra.mxu0 0
      %934 = vmatprep.subr.bf16.mxu0 0
      %935 = vmatpush1.bf16.msra.mxu0 0
      %936 = vmatprep.subr.bf16.mxu0 0
      %937 = vmatpush1.bf16.msra.mxu0 0
      %938 = vmatprep.subr.bf16.mxu0 0
      %939 = vmatpush1.bf16.msra.mxu0 0
      %940 = vmatprep.subr.bf16.mxu0 0
      %941 = vmatpush1.bf16.msra.mxu0 0
      %942 = vmatprep.subr.bf16.mxu0 0
      %943 = vmatpush1.bf16.msra.mxu0 0
      %944 = vmatprep.subr.bf16.mxu0 0
      %945 = vmatpush1.bf16.msra.mxu0 %v928
      %946 = vmatprep.subr.bf16.mxu0 0
      %947 = vmatpush2.bf16.msra.mxu0 0
      %948 = vmatprep.subr.bf16.mxu0 0
      %949 = vmatpush2.bf16.msra.mxu0 0
      %950 = vmatprep.subr.bf16.mxu0 0
      %951 = vmatpush2.bf16.msra.mxu0 0
      %952 = vmatprep.subr.bf16.mxu0 0
      %953 = vmatpush2.bf16.msra.mxu0 0
      %954 = vmatprep.subr.bf16.mxu0 0
      %955 = vmatpush2.bf16.msra.mxu0 0
      %956 = vmatprep.subr.bf16.mxu0 0
      %957 = vmatpush2.bf16.msra.mxu0 0
      %958 = vmatprep.subr.bf16.mxu0 0
      %959 = vmatpush2.bf16.msra.mxu0 0
      %960 = vmatprep.subr.bf16.mxu0 0
      %961 = vmatpush2.bf16.msra.mxu0 0
      %962 = vmatprep.mubr.bf16.mxu0 0
      %963 = vmatmul.mubr.bf16.gmra.mxu0 %v916
      %v964 = vpop.f32.mrf.mxu0
      %v965 = vadd.f32 0.0, %v964
      %v966 = vpop.f32.mrf.mxu0
      %v967 = vpop.f32.mrf.mxu0
      %v968 = vadd.f32 0.0, %v967
      %v969 = vpop.f32.mrf.mxu0
      %970 = vmatprep.mubr.bf16.mxu0 0
      %971 = vmatmul.mubr.bf16.gmra.mxu0 %v919
      %v972 = vpop.f32.mrf.mxu0
      %v973 = vadd.f32 0.0, %v972
      %v974 = vpop.f32.mrf.mxu0
      %v975 = vpop.f32.mrf.mxu0
      %v976 = vadd.f32 0.0, %v975
      %v977 = vpop.f32.mrf.mxu0
      %978 = vmatprep.mubr.bf16.mxu0 0
      %979 = vmatmul.mubr.bf16.gmra.mxu0 %v922
      %v980 = vpop.f32.mrf.mxu0
      %v981 = vadd.f32 0.0, %v980
      %v982 = vpop.f32.mrf.mxu0
      %v983 = vpop.f32.mrf.mxu0
      %v984 = vadd.f32 0.0, %v983
      %v985 = vpop.f32.mrf.mxu0
      %986 = vmatprep.mubr.bf16.mxu0 0
      %987 = vmatmul.mubr.bf16.gmra.mxu0 %v925
      %v988 = vpop.f32.mrf.mxu0
      %v989 = vadd.f32 0.0, %v988
      %v990 = vpop.f32.mrf.mxu0
      %v991 = vpop.f32.mrf.mxu0
      %v992 = vadd.f32 0.0, %v991
      %v993 = vpop.f32.mrf.mxu0
      %994 = vdwg.mxu0
      %v995 = vadd.f32 %v877, %v965
      %v996 = vadd.f32 %v878, %v968
      %v997 = vadd.f32 %v879, %v973
      %v998 = vadd.f32 %v880, %v976
      %v999 = vadd.f32 %v881, %v981
      %v1000 = vadd.f32 %v882, %v984
      %v1001 = vadd.f32 %v883, %v989
      %v1002 = vadd.f32 %v884, %v992
      %v1003 = vld [vmem:[%s301] sm:$0xf]
      %v1004 = vld [vmem:[%s301 + $0x4] sm:$0x1]
      %v1005 = vld [vmem:[%s301 + $0x8] sm:$0xf]
      %v1006 = vld [vmem:[%s301 + $0xc] sm:$0x1]
      %v1007 = vld [vmem:[%s301 + $0x10] sm:$0xf]
      %v1008 = vld [vmem:[%s301 + $0x14] sm:$0x1]
      %v1009 = vld [vmem:[%s301 + $0x18] sm:$0xf]
      %v1010 = vld [vmem:[%s301 + $0x1c] sm:$0x1]
      %v1011 = vld [vmem:[%s301 + $0x20] sm:$0xf]
      %v1012 = vld [vmem:[%s301 + $0x24] sm:$0x1]
      %v1013 = vld [vmem:[%s301 + $0x28] sm:$0xf]
      %v1014 = vld [vmem:[%s301 + $0x2c] sm:$0x1]
      %v1015 = vld [vmem:[%s301 + $0x30] sm:$0xf]
      %v1016 = vld [vmem:[%s301 + $0x34] sm:$0x1]
      %v1017 = vld [vmem:[%s301 + $0x38] sm:$0xf]
      %v1018 = vld [vmem:[%s301 + $0x3c] sm:$0x1]
      %v1020 = vshrl.u32 %v1003, 16
      %v1022 = vrot.slane %v1020, 4
      %v1023 = vshll.u32 %v1003, 16
      %v1025 = vrot.slane %v1023, 5
      %v1026 = vor.u32 %v1022, %v1025
      %v1027 = vrot.slane %v1026, 4
      %v1029 = vshll.u32 %v1004, 16
      %v1031 = vrot.slane %v1029, 5
      %v1032 = vsel %vm552, %v1027, %v1031
      %v1034 = vshrl.u32 %v1005, 16
      %v1036 = vrot.slane %v1034, 4
      %v1037 = vshll.u32 %v1005, 16
      %v1039 = vrot.slane %v1037, 5
      %v1040 = vor.u32 %v1036, %v1039
      %v1041 = vrot.slane %v1040, 4
      %v1043 = vshll.u32 %v1006, 16
      %v1045 = vrot.slane %v1043, 5
      %v1046 = vsel %vm552, %v1041, %v1045
      %v1048 = vshrl.u32 %v1007, 16
      %v1050 = vrot.slane %v1048, 4
      %v1051 = vshll.u32 %v1007, 16
      %v1053 = vrot.slane %v1051, 5
      %v1054 = vor.u32 %v1050, %v1053
      %v1055 = vrot.slane %v1054, 4
      %v1057 = vshll.u32 %v1008, 16
      %v1059 = vrot.slane %v1057, 5
      %v1060 = vsel %vm552, %v1055, %v1059
      %v1062 = vshrl.u32 %v1009, 16
      %v1064 = vrot.slane %v1062, 4
      %v1065 = vshll.u32 %v1009, 16
      %v1067 = vrot.slane %v1065, 5
      %v1068 = vor.u32 %v1064, %v1067
      %v1069 = vrot.slane %v1068, 4
      %v1071 = vshll.u32 %v1010, 16
      %v1073 = vrot.slane %v1071, 5
      %v1074 = vsel %vm552, %v1069, %v1073
      %v1076 = vshrl.u32 %v1011, 16
      %v1078 = vrot.slane %v1076, 4
      %v1079 = vshll.u32 %v1011, 16
      %v1081 = vrot.slane %v1079, 5
      %v1082 = vor.u32 %v1078, %v1081
      %v1083 = vrot.slane %v1082, 4
      %v1085 = vshll.u32 %v1012, 16
      %v1087 = vrot.slane %v1085, 5
      %v1088 = vsel %vm552, %v1083, %v1087
      %v1090 = vshrl.u32 %v1013, 16
      %v1092 = vrot.slane %v1090, 4
      %v1093 = vshll.u32 %v1013, 16
      %v1095 = vrot.slane %v1093, 5
      %v1096 = vor.u32 %v1092, %v1095
      %v1097 = vrot.slane %v1096, 4
      %v1099 = vshll.u32 %v1014, 16
      %v1101 = vrot.slane %v1099, 5
      %v1102 = vsel %vm552, %v1097, %v1101
      %v1104 = vshrl.u32 %v1015, 16
      %v1106 = vrot.slane %v1104, 4
      %v1107 = vshll.u32 %v1015, 16
      %v1109 = vrot.slane %v1107, 5
      %v1110 = vor.u32 %v1106, %v1109
      %v1111 = vrot.slane %v1110, 4
      %v1113 = vshll.u32 %v1016, 16
      %v1115 = vrot.slane %v1113, 5
      %v1116 = vsel %vm552, %v1111, %v1115
      %v1118 = vshrl.u32 %v1017, 16
      %v1120 = vrot.slane %v1118, 4
      %v1121 = vshll.u32 %v1017, 16
      %v1123 = vrot.slane %v1121, 5
      %v1124 = vor.u32 %v1120, %v1123
      %v1125 = vrot.slane %v1124, 4
      %v1127 = vshll.u32 %v1018, 16
      %v1129 = vrot.slane %v1127, 5
      %v1130 = vsel %vm552, %v1125, %v1129
      %s1131 = scalar_lea.vmem %s4, 10
      %v1132 = vld [vmem:[%s1131] sm:$0x3]
      %v1133 = vunpack.c.l.b16 %v1032
      %v1134 = vunpack.c.l.b16 %v1046
      %v1135 = vunpack.c.l.b16 %v1060
      %v1136 = vunpack.c.l.b16 %v1074
      %v1137 = vunpack.c.l.b16 %v1088
      %v1138 = vunpack.c.l.b16 %v1102
      %v1139 = vunpack.c.l.b16 %v1116
      %v1140 = vunpack.c.l.b16 %v1130
      %v1141 = vpack.c.b16 %v1134, %v1133
      %v1142 = vpack.c.b16 %v1136, %v1135
      %v1143 = vpack.c.b16 %v1138, %v1137
      %v1144 = vpack.c.b16 %v1140, %v1139
      %v1146 = vsel %vm352, %v1141, 0
      %v1149 = vsel %vm352, %v1142, 0
      %v1152 = vsel %vm352, %v1143, 0
      %v1155 = vsel %vm352, %v1144, 0
      %v1158 = vsel %vm365, %v1132, 0
      %1160 = vmatprep.subr.bf16.mxu0 0
      %1161 = vmatpush1.bf16.msra.mxu0 0
      %1162 = vmatprep.subr.bf16.mxu0 0
      %1163 = vmatpush1.bf16.msra.mxu0 0
      %1164 = vmatprep.subr.bf16.mxu0 0
      %1165 = vmatpush1.bf16.msra.mxu0 0
      %1166 = vmatprep.subr.bf16.mxu0 0
      %1167 = vmatpush1.bf16.msra.mxu0 0
      %1168 = vmatprep.subr.bf16.mxu0 0
      %1169 = vmatpush1.bf16.msra.mxu0 0
      %1170 = vmatprep.subr.bf16.mxu0 0
      %1171 = vmatpush1.bf16.msra.mxu0 0
      %1172 = vmatprep.subr.bf16.mxu0 0
      %1173 = vmatpush1.bf16.msra.mxu0 0
      %1174 = vmatprep.subr.bf16.mxu0 0
      %1175 = vmatpush1.bf16.msra.mxu0 %v1158
      %1176 = vmatprep.subr.bf16.mxu0 0
      %1177 = vmatpush2.bf16.msra.mxu0 0
      %1178 = vmatprep.subr.bf16.mxu0 0
      %1179 = vmatpush2.bf16.msra.mxu0 0
      %1180 = vmatprep.subr.bf16.mxu0 0
      %1181 = vmatpush2.bf16.msra.mxu0 0
      %1182 = vmatprep.subr.bf16.mxu0 0
      %1183 = vmatpush2.bf16.msra.mxu0 0
      %1184 = vmatprep.subr.bf16.mxu0 0
      %1185 = vmatpush2.bf16.msra.mxu0 0
      %1186 = vmatprep.subr.bf16.mxu0 0
      %1187 = vmatpush2.bf16.msra.mxu0 0
      %1188 = vmatprep.subr.bf16.mxu0 0
      %1189 = vmatpush2.bf16.msra.mxu0 0
      %1190 = vmatprep.subr.bf16.mxu0 0
      %1191 = vmatpush2.bf16.msra.mxu0 0
      %1192 = vmatprep.mubr.bf16.mxu0 0
      %1193 = vmatmul.mubr.bf16.gmra.mxu0 %v1146
      %v1194 = vpop.f32.mrf.mxu0
      %v1195 = vadd.f32 0.0, %v1194
      %v1196 = vpop.f32.mrf.mxu0
      %v1197 = vpop.f32.mrf.mxu0
      %v1198 = vadd.f32 0.0, %v1197
      %v1199 = vpop.f32.mrf.mxu0
      %1200 = vmatprep.mubr.bf16.mxu0 0
      %1201 = vmatmul.mubr.bf16.gmra.mxu0 %v1149
      %v1202 = vpop.f32.mrf.mxu0
      %v1203 = vadd.f32 0.0, %v1202
      %v1204 = vpop.f32.mrf.mxu0
      %v1205 = vpop.f32.mrf.mxu0
      %v1206 = vadd.f32 0.0, %v1205
      %v1207 = vpop.f32.mrf.mxu0
      %1208 = vmatprep.mubr.bf16.mxu0 0
      %1209 = vmatmul.mubr.bf16.gmra.mxu0 %v1152
      %v1210 = vpop.f32.mrf.mxu0
      %v1211 = vadd.f32 0.0, %v1210
      %v1212 = vpop.f32.mrf.mxu0
      %v1213 = vpop.f32.mrf.mxu0
      %v1214 = vadd.f32 0.0, %v1213
      %v1215 = vpop.f32.mrf.mxu0
      %1216 = vmatprep.mubr.bf16.mxu0 0
      %1217 = vmatmul.mubr.bf16.gmra.mxu0 %v1155
      %v1218 = vpop.f32.mrf.mxu0
      %v1219 = vadd.f32 0.0, %v1218
      %v1220 = vpop.f32.mrf.mxu0
      %v1221 = vpop.f32.mrf.mxu0
      %v1222 = vadd.f32 0.0, %v1221
      %v1223 = vpop.f32.mrf.mxu0
      %1224 = vdwg.mxu0
      %v1225 = vadd.f32 %v995, %v1195
      %v1226 = vadd.f32 %v996, %v1198
      %v1227 = vadd.f32 %v997, %v1203
      %v1228 = vadd.f32 %v998, %v1206
      %v1229 = vadd.f32 %v999, %v1211
      %v1230 = vadd.f32 %v1000, %v1214
      %v1231 = vadd.f32 %v1001, %v1219
      %v1232 = vadd.f32 %v1002, %v1222
      %s1233 = scalar_lea.vmem %s291, 8
      %v1234 = vld [vmem:[%s1233] sm:$0xf]
      %v1235 = vld [vmem:[%s1233 + $0x8] sm:$0xf]
      %v1236 = vld [vmem:[%s1233 + $0x10] sm:$0xf]
      %v1237 = vld [vmem:[%s1233 + $0x18] sm:$0xf]
      %v1238 = vld [vmem:[%s1233 + $0x20] sm:$0xf]
      %v1239 = vld [vmem:[%s1233 + $0x28] sm:$0xf]
      %v1240 = vld [vmem:[%s1233 + $0x30] sm:$0xf]
      %v1241 = vld [vmem:[%s1233 + $0x38] sm:$0xf]
      %s1242 = scalar_lea.vmem %s4, 12
      %v1243 = vld [vmem:[%s1242] sm:$0x3]
      %v1252 = vunpack.c.l.b16 %v1234
      %v1253 = vunpack.c.l.b16 %v1235
      %v1254 = vunpack.c.l.b16 %v1236
      %v1255 = vunpack.c.l.b16 %v1237
      %v1256 = vunpack.c.l.b16 %v1238
      %v1257 = vunpack.c.l.b16 %v1239
      %v1258 = vunpack.c.l.b16 %v1240
      %v1259 = vunpack.c.l.b16 %v1241
      %v1260 = vpack.c.b16 %v1253, %v1252
      %v1261 = vpack.c.b16 %v1255, %v1254
      %v1262 = vpack.c.b16 %v1257, %v1256
      %v1263 = vpack.c.b16 %v1259, %v1258
      %v1265 = vsel %vm352, %v1260, 0
      %v1268 = vsel %vm352, %v1261, 0
      %v1271 = vsel %vm352, %v1262, 0
      %v1274 = vsel %vm352, %v1263, 0
      %v1277 = vsel %vm365, %v1243, 0
      %1279 = vmatprep.subr.bf16.mxu0 0
      %1280 = vmatpush1.bf16.msra.mxu0 0
      %1281 = vmatprep.subr.bf16.mxu0 0
      %1282 = vmatpush1.bf16.msra.mxu0 0
      %1283 = vmatprep.subr.bf16.mxu0 0
      %1284 = vmatpush1.bf16.msra.mxu0 0
      %1285 = vmatprep.subr.bf16.mxu0 0
      %1286 = vmatpush1.bf16.msra.mxu0 0
      %1287 = vmatprep.subr.bf16.mxu0 0
      %1288 = vmatpush1.bf16.msra.mxu0 0
      %1289 = vmatprep.subr.bf16.mxu0 0
      %1290 = vmatpush1.bf16.msra.mxu0 0
      %1291 = vmatprep.subr.bf16.mxu0 0
      %1292 = vmatpush1.bf16.msra.mxu0 0
      %1293 = vmatprep.subr.bf16.mxu0 0
      %1294 = vmatpush1.bf16.msra.mxu0 %v1277
      %1295 = vmatprep.subr.bf16.mxu0 0
      %1296 = vmatpush2.bf16.msra.mxu0 0
      %1297 = vmatprep.subr.bf16.mxu0 0
      %1298 = vmatpush2.bf16.msra.mxu0 0
      %1299 = vmatprep.subr.bf16.mxu0 0
      %1300 = vmatpush2.bf16.msra.mxu0 0
      %1301 = vmatprep.subr.bf16.mxu0 0
      %1302 = vmatpush2.bf16.msra.mxu0 0
      %1303 = vmatprep.subr.bf16.mxu0 0
      %1304 = vmatpush2.bf16.msra.mxu0 0
      %1305 = vmatprep.subr.bf16.mxu0 0
      %1306 = vmatpush2.bf16.msra.mxu0 0
      %1307 = vmatprep.subr.bf16.mxu0 0
      %1308 = vmatpush2.bf16.msra.mxu0 0
      %1309 = vmatprep.subr.bf16.mxu0 0
      %1310 = vmatpush2.bf16.msra.mxu0 0
      %1311 = vmatprep.mubr.bf16.mxu0 0
      %1312 = vmatmul.mubr.bf16.gmra.mxu0 %v1265
      %v1313 = vpop.f32.mrf.mxu0
      %v1314 = vadd.f32 0.0, %v1313
      %v1315 = vpop.f32.mrf.mxu0
      %v1316 = vpop.f32.mrf.mxu0
      %v1317 = vadd.f32 0.0, %v1316
      %v1318 = vpop.f32.mrf.mxu0
      %1319 = vmatprep.mubr.bf16.mxu0 0
      %1320 = vmatmul.mubr.bf16.gmra.mxu0 %v1268
      %v1321 = vpop.f32.mrf.mxu0
      %v1322 = vadd.f32 0.0, %v1321
      %v1323 = vpop.f32.mrf.mxu0
      %v1324 = vpop.f32.mrf.mxu0
      %v1325 = vadd.f32 0.0, %v1324
      %v1326 = vpop.f32.mrf.mxu0
      %1327 = vmatprep.mubr.bf16.mxu0 0
      %1328 = vmatmul.mubr.bf16.gmra.mxu0 %v1271
      %v1329 = vpop.f32.mrf.mxu0
      %v1330 = vadd.f32 0.0, %v1329
      %v1331 = vpop.f32.mrf.mxu0
      %v1332 = vpop.f32.mrf.mxu0
      %v1333 = vadd.f32 0.0, %v1332
      %v1334 = vpop.f32.mrf.mxu0
      %1335 = vmatprep.mubr.bf16.mxu0 0
      %1336 = vmatmul.mubr.bf16.gmra.mxu0 %v1274
      %v1337 = vpop.f32.mrf.mxu0
      %v1338 = vadd.f32 0.0, %v1337
      %v1339 = vpop.f32.mrf.mxu0
      %v1340 = vpop.f32.mrf.mxu0
      %v1341 = vadd.f32 0.0, %v1340
      %v1342 = vpop.f32.mrf.mxu0
      %1343 = vdwg.mxu0
      %v1344 = vadd.f32 %v1225, %v1314
      %v1345 = vadd.f32 %v1226, %v1317
      %v1346 = vadd.f32 %v1227, %v1322
      %v1347 = vadd.f32 %v1228, %v1325
      %v1348 = vadd.f32 %v1229, %v1330
      %v1349 = vadd.f32 %v1230, %v1333
      %v1350 = vadd.f32 %v1231, %v1338
      %v1351 = vadd.f32 %v1232, %v1341
      %s1352 = scalar_lea.vmem %s296, 8
      %v1353 = vld [vmem:[%s1352] sm:$0xf]
      %v1354 = vld [vmem:[%s1352 + $0x8] sm:$0xf]
      %v1355 = vld [vmem:[%s1352 + $0x10] sm:$0xf]
      %v1356 = vld [vmem:[%s1352 + $0x18] sm:$0xf]
      %v1357 = vld [vmem:[%s1352 + $0x20] sm:$0xf]
      %v1358 = vld [vmem:[%s1352 + $0x28] sm:$0xf]
      %v1359 = vld [vmem:[%s1352 + $0x30] sm:$0xf]
      %v1360 = vld [vmem:[%s1352 + $0x38] sm:$0xf]
      %s1361 = scalar_lea.vmem %s4, 14
      %v1362 = vld [vmem:[%s1361] sm:$0x3]
      %v1371 = vunpack.c.l.b16 %v1353
      %v1372 = vunpack.c.l.b16 %v1354
      %v1373 = vunpack.c.l.b16 %v1355
      %v1374 = vunpack.c.l.b16 %v1356
      %v1375 = vunpack.c.l.b16 %v1357
      %v1376 = vunpack.c.l.b16 %v1358
      %v1377 = vunpack.c.l.b16 %v1359
      %v1378 = vunpack.c.l.b16 %v1360
      %v1379 = vpack.c.b16 %v1372, %v1371
      %v1380 = vpack.c.b16 %v1374, %v1373
      %v1381 = vpack.c.b16 %v1376, %v1375
      %v1382 = vpack.c.b16 %v1378, %v1377
      %v1384 = vsel %vm352, %v1379, 0
      %v1387 = vsel %vm352, %v1380, 0
      %v1390 = vsel %vm352, %v1381, 0
      %v1393 = vsel %vm352, %v1382, 0
      %v1396 = vsel %vm365, %v1362, 0
      %1398 = vmatprep.subr.bf16.mxu0 0
      %1399 = vmatpush1.bf16.msra.mxu0 0
      %1400 = vmatprep.subr.bf16.mxu0 0
      %1401 = vmatpush1.bf16.msra.mxu0 0
      %1402 = vmatprep.subr.bf16.mxu0 0
      %1403 = vmatpush1.bf16.msra.mxu0 0
      %1404 = vmatprep.subr.bf16.mxu0 0
      %1405 = vmatpush1.bf16.msra.mxu0 0
      %1406 = vmatprep.subr.bf16.mxu0 0
      %1407 = vmatpush1.bf16.msra.mxu0 0
      %1408 = vmatprep.subr.bf16.mxu0 0
      %1409 = vmatpush1.bf16.msra.mxu0 0
      %1410 = vmatprep.subr.bf16.mxu0 0
      %1411 = vmatpush1.bf16.msra.mxu0 0
      %1412 = vmatprep.subr.bf16.mxu0 0
      %1413 = vmatpush1.bf16.msra.mxu0 %v1396
      %1414 = vmatprep.subr.bf16.mxu0 0
      %1415 = vmatpush2.bf16.msra.mxu0 0
      %1416 = vmatprep.subr.bf16.mxu0 0
      %1417 = vmatpush2.bf16.msra.mxu0 0
      %1418 = vmatprep.subr.bf16.mxu0 0
      %1419 = vmatpush2.bf16.msra.mxu0 0
      %1420 = vmatprep.subr.bf16.mxu0 0
      %1421 = vmatpush2.bf16.msra.mxu0 0
      %1422 = vmatprep.subr.bf16.mxu0 0
      %1423 = vmatpush2.bf16.msra.mxu0 0
      %1424 = vmatprep.subr.bf16.mxu0 0
      %1425 = vmatpush2.bf16.msra.mxu0 0
      %1426 = vmatprep.subr.bf16.mxu0 0
      %1427 = vmatpush2.bf16.msra.mxu0 0
      %1428 = vmatprep.subr.bf16.mxu0 0
      %1429 = vmatpush2.bf16.msra.mxu0 0
      %1430 = vmatprep.mubr.bf16.mxu0 0
      %1431 = vmatmul.mubr.bf16.gmra.mxu0 %v1384
      %v1432 = vpop.f32.mrf.mxu0
      %v1433 = vadd.f32 0.0, %v1432
      %v1434 = vpop.f32.mrf.mxu0
      %v1435 = vpop.f32.mrf.mxu0
      %v1436 = vadd.f32 0.0, %v1435
      %v1437 = vpop.f32.mrf.mxu0
      %1438 = vmatprep.mubr.bf16.mxu0 0
      %1439 = vmatmul.mubr.bf16.gmra.mxu0 %v1387
      %v1440 = vpop.f32.mrf.mxu0
      %v1441 = vadd.f32 0.0, %v1440
      %v1442 = vpop.f32.mrf.mxu0
      %v1443 = vpop.f32.mrf.mxu0
      %v1444 = vadd.f32 0.0, %v1443
      %v1445 = vpop.f32.mrf.mxu0
      %1446 = vmatprep.mubr.bf16.mxu0 0
      %1447 = vmatmul.mubr.bf16.gmra.mxu0 %v1390
      %v1448 = vpop.f32.mrf.mxu0
      %v1449 = vadd.f32 0.0, %v1448
      %v1450 = vpop.f32.mrf.mxu0
      %v1451 = vpop.f32.mrf.mxu0
      %v1452 = vadd.f32 0.0, %v1451
      %v1453 = vpop.f32.mrf.mxu0
      %1454 = vmatprep.mubr.bf16.mxu0 0
      %1455 = vmatmul.mubr.bf16.gmra.mxu0 %v1393
      %v1456 = vpop.f32.mrf.mxu0
      %v1457 = vadd.f32 0.0, %v1456
      %v1458 = vpop.f32.mrf.mxu0
      %v1459 = vpop.f32.mrf.mxu0
      %v1460 = vadd.f32 0.0, %v1459
      %v1461 = vpop.f32.mrf.mxu0
      %1462 = vdwg.mxu0
      %v1463 = vadd.f32 %v1344, %v1433
      %v1464 = vadd.f32 %v1345, %v1436
      %v1465 = vadd.f32 %v1346, %v1441
      %v1466 = vadd.f32 %v1347, %v1444
      %v1467 = vadd.f32 %v1348, %v1449
      %v1468 = vadd.f32 %v1349, %v1452
      %v1469 = vadd.f32 %v1350, %v1457
      %v1470 = vadd.f32 %v1351, %v1460
      %v1471 = vld [vmem:[%s1233] sm:$0xf]
      %v1472 = vld [vmem:[%s1233 + $0x4] sm:$0x1]
      %v1473 = vld [vmem:[%s1233 + $0x8] sm:$0xf]
      %v1474 = vld [vmem:[%s1233 + $0xc] sm:$0x1]
      %v1475 = vld [vmem:[%s1233 + $0x10] sm:$0xf]
      %v1476 = vld [vmem:[%s1233 + $0x14] sm:$0x1]
      %v1477 = vld [vmem:[%s1233 + $0x18] sm:$0xf]
      %v1478 = vld [vmem:[%s1233 + $0x1c] sm:$0x1]
      %v1479 = vld [vmem:[%s1233 + $0x20] sm:$0xf]
      %v1480 = vld [vmem:[%s1233 + $0x24] sm:$0x1]
      %v1481 = vld [vmem:[%s1233 + $0x28] sm:$0xf]
      %v1482 = vld [vmem:[%s1233 + $0x2c] sm:$0x1]
      %v1483 = vld [vmem:[%s1233 + $0x30] sm:$0xf]
      %v1484 = vld [vmem:[%s1233 + $0x34] sm:$0x1]
      %v1485 = vld [vmem:[%s1233 + $0x38] sm:$0xf]
      %v1486 = vld [vmem:[%s1233 + $0x3c] sm:$0x1]
      %v1488 = vshrl.u32 %v1471, 16
      %v1490 = vrot.slane %v1488, 4
      %v1491 = vshll.u32 %v1471, 16
      %v1493 = vrot.slane %v1491, 5
      %v1494 = vor.u32 %v1490, %v1493
      %v1495 = vrot.slane %v1494, 4
      %v1497 = vshll.u32 %v1472, 16
      %v1499 = vrot.slane %v1497, 5
      %v1500 = vsel %vm552, %v1495, %v1499
      %v1502 = vshrl.u32 %v1473, 16
      %v1504 = vrot.slane %v1502, 4
      %v1505 = vshll.u32 %v1473, 16
      %v1507 = vrot.slane %v1505, 5
      %v1508 = vor.u32 %v1504, %v1507
      %v1509 = vrot.slane %v1508, 4
      %v1511 = vshll.u32 %v1474, 16
      %v1513 = vrot.slane %v1511, 5
      %v1514 = vsel %vm552, %v1509, %v1513
      %v1516 = vshrl.u32 %v1475, 16
      %v1518 = vrot.slane %v1516, 4
      %v1519 = vshll.u32 %v1475, 16
      %v1521 = vrot.slane %v1519, 5
      %v1522 = vor.u32 %v1518, %v1521
      %v1523 = vrot.slane %v1522, 4
      %v1525 = vshll.u32 %v1476, 16
      %v1527 = vrot.slane %v1525, 5
      %v1528 = vsel %vm552, %v1523, %v1527
      %v1530 = vshrl.u32 %v1477, 16
      %v1532 = vrot.slane %v1530, 4
      %v1533 = vshll.u32 %v1477, 16
      %v1535 = vrot.slane %v1533, 5
      %v1536 = vor.u32 %v1532, %v1535
      %v1537 = vrot.slane %v1536, 4
      %v1539 = vshll.u32 %v1478, 16
      %v1541 = vrot.slane %v1539, 5
      %v1542 = vsel %vm552, %v1537, %v1541
      %v1544 = vshrl.u32 %v1479, 16
      %v1546 = vrot.slane %v1544, 4
      %v1547 = vshll.u32 %v1479, 16
      %v1549 = vrot.slane %v1547, 5
      %v1550 = vor.u32 %v1546, %v1549
      %v1551 = vrot.slane %v1550, 4
      %v1553 = vshll.u32 %v1480, 16
      %v1555 = vrot.slane %v1553, 5
      %v1556 = vsel %vm552, %v1551, %v1555
      %v1558 = vshrl.u32 %v1481, 16
      %v1560 = vrot.slane %v1558, 4
      %v1561 = vshll.u32 %v1481, 16
      %v1563 = vrot.slane %v1561, 5
      %v1564 = vor.u32 %v1560, %v1563
      %v1565 = vrot.slane %v1564, 4
      %v1567 = vshll.u32 %v1482, 16
      %v1569 = vrot.slane %v1567, 5
      %v1570 = vsel %vm552, %v1565, %v1569
      %v1572 = vshrl.u32 %v1483, 16
      %v1574 = vrot.slane %v1572, 4
      %v1575 = vshll.u32 %v1483, 16
      %v1577 = vrot.slane %v1575, 5
      %v1578 = vor.u32 %v1574, %v1577
      %v1579 = vrot.slane %v1578, 4
      %v1581 = vshll.u32 %v1484, 16
      %v1583 = vrot.slane %v1581, 5
      %v1584 = vsel %vm552, %v1579, %v1583
      %v1586 = vshrl.u32 %v1485, 16
      %v1588 = vrot.slane %v1586, 4
      %v1589 = vshll.u32 %v1485, 16
      %v1591 = vrot.slane %v1589, 5
      %v1592 = vor.u32 %v1588, %v1591
      %v1593 = vrot.slane %v1592, 4
      %v1595 = vshll.u32 %v1486, 16
      %v1597 = vrot.slane %v1595, 5
      %v1598 = vsel %vm552, %v1593, %v1597
      %s1599 = scalar_lea.vmem %s4, 16
      %v1600 = vld [vmem:[%s1599] sm:$0x3]
      %v1601 = vunpack.c.l.b16 %v1500
      %v1602 = vunpack.c.l.b16 %v1514
      %v1603 = vunpack.c.l.b16 %v1528
      %v1604 = vunpack.c.l.b16 %v1542
      %v1605 = vunpack.c.l.b16 %v1556
      %v1606 = vunpack.c.l.b16 %v1570
      %v1607 = vunpack.c.l.b16 %v1584
      %v1608 = vunpack.c.l.b16 %v1598
      %v1609 = vpack.c.b16 %v1602, %v1601
      %v1610 = vpack.c.b16 %v1604, %v1603
      %v1611 = vpack.c.b16 %v1606, %v1605
      %v1612 = vpack.c.b16 %v1608, %v1607
      %v1614 = vsel %vm352, %v1609, 0
      %v1617 = vsel %vm352, %v1610, 0
      %v1620 = vsel %vm352, %v1611, 0
      %v1623 = vsel %vm352, %v1612, 0
      %v1626 = vsel %vm365, %v1600, 0
      %1628 = vmatprep.subr.bf16.mxu0 0
      %1629 = vmatpush1.bf16.msra.mxu0 0
      %1630 = vmatprep.subr.bf16.mxu0 0
      %1631 = vmatpush1.bf16.msra.mxu0 0
      %1632 = vmatprep.subr.bf16.mxu0 0
      %1633 = vmatpush1.bf16.msra.mxu0 0
      %1634 = vmatprep.subr.bf16.mxu0 0
      %1635 = vmatpush1.bf16.msra.mxu0 0
      %1636 = vmatprep.subr.bf16.mxu0 0
      %1637 = vmatpush1.bf16.msra.mxu0 0
      %1638 = vmatprep.subr.bf16.mxu0 0
      %1639 = vmatpush1.bf16.msra.mxu0 0
      %1640 = vmatprep.subr.bf16.mxu0 0
      %1641 = vmatpush1.bf16.msra.mxu0 0
      %1642 = vmatprep.subr.bf16.mxu0 0
      %1643 = vmatpush1.bf16.msra.mxu0 %v1626
      %1644 = vmatprep.subr.bf16.mxu0 0
      %1645 = vmatpush2.bf16.msra.mxu0 0
      %1646 = vmatprep.subr.bf16.mxu0 0
      %1647 = vmatpush2.bf16.msra.mxu0 0
      %1648 = vmatprep.subr.bf16.mxu0 0
      %1649 = vmatpush2.bf16.msra.mxu0 0
      %1650 = vmatprep.subr.bf16.mxu0 0
      %1651 = vmatpush2.bf16.msra.mxu0 0
      %1652 = vmatprep.subr.bf16.mxu0 0
      %1653 = vmatpush2.bf16.msra.mxu0 0
      %1654 = vmatprep.subr.bf16.mxu0 0
      %1655 = vmatpush2.bf16.msra.mxu0 0
      %1656 = vmatprep.subr.bf16.mxu0 0
      %1657 = vmatpush2.bf16.msra.mxu0 0
      %1658 = vmatprep.subr.bf16.mxu0 0
      %1659 = vmatpush2.bf16.msra.mxu0 0
      %1660 = vmatprep.mubr.bf16.mxu0 0
      %1661 = vmatmul.mubr.bf16.gmra.mxu0 %v1614
      %v1662 = vpop.f32.mrf.mxu0
      %v1663 = vadd.f32 0.0, %v1662
      %v1664 = vpop.f32.mrf.mxu0
      %v1665 = vpop.f32.mrf.mxu0
      %v1666 = vadd.f32 0.0, %v1665
      %v1667 = vpop.f32.mrf.mxu0
      %1668 = vmatprep.mubr.bf16.mxu0 0
      %1669 = vmatmul.mubr.bf16.gmra.mxu0 %v1617
      %v1670 = vpop.f32.mrf.mxu0
      %v1671 = vadd.f32 0.0, %v1670
      %v1672 = vpop.f32.mrf.mxu0
      %v1673 = vpop.f32.mrf.mxu0
      %v1674 = vadd.f32 0.0, %v1673
      %v1675 = vpop.f32.mrf.mxu0
      %1676 = vmatprep.mubr.bf16.mxu0 0
      %1677 = vmatmul.mubr.bf16.gmra.mxu0 %v1620
      %v1678 = vpop.f32.mrf.mxu0
      %v1679 = vadd.f32 0.0, %v1678
      %v1680 = vpop.f32.mrf.mxu0
      %v1681 = vpop.f32.mrf.mxu0
      %v1682 = vadd.f32 0.0, %v1681
      %v1683 = vpop.f32.mrf.mxu0
      %1684 = vmatprep.mubr.bf16.mxu0 0
      %1685 = vmatmul.mubr.bf16.gmra.mxu0 %v1623
      %v1686 = vpop.f32.mrf.mxu0
      %v1687 = vadd.f32 0.0, %v1686
      %v1688 = vpop.f32.mrf.mxu0
      %v1689 = vpop.f32.mrf.mxu0
      %v1690 = vadd.f32 0.0, %v1689
      %v1691 = vpop.f32.mrf.mxu0
      %1692 = vdwg.mxu0
      %v1693 = vadd.f32 %v1463, %v1663
      %v1694 = vadd.f32 %v1464, %v1666
      %v1695 = vadd.f32 %v1465, %v1671
      %v1696 = vadd.f32 %v1466, %v1674
      %v1697 = vadd.f32 %v1467, %v1679
      %v1698 = vadd.f32 %v1468, %v1682
      %v1699 = vadd.f32 %v1469, %v1687
      %v1700 = vadd.f32 %v1470, %v1690
      %v1701 = vld [vmem:[%s5] sm:$0x1]
      %v1703 = vlaneseq
      %v1704 = vshrl.u32 %v1703, 7
      %v1705 = vsub.s32 0, %v1704
      %v1706 = vrot.slane %v1701, %v1705
      %v1708 = vadd.f32 %v1693, %v1706
      %v1709 = vadd.f32 %v1694, %v1706
      %v1710 = vadd.f32 %v1695, %v1706
      %v1711 = vadd.f32 %v1696, %v1706
      %v1712 = vadd.f32 %v1697, %v1706
      %v1713 = vadd.f32 %v1698, %v1706
      %v1714 = vadd.f32 %v1699, %v1706
      %v1715 = vadd.f32 %v1700, %v1706
      %v1716 = vmax.f32 %v1708, 0.0
      %v1717 = vmax.f32 %v1709, 0.0
      %v1718 = vmax.f32 %v1710, 0.0
      %v1719 = vmax.f32 %v1711, 0.0
      %v1720 = vmax.f32 %v1712, 0.0
      %v1721 = vmax.f32 %v1713, 0.0
      %v1722 = vmax.f32 %v1714, 0.0
      %v1723 = vmax.f32 %v1715, 0.0
      %v1724 = vpack.c.bf16 %v1717, %v1716
      %v1725 = vpack.c.bf16 %v1719, %v1718
      %v1726 = vpack.c.bf16 %v1721, %v1720
      %v1727 = vpack.c.bf16 %v1723, %v1722
      %v1732 = vunpack.c.l.b16 %v1724
      %v1733 = vunpack.c.h.b16 %v1724
      %v1734 = vunpack.c.l.b16 %v1725
      %v1735 = vunpack.c.h.b16 %v1725
      %v1736 = vunpack.c.l.b16 %v1726
      %v1737 = vunpack.c.h.b16 %v1726
      %v1738 = vunpack.c.l.b16 %v1727
      %v1739 = vunpack.c.h.b16 %v1727
      %v1740 = vpack.c.b16 %v1732, %v1732
      %v1741 = vpack.c.b16 %v1733, %v1733
      %v1742 = vpack.c.b16 %v1734, %v1734
      %v1743 = vpack.c.b16 %v1735, %v1735
      %v1744 = vpack.c.b16 %v1736, %v1736
      %v1745 = vpack.c.b16 %v1737, %v1737
      %v1746 = vpack.c.b16 %v1738, %v1738
      %v1747 = vpack.c.b16 %v1739, %v1739
      %1756 = vst [vmem:[%s311] sm:$0xf] %v1740
      %1757 = vst [vmem:[%s311 + $0x4] sm:$0xf] %v1741
      %1758 = vst [vmem:[%s311 + $0x8] sm:$0xf] %v1742
      %1759 = vst [vmem:[%s311 + $0xc] sm:$0xf] %v1743
      %1760 = vst [vmem:[%s311 + $0x10] sm:$0xf] %v1744
      %1761 = vst [vmem:[%s311 + $0x14] sm:$0xf] %v1745
      %1762 = vst [vmem:[%s311 + $0x18] sm:$0xf] %v1746
      %1763 = vst [vmem:[%s311 + $0x1c] sm:$0xf] %v1747
      %p1764 = scmp.lt.s32.totalorder %s17, 1
      %s1765 = scalar_select %p1764, %s17, 1
      %s1766 = smul.addr %s1765, 8
      %s1767 = smul.addr %s1766, 4
      %s1768 = scalar_lea.vmem %s6, %s1767
      // Predicated region
      $region45: #{jetseg_forward.3} parent=43 // pred_check
        %p1769 = pneg %p181
      $region46: #{jetseg_forward.3} parent=43 // pred_check_branch
        %1771 = sbr.rel (%p1769) target = $region48
      $region47: #{jetseg_forward.3} parent=43 // pred_region
        _
      $region48: #{jetseg_forward.3} parent=43 // pred_fallthru
        _
    $region44: #{jetseg_forward.3} parent=5 // pred_fallthru
      _
    %p1772 = scmp.le.s32.totalorder 2, %s12
    // Predicated region
    $region49: #{jetseg_forward.3} parent=5 // pred_check
      %p1773 = pneg %p1772
    $region50: #{jetseg_forward.3} parent=5 // pred_check_branch
      %1775 = sbr.rel (%p1773) target = $region52
    $region51: #{jetseg_forward.3} parent=5 // pred_region
      %s1776 = ssub.s32 %s12, 2
      // Predicated region
      $region53: #{jetseg_forward.3} parent=51 // pred_check
        %p1777 = pneg %p187
      $region54: #{jetseg_forward.3} parent=51 // pred_check_branch
        %1779 = sbr.rel (%p1777) target = $region56
      $region55: #{jetseg_forward.3} parent=51 // pred_region
        %p1780 = scmp.lt.s32.totalorder %s18, 1
        %s1781 = scalar_select %p1780, %s18, 1
        %s1782 = smul.addr %s1781, 8
        %s1783 = smul.addr %s1782, 4
        %s1784 = scalar_lea.vmem %s6, %s1783
      $region56: #{jetseg_forward.3} parent=51 // pred_fallthru
        _
    $region52: #{jetseg_forward.3} parent=5 // pred_fallthru
      _
  $region6: #{jetseg_forward.3} parent=0 // loop_footer
    %s16 = sadd.s32 1, %s12
  $region7: #{jetseg_forward.3} parent=0 // loop_footer_branch
    %11 = sbr.rel target = $region3
  $region8: #{jetseg_forward.3} parent=0 // loop_exit
    _

// kernel: jetseg_forward.4
$region0: #{jetseg_forward.4}
  #allocation0 [shape = 'u32[]', space=smem, size = 0x4, offset = 0x4, fixed_abs, tag = 'smem constant byte address 0x4 - core index']
  #allocation1 [shape = 'u32[144,128]{1,0:T(1,128)}', space=vmem, size = 0x12000, scoped, tag = 'internal scratch']
  %s0 = inlined_call_operand.vmem [shape: bf16[2,5,5,128], index: 0, kind: input, shape index: {}]
  %s1 = inlined_call_operand.vmem [shape: bf16[2,5,5,128], index: 1, kind: input, shape index: {}]
  %s2 = inlined_call_operand.vmem [shape: bf16[2,5,5,128], index: 2, kind: input, shape index: {}]
  %s3 = inlined_call_operand.vmem [shape: bf16[2,5,5,128], index: 3, kind: input, shape index: {}]
  %s4 = inlined_call_operand.vmem [shape: bf16[3,3,128,128], index: 4, kind: input, shape index: {}]
  %s5 = inlined_call_operand.vmem [shape: f32[1,128], index: 5, kind: input, shape index: {}]
  %s6 = inlined_call_operand.vmem [shape: bf16[2,16,128], index: 6, kind: output, shape index: {}]
  %s7 = sld [smem:[#allocation0]]
  $region57: #{jetseg_forward.4} parent=0
    _
  %s9 = ssub.s32 1, %s7
  %s10 = scalar_select 0, %s9, %s7
  loop: start=0, step=1, limit=4
  $region2: #{jetseg_forward.4} parent=0 // loop_pre_header
    _
  $region3: #{jetseg_forward.4} parent=0 // loop_header
    %s12 = sphi 0, %s16
    %p13 = scmp.ge.s32.totalorder %s12, 4
    %s22 = sphi 0, %s24
    %s25 = sphi 0, %s22
    %s26 = sphi 0, %s25
    %s42 = sphi 0, %s26
    %s48 = sphi 0, %s50
    %s51 = sphi 0, %s48
    %s52 = sphi 0, %s51
    %s68 = sphi 0, %s52
    %s74 = sphi 0, %s76
    %s77 = sphi 0, %s74
    %s78 = sphi 0, %s77
    %s94 = sphi 0, %s78
    %s100 = sphi 0, %s102
    %s103 = sphi 0, %s100
    %s104 = sphi 0, %s103
    %s120 = sphi 0, %s104
    %s124 = sphi 0, %s124
    %s126 = sphi 0, %s124
    %s127 = sphi 0, %s126
    %s141 = sphi 0, %s127
    %s145 = sphi 0, %s145
    %s147 = sphi 0, %s145
    %s148 = sphi 0, %s147
    %s162 = sphi 0, %s148
    %s168 = sphi 0, %s170
    %s171 = sphi 0, %s168
    %s172 = sphi 0, %s171
    %s188 = sphi 0, %s172
  $region4: #{jetseg_forward.4} parent=0 // loop_header_branch
    %15 = sbr.rel (%p13) target = $region8
  $region5: #{jetseg_forward.4} parent=0 // loop_body
    %s17 = ssub.s32 %s12, 1
    %s18 = ssub.s32 %s12, 2
    %s19 = sadd.s32 %s12, 1
    %s20 = ssub.s32 %s12, %s19
    %p21 = scmp.eq.s32.totalorder %s20, 0
    %s23 = sadd.s32 %s22, 1
    %s24 = scalar_select %p21, %s22, %s23
    %p27 = pneg %p21
    %p28 = scmp.eq.s32.totalorder %s12, 1
    %p29 = por %p27, %p28
    %p30 = scmp.ne.s32.totalorder %s22, %s25
    %p31 = scmp.eq.s32.totalorder %s12, 0
    %p32 = por %p30, %p31
    %p33 = scmp.ne.s32.totalorder %s22, %s25
    %p34 = scmp.eq.s32.totalorder %s17, 1
    %p35 = por %p33, %p34
    %p36 = scmp.ne.s32.totalorder %s25, %s26
    %p37 = scmp.eq.s32.totalorder %s17, 0
    %p38 = por %p36, %p37
    %p39 = scmp.ne.s32.totalorder %s25, %s26
    %p40 = scmp.eq.s32.totalorder %s18, 1
    %p41 = por %p39, %p40
    %p43 = scmp.ne.s32.totalorder %s26, %s42
    %p44 = scmp.eq.s32.totalorder %s18, 0
    %p45 = por %p43, %p44
    %s46 = ssub.s32 %s12, %s19
    %p47 = scmp.eq.s32.totalorder %s46, 0
    %s49 = sadd.s32 %s48, 1
    %s50 = scalar_select %p47, %s48, %s49
    %p53 = pneg %p47
    %p54 = scmp.eq.s32.totalorder %s12, 1
    %p55 = por %p53, %p54
    %p56 = scmp.ne.s32.totalorder %s48, %s51
    %p57 = scmp.eq.s32.totalorder %s12, 0
    %p58 = por %p56, %p57
    %p59 = scmp.ne.s32.totalorder %s48, %s51
    %p60 = scmp.eq.s32.totalorder %s17, 1
    %p61 = por %p59, %p60
    %p62 = scmp.ne.s32.totalorder %s51, %s52
    %p63 = scmp.eq.s32.totalorder %s17, 0
    %p64 = por %p62, %p63
    %p65 = scmp.ne.s32.totalorder %s51, %s52
    %p66 = scmp.eq.s32.totalorder %s18, 1
    %p67 = por %p65, %p66
    %p69 = scmp.ne.s32.totalorder %s52, %s68
    %p70 = scmp.eq.s32.totalorder %s18, 0
    %p71 = por %p69, %p70
    %s72 = ssub.s32 %s12, %s19
    %p73 = scmp.eq.s32.totalorder %s72, 0
    %s75 = sadd.s32 %s74, 1
    %s76 = scalar_select %p73, %s74, %s75
    %p79 = pneg %p73
    %p80 = scmp.eq.s32.totalorder %s12, 1
    %p81 = por %p79, %p80
    %p82 = scmp.ne.s32.totalorder %s74, %s77
    %p83 = scmp.eq.s32.totalorder %s12, 0
    %p84 = por %p82, %p83
    %p85 = scmp.ne.s32.totalorder %s74, %s77
    %p86 = scmp.eq.s32.totalorder %s17, 1
    %p87 = por %p85, %p86
    %p88 = scmp.ne.s32.totalorder %s77, %s78
    %p89 = scmp.eq.s32.totalorder %s17, 0
    %p90 = por %p88, %p89
    %p91 = scmp.ne.s32.totalorder %s77, %s78
    %p92 = scmp.eq.s32.totalorder %s18, 1
    %p93 = por %p91, %p92
    %p95 = scmp.ne.s32.totalorder %s78, %s94
    %p96 = scmp.eq.s32.totalorder %s18, 0
    %p97 = por %p95, %p96
    %s98 = ssub.s32 %s12, %s19
    %p99 = scmp.eq.s32.totalorder %s98, 0
    %s101 = sadd.s32 %s100, 1
    %s102 = scalar_select %p99, %s100, %s101
    %p105 = pneg %p99
    %p106 = scmp.eq.s32.totalorder %s12, 1
    %p107 = por %p105, %p106
    %p108 = scmp.ne.s32.totalorder %s100, %s103
    %p109 = scmp.eq.s32.totalorder %s12, 0
    %p110 = por %p108, %p109
    %p111 = scmp.ne.s32.totalorder %s100, %s103
    %p112 = scmp.eq.s32.totalorder %s17, 1
    %p113 = por %p111, %p112
    %p114 = scmp.ne.s32.totalorder %s103, %s104
    %p115 = scmp.eq.s32.totalorder %s17, 0
    %p116 = por %p114, %p115
    %p117 = scmp.ne.s32.totalorder %s103, %s104
    %p118 = scmp.eq.s32.totalorder %s18, 1
    %p119 = por %p117, %p118
    %p121 = scmp.ne.s32.totalorder %s104, %s120
    %p122 = scmp.eq.s32.totalorder %s18, 0
    %p123 = por %p121, %p122
    %s125 = sadd.s32 %s124, 1
    %p128 = scmp.eq.s32.totalorder %s12, 1
    %p129 = scmp.ne.s32.totalorder %s124, %s126
    %p130 = scmp.eq.s32.totalorder %s12, 0
    %p131 = por %p129, %p130
    %p132 = scmp.ne.s32.totalorder %s124, %s126
    %p133 = scmp.eq.s32.totalorder %s17, 1
    %p134 = por %p132, %p133
    %p135 = scmp.ne.s32.totalorder %s126, %s127
    %p136 = scmp.eq.s32.totalorder %s17, 0
    %p137 = por %p135, %p136
    %p138 = scmp.ne.s32.totalorder %s126, %s127
    %p139 = scmp.eq.s32.totalorder %s18, 1
    %p140 = por %p138, %p139
    %p142 = scmp.ne.s32.totalorder %s127, %s141
    %p143 = scmp.eq.s32.totalorder %s18, 0
    %p144 = por %p142, %p143
    %s146 = sadd.s32 %s145, 1
    %p149 = scmp.eq.s32.totalorder %s12, 1
    %p150 = scmp.ne.s32.totalorder %s145, %s147
    %p151 = scmp.eq.s32.totalorder %s12, 0
    %p152 = por %p150, %p151
    %p153 = scmp.ne.s32.totalorder %s145, %s147
    %p154 = scmp.eq.s32.totalorder %s17, 1
    %p155 = por %p153, %p154
    %p156 = scmp.ne.s32.totalorder %s147, %s148
    %p157 = scmp.eq.s32.totalorder %s17, 0
    %p158 = por %p156, %p157
    %p159 = scmp.ne.s32.totalorder %s147, %s148
    %p160 = scmp.eq.s32.totalorder %s18, 1
    %p161 = por %p159, %p160
    %p163 = scmp.ne.s32.totalorder %s148, %s162
    %p164 = scmp.eq.s32.totalorder %s18, 0
    %p165 = por %p163, %p164
    %s166 = ssub.s32 %s12, %s19
    %p167 = scmp.eq.s32.totalorder %s166, 0
    %s169 = sadd.s32 %s168, 1
    %s170 = scalar_select %p167, %s168, %s169
    %p173 = pneg %p167
    %p174 = scmp.eq.s32.totalorder %s12, 1
    %p175 = por %p173, %p174
    %p176 = scmp.ne.s32.totalorder %s168, %s171
    %p177 = scmp.eq.s32.totalorder %s12, 0
    %p178 = por %p176, %p177
    %p179 = scmp.ne.s32.totalorder %s168, %s171
    %p180 = scmp.eq.s32.totalorder %s17, 1
    %p181 = por %p179, %p180
    %p182 = scmp.ne.s32.totalorder %s171, %s172
    %p183 = scmp.eq.s32.totalorder %s17, 0
    %p184 = por %p182, %p183
    %p185 = scmp.ne.s32.totalorder %s171, %s172
    %p186 = scmp.eq.s32.totalorder %s18, 1
    %p187 = por %p185, %p186
    %p189 = scmp.ne.s32.totalorder %s172, %s188
    %p190 = scmp.eq.s32.totalorder %s18, 0
    %p191 = por %p189, %p190
    %p192 = scmp.le.s32.totalorder 1, %s12
    %p193 = scmp.lt.s32.totalorder %s12, 3
    %p194 = pnand %p192, %p193
    %p195 = pneg %p194
    // Predicated region
    $region9: #{jetseg_forward.4} parent=5 // pred_check
      _
    $region10: #{jetseg_forward.4} parent=5 // pred_check_branch
      %197 = sbr.rel (%p194) target = $region12
    $region11: #{jetseg_forward.4} parent=5 // pred_region
      %s198 = ssub.s32 %s12, 1
      // Predicated region
      $region13: #{jetseg_forward.4} parent=11 // pred_check
        %p199 = pneg %p137
      $region14: #{jetseg_forward.4} parent=11 // pred_check_branch
        %201 = sbr.rel (%p199) target = $region16
      $region15: #{jetseg_forward.4} parent=11 // pred_region
        _
      $region16: #{jetseg_forward.4} parent=11 // pred_fallthru
        _
      // Predicated region
      $region17: #{jetseg_forward.4} parent=11 // pred_check
        %p202 = pneg %p158
      $region18: #{jetseg_forward.4} parent=11 // pred_check_branch
        %204 = sbr.rel (%p202) target = $region20
      $region19: #{jetseg_forward.4} parent=11 // pred_region
        _
      $region20: #{jetseg_forward.4} parent=11 // pred_fallthru
        _
    $region12: #{jetseg_forward.4} parent=5 // pred_fallthru
      _
    %p205 = scmp.lt.s32.totalorder %s12, 2
    // Predicated region
    $region21: #{jetseg_forward.4} parent=5 // pred_check
      %p206 = pneg %p205
    $region22: #{jetseg_forward.4} parent=5 // pred_check_branch
      %208 = sbr.rel (%p206) target = $region24
    $region23: #{jetseg_forward.4} parent=5 // pred_region
      // Predicated region
      $region25: #{jetseg_forward.4} parent=23 // pred_check
        %p209 = pneg %p32
      $region26: #{jetseg_forward.4} parent=23 // pred_check_branch
        %211 = sbr.rel (%p209) target = $region28
      $region27: #{jetseg_forward.4} parent=23 // pred_region
        %p212 = scmp.lt.s32.totalorder %s12, 1
        %s213 = scalar_select %p212, %s12, 1
        %s214 = smul.addr %s213, 5
        %s215 = smul.addr %s214, 4
        %s216 = scalar_lea.vmem %s0, %s215
      $region28: #{jetseg_forward.4} parent=23 // pred_fallthru
        _
      // Predicated region
      $region29: #{jetseg_forward.4} parent=23 // pred_check
        %p217 = pneg %p58
      $region30: #{jetseg_forward.4} parent=23 // pred_check_branch
        %219 = sbr.rel (%p217) target = $region32
      $region31: #{jetseg_forward.4} parent=23 // pred_region
        %p220 = scmp.lt.s32.totalorder %s12, 1
        %s221 = scalar_select %p220, %s12, 1
        %s222 = smul.addr %s221, 5
        %s223 = smul.addr %s222, 4
        %s224 = scalar_lea.vmem %s1, %s223
      $region32: #{jetseg_forward.4} parent=23 // pred_fallthru
        _
      // Predicated region
      $region33: #{jetseg_forward.4} parent=23 // pred_check
        %p225 = pneg %p84
      $region34: #{jetseg_forward.4} parent=23 // pred_check_branch
        %227 = sbr.rel (%p225) target = $region36
      $region35: #{jetseg_forward.4} parent=23 // pred_region
        %p228 = scmp.lt.s32.totalorder %s12, 1
        %s229 = scalar_select %p228, %s12, 1
        %s230 = smul.addr %s229, 5
        %s231 = smul.addr %s230, 4
        %s232 = scalar_lea.vmem %s2, %s231
      $region36: #{jetseg_forward.4} parent=23 // pred_fallthru
        _
      // Predicated region
      $region37: #{jetseg_forward.4} parent=23 // pred_check
        %p233 = pneg %p110
      $region38: #{jetseg_forward.4} parent=23 // pred_check_branch
        %235 = sbr.rel (%p233) target = $region40
      $region39: #{jetseg_forward.4} parent=23 // pred_region
        %p236 = scmp.lt.s32.totalorder %s12, 1
        %s237 = scalar_select %p236, %s12, 1
        %s238 = smul.addr %s237, 5
        %s239 = smul.addr %s238, 4
        %s240 = scalar_lea.vmem %s3, %s239
      $region40: #{jetseg_forward.4} parent=23 // pred_fallthru
        _
    $region24: #{jetseg_forward.4} parent=5 // pred_fallthru
      _
    %p241 = scmp.le.s32.totalorder 1, %s12
    %p242 = scmp.lt.s32.totalorder %s12, 3
    %p243 = pnand %p241, %p242
    %p244 = pneg %p243
    // Predicated region
    $region41: #{jetseg_forward.4} parent=5 // pred_check
      _
    $region42: #{jetseg_forward.4} parent=5 // pred_check_branch
      %246 = sbr.rel (%p243) target = $region44
    $region43: #{jetseg_forward.4} parent=5 // pred_region
      %s247 = ssub.s32 %s12, 1
      %p248 = scmp.lt.s32.totalorder %s17, 1
      %s249 = scalar_select %p248, %s17, 1
      %s250 = smul.addr %s249, 5
      %s251 = smul.addr %s250, 4
      %s252 = scalar_lea.vmem %s0, %s251
      %p253 = pneg %p38
      %p254 = pneg %p35
      %p255 = scmp.lt.s32.totalorder %s17, 1
      %s256 = scalar_select %p255, %s17, 1
      %s257 = smul.addr %s256, 5
      %s258 = smul.addr %s257, 4
      %s259 = scalar_lea.vmem %s1, %s258
      %p260 = pneg %p64
      %p261 = pneg %p61
      %p262 = scmp.lt.s32.totalorder %s17, 1
      %s263 = scalar_select %p262, %s17, 1
      %s264 = smul.addr %s263, 5
      %s265 = smul.addr %s264, 4
      %s266 = scalar_lea.vmem %s2, %s265
      %p267 = pneg %p90
      %p268 = pneg %p87
      %p269 = scmp.lt.s32.totalorder %s17, 1
      %s270 = scalar_select %p269, %s17, 1
      %s271 = smul.addr %s270, 5
      %s272 = smul.addr %s271, 4
      %s273 = scalar_lea.vmem %s3, %s272
      %p274 = pneg %p116
      %p275 = pneg %p113
      %p276 = pneg %p137
      %p277 = pneg %p134
      %p278 = pneg %p158
      %p279 = pneg %p155
      %p280 = pneg %p184
      %p281 = pneg %p181
      %p282 = scmp.lt.s32.totalorder %s17, 1
      %s283 = scalar_select %p282, %s17, 1
      %s284 = smul.addr %s283, 2
      %s285 = smul.addr %s284, 4
      %s286 = scalar_lea.vmem %s6, %s285
      %p287 = scmp.lt.s32.totalorder %s17, 1
      %s288 = scalar_select %p287, %s17, 1
      %s289 = smul.addr %s288, 5
      %s290 = smul.addr %s289, 4
      %s291 = scalar_lea.vmem %s0, %s290
      %p292 = scmp.lt.s32.totalorder %s17, 1
      %s293 = scalar_select %p292, %s17, 1
      %s294 = smul.addr %s293, 5
      %s295 = smul.addr %s294, 4
      %s296 = scalar_lea.vmem %s1, %s295
      %p297 = scmp.lt.s32.totalorder %s17, 1
      %s298 = scalar_select %p297, %s17, 1
      %s299 = smul.addr %s298, 5
      %s300 = smul.addr %s299, 4
      %s301 = scalar_lea.vmem %s2, %s300
      %p302 = scmp.lt.s32.totalorder %s17, 1
      %s303 = scalar_select %p302, %s17, 1
      %s304 = smul.addr %s303, 5
      %s305 = smul.addr %s304, 4
      %s306 = scalar_lea.vmem %s3, %s305
      %p307 = scmp.lt.s32.totalorder %s17, 1
      %s308 = scalar_select %p307, %s17, 1
      %s309 = smul.addr %s308, 2
      %s310 = smul.addr %s309, 4
      %s311 = scalar_lea.vmem %s6, %s310
      %v313 = vld [vmem:[%s291] sm:$0x3]
      %v314 = vld [vmem:[%s291 + $0x4] sm:$0x3]
      %v315 = vld [vmem:[%s291 + $0x8] sm:$0x3]
      %v316 = vld [vmem:[%s291 + $0xc] sm:$0x3]
      %v317 = vld [vmem:[%s4] sm:$0xf]
      %v318 = vld [vmem:[%s4 + $0x4] sm:$0xf]
      %v319 = vld [vmem:[%s4 + $0x8] sm:$0xf]
      %v320 = vld [vmem:[%s4 + $0xc] sm:$0xf]
      %v321 = vld [vmem:[%s4 + $0x10] sm:$0xf]
      %v322 = vld [vmem:[%s4 + $0x14] sm:$0xf]
      %v323 = vld [vmem:[%s4 + $0x18] sm:$0xf]
      %v324 = vld [vmem:[%s4 + $0x1c] sm:$0xf]
      %v325 = vld [vmem:[%s4 + $0x20] sm:$0xf]
      %v326 = vld [vmem:[%s4 + $0x24] sm:$0xf]
      %v327 = vld [vmem:[%s4 + $0x28] sm:$0xf]
      %v328 = vld [vmem:[%s4 + $0x2c] sm:$0xf]
      %v329 = vld [vmem:[%s4 + $0x30] sm:$0xf]
      %v330 = vld [vmem:[%s4 + $0x34] sm:$0xf]
      %v331 = vld [vmem:[%s4 + $0x38] sm:$0xf]
      %v332 = vld [vmem:[%s4 + $0x3c] sm:$0xf]
      %v333 = vld [vmem:[%s296] sm:$0x3]
      %v334 = vld [vmem:[%s296 + $0x4] sm:$0x3]
      %v335 = vld [vmem:[%s296 + $0x8] sm:$0x3]
      %v336 = vld [vmem:[%s296 + $0xc] sm:$0x3]
      %s337 = scalar_lea.vmem %s4, 64
      %v338 = vld [vmem:[%s337] sm:$0xf]
      %v339 = vld [vmem:[%s337 + $0x4] sm:$0xf]
      %v340 = vld [vmem:[%s337 + $0x8] sm:$0xf]
      %v341 = vld [vmem:[%s337 + $0xc] sm:$0xf]
      %v342 = vld [vmem:[%s337 + $0x10] sm:$0xf]
      %v343 = vld [vmem:[%s337 + $0x14] sm:$0xf]
      %v344 = vld [vmem:[%s337 + $0x18] sm:$0xf]
      %v345 = vld [vmem:[%s337 + $0x1c] sm:$0xf]
      %v346 = vld [vmem:[%s337 + $0x20] sm:$0xf]
      %v347 = vld [vmem:[%s337 + $0x24] sm:$0xf]
      %v348 = vld [vmem:[%s337 + $0x28] sm:$0xf]
      %v349 = vld [vmem:[%s337 + $0x2c] sm:$0xf]
      %v350 = vld [vmem:[%s337 + $0x30] sm:$0xf]
      %v351 = vld [vmem:[%s337 + $0x34] sm:$0xf]
      %v352 = vld [vmem:[%s337 + $0x38] sm:$0xf]
      %v353 = vld [vmem:[%s337 + $0x3c] sm:$0xf]
      %v358 = vcombine.low %v333, %v334
      %v359 = vcombine.low %v335, %v336
      %v361 = vunpack.c.l.s4 1983009808
      %v362 = vunpack.c.0.s8 %v361
      %v363 = vlaneseq
      %v364 = vshrl.u32 %v363, 7
      %v365 = vsub.s32 %v362, %v364
      %v366 = vrot.slane %v358, %v365
      %v368 = vunpack.c.l.s4 1983009808
      %v369 = vunpack.c.0.s8 %v368
      %v370 = vlaneseq
      %v371 = vshrl.u32 %v370, 7
      %v372 = vsub.s32 %v369, %v371
      %v373 = vrot.slane %v359, %v372
      %v374 = vcombine.low %v366, %v373
      %v392 = vunpack.c.l.b16 %v338
      %v393 = vunpack.c.l.b16 %v339
      %v394 = vunpack.c.l.b16 %v340
      %v395 = vunpack.c.l.b16 %v341
      %v396 = vunpack.c.l.b16 %v342
      %v397 = vunpack.c.l.b16 %v343
      %v398 = vunpack.c.l.b16 %v344
      %v399 = vunpack.c.l.b16 %v345
      %v400 = vunpack.c.l.b16 %v346
      %v401 = vunpack.c.l.b16 %v347
      %v402 = vunpack.c.l.b16 %v348
      %v403 = vunpack.c.l.b16 %v349
      %v404 = vunpack.c.l.b16 %v350
      %v405 = vunpack.c.l.b16 %v351
      %v406 = vunpack.c.l.b16 %v352
      %v407 = vunpack.c.l.b16 %v353
      %v408 = vpack.c.b16 %v393, %v392
      %v409 = vpack.c.b16 %v395, %v394
      %v410 = vpack.c.b16 %v397, %v396
      %v411 = vpack.c.b16 %v399, %v398
      %v412 = vpack.c.b16 %v401, %v400
      %v413 = vpack.c.b16 %v403, %v402
      %v414 = vpack.c.b16 %v405, %v404
      %v415 = vpack.c.b16 %v407, %v406
      %424 = vmatprep.subr.bf16.mxu0 0
      %425 = vmatpush1.bf16.msra.mxu0 %v415
      %426 = vmatprep.subr.bf16.mxu0 0
      %427 = vmatpush1.bf16.msra.mxu0 %v414
      %428 = vmatprep.subr.bf16.mxu0 0
      %429 = vmatpush1.bf16.msra.mxu0 %v413
      %430 = vmatprep.subr.bf16.mxu0 0
      %431 = vmatpush1.bf16.msra.mxu0 %v412
      %432 = vmatprep.subr.bf16.mxu0 0
      %433 = vmatpush1.bf16.msra.mxu0 %v411
      %434 = vmatprep.subr.bf16.mxu0 0
      %435 = vmatpush1.bf16.msra.mxu0 %v410
      %436 = vmatprep.subr.bf16.mxu0 0
      %437 = vmatpush1.bf16.msra.mxu0 %v409
      %438 = vmatprep.subr.bf16.mxu0 0
      %439 = vmatpush1.bf16.msra.mxu0 %v408
      %440 = vmatprep.subr.bf16.mxu0 0
      %441 = vmatpush2.bf16.msra.mxu0 0
      %442 = vmatprep.subr.bf16.mxu0 0
      %443 = vmatpush2.bf16.msra.mxu0 0
      %444 = vmatprep.subr.bf16.mxu0 0
      %445 = vmatpush2.bf16.msra.mxu0 0
      %446 = vmatprep.subr.bf16.mxu0 0
      %447 = vmatpush2.bf16.msra.mxu0 0
      %448 = vmatprep.subr.bf16.mxu0 0
      %449 = vmatpush2.bf16.msra.mxu0 0
      %450 = vmatprep.subr.bf16.mxu0 0
      %451 = vmatpush2.bf16.msra.mxu0 0
      %452 = vmatprep.subr.bf16.mxu0 0
      %453 = vmatpush2.bf16.msra.mxu0 0
      %454 = vmatprep.subr.bf16.mxu0 0
      %455 = vmatpush2.bf16.msra.mxu0 0
      %456 = vmatprep.mubr.bf16.mxu0 0
      %457 = vmatmul.mubr.bf16.gmra.mxu0 %v374
      %v458 = vpop.f32.mrf.mxu0
      %v459 = vadd.f32 0.0, %v458
      %v460 = vpop.f32.mrf.mxu0
      %v461 = vpop.f32.mrf.mxu0
      %v462 = vadd.f32 0.0, %v461
      %v463 = vpop.f32.mrf.mxu0
      %464 = vdwg.mxu0
      %v469 = vcombine.low %v313, %v314
      %v470 = vcombine.low %v315, %v316
      %v472 = vunpack.c.l.s4 1983009808
      %v473 = vunpack.c.0.s8 %v472
      %v474 = vlaneseq
      %v475 = vshrl.u32 %v474, 7
      %v476 = vsub.s32 %v473, %v475
      %v477 = vrot.slane %v469, %v476
      %v479 = vunpack.c.l.s4 1983009808
      %v480 = vunpack.c.0.s8 %v479
      %v481 = vlaneseq
      %v482 = vshrl.u32 %v481, 7
      %v483 = vsub.s32 %v480, %v482
      %v484 = vrot.slane %v470, %v483
      %v485 = vcombine.low %v477, %v484
      %v503 = vunpack.c.l.b16 %v317
      %v504 = vunpack.c.l.b16 %v318
      %v505 = vunpack.c.l.b16 %v319
      %v506 = vunpack.c.l.b16 %v320
      %v507 = vunpack.c.l.b16 %v321
      %v508 = vunpack.c.l.b16 %v322
      %v509 = vunpack.c.l.b16 %v323
      %v510 = vunpack.c.l.b16 %v324
      %v511 = vunpack.c.l.b16 %v325
      %v512 = vunpack.c.l.b16 %v326
      %v513 = vunpack.c.l.b16 %v327
      %v514 = vunpack.c.l.b16 %v328
      %v515 = vunpack.c.l.b16 %v329
      %v516 = vunpack.c.l.b16 %v330
      %v517 = vunpack.c.l.b16 %v331
      %v518 = vunpack.c.l.b16 %v332
      %v519 = vpack.c.b16 %v504, %v503
      %v520 = vpack.c.b16 %v506, %v505
      %v521 = vpack.c.b16 %v508, %v507
      %v522 = vpack.c.b16 %v510, %v509
      %v523 = vpack.c.b16 %v512, %v511
      %v524 = vpack.c.b16 %v514, %v513
      %v525 = vpack.c.b16 %v516, %v515
      %v526 = vpack.c.b16 %v518, %v517
      %535 = vmatprep.subr.bf16.mxu0 0
      %536 = vmatpush1.bf16.msra.mxu0 %v526
      %537 = vmatprep.subr.bf16.mxu0 0
      %538 = vmatpush1.bf16.msra.mxu0 %v525
      %539 = vmatprep.subr.bf16.mxu0 0
      %540 = vmatpush1.bf16.msra.mxu0 %v524
      %541 = vmatprep.subr.bf16.mxu0 0
      %542 = vmatpush1.bf16.msra.mxu0 %v523
      %543 = vmatprep.subr.bf16.mxu0 0
      %544 = vmatpush1.bf16.msra.mxu0 %v522
      %545 = vmatprep.subr.bf16.mxu0 0
      %546 = vmatpush1.bf16.msra.mxu0 %v521
      %547 = vmatprep.subr.bf16.mxu0 0
      %548 = vmatpush1.bf16.msra.mxu0 %v520
      %549 = vmatprep.subr.bf16.mxu0 0
      %550 = vmatpush1.bf16.msra.mxu0 %v519
      %551 = vmatprep.subr.bf16.mxu0 0
      %552 = vmatpush2.bf16.msra.mxu0 0
      %553 = vmatprep.subr.bf16.mxu0 0
      %554 = vmatpush2.bf16.msra.mxu0 0
      %555 = vmatprep.subr.bf16.mxu0 0
      %556 = vmatpush2.bf16.msra.mxu0 0
      %557 = vmatprep.subr.bf16.mxu0 0
      %558 = vmatpush2.bf16.msra.mxu0 0
      %559 = vmatprep.subr.bf16.mxu0 0
      %560 = vmatpush2.bf16.msra.mxu0 0
      %561 = vmatprep.subr.bf16.mxu0 0
      %562 = vmatpush2.bf16.msra.mxu0 0
      %563 = vmatprep.subr.bf16.mxu0 0
      %564 = vmatpush2.bf16.msra.mxu0 0
      %565 = vmatprep.subr.bf16.mxu0 0
      %566 = vmatpush2.bf16.msra.mxu0 0
      %567 = vmatprep.mubr.bf16.mxu0 0
      %568 = vmatmul.mubr.bf16.gmra.mxu0 %v485
      %v569 = vpop.f32.mrf.mxu0
      %v570 = vadd.f32 %v459, %v569
      %v571 = vpop.f32.mrf.mxu0
      %v572 = vpop.f32.mrf.mxu0
      %v573 = vadd.f32 %v462, %v572
      %v574 = vpop.f32.mrf.mxu0
      %575 = vdwg.mxu0
      %v576 = vld [vmem:[%s291] sm:$0x7]
      %v577 = vld [vmem:[%s291 + $0x4] sm:$0x7]
      %v578 = vld [vmem:[%s291 + $0x8] sm:$0x7]
      %v579 = vld [vmem:[%s291 + $0xc] sm:$0x7]
      %v585 = vunpack.c.l.s4 1983009808
      %v586 = vunpack.c.0.s8 %v585
      %v587 = vlaneseq
      %v588 = vshrl.u32 %v587, 7
      %v589 = vsub.s32 %v586, %v588
      %v590 = vrot.slane %v576, %v589
      %v591 = vcombine.high %v590, %v590
      %v593 = vunpack.c.l.s4 1983009808
      %v594 = vunpack.c.0.s8 %v593
      %v595 = vlaneseq
      %v596 = vshrl.u32 %v595, 7
      %v597 = vsub.s32 %v594, %v596
      %v598 = vrot.slane %v577, %v597
      %v599 = vcombine.high %v598, %v598
      %v601 = vunpack.c.l.s4 1983009808
      %v602 = vunpack.c.0.s8 %v601
      %v603 = vlaneseq
      %v604 = vshrl.u32 %v603, 7
      %v605 = vsub.s32 %v602, %v604
      %v606 = vrot.slane %v578, %v605
      %v607 = vcombine.high %v606, %v606
      %v609 = vunpack.c.l.s4 1983009808
      %v610 = vunpack.c.0.s8 %v609
      %v611 = vlaneseq
      %v612 = vshrl.u32 %v611, 7
      %v613 = vsub.s32 %v610, %v612
      %v614 = vrot.slane %v579, %v613
      %v615 = vcombine.high %v614, %v614
      %vm616 = vsmask.f32 1280
      %vm617 = vsmask.f32 3336
      %vm618 = vmor %vm616, %vm617
      %vm619 = vsmask.f32 5392
      %vm620 = vmor %vm618, %vm619
      %vm621 = vsmask.f32 7448
      %vm622 = vmor %vm620, %vm621
      %v624 = vshrl.u32 %v590, 16
      %v626 = vrot.slane %v624, 6
      %v627 = vshll.u32 %v590, 16
      %v629 = vrot.slane %v627, 7
      %v630 = vor.u32 %v626, %v629
      %v631 = vrot.slane %v630, 2
      %v633 = vshll.u32 %v591, 16
      %v635 = vrot.slane %v633, 7
      %v636 = vsel %vm622, %v631, %v635
      %v638 = vshrl.u32 %v598, 16
      %v640 = vrot.slane %v638, 6
      %v641 = vshll.u32 %v598, 16
      %v643 = vrot.slane %v641, 7
      %v644 = vor.u32 %v640, %v643
      %v645 = vrot.slane %v644, 2
      %v647 = vshll.u32 %v599, 16
      %v649 = vrot.slane %v647, 7
      %v650 = vsel %vm622, %v645, %v649
      %v652 = vshrl.u32 %v606, 16
      %v654 = vrot.slane %v652, 6
      %v655 = vshll.u32 %v606, 16
      %v657 = vrot.slane %v655, 7
      %v658 = vor.u32 %v654, %v657
      %v659 = vrot.slane %v658, 2
      %v661 = vshll.u32 %v607, 16
      %v663 = vrot.slane %v661, 7
      %v664 = vsel %vm622, %v659, %v663
      %v666 = vshrl.u32 %v614, 16
      %v668 = vrot.slane %v666, 6
      %v669 = vshll.u32 %v614, 16
      %v671 = vrot.slane %v669, 7
      %v672 = vor.u32 %v668, %v671
      %v673 = vrot.slane %v672, 2
      %v675 = vshll.u32 %v615, 16
      %v677 = vrot.slane %v675, 7
      %v678 = vsel %vm622, %v673, %v677
      %s679 = scalar_lea.vmem %s4, 128
      %v680 = vld [vmem:[%s679] sm:$0xf]
      %v681 = vld [vmem:[%s679 + $0x4] sm:$0xf]
      %v682 = vld [vmem:[%s679 + $0x8] sm:$0xf]
      %v683 = vld [vmem:[%s679 + $0xc] sm:$0xf]
      %v684 = vld [vmem:[%s679 + $0x10] sm:$0xf]
      %v685 = vld [vmem:[%s679 + $0x14] sm:$0xf]
      %v686 = vld [vmem:[%s679 + $0x18] sm:$0xf]
      %v687 = vld [vmem:[%s679 + $0x1c] sm:$0xf]
      %v688 = vld [vmem:[%s679 + $0x20] sm:$0xf]
      %v689 = vld [vmem:[%s679 + $0x24] sm:$0xf]
      %v690 = vld [vmem:[%s679 + $0x28] sm:$0xf]
      %v691 = vld [vmem:[%s679 + $0x2c] sm:$0xf]
      %v692 = vld [vmem:[%s679 + $0x30] sm:$0xf]
      %v693 = vld [vmem:[%s679 + $0x34] sm:$0xf]
      %v694 = vld [vmem:[%s679 + $0x38] sm:$0xf]
      %v695 = vld [vmem:[%s679 + $0x3c] sm:$0xf]
      %v696 = vcombine.low %v636, %v650
      %v697 = vcombine.low %v664, %v678
      %v699 = vunpack.c.l.s4 1983009808
      %v700 = vunpack.c.0.s8 %v699
      %v701 = vlaneseq
      %v702 = vshrl.u32 %v701, 7
      %v703 = vsub.s32 %v700, %v702
      %v704 = vrot.slane %v696, %v703
      %v706 = vunpack.c.l.s4 1983009808
      %v707 = vunpack.c.0.s8 %v706
      %v708 = vlaneseq
      %v709 = vshrl.u32 %v708, 7
      %v710 = vsub.s32 %v707, %v709
      %v711 = vrot.slane %v697, %v710
      %v712 = vcombine.low %v704, %v711
      %v730 = vunpack.c.l.b16 %v680
      %v731 = vunpack.c.l.b16 %v681
      %v732 = vunpack.c.l.b16 %v682
      %v733 = vunpack.c.l.b16 %v683
      %v734 = vunpack.c.l.b16 %v684
      %v735 = vunpack.c.l.b16 %v685
      %v736 = vunpack.c.l.b16 %v686
      %v737 = vunpack.c.l.b16 %v687
      %v738 = vunpack.c.l.b16 %v688
      %v739 = vunpack.c.l.b16 %v689
      %v740 = vunpack.c.l.b16 %v690
      %v741 = vunpack.c.l.b16 %v691
      %v742 = vunpack.c.l.b16 %v692
      %v743 = vunpack.c.l.b16 %v693
      %v744 = vunpack.c.l.b16 %v694
      %v745 = vunpack.c.l.b16 %v695
      %v746 = vpack.c.b16 %v731, %v730
      %v747 = vpack.c.b16 %v733, %v732
      %v748 = vpack.c.b16 %v735, %v734
      %v749 = vpack.c.b16 %v737, %v736
      %v750 = vpack.c.b16 %v739, %v738
      %v751 = vpack.c.b16 %v741, %v740
      %v752 = vpack.c.b16 %v743, %v742
      %v753 = vpack.c.b16 %v745, %v744
      %762 = vmatprep.subr.bf16.mxu0 0
      %763 = vmatpush1.bf16.msra.mxu0 %v753
      %764 = vmatprep.subr.bf16.mxu0 0
      %765 = vmatpush1.bf16.msra.mxu0 %v752
      %766 = vmatprep.subr.bf16.mxu0 0
      %767 = vmatpush1.bf16.msra.mxu0 %v751
      %768 = vmatprep.subr.bf16.mxu0 0
      %769 = vmatpush1.bf16.msra.mxu0 %v750
      %770 = vmatprep.subr.bf16.mxu0 0
      %771 = vmatpush1.bf16.msra.mxu0 %v749
      %772 = vmatprep.subr.bf16.mxu0 0
      %773 = vmatpush1.bf16.msra.mxu0 %v748
      %774 = vmatprep.subr.bf16.mxu0 0
      %775 = vmatpush1.bf16.msra.mxu0 %v747
      %776 = vmatprep.subr.bf16.mxu0 0
      %777 = vmatpush1.bf16.msra.mxu0 %v746
      %778 = vmatprep.subr.bf16.mxu0 0
      %779 = vmatpush2.bf16.msra.mxu0 0
      %780 = vmatprep.subr.bf16.mxu0 0
      %781 = vmatpush2.bf16.msra.mxu0 0
      %782 = vmatprep.subr.bf16.mxu0 0
      %783 = vmatpush2.bf16.msra.mxu0 0
      %784 = vmatprep.subr.bf16.mxu0 0
      %785 = vmatpush2.bf16.msra.mxu0 0
      %786 = vmatprep.subr.bf16.mxu0 0
      %787 = vmatpush2.bf16.msra.mxu0 0
      %788 = vmatprep.subr.bf16.mxu0 0
      %789 = vmatpush2.bf16.msra.mxu0 0
      %790 = vmatprep.subr.bf16.mxu0 0
      %791 = vmatpush2.bf16.msra.mxu0 0
      %792 = vmatprep.subr.bf16.mxu0 0
      %793 = vmatpush2.bf16.msra.mxu0 0
      %794 = vmatprep.mubr.bf16.mxu0 0
      %795 = vmatmul.mubr.bf16.gmra.mxu0 %v712
      %v796 = vpop.f32.mrf.mxu0
      %v797 = vadd.f32 0.0, %v796
      %v798 = vpop.f32.mrf.mxu0
      %v799 = vpop.f32.mrf.mxu0
      %v800 = vadd.f32 0.0, %v799
      %v801 = vpop.f32.mrf.mxu0
      %802 = vdwg.mxu0
      %v803 = vadd.f32 %v570, %v797
      %v804 = vadd.f32 %v573, %v800
      %v805 = vld [vmem:[%s301] sm:$0x3]
      %v806 = vld [vmem:[%s301 + $0x4] sm:$0x3]
      %v807 = vld [vmem:[%s301 + $0x8] sm:$0x3]
      %v808 = vld [vmem:[%s301 + $0xc] sm:$0x3]
      %s809 = scalar_lea.vmem %s4, 192
      %v810 = vld [vmem:[%s809] sm:$0xf]
      %v811 = vld [vmem:[%s809 + $0x4] sm:$0xf]
      %v812 = vld [vmem:[%s809 + $0x8] sm:$0xf]
      %v813 = vld [vmem:[%s809 + $0xc] sm:$0xf]
      %v814 = vld [vmem:[%s809 + $0x10] sm:$0xf]
      %v815 = vld [vmem:[%s809 + $0x14] sm:$0xf]
      %v816 = vld [vmem:[%s809 + $0x18] sm:$0xf]
      %v817 = vld [vmem:[%s809 + $0x1c] sm:$0xf]
      %v818 = vld [vmem:[%s809 + $0x20] sm:$0xf]
      %v819 = vld [vmem:[%s809 + $0x24] sm:$0xf]
      %v820 = vld [vmem:[%s809 + $0x28] sm:$0xf]
      %v821 = vld [vmem:[%s809 + $0x2c] sm:$0xf]
      %v822 = vld [vmem:[%s809 + $0x30] sm:$0xf]
      %v823 = vld [vmem:[%s809 + $0x34] sm:$0xf]
      %v824 = vld [vmem:[%s809 + $0x38] sm:$0xf]
      %v825 = vld [vmem:[%s809 + $0x3c] sm:$0xf]
      %v830 = vcombine.low %v805, %v806
      %v831 = vcombine.low %v807, %v808
      %v833 = vunpack.c.l.s4 1983009808
      %v834 = vunpack.c.0.s8 %v833
      %v835 = vlaneseq
      %v836 = vshrl.u32 %v835, 7
      %v837 = vsub.s32 %v834, %v836
      %v838 = vrot.slane %v830, %v837
      %v840 = vunpack.c.l.s4 1983009808
      %v841 = vunpack.c.0.s8 %v840
      %v842 = vlaneseq
      %v843 = vshrl.u32 %v842, 7
      %v844 = vsub.s32 %v841, %v843
      %v845 = vrot.slane %v831, %v844
      %v846 = vcombine.low %v838, %v845
      %v864 = vunpack.c.l.b16 %v810
      %v865 = vunpack.c.l.b16 %v811
      %v866 = vunpack.c.l.b16 %v812
      %v867 = vunpack.c.l.b16 %v813
      %v868 = vunpack.c.l.b16 %v814
      %v869 = vunpack.c.l.b16 %v815
      %v870 = vunpack.c.l.b16 %v816
      %v871 = vunpack.c.l.b16 %v817
      %v872 = vunpack.c.l.b16 %v818
      %v873 = vunpack.c.l.b16 %v819
      %v874 = vunpack.c.l.b16 %v820
      %v875 = vunpack.c.l.b16 %v821
      %v876 = vunpack.c.l.b16 %v822
      %v877 = vunpack.c.l.b16 %v823
      %v878 = vunpack.c.l.b16 %v824
      %v879 = vunpack.c.l.b16 %v825
      %v880 = vpack.c.b16 %v865, %v864
      %v881 = vpack.c.b16 %v867, %v866
      %v882 = vpack.c.b16 %v869, %v868
      %v883 = vpack.c.b16 %v871, %v870
      %v884 = vpack.c.b16 %v873, %v872
      %v885 = vpack.c.b16 %v875, %v874
      %v886 = vpack.c.b16 %v877, %v876
      %v887 = vpack.c.b16 %v879, %v878
      %896 = vmatprep.subr.bf16.mxu0 0
      %897 = vmatpush1.bf16.msra.mxu0 %v887
      %898 = vmatprep.subr.bf16.mxu0 0
      %899 = vmatpush1.bf16.msra.mxu0 %v886
      %900 = vmatprep.subr.bf16.mxu0 0
      %901 = vmatpush1.bf16.msra.mxu0 %v885
      %902 = vmatprep.subr.bf16.mxu0 0
      %903 = vmatpush1.bf16.msra.mxu0 %v884
      %904 = vmatprep.subr.bf16.mxu0 0
      %905 = vmatpush1.bf16.msra.mxu0 %v883
      %906 = vmatprep.subr.bf16.mxu0 0
      %907 = vmatpush1.bf16.msra.mxu0 %v882
      %908 = vmatprep.subr.bf16.mxu0 0
      %909 = vmatpush1.bf16.msra.mxu0 %v881
      %910 = vmatprep.subr.bf16.mxu0 0
      %911 = vmatpush1.bf16.msra.mxu0 %v880
      %912 = vmatprep.subr.bf16.mxu0 0
      %913 = vmatpush2.bf16.msra.mxu0 0
      %914 = vmatprep.subr.bf16.mxu0 0
      %915 = vmatpush2.bf16.msra.mxu0 0
      %916 = vmatprep.subr.bf16.mxu0 0
      %917 = vmatpush2.bf16.msra.mxu0 0
      %918 = vmatprep.subr.bf16.mxu0 0
      %919 = vmatpush2.bf16.msra.mxu0 0
      %920 = vmatprep.subr.bf16.mxu0 0
      %921 = vmatpush2.bf16.msra.mxu0 0
      %922 = vmatprep.subr.bf16.mxu0 0
      %923 = vmatpush2.bf16.msra.mxu0 0
      %924 = vmatprep.subr.bf16.mxu0 0
      %925 = vmatpush2.bf16.msra.mxu0 0
      %926 = vmatprep.subr.bf16.mxu0 0
      %927 = vmatpush2.bf16.msra.mxu0 0
      %928 = vmatprep.mubr.bf16.mxu0 0
      %929 = vmatmul.mubr.bf16.gmra.mxu0 %v846
      %v930 = vpop.f32.mrf.mxu0
      %v931 = vadd.f32 0.0, %v930
      %v932 = vpop.f32.mrf.mxu0
      %v933 = vpop.f32.mrf.mxu0
      %v934 = vadd.f32 0.0, %v933
      %v935 = vpop.f32.mrf.mxu0
      %936 = vdwg.mxu0
      %v937 = vadd.f32 %v803, %v931
      %v938 = vadd.f32 %v804, %v934
      %v939 = vld [vmem:[%s306] sm:$0x3]
      %v940 = vld [vmem:[%s306 + $0x4] sm:$0x3]
      %v941 = vld [vmem:[%s306 + $0x8] sm:$0x3]
      %v942 = vld [vmem:[%s306 + $0xc] sm:$0x3]
      %s943 = scalar_lea.vmem %s4, 256
      %v944 = vld [vmem:[%s943] sm:$0xf]
      %v945 = vld [vmem:[%s943 + $0x4] sm:$0xf]
      %v946 = vld [vmem:[%s943 + $0x8] sm:$0xf]
      %v947 = vld [vmem:[%s943 + $0xc] sm:$0xf]
      %v948 = vld [vmem:[%s943 + $0x10] sm:$0xf]
      %v949 = vld [vmem:[%s943 + $0x14] sm:$0xf]
      %v950 = vld [vmem:[%s943 + $0x18] sm:$0xf]
      %v951 = vld [vmem:[%s943 + $0x1c] sm:$0xf]
      %v952 = vld [vmem:[%s943 + $0x20] sm:$0xf]
      %v953 = vld [vmem:[%s943 + $0x24] sm:$0xf]
      %v954 = vld [vmem:[%s943 + $0x28] sm:$0xf]
      %v955 = vld [vmem:[%s943 + $0x2c] sm:$0xf]
      %v956 = vld [vmem:[%s943 + $0x30] sm:$0xf]
      %v957 = vld [vmem:[%s943 + $0x34] sm:$0xf]
      %v958 = vld [vmem:[%s943 + $0x38] sm:$0xf]
      %v959 = vld [vmem:[%s943 + $0x3c] sm:$0xf]
      %v964 = vcombine.low %v939, %v940
      %v965 = vcombine.low %v941, %v942
      %v967 = vunpack.c.l.s4 1983009808
      %v968 = vunpack.c.0.s8 %v967
      %v969 = vlaneseq
      %v970 = vshrl.u32 %v969, 7
      %v971 = vsub.s32 %v968, %v970
      %v972 = vrot.slane %v964, %v971
      %v974 = vunpack.c.l.s4 1983009808
      %v975 = vunpack.c.0.s8 %v974
      %v976 = vlaneseq
      %v977 = vshrl.u32 %v976, 7
      %v978 = vsub.s32 %v975, %v977
      %v979 = vrot.slane %v965, %v978
      %v980 = vcombine.low %v972, %v979
      %v998 = vunpack.c.l.b16 %v944
      %v999 = vunpack.c.l.b16 %v945
      %v1000 = vunpack.c.l.b16 %v946
      %v1001 = vunpack.c.l.b16 %v947
      %v1002 = vunpack.c.l.b16 %v948
      %v1003 = vunpack.c.l.b16 %v949
      %v1004 = vunpack.c.l.b16 %v950
      %v1005 = vunpack.c.l.b16 %v951
      %v1006 = vunpack.c.l.b16 %v952
      %v1007 = vunpack.c.l.b16 %v953
      %v1008 = vunpack.c.l.b16 %v954
      %v1009 = vunpack.c.l.b16 %v955
      %v1010 = vunpack.c.l.b16 %v956
      %v1011 = vunpack.c.l.b16 %v957
      %v1012 = vunpack.c.l.b16 %v958
      %v1013 = vunpack.c.l.b16 %v959
      %v1014 = vpack.c.b16 %v999, %v998
      %v1015 = vpack.c.b16 %v1001, %v1000
      %v1016 = vpack.c.b16 %v1003, %v1002
      %v1017 = vpack.c.b16 %v1005, %v1004
      %v1018 = vpack.c.b16 %v1007, %v1006
      %v1019 = vpack.c.b16 %v1009, %v1008
      %v1020 = vpack.c.b16 %v1011, %v1010
      %v1021 = vpack.c.b16 %v1013, %v1012
      %1030 = vmatprep.subr.bf16.mxu0 0
      %1031 = vmatpush1.bf16.msra.mxu0 %v1021
      %1032 = vmatprep.subr.bf16.mxu0 0
      %1033 = vmatpush1.bf16.msra.mxu0 %v1020
      %1034 = vmatprep.subr.bf16.mxu0 0
      %1035 = vmatpush1.bf16.msra.mxu0 %v1019
      %1036 = vmatprep.subr.bf16.mxu0 0
      %1037 = vmatpush1.bf16.msra.mxu0 %v1018
      %1038 = vmatprep.subr.bf16.mxu0 0
      %1039 = vmatpush1.bf16.msra.mxu0 %v1017
      %1040 = vmatprep.subr.bf16.mxu0 0
      %1041 = vmatpush1.bf16.msra.mxu0 %v1016
      %1042 = vmatprep.subr.bf16.mxu0 0
      %1043 = vmatpush1.bf16.msra.mxu0 %v1015
      %1044 = vmatprep.subr.bf16.mxu0 0
      %1045 = vmatpush1.bf16.msra.mxu0 %v1014
      %1046 = vmatprep.subr.bf16.mxu0 0
      %1047 = vmatpush2.bf16.msra.mxu0 0
      %1048 = vmatprep.subr.bf16.mxu0 0
      %1049 = vmatpush2.bf16.msra.mxu0 0
      %1050 = vmatprep.subr.bf16.mxu0 0
      %1051 = vmatpush2.bf16.msra.mxu0 0
      %1052 = vmatprep.subr.bf16.mxu0 0
      %1053 = vmatpush2.bf16.msra.mxu0 0
      %1054 = vmatprep.subr.bf16.mxu0 0
      %1055 = vmatpush2.bf16.msra.mxu0 0
      %1056 = vmatprep.subr.bf16.mxu0 0
      %1057 = vmatpush2.bf16.msra.mxu0 0
      %1058 = vmatprep.subr.bf16.mxu0 0
      %1059 = vmatpush2.bf16.msra.mxu0 0
      %1060 = vmatprep.subr.bf16.mxu0 0
      %1061 = vmatpush2.bf16.msra.mxu0 0
      %1062 = vmatprep.mubr.bf16.mxu0 0
      %1063 = vmatmul.mubr.bf16.gmra.mxu0 %v980
      %v1064 = vpop.f32.mrf.mxu0
      %v1065 = vadd.f32 0.0, %v1064
      %v1066 = vpop.f32.mrf.mxu0
      %v1067 = vpop.f32.mrf.mxu0
      %v1068 = vadd.f32 0.0, %v1067
      %v1069 = vpop.f32.mrf.mxu0
      %1070 = vdwg.mxu0
      %v1071 = vadd.f32 %v937, %v1065
      %v1072 = vadd.f32 %v938, %v1068
      %v1073 = vld [vmem:[%s301] sm:$0x7]
      %v1074 = vld [vmem:[%s301 + $0x4] sm:$0x7]
      %v1075 = vld [vmem:[%s301 + $0x8] sm:$0x7]
      %v1076 = vld [vmem:[%s301 + $0xc] sm:$0x7]
      %v1082 = vunpack.c.l.s4 1983009808
      %v1083 = vunpack.c.0.s8 %v1082
      %v1084 = vlaneseq
      %v1085 = vshrl.u32 %v1084, 7
      %v1086 = vsub.s32 %v1083, %v1085
      %v1087 = vrot.slane %v1073, %v1086
      %v1088 = vcombine.high %v1087, %v1087
      %v1090 = vunpack.c.l.s4 1983009808
      %v1091 = vunpack.c.0.s8 %v1090
      %v1092 = vlaneseq
      %v1093 = vshrl.u32 %v1092, 7
      %v1094 = vsub.s32 %v1091, %v1093
      %v1095 = vrot.slane %v1074, %v1094
      %v1096 = vcombine.high %v1095, %v1095
      %v1098 = vunpack.c.l.s4 1983009808
      %v1099 = vunpack.c.0.s8 %v1098
      %v1100 = vlaneseq
      %v1101 = vshrl.u32 %v1100, 7
      %v1102 = vsub.s32 %v1099, %v1101
      %v1103 = vrot.slane %v1075, %v1102
      %v1104 = vcombine.high %v1103, %v1103
      %v1106 = vunpack.c.l.s4 1983009808
      %v1107 = vunpack.c.0.s8 %v1106
      %v1108 = vlaneseq
      %v1109 = vshrl.u32 %v1108, 7
      %v1110 = vsub.s32 %v1107, %v1109
      %v1111 = vrot.slane %v1076, %v1110
      %v1112 = vcombine.high %v1111, %v1111
      %v1114 = vshrl.u32 %v1087, 16
      %v1116 = vrot.slane %v1114, 6
      %v1117 = vshll.u32 %v1087, 16
      %v1119 = vrot.slane %v1117, 7
      %v1120 = vor.u32 %v1116, %v1119
      %v1121 = vrot.slane %v1120, 2
      %v1123 = vshll.u32 %v1088, 16
      %v1125 = vrot.slane %v1123, 7
      %v1126 = vsel %vm622, %v1121, %v1125
      %v1128 = vshrl.u32 %v1095, 16
      %v1130 = vrot.slane %v1128, 6
      %v1131 = vshll.u32 %v1095, 16
      %v1133 = vrot.slane %v1131, 7
      %v1134 = vor.u32 %v1130, %v1133
      %v1135 = vrot.slane %v1134, 2
      %v1137 = vshll.u32 %v1096, 16
      %v1139 = vrot.slane %v1137, 7
      %v1140 = vsel %vm622, %v1135, %v1139
      %v1142 = vshrl.u32 %v1103, 16
      %v1144 = vrot.slane %v1142, 6
      %v1145 = vshll.u32 %v1103, 16
      %v1147 = vrot.slane %v1145, 7
      %v1148 = vor.u32 %v1144, %v1147
      %v1149 = vrot.slane %v1148, 2
      %v1151 = vshll.u32 %v1104, 16
      %v1153 = vrot.slane %v1151, 7
      %v1154 = vsel %vm622, %v1149, %v1153
      %v1156 = vshrl.u32 %v1111, 16
      %v1158 = vrot.slane %v1156, 6
      %v1159 = vshll.u32 %v1111, 16
      %v1161 = vrot.slane %v1159, 7
      %v1162 = vor.u32 %v1158, %v1161
      %v1163 = vrot.slane %v1162, 2
      %v1165 = vshll.u32 %v1112, 16
      %v1167 = vrot.slane %v1165, 7
      %v1168 = vsel %vm622, %v1163, %v1167
      %s1169 = scalar_lea.vmem %s4, 320
      %v1170 = vld [vmem:[%s1169] sm:$0xf]
      %v1171 = vld [vmem:[%s1169 + $0x4] sm:$0xf]
      %v1172 = vld [vmem:[%s1169 + $0x8] sm:$0xf]
      %v1173 = vld [vmem:[%s1169 + $0xc] sm:$0xf]
      %v1174 = vld [vmem:[%s1169 + $0x10] sm:$0xf]
      %v1175 = vld [vmem:[%s1169 + $0x14] sm:$0xf]
      %v1176 = vld [vmem:[%s1169 + $0x18] sm:$0xf]
      %v1177 = vld [vmem:[%s1169 + $0x1c] sm:$0xf]
      %v1178 = vld [vmem:[%s1169 + $0x20] sm:$0xf]
      %v1179 = vld [vmem:[%s1169 + $0x24] sm:$0xf]
      %v1180 = vld [vmem:[%s1169 + $0x28] sm:$0xf]
      %v1181 = vld [vmem:[%s1169 + $0x2c] sm:$0xf]
      %v1182 = vld [vmem:[%s1169 + $0x30] sm:$0xf]
      %v1183 = vld [vmem:[%s1169 + $0x34] sm:$0xf]
      %v1184 = vld [vmem:[%s1169 + $0x38] sm:$0xf]
      %v1185 = vld [vmem:[%s1169 + $0x3c] sm:$0xf]
      %v1186 = vcombine.low %v1126, %v1140
      %v1187 = vcombine.low %v1154, %v1168
      %v1189 = vunpack.c.l.s4 1983009808
      %v1190 = vunpack.c.0.s8 %v1189
      %v1191 = vlaneseq
      %v1192 = vshrl.u32 %v1191, 7
      %v1193 = vsub.s32 %v1190, %v1192
      %v1194 = vrot.slane %v1186, %v1193
      %v1196 = vunpack.c.l.s4 1983009808
      %v1197 = vunpack.c.0.s8 %v1196
      %v1198 = vlaneseq
      %v1199 = vshrl.u32 %v1198, 7
      %v1200 = vsub.s32 %v1197, %v1199
      %v1201 = vrot.slane %v1187, %v1200
      %v1202 = vcombine.low %v1194, %v1201
      %v1220 = vunpack.c.l.b16 %v1170
      %v1221 = vunpack.c.l.b16 %v1171
      %v1222 = vunpack.c.l.b16 %v1172
      %v1223 = vunpack.c.l.b16 %v1173
      %v1224 = vunpack.c.l.b16 %v1174
      %v1225 = vunpack.c.l.b16 %v1175
      %v1226 = vunpack.c.l.b16 %v1176
      %v1227 = vunpack.c.l.b16 %v1177
      %v1228 = vunpack.c.l.b16 %v1178
      %v1229 = vunpack.c.l.b16 %v1179
      %v1230 = vunpack.c.l.b16 %v1180
      %v1231 = vunpack.c.l.b16 %v1181
      %v1232 = vunpack.c.l.b16 %v1182
      %v1233 = vunpack.c.l.b16 %v1183
      %v1234 = vunpack.c.l.b16 %v1184
      %v1235 = vunpack.c.l.b16 %v1185
      %v1236 = vpack.c.b16 %v1221, %v1220
      %v1237 = vpack.c.b16 %v1223, %v1222
      %v1238 = vpack.c.b16 %v1225, %v1224
      %v1239 = vpack.c.b16 %v1227, %v1226
      %v1240 = vpack.c.b16 %v1229, %v1228
      %v1241 = vpack.c.b16 %v1231, %v1230
      %v1242 = vpack.c.b16 %v1233, %v1232
      %v1243 = vpack.c.b16 %v1235, %v1234
      %1252 = vmatprep.subr.bf16.mxu0 0
      %1253 = vmatpush1.bf16.msra.mxu0 %v1243
      %1254 = vmatprep.subr.bf16.mxu0 0
      %1255 = vmatpush1.bf16.msra.mxu0 %v1242
      %1256 = vmatprep.subr.bf16.mxu0 0
      %1257 = vmatpush1.bf16.msra.mxu0 %v1241
      %1258 = vmatprep.subr.bf16.mxu0 0
      %1259 = vmatpush1.bf16.msra.mxu0 %v1240
      %1260 = vmatprep.subr.bf16.mxu0 0
      %1261 = vmatpush1.bf16.msra.mxu0 %v1239
      %1262 = vmatprep.subr.bf16.mxu0 0
      %1263 = vmatpush1.bf16.msra.mxu0 %v1238
      %1264 = vmatprep.subr.bf16.mxu0 0
      %1265 = vmatpush1.bf16.msra.mxu0 %v1237
      %1266 = vmatprep.subr.bf16.mxu0 0
      %1267 = vmatpush1.bf16.msra.mxu0 %v1236
      %1268 = vmatprep.subr.bf16.mxu0 0
      %1269 = vmatpush2.bf16.msra.mxu0 0
      %1270 = vmatprep.subr.bf16.mxu0 0
      %1271 = vmatpush2.bf16.msra.mxu0 0
      %1272 = vmatprep.subr.bf16.mxu0 0
      %1273 = vmatpush2.bf16.msra.mxu0 0
      %1274 = vmatprep.subr.bf16.mxu0 0
      %1275 = vmatpush2.bf16.msra.mxu0 0
      %1276 = vmatprep.subr.bf16.mxu0 0
      %1277 = vmatpush2.bf16.msra.mxu0 0
      %1278 = vmatprep.subr.bf16.mxu0 0
      %1279 = vmatpush2.bf16.msra.mxu0 0
      %1280 = vmatprep.subr.bf16.mxu0 0
      %1281 = vmatpush2.bf16.msra.mxu0 0
      %1282 = vmatprep.subr.bf16.mxu0 0
      %1283 = vmatpush2.bf16.msra.mxu0 0
      %1284 = vmatprep.mubr.bf16.mxu0 0
      %1285 = vmatmul.mubr.bf16.gmra.mxu0 %v1202
      %v1286 = vpop.f32.mrf.mxu0
      %v1287 = vadd.f32 0.0, %v1286
      %v1288 = vpop.f32.mrf.mxu0
      %v1289 = vpop.f32.mrf.mxu0
      %v1290 = vadd.f32 0.0, %v1289
      %v1291 = vpop.f32.mrf.mxu0
      %1292 = vdwg.mxu0
      %v1293 = vadd.f32 %v1071, %v1287
      %v1294 = vadd.f32 %v1072, %v1290
      %s1295 = scalar_lea.vmem %s291, 4
      %v1296 = vld [vmem:[%s1295] sm:$0x3]
      %v1297 = vld [vmem:[%s1295 + $0x4] sm:$0x3]
      %v1298 = vld [vmem:[%s1295 + $0x8] sm:$0x3]
      %v1299 = vld [vmem:[%s1295 + $0xc] sm:$0x3]
      %s1300 = scalar_lea.vmem %s4, 384
      %v1301 = vld [vmem:[%s1300] sm:$0xf]
      %v1302 = vld [vmem:[%s1300 + $0x4] sm:$0xf]
      %v1303 = vld [vmem:[%s1300 + $0x8] sm:$0xf]
      %v1304 = vld [vmem:[%s1300 + $0xc] sm:$0xf]
      %v1305 = vld [vmem:[%s1300 + $0x10] sm:$0xf]
      %v1306 = vld [vmem:[%s1300 + $0x14] sm:$0xf]
      %v1307 = vld [vmem:[%s1300 + $0x18] sm:$0xf]
      %v1308 = vld [vmem:[%s1300 + $0x1c] sm:$0xf]
      %v1309 = vld [vmem:[%s1300 + $0x20] sm:$0xf]
      %v1310 = vld [vmem:[%s1300 + $0x24] sm:$0xf]
      %v1311 = vld [vmem:[%s1300 + $0x28] sm:$0xf]
      %v1312 = vld [vmem:[%s1300 + $0x2c] sm:$0xf]
      %v1313 = vld [vmem:[%s1300 + $0x30] sm:$0xf]
      %v1314 = vld [vmem:[%s1300 + $0x34] sm:$0xf]
      %v1315 = vld [vmem:[%s1300 + $0x38] sm:$0xf]
      %v1316 = vld [vmem:[%s1300 + $0x3c] sm:$0xf]
      %v1321 = vcombine.low %v1296, %v1297
      %v1322 = vcombine.low %v1298, %v1299
      %v1324 = vunpack.c.l.s4 1983009808
      %v1325 = vunpack.c.0.s8 %v1324
      %v1326 = vlaneseq
      %v1327 = vshrl.u32 %v1326, 7
      %v1328 = vsub.s32 %v1325, %v1327
      %v1329 = vrot.slane %v1321, %v1328
      %v1331 = vunpack.c.l.s4 1983009808
      %v1332 = vunpack.c.0.s8 %v1331
      %v1333 = vlaneseq
      %v1334 = vshrl.u32 %v1333, 7
      %v1335 = vsub.s32 %v1332, %v1334
      %v1336 = vrot.slane %v1322, %v1335
      %v1337 = vcombine.low %v1329, %v1336
      %v1355 = vunpack.c.l.b16 %v1301
      %v1356 = vunpack.c.l.b16 %v1302
      %v1357 = vunpack.c.l.b16 %v1303
      %v1358 = vunpack.c.l.b16 %v1304
      %v1359 = vunpack.c.l.b16 %v1305
      %v1360 = vunpack.c.l.b16 %v1306
      %v1361 = vunpack.c.l.b16 %v1307
      %v1362 = vunpack.c.l.b16 %v1308
      %v1363 = vunpack.c.l.b16 %v1309
      %v1364 = vunpack.c.l.b16 %v1310
      %v1365 = vunpack.c.l.b16 %v1311
      %v1366 = vunpack.c.l.b16 %v1312
      %v1367 = vunpack.c.l.b16 %v1313
      %v1368 = vunpack.c.l.b16 %v1314
      %v1369 = vunpack.c.l.b16 %v1315
      %v1370 = vunpack.c.l.b16 %v1316
      %v1371 = vpack.c.b16 %v1356, %v1355
      %v1372 = vpack.c.b16 %v1358, %v1357
      %v1373 = vpack.c.b16 %v1360, %v1359
      %v1374 = vpack.c.b16 %v1362, %v1361
      %v1375 = vpack.c.b16 %v1364, %v1363
      %v1376 = vpack.c.b16 %v1366, %v1365
      %v1377 = vpack.c.b16 %v1368, %v1367
      %v1378 = vpack.c.b16 %v1370, %v1369
      %1387 = vmatprep.subr.bf16.mxu0 0
      %1388 = vmatpush1.bf16.msra.mxu0 %v1378
      %1389 = vmatprep.subr.bf16.mxu0 0
      %1390 = vmatpush1.bf16.msra.mxu0 %v1377
      %1391 = vmatprep.subr.bf16.mxu0 0
      %1392 = vmatpush1.bf16.msra.mxu0 %v1376
      %1393 = vmatprep.subr.bf16.mxu0 0
      %1394 = vmatpush1.bf16.msra.mxu0 %v1375
      %1395 = vmatprep.subr.bf16.mxu0 0
      %1396 = vmatpush1.bf16.msra.mxu0 %v1374
      %1397 = vmatprep.subr.bf16.mxu0 0
      %1398 = vmatpush1.bf16.msra.mxu0 %v1373
      %1399 = vmatprep.subr.bf16.mxu0 0
      %1400 = vmatpush1.bf16.msra.mxu0 %v1372
      %1401 = vmatprep.subr.bf16.mxu0 0
      %1402 = vmatpush1.bf16.msra.mxu0 %v1371
      %1403 = vmatprep.subr.bf16.mxu0 0
      %1404 = vmatpush2.bf16.msra.mxu0 0
      %1405 = vmatprep.subr.bf16.mxu0 0
      %1406 = vmatpush2.bf16.msra.mxu0 0
      %1407 = vmatprep.subr.bf16.mxu0 0
      %1408 = vmatpush2.bf16.msra.mxu0 0
      %1409 = vmatprep.subr.bf16.mxu0 0
      %1410 = vmatpush2.bf16.msra.mxu0 0
      %1411 = vmatprep.subr.bf16.mxu0 0
      %1412 = vmatpush2.bf16.msra.mxu0 0
      %1413 = vmatprep.subr.bf16.mxu0 0
      %1414 = vmatpush2.bf16.msra.mxu0 0
      %1415 = vmatprep.subr.bf16.mxu0 0
      %1416 = vmatpush2.bf16.msra.mxu0 0
      %1417 = vmatprep.subr.bf16.mxu0 0
      %1418 = vmatpush2.bf16.msra.mxu0 0
      %1419 = vmatprep.mubr.bf16.mxu0 0
      %1420 = vmatmul.mubr.bf16.gmra.mxu0 %v1337
      %v1421 = vpop.f32.mrf.mxu0
      %v1422 = vadd.f32 0.0, %v1421
      %v1423 = vpop.f32.mrf.mxu0
      %v1424 = vpop.f32.mrf.mxu0
      %v1425 = vadd.f32 0.0, %v1424
      %v1426 = vpop.f32.mrf.mxu0
      %1427 = vdwg.mxu0
      %v1428 = vadd.f32 %v1293, %v1422
      %v1429 = vadd.f32 %v1294, %v1425
      %s1430 = scalar_lea.vmem %s296, 4
      %v1431 = vld [vmem:[%s1430] sm:$0x3]
      %v1432 = vld [vmem:[%s1430 + $0x4] sm:$0x3]
      %v1433 = vld [vmem:[%s1430 + $0x8] sm:$0x3]
      %v1434 = vld [vmem:[%s1430 + $0xc] sm:$0x3]
      %s1435 = scalar_lea.vmem %s4, 448
      %v1436 = vld [vmem:[%s1435] sm:$0xf]
      %v1437 = vld [vmem:[%s1435 + $0x4] sm:$0xf]
      %v1438 = vld [vmem:[%s1435 + $0x8] sm:$0xf]
      %v1439 = vld [vmem:[%s1435 + $0xc] sm:$0xf]
      %v1440 = vld [vmem:[%s1435 + $0x10] sm:$0xf]
      %v1441 = vld [vmem:[%s1435 + $0x14] sm:$0xf]
      %v1442 = vld [vmem:[%s1435 + $0x18] sm:$0xf]
      %v1443 = vld [vmem:[%s1435 + $0x1c] sm:$0xf]
      %v1444 = vld [vmem:[%s1435 + $0x20] sm:$0xf]
      %v1445 = vld [vmem:[%s1435 + $0x24] sm:$0xf]
      %v1446 = vld [vmem:[%s1435 + $0x28] sm:$0xf]
      %v1447 = vld [vmem:[%s1435 + $0x2c] sm:$0xf]
      %v1448 = vld [vmem:[%s1435 + $0x30] sm:$0xf]
      %v1449 = vld [vmem:[%s1435 + $0x34] sm:$0xf]
      %v1450 = vld [vmem:[%s1435 + $0x38] sm:$0xf]
      %v1451 = vld [vmem:[%s1435 + $0x3c] sm:$0xf]
      %v1456 = vcombine.low %v1431, %v1432
      %v1457 = vcombine.low %v1433, %v1434
      %v1459 = vunpack.c.l.s4 1983009808
      %v1460 = vunpack.c.0.s8 %v1459
      %v1461 = vlaneseq
      %v1462 = vshrl.u32 %v1461, 7
      %v1463 = vsub.s32 %v1460, %v1462
      %v1464 = vrot.slane %v1456, %v1463
      %v1466 = vunpack.c.l.s4 1983009808
      %v1467 = vunpack.c.0.s8 %v1466
      %v1468 = vlaneseq
      %v1469 = vshrl.u32 %v1468, 7
      %v1470 = vsub.s32 %v1467, %v1469
      %v1471 = vrot.slane %v1457, %v1470
      %v1472 = vcombine.low %v1464, %v1471
      %v1490 = vunpack.c.l.b16 %v1436
      %v1491 = vunpack.c.l.b16 %v1437
      %v1492 = vunpack.c.l.b16 %v1438
      %v1493 = vunpack.c.l.b16 %v1439
      %v1494 = vunpack.c.l.b16 %v1440
      %v1495 = vunpack.c.l.b16 %v1441
      %v1496 = vunpack.c.l.b16 %v1442
      %v1497 = vunpack.c.l.b16 %v1443
      %v1498 = vunpack.c.l.b16 %v1444
      %v1499 = vunpack.c.l.b16 %v1445
      %v1500 = vunpack.c.l.b16 %v1446
      %v1501 = vunpack.c.l.b16 %v1447
      %v1502 = vunpack.c.l.b16 %v1448
      %v1503 = vunpack.c.l.b16 %v1449
      %v1504 = vunpack.c.l.b16 %v1450
      %v1505 = vunpack.c.l.b16 %v1451
      %v1506 = vpack.c.b16 %v1491, %v1490
      %v1507 = vpack.c.b16 %v1493, %v1492
      %v1508 = vpack.c.b16 %v1495, %v1494
      %v1509 = vpack.c.b16 %v1497, %v1496
      %v1510 = vpack.c.b16 %v1499, %v1498
      %v1511 = vpack.c.b16 %v1501, %v1500
      %v1512 = vpack.c.b16 %v1503, %v1502
      %v1513 = vpack.c.b16 %v1505, %v1504
      %1522 = vmatprep.subr.bf16.mxu0 0
      %1523 = vmatpush1.bf16.msra.mxu0 %v1513
      %1524 = vmatprep.subr.bf16.mxu0 0
      %1525 = vmatpush1.bf16.msra.mxu0 %v1512
      %1526 = vmatprep.subr.bf16.mxu0 0
      %1527 = vmatpush1.bf16.msra.mxu0 %v1511
      %1528 = vmatprep.subr.bf16.mxu0 0
      %1529 = vmatpush1.bf16.msra.mxu0 %v1510
      %1530 = vmatprep.subr.bf16.mxu0 0
      %1531 = vmatpush1.bf16.msra.mxu0 %v1509
      %1532 = vmatprep.subr.bf16.mxu0 0
      %1533 = vmatpush1.bf16.msra.mxu0 %v1508
      %1534 = vmatprep.subr.bf16.mxu0 0
      %1535 = vmatpush1.bf16.msra.mxu0 %v1507
      %1536 = vmatprep.subr.bf16.mxu0 0
      %1537 = vmatpush1.bf16.msra.mxu0 %v1506
      %1538 = vmatprep.subr.bf16.mxu0 0
      %1539 = vmatpush2.bf16.msra.mxu0 0
      %1540 = vmatprep.subr.bf16.mxu0 0
      %1541 = vmatpush2.bf16.msra.mxu0 0
      %1542 = vmatprep.subr.bf16.mxu0 0
      %1543 = vmatpush2.bf16.msra.mxu0 0
      %1544 = vmatprep.subr.bf16.mxu0 0
      %1545 = vmatpush2.bf16.msra.mxu0 0
      %1546 = vmatprep.subr.bf16.mxu0 0
      %1547 = vmatpush2.bf16.msra.mxu0 0
      %1548 = vmatprep.subr.bf16.mxu0 0
      %1549 = vmatpush2.bf16.msra.mxu0 0
      %1550 = vmatprep.subr.bf16.mxu0 0
      %1551 = vmatpush2.bf16.msra.mxu0 0
      %1552 = vmatprep.subr.bf16.mxu0 0
      %1553 = vmatpush2.bf16.msra.mxu0 0
      %1554 = vmatprep.mubr.bf16.mxu0 0
      %1555 = vmatmul.mubr.bf16.gmra.mxu0 %v1472
      %v1556 = vpop.f32.mrf.mxu0
      %v1557 = vadd.f32 0.0, %v1556
      %v1558 = vpop.f32.mrf.mxu0
      %v1559 = vpop.f32.mrf.mxu0
      %v1560 = vadd.f32 0.0, %v1559
      %v1561 = vpop.f32.mrf.mxu0
      %1562 = vdwg.mxu0
      %v1563 = vadd.f32 %v1428, %v1557
      %v1564 = vadd.f32 %v1429, %v1560
      %v1565 = vld [vmem:[%s1295] sm:$0x7]
      %v1566 = vld [vmem:[%s1295 + $0x4] sm:$0x7]
      %v1567 = vld [vmem:[%s1295 + $0x8] sm:$0x7]
      %v1568 = vld [vmem:[%s1295 + $0xc] sm:$0x7]
      %v1574 = vunpack.c.l.s4 1983009808
      %v1575 = vunpack.c.0.s8 %v1574
      %v1576 = vlaneseq
      %v1577 = vshrl.u32 %v1576, 7
      %v1578 = vsub.s32 %v1575, %v1577
      %v1579 = vrot.slane %v1565, %v1578
      %v1580 = vcombine.high %v1579, %v1579
      %v1582 = vunpack.c.l.s4 1983009808
      %v1583 = vunpack.c.0.s8 %v1582
      %v1584 = vlaneseq
      %v1585 = vshrl.u32 %v1584, 7
      %v1586 = vsub.s32 %v1583, %v1585
      %v1587 = vrot.slane %v1566, %v1586
      %v1588 = vcombine.high %v1587, %v1587
      %v1590 = vunpack.c.l.s4 1983009808
      %v1591 = vunpack.c.0.s8 %v1590
      %v1592 = vlaneseq
      %v1593 = vshrl.u32 %v1592, 7
      %v1594 = vsub.s32 %v1591, %v1593
      %v1595 = vrot.slane %v1567, %v1594
      %v1596 = vcombine.high %v1595, %v1595
      %v1598 = vunpack.c.l.s4 1983009808
      %v1599 = vunpack.c.0.s8 %v1598
      %v1600 = vlaneseq
      %v1601 = vshrl.u32 %v1600, 7
      %v1602 = vsub.s32 %v1599, %v1601
      %v1603 = vrot.slane %v1568, %v1602
      %v1604 = vcombine.high %v1603, %v1603
      %v1606 = vshrl.u32 %v1579, 16
      %v1608 = vrot.slane %v1606, 6
      %v1609 = vshll.u32 %v1579, 16
      %v1611 = vrot.slane %v1609, 7
      %v1612 = vor.u32 %v1608, %v1611
      %v1613 = vrot.slane %v1612, 2
      %v1615 = vshll.u32 %v1580, 16
      %v1617 = vrot.slane %v1615, 7
      %v1618 = vsel %vm622, %v1613, %v1617
      %v1620 = vshrl.u32 %v1587, 16
      %v1622 = vrot.slane %v1620, 6
      %v1623 = vshll.u32 %v1587, 16
      %v1625 = vrot.slane %v1623, 7
      %v1626 = vor.u32 %v1622, %v1625
      %v1627 = vrot.slane %v1626, 2
      %v1629 = vshll.u32 %v1588, 16
      %v1631 = vrot.slane %v1629, 7
      %v1632 = vsel %vm622, %v1627, %v1631
      %v1634 = vshrl.u32 %v1595, 16
      %v1636 = vrot.slane %v1634, 6
      %v1637 = vshll.u32 %v1595, 16
      %v1639 = vrot.slane %v1637, 7
      %v1640 = vor.u32 %v1636, %v1639
      %v1641 = vrot.slane %v1640, 2
      %v1643 = vshll.u32 %v1596, 16
      %v1645 = vrot.slane %v1643, 7
      %v1646 = vsel %vm622, %v1641, %v1645
      %v1648 = vshrl.u32 %v1603, 16
      %v1650 = vrot.slane %v1648, 6
      %v1651 = vshll.u32 %v1603, 16
      %v1653 = vrot.slane %v1651, 7
      %v1654 = vor.u32 %v1650, %v1653
      %v1655 = vrot.slane %v1654, 2
      %v1657 = vshll.u32 %v1604, 16
      %v1659 = vrot.slane %v1657, 7
      %v1660 = vsel %vm622, %v1655, %v1659
      %s1661 = scalar_lea.vmem %s4, 512
      %v1662 = vld [vmem:[%s1661] sm:$0xf]
      %v1663 = vld [vmem:[%s1661 + $0x4] sm:$0xf]
      %v1664 = vld [vmem:[%s1661 + $0x8] sm:$0xf]
      %v1665 = vld [vmem:[%s1661 + $0xc] sm:$0xf]
      %v1666 = vld [vmem:[%s1661 + $0x10] sm:$0xf]
      %v1667 = vld [vmem:[%s1661 + $0x14] sm:$0xf]
      %v1668 = vld [vmem:[%s1661 + $0x18] sm:$0xf]
      %v1669 = vld [vmem:[%s1661 + $0x1c] sm:$0xf]
      %v1670 = vld [vmem:[%s1661 + $0x20] sm:$0xf]
      %v1671 = vld [vmem:[%s1661 + $0x24] sm:$0xf]
      %v1672 = vld [vmem:[%s1661 + $0x28] sm:$0xf]
      %v1673 = vld [vmem:[%s1661 + $0x2c] sm:$0xf]
      %v1674 = vld [vmem:[%s1661 + $0x30] sm:$0xf]
      %v1675 = vld [vmem:[%s1661 + $0x34] sm:$0xf]
      %v1676 = vld [vmem:[%s1661 + $0x38] sm:$0xf]
      %v1677 = vld [vmem:[%s1661 + $0x3c] sm:$0xf]
      %v1678 = vcombine.low %v1618, %v1632
      %v1679 = vcombine.low %v1646, %v1660
      %v1681 = vunpack.c.l.s4 1983009808
      %v1682 = vunpack.c.0.s8 %v1681
      %v1683 = vlaneseq
      %v1684 = vshrl.u32 %v1683, 7
      %v1685 = vsub.s32 %v1682, %v1684
      %v1686 = vrot.slane %v1678, %v1685
      %v1688 = vunpack.c.l.s4 1983009808
      %v1689 = vunpack.c.0.s8 %v1688
      %v1690 = vlaneseq
      %v1691 = vshrl.u32 %v1690, 7
      %v1692 = vsub.s32 %v1689, %v1691
      %v1693 = vrot.slane %v1679, %v1692
      %v1694 = vcombine.low %v1686, %v1693
      %v1712 = vunpack.c.l.b16 %v1662
      %v1713 = vunpack.c.l.b16 %v1663
      %v1714 = vunpack.c.l.b16 %v1664
      %v1715 = vunpack.c.l.b16 %v1665
      %v1716 = vunpack.c.l.b16 %v1666
      %v1717 = vunpack.c.l.b16 %v1667
      %v1718 = vunpack.c.l.b16 %v1668
      %v1719 = vunpack.c.l.b16 %v1669
      %v1720 = vunpack.c.l.b16 %v1670
      %v1721 = vunpack.c.l.b16 %v1671
      %v1722 = vunpack.c.l.b16 %v1672
      %v1723 = vunpack.c.l.b16 %v1673
      %v1724 = vunpack.c.l.b16 %v1674
      %v1725 = vunpack.c.l.b16 %v1675
      %v1726 = vunpack.c.l.b16 %v1676
      %v1727 = vunpack.c.l.b16 %v1677
      %v1728 = vpack.c.b16 %v1713, %v1712
      %v1729 = vpack.c.b16 %v1715, %v1714
      %v1730 = vpack.c.b16 %v1717, %v1716
      %v1731 = vpack.c.b16 %v1719, %v1718
      %v1732 = vpack.c.b16 %v1721, %v1720
      %v1733 = vpack.c.b16 %v1723, %v1722
      %v1734 = vpack.c.b16 %v1725, %v1724
      %v1735 = vpack.c.b16 %v1727, %v1726
      %1744 = vmatprep.subr.bf16.mxu0 0
      %1745 = vmatpush1.bf16.msra.mxu0 %v1735
      %1746 = vmatprep.subr.bf16.mxu0 0
      %1747 = vmatpush1.bf16.msra.mxu0 %v1734
      %1748 = vmatprep.subr.bf16.mxu0 0
      %1749 = vmatpush1.bf16.msra.mxu0 %v1733
      %1750 = vmatprep.subr.bf16.mxu0 0
      %1751 = vmatpush1.bf16.msra.mxu0 %v1732
      %1752 = vmatprep.subr.bf16.mxu0 0
      %1753 = vmatpush1.bf16.msra.mxu0 %v1731
      %1754 = vmatprep.subr.bf16.mxu0 0
      %1755 = vmatpush1.bf16.msra.mxu0 %v1730
      %1756 = vmatprep.subr.bf16.mxu0 0
      %1757 = vmatpush1.bf16.msra.mxu0 %v1729
      %1758 = vmatprep.subr.bf16.mxu0 0
      %1759 = vmatpush1.bf16.msra.mxu0 %v1728
      %1760 = vmatprep.subr.bf16.mxu0 0
      %1761 = vmatpush2.bf16.msra.mxu0 0
      %1762 = vmatprep.subr.bf16.mxu0 0
      %1763 = vmatpush2.bf16.msra.mxu0 0
      %1764 = vmatprep.subr.bf16.mxu0 0
      %1765 = vmatpush2.bf16.msra.mxu0 0
      %1766 = vmatprep.subr.bf16.mxu0 0
      %1767 = vmatpush2.bf16.msra.mxu0 0
      %1768 = vmatprep.subr.bf16.mxu0 0
      %1769 = vmatpush2.bf16.msra.mxu0 0
      %1770 = vmatprep.subr.bf16.mxu0 0
      %1771 = vmatpush2.bf16.msra.mxu0 0
      %1772 = vmatprep.subr.bf16.mxu0 0
      %1773 = vmatpush2.bf16.msra.mxu0 0
      %1774 = vmatprep.subr.bf16.mxu0 0
      %1775 = vmatpush2.bf16.msra.mxu0 0
      %1776 = vmatprep.mubr.bf16.mxu0 0
      %1777 = vmatmul.mubr.bf16.gmra.mxu0 %v1694
      %v1778 = vpop.f32.mrf.mxu0
      %v1779 = vadd.f32 0.0, %v1778
      %v1780 = vpop.f32.mrf.mxu0
      %v1781 = vpop.f32.mrf.mxu0
      %v1782 = vadd.f32 0.0, %v1781
      %v1783 = vpop.f32.mrf.mxu0
      %1784 = vdwg.mxu0
      %v1785 = vadd.f32 %v1563, %v1779
      %v1786 = vadd.f32 %v1564, %v1782
      %v1787 = vld [vmem:[%s5] sm:$0x1]
      %v1789 = vlaneseq
      %v1790 = vshrl.u32 %v1789, 7
      %v1791 = vsub.s32 0, %v1790
      %v1792 = vrot.slane %v1787, %v1791
      %v1794 = vadd.f32 %v1785, %v1792
      %v1795 = vadd.f32 %v1786, %v1792
      %v1796 = vmax.f32 %v1794, 0.0
      %v1797 = vmax.f32 %v1795, 0.0
      %v1798 = vpack.c.bf16 %v1797, %v1796
      %v1800 = vunpack.c.l.b16 %v1798
      %v1801 = vunpack.c.h.b16 %v1798
      %v1802 = vpack.c.b16 %v1800, %v1800
      %v1803 = vpack.c.b16 %v1801, %v1801
      %1806 = vst [vmem:[%s311] sm:$0xf] %v1802
      %1807 = vst [vmem:[%s311 + $0x4] sm:$0xf] %v1803
      %p1808 = scmp.lt.s32.totalorder %s17, 1
      %s1809 = scalar_select %p1808, %s17, 1
      %s1810 = smul.addr %s1809, 2
      %s1811 = smul.addr %s1810, 4
      %s1812 = scalar_lea.vmem %s6, %s1811
      // Predicated region
      $region45: #{jetseg_forward.4} parent=43 // pred_check
        %p1813 = pneg %p181
      $region46: #{jetseg_forward.4} parent=43 // pred_check_branch
        %1815 = sbr.rel (%p1813) target = $region48
      $region47: #{jetseg_forward.4} parent=43 // pred_region
        _
      $region48: #{jetseg_forward.4} parent=43 // pred_fallthru
        _
    $region44: #{jetseg_forward.4} parent=5 // pred_fallthru
      _
    %p1816 = scmp.le.s32.totalorder 2, %s12
    // Predicated region
    $region49: #{jetseg_forward.4} parent=5 // pred_check
      %p1817 = pneg %p1816
    $region50: #{jetseg_forward.4} parent=5 // pred_check_branch
      %1819 = sbr.rel (%p1817) target = $region52
    $region51: #{jetseg_forward.4} parent=5 // pred_region
      %s1820 = ssub.s32 %s12, 2
      // Predicated region
      $region53: #{jetseg_forward.4} parent=51 // pred_check
        %p1821 = pneg %p187
      $region54: #{jetseg_forward.4} parent=51 // pred_check_branch
        %1823 = sbr.rel (%p1821) target = $region56
      $region55: #{jetseg_forward.4} parent=51 // pred_region
        %p1824 = scmp.lt.s32.totalorder %s18, 1
        %s1825 = scalar_select %p1824, %s18, 1
        %s1826 = smul.addr %s1825, 2
        %s1827 = smul.addr %s1826, 4
        %s1828 = scalar_lea.vmem %s6, %s1827
      $region56: #{jetseg_forward.4} parent=51 // pred_fallthru
        _
    $region52: #{jetseg_forward.4} parent=5 // pred_fallthru
      _
  $region6: #{jetseg_forward.4} parent=0 // loop_footer
    %s16 = sadd.s32 1, %s12
  $region7: #{jetseg_forward.4} parent=0 // loop_footer_branch
    %11 = sbr.rel target = $region3
  $region8: #{jetseg_forward.4} parent=0 // loop_exit
    _

// kernel: jetseg_forward.5
$region0: #{jetseg_forward.5}
  #allocation0 [shape = 'u32[]', space=smem, size = 0x4, offset = 0x4, fixed_abs, tag = 'smem constant byte address 0x4 - core index']
  #allocation1 [shape = 'u32[144,128]{1,0:T(1,128)}', space=vmem, size = 0x12000, scoped, tag = 'internal scratch']
  #allocation2 [shape = 'f32[4,32,16]{2,1,0:T(8,128)}', space=vmem, size = 0x10000, scoped, tag = 'scratch operand']
  %s0 = inlined_call_operand.vmem [shape: bf16[2,4,4,128], index: 0, kind: input, shape index: {}]
  %s1 = inlined_call_operand.vmem [shape: bf16[32,128], index: 1, kind: input, shape index: {}]
  %s2 = inlined_call_operand.vmem [shape: f32[32,1], index: 2, kind: input, shape index: {}]
  %s3 = inlined_call_operand.vmem [shape: bf16[16,4], index: 3, kind: input, shape index: {}, may-alias: {3,4}]
  %s4 = inlined_call_operand.vmem [shape: bf16[16,4], index: 4, kind: input, shape index: {}, may-alias: {3,4}]
  %s5 = inlined_call_operand.vmem [shape: f32[2,32,16,16], index: 5, kind: output, shape index: {}]
  %s6 = sld [smem:[#allocation0]]
  $region53: #{jetseg_forward.5} parent=0
    _
  %s8 = ssub.s32 1, %s6
  %s9 = scalar_select 0, %s8, %s6
  loop: start=0, step=1, limit=4
  $region2: #{jetseg_forward.5} parent=0 // loop_pre_header
    _
  $region3: #{jetseg_forward.5} parent=0 // loop_header
    %s11 = sphi 0, %s15
    %p12 = scmp.ge.s32.totalorder %s11, 4
    %s21 = sphi 0, %s23
    %s24 = sphi 0, %s21
    %s25 = sphi 0, %s24
    %s41 = sphi 0, %s25
    %s45 = sphi 0, %s45
    %s47 = sphi 0, %s45
    %s48 = sphi 0, %s47
    %s62 = sphi 0, %s48
    %s66 = sphi 0, %s66
    %s68 = sphi 0, %s66
    %s69 = sphi 0, %s68
    %s83 = sphi 0, %s69
    %s87 = sphi 0, %s87
    %s89 = sphi 0, %s87
    %s90 = sphi 0, %s89
    %s104 = sphi 0, %s90
    %s108 = sphi 0, %s108
    %s110 = sphi 0, %s108
    %s111 = sphi 0, %s110
    %s125 = sphi 0, %s111
    %s131 = sphi 0, %s133
    %s134 = sphi 0, %s131
    %s135 = sphi 0, %s134
    %s151 = sphi 0, %s135
  $region4: #{jetseg_forward.5} parent=0 // loop_header_branch
    %14 = sbr.rel (%p12) target = $region8
  $region5: #{jetseg_forward.5} parent=0 // loop_body
    %s16 = ssub.s32 %s11, 1
    %s17 = ssub.s32 %s11, 2
    %s18 = sadd.s32 %s11, 1
    %s19 = ssub.s32 %s11, %s18
    %p20 = scmp.eq.s32.totalorder %s19, 0
    %s22 = sadd.s32 %s21, 1
    %s23 = scalar_select %p20, %s21, %s22
    %p26 = pneg %p20
    %p27 = scmp.eq.s32.totalorder %s11, 1
    %p28 = por %p26, %p27
    %p29 = scmp.ne.s32.totalorder %s21, %s24
    %p30 = scmp.eq.s32.totalorder %s11, 0
    %p31 = por %p29, %p30
    %p32 = scmp.ne.s32.totalorder %s21, %s24
    %p33 = scmp.eq.s32.totalorder %s16, 1
    %p34 = por %p32, %p33
    %p35 = scmp.ne.s32.totalorder %s24, %s25
    %p36 = scmp.eq.s32.totalorder %s16, 0
    %p37 = por %p35, %p36
    %p38 = scmp.ne.s32.totalorder %s24, %s25
    %p39 = scmp.eq.s32.totalorder %s17, 1
    %p40 = por %p38, %p39
    %p42 = scmp.ne.s32.totalorder %s25, %s41
    %p43 = scmp.eq.s32.totalorder %s17, 0
    %p44 = por %p42, %p43
    %s46 = sadd.s32 %s45, 1
    %p49 = scmp.eq.s32.totalorder %s11, 1
    %p50 = scmp.ne.s32.totalorder %s45, %s47
    %p51 = scmp.eq.s32.totalorder %s11, 0
    %p52 = por %p50, %p51
    %p53 = scmp.ne.s32.totalorder %s45, %s47
    %p54 = scmp.eq.s32.totalorder %s16, 1
    %p55 = por %p53, %p54
    %p56 = scmp.ne.s32.totalorder %s47, %s48
    %p57 = scmp.eq.s32.totalorder %s16, 0
    %p58 = por %p56, %p57
    %p59 = scmp.ne.s32.totalorder %s47, %s48
    %p60 = scmp.eq.s32.totalorder %s17, 1
    %p61 = por %p59, %p60
    %p63 = scmp.ne.s32.totalorder %s48, %s62
    %p64 = scmp.eq.s32.totalorder %s17, 0
    %p65 = por %p63, %p64
    %s67 = sadd.s32 %s66, 1
    %p70 = scmp.eq.s32.totalorder %s11, 1
    %p71 = scmp.ne.s32.totalorder %s66, %s68
    %p72 = scmp.eq.s32.totalorder %s11, 0
    %p73 = por %p71, %p72
    %p74 = scmp.ne.s32.totalorder %s66, %s68
    %p75 = scmp.eq.s32.totalorder %s16, 1
    %p76 = por %p74, %p75
    %p77 = scmp.ne.s32.totalorder %s68, %s69
    %p78 = scmp.eq.s32.totalorder %s16, 0
    %p79 = por %p77, %p78
    %p80 = scmp.ne.s32.totalorder %s68, %s69
    %p81 = scmp.eq.s32.totalorder %s17, 1
    %p82 = por %p80, %p81
    %p84 = scmp.ne.s32.totalorder %s69, %s83
    %p85 = scmp.eq.s32.totalorder %s17, 0
    %p86 = por %p84, %p85
    %s88 = sadd.s32 %s87, 1
    %p91 = scmp.eq.s32.totalorder %s11, 1
    %p92 = scmp.ne.s32.totalorder %s87, %s89
    %p93 = scmp.eq.s32.totalorder %s11, 0
    %p94 = por %p92, %p93
    %p95 = scmp.ne.s32.totalorder %s87, %s89
    %p96 = scmp.eq.s32.totalorder %s16, 1
    %p97 = por %p95, %p96
    %p98 = scmp.ne.s32.totalorder %s89, %s90
    %p99 = scmp.eq.s32.totalorder %s16, 0
    %p100 = por %p98, %p99
    %p101 = scmp.ne.s32.totalorder %s89, %s90
    %p102 = scmp.eq.s32.totalorder %s17, 1
    %p103 = por %p101, %p102
    %p105 = scmp.ne.s32.totalorder %s90, %s104
    %p106 = scmp.eq.s32.totalorder %s17, 0
    %p107 = por %p105, %p106
    %s109 = sadd.s32 %s108, 1
    %p112 = scmp.eq.s32.totalorder %s11, 1
    %p113 = scmp.ne.s32.totalorder %s108, %s110
    %p114 = scmp.eq.s32.totalorder %s11, 0
    %p115 = por %p113, %p114
    %p116 = scmp.ne.s32.totalorder %s108, %s110
    %p117 = scmp.eq.s32.totalorder %s16, 1
    %p118 = por %p116, %p117
    %p119 = scmp.ne.s32.totalorder %s110, %s111
    %p120 = scmp.eq.s32.totalorder %s16, 0
    %p121 = por %p119, %p120
    %p122 = scmp.ne.s32.totalorder %s110, %s111
    %p123 = scmp.eq.s32.totalorder %s17, 1
    %p124 = por %p122, %p123
    %p126 = scmp.ne.s32.totalorder %s111, %s125
    %p127 = scmp.eq.s32.totalorder %s17, 0
    %p128 = por %p126, %p127
    %s129 = ssub.s32 %s11, %s18
    %p130 = scmp.eq.s32.totalorder %s129, 0
    %s132 = sadd.s32 %s131, 1
    %s133 = scalar_select %p130, %s131, %s132
    %p136 = pneg %p130
    %p137 = scmp.eq.s32.totalorder %s11, 1
    %p138 = por %p136, %p137
    %p139 = scmp.ne.s32.totalorder %s131, %s134
    %p140 = scmp.eq.s32.totalorder %s11, 0
    %p141 = por %p139, %p140
    %p142 = scmp.ne.s32.totalorder %s131, %s134
    %p143 = scmp.eq.s32.totalorder %s16, 1
    %p144 = por %p142, %p143
    %p145 = scmp.ne.s32.totalorder %s134, %s135
    %p146 = scmp.eq.s32.totalorder %s16, 0
    %p147 = por %p145, %p146
    %p148 = scmp.ne.s32.totalorder %s134, %s135
    %p149 = scmp.eq.s32.totalorder %s17, 1
    %p150 = por %p148, %p149
    %p152 = scmp.ne.s32.totalorder %s135, %s151
    %p153 = scmp.eq.s32.totalorder %s17, 0
    %p154 = por %p152, %p153
    %p155 = scmp.le.s32.totalorder 1, %s11
    %p156 = scmp.lt.s32.totalorder %s11, 3
    %p157 = pnand %p155, %p156
    %p158 = pneg %p157
    // Predicated region
    $region9: #{jetseg_forward.5} parent=5 // pred_check
      _
    $region10: #{jetseg_forward.5} parent=5 // pred_check_branch
      %160 = sbr.rel (%p157) target = $region12
    $region11: #{jetseg_forward.5} parent=5 // pred_region
      %s161 = ssub.s32 %s11, 1
      // Predicated region
      $region13: #{jetseg_forward.5} parent=11 // pred_check
        %p162 = pneg %p58
      $region14: #{jetseg_forward.5} parent=11 // pred_check_branch
        %164 = sbr.rel (%p162) target = $region16
      $region15: #{jetseg_forward.5} parent=11 // pred_region
        _
      $region16: #{jetseg_forward.5} parent=11 // pred_fallthru
        _
      // Predicated region
      $region17: #{jetseg_forward.5} parent=11 // pred_check
        %p165 = pneg %p79
      $region18: #{jetseg_forward.5} parent=11 // pred_check_branch
        %167 = sbr.rel (%p165) target = $region20
      $region19: #{jetseg_forward.5} parent=11 // pred_region
        _
      $region20: #{jetseg_forward.5} parent=11 // pred_fallthru
        _
      // Predicated region
      $region21: #{jetseg_forward.5} parent=11 // pred_check
        %p168 = pneg %p100
      $region22: #{jetseg_forward.5} parent=11 // pred_check_branch
        %170 = sbr.rel (%p168) target = $region24
      $region23: #{jetseg_forward.5} parent=11 // pred_region
        _
      $region24: #{jetseg_forward.5} parent=11 // pred_fallthru
        _
      // Predicated region
      $region25: #{jetseg_forward.5} parent=11 // pred_check
        %p171 = pneg %p121
      $region26: #{jetseg_forward.5} parent=11 // pred_check_branch
        %173 = sbr.rel (%p171) target = $region28
      $region27: #{jetseg_forward.5} parent=11 // pred_region
        _
      $region28: #{jetseg_forward.5} parent=11 // pred_fallthru
        _
    $region12: #{jetseg_forward.5} parent=5 // pred_fallthru
      _
    %p174 = scmp.lt.s32.totalorder %s11, 2
    // Predicated region
    $region29: #{jetseg_forward.5} parent=5 // pred_check
      %p175 = pneg %p174
    $region30: #{jetseg_forward.5} parent=5 // pred_check_branch
      %177 = sbr.rel (%p175) target = $region32
    $region31: #{jetseg_forward.5} parent=5 // pred_region
      // Predicated region
      $region33: #{jetseg_forward.5} parent=31 // pred_check
        %p178 = pneg %p31
      $region34: #{jetseg_forward.5} parent=31 // pred_check_branch
        %180 = sbr.rel (%p178) target = $region36
      $region35: #{jetseg_forward.5} parent=31 // pred_region
        %p181 = scmp.lt.s32.totalorder %s11, 1
        %s182 = scalar_select %p181, %s11, 1
        %s183 = smul.addr %s182, 4
        %s184 = smul.addr %s183, 2
        %s185 = scalar_lea.vmem %s0, %s184
      $region36: #{jetseg_forward.5} parent=31 // pred_fallthru
        _
    $region32: #{jetseg_forward.5} parent=5 // pred_fallthru
      _
    %p186 = scmp.le.s32.totalorder 1, %s11
    %p187 = scmp.lt.s32.totalorder %s11, 3
    %p188 = pnand %p186, %p187
    %p189 = pneg %p188
    // Predicated region
    $region37: #{jetseg_forward.5} parent=5 // pred_check
      _
    $region38: #{jetseg_forward.5} parent=5 // pred_check_branch
      %191 = sbr.rel (%p188) target = $region40
    $region39: #{jetseg_forward.5} parent=5 // pred_region
      %s192 = ssub.s32 %s11, 1
      %p193 = scmp.lt.s32.totalorder %s16, 1
      %s194 = scalar_select %p193, %s16, 1
      %s195 = smul.addr %s194, 4
      %s196 = smul.addr %s195, 2
      %s197 = scalar_lea.vmem %s0, %s196
      %p198 = pneg %p37
      %p199 = pneg %p34
      %p200 = pneg %p58
      %p201 = pneg %p55
      %p202 = pneg %p79
      %p203 = pneg %p76
      %p204 = pneg %p100
      %p205 = pneg %p97
      %p206 = pneg %p121
      %p207 = pneg %p118
      %p208 = pneg %p147
      %p209 = pneg %p144
      %p210 = scmp.lt.s32.totalorder %s16, 1
      %s211 = scalar_select %p210, %s16, 1
      %s212 = smul.addr %s211, 64
      %s213 = smul.addr %s212, 8
      %s214 = scalar_lea.vmem %s5, %s213
      %p215 = scmp.lt.s32.totalorder %s16, 1
      %s216 = scalar_select %p215, %s16, 1
      %s217 = smul.addr %s216, 4
      %s218 = smul.addr %s217, 2
      %s219 = scalar_lea.vmem %s0, %s218
      %p220 = scmp.lt.s32.totalorder %s16, 1
      %s221 = scalar_select %p220, %s16, 1
      %s222 = smul.addr %s221, 64
      %s223 = smul.addr %s222, 8
      %s224 = scalar_lea.vmem %s5, %s223
      %v226 = vld [vmem:[%s219] sm:$0x3]
      %v227 = vld [vmem:[%s1] sm:$0xf]
      %v228 = vld [vmem:[%s1 + $0x4] sm:$0xf]
      %v229 = vld [vmem:[%s1 + $0x8] sm:$0xf]
      %v230 = vld [vmem:[%s1 + $0xc] sm:$0xf]
      %v231 = vld [vmem:[%s2] sm:$0xff]
      %v232 = vld [vmem:[%s2 + $0x8] sm:$0xff]
      %v233 = vld [vmem:[%s2 + $0x10] sm:$0xff]
      %v234 = vld [vmem:[%s2 + $0x18] sm:$0xff]
      %236 = vset.pattern.permute.xlu0 0
      %237 = vperm.xlu0 %236, %v231
      %v238 = vpop.permute.xlu0 %237
      %241 = vset.pattern.permute.xlu0 0
      %242 = vperm.xlu0 %241, %v232
      %v243 = vpop.permute.xlu0 %242
      %246 = vset.pattern.permute.xlu0 0
      %247 = vperm.xlu0 %246, %v233
      %v248 = vpop.permute.xlu0 %247
      %251 = vset.pattern.permute.xlu0 0
      %252 = vperm.xlu0 %251, %v234
      %v253 = vpop.permute.xlu0 %252
      %v259 = vunpack.c.l.b16 %v227
      %v260 = vunpack.c.l.b16 %v228
      %v261 = vunpack.c.l.b16 %v229
      %v262 = vunpack.c.l.b16 %v230
      %v263 = vpack.c.b16 %v260, %v259
      %v264 = vpack.c.b16 %v262, %v261
      %267 = vmatprep.subr.bf16.mxu0 0
      %268 = vmatpush1.bf16.xpose.msra.mxu0 0
      %269 = vmatprep.subr.bf16.mxu0 0
      %270 = vmatpush1.bf16.xpose.msra.mxu0 0
      %271 = vmatprep.subr.bf16.mxu0 0
      %272 = vmatpush1.bf16.xpose.msra.mxu0 0
      %273 = vmatprep.subr.bf16.mxu0 0
      %274 = vmatpush1.bf16.xpose.msra.mxu0 0
      %275 = vmatprep.subr.bf16.mxu0 0
      %276 = vmatpush1.bf16.xpose.msra.mxu0 0
      %277 = vmatprep.subr.bf16.mxu0 0
      %278 = vmatpush1.bf16.xpose.msra.mxu0 0
      %279 = vmatprep.subr.bf16.mxu0 0
      %280 = vmatpush1.bf16.xpose.msra.mxu0 0
      %281 = vmatprep.subr.bf16.mxu0 0
      %282 = vmatpush1.bf16.xpose.msra.mxu0 %v226
      %283 = vmatprep.subr.bf16.mxu0 0
      %284 = vmatpush2.bf16.xpose.msra.mxu0 0
      %285 = vmatprep.subr.bf16.mxu0 0
      %286 = vmatpush2.bf16.xpose.msra.mxu0 0
      %287 = vmatprep.subr.bf16.mxu0 0
      %288 = vmatpush2.bf16.xpose.msra.mxu0 0
      %289 = vmatprep.subr.bf16.mxu0 0
      %290 = vmatpush2.bf16.xpose.msra.mxu0 0
      %291 = vmatprep.subr.bf16.mxu0 0
      %292 = vmatpush2.bf16.xpose.msra.mxu0 0
      %293 = vmatprep.subr.bf16.mxu0 0
      %294 = vmatpush2.bf16.xpose.msra.mxu0 0
      %295 = vmatprep.subr.bf16.mxu0 0
      %296 = vmatpush2.bf16.xpose.msra.mxu0 0
      %297 = vmatprep.subr.bf16.mxu0 0
      %298 = vmatpush2.bf16.xpose.msra.mxu0 0
      %299 = vmatprep.mubr.bf16.mxu0 0
      %300 = vmatmul.mubr.bf16.gmra.mxu0 %v263
      %v301 = vpop.f32.mrf.mxu0
      %v302 = vadd.f32 %v238, %v301
      %v303 = vpop.f32.mrf.mxu0
      %v304 = vpop.f32.mrf.mxu0
      %v305 = vadd.f32 %v243, %v304
      %v306 = vpop.f32.mrf.mxu0
      %307 = vmatprep.mubr.bf16.mxu0 0
      %308 = vmatmul.mubr.bf16.gmra.mxu0 %v264
      %v309 = vpop.f32.mrf.mxu0
      %v310 = vadd.f32 %v248, %v309
      %v311 = vpop.f32.mrf.mxu0
      %v312 = vpop.f32.mrf.mxu0
      %v313 = vadd.f32 %v253, %v312
      %v314 = vpop.f32.mrf.mxu0
      %315 = vdwg.mxu0
      %v316 = vpack.c.bf16 %v305, %v302
      %v317 = vpack.c.bf16 %v313, %v310
      %v318 = vld [vmem:[%s4] sm:$0xf]
      %v319 = vld [vmem:[%s4 + $0x4] sm:$0xf]
      %v322 = vunpack.c.l.b16 %v318
      %v323 = vunpack.c.l.b16 %v319
      %v324 = vpack.c.b16 %v323, %v322
      %vm325 = vcmask 31744
      %v327 = vsel %vm325, %v316, 0
      %v330 = vsel %vm325, %v317, 0
      %v333 = vsel %vm325, %v324, 0
      %335 = vmatprep.subr.bf16.mxu0 0
      %336 = vmatpush1.bf16.xpose.msra.mxu0 0
      %337 = vmatprep.subr.bf16.mxu0 0
      %338 = vmatpush1.bf16.xpose.msra.mxu0 0
      %339 = vmatprep.subr.bf16.mxu0 0
      %340 = vmatpush1.bf16.xpose.msra.mxu0 0
      %341 = vmatprep.subr.bf16.mxu0 0
      %342 = vmatpush1.bf16.xpose.msra.mxu0 0
      %343 = vmatprep.subr.bf16.mxu0 0
      %344 = vmatpush1.bf16.xpose.msra.mxu0 0
      %345 = vmatprep.subr.bf16.mxu0 0
      %346 = vmatpush1.bf16.xpose.msra.mxu0 0
      %347 = vmatprep.subr.bf16.mxu0 0
      %348 = vmatpush1.bf16.xpose.msra.mxu0 0
      %349 = vmatprep.subr.bf16.mxu0 0
      %350 = vmatpush1.bf16.xpose.msra.mxu0 %v333
      %351 = vmatprep.subr.bf16.mxu0 0
      %352 = vmatpush2.bf16.xpose.msra.mxu0 0
      %353 = vmatprep.subr.bf16.mxu0 0
      %354 = vmatpush2.bf16.xpose.msra.mxu0 0
      %355 = vmatprep.subr.bf16.mxu0 0
      %356 = vmatpush2.bf16.xpose.msra.mxu0 0
      %357 = vmatprep.subr.bf16.mxu0 0
      %358 = vmatpush2.bf16.xpose.msra.mxu0 0
      %359 = vmatprep.subr.bf16.mxu0 0
      %360 = vmatpush2.bf16.xpose.msra.mxu0 0
      %361 = vmatprep.subr.bf16.mxu0 0
      %362 = vmatpush2.bf16.xpose.msra.mxu0 0
      %363 = vmatprep.subr.bf16.mxu0 0
      %364 = vmatpush2.bf16.xpose.msra.mxu0 0
      %365 = vmatprep.subr.bf16.mxu0 0
      %366 = vmatpush2.bf16.xpose.msra.mxu0 0
      %367 = vmatprep.mubr.bf16.mxu0 0
      %368 = vmatmul.mubr.bf16.gmra.mxu0 %v327
      %v369 = vpop.f32.mrf.mxu0
      %v370 = vadd.f32 0.0, %v369
      %v371 = vpop.f32.mrf.mxu0
      %v372 = vpop.f32.mrf.mxu0
      %v373 = vadd.f32 0.0, %v372
      %v374 = vpop.f32.mrf.mxu0
      %375 = vmatprep.mubr.bf16.mxu0 0
      %376 = vmatmul.mubr.bf16.gmra.mxu0 %v330
      %v377 = vpop.f32.mrf.mxu0
      %v378 = vadd.f32 0.0, %v377
      %v379 = vpop.f32.mrf.mxu0
      %v380 = vpop.f32.mrf.mxu0
      %v381 = vadd.f32 0.0, %v380
      %v382 = vpop.f32.mrf.mxu0
      %383 = vdwg.mxu0
      %vm384 = vcmask 130048
      %385 = vst.msk [vmem:[#allocation2] sm:$0xff] %vm384, %v370
      %386 = vst.msk [vmem:[#allocation2 + $0x8] sm:$0xff] %vm384, %v373
      %387 = vst.msk [vmem:[#allocation2 + $0x10] sm:$0xff] %vm384, %v378
      %388 = vst.msk [vmem:[#allocation2 + $0x18] sm:$0xff] %vm384, %v381
      %s389 = scalar_lea.vmem %s219, 2
      %v390 = vld [vmem:[%s389] sm:$0x3]
      %v391 = vld [vmem:[%s1] sm:$0xf]
      %v392 = vld [vmem:[%s1 + $0x4] sm:$0xf]
      %v393 = vld [vmem:[%s1 + $0x8] sm:$0xf]
      %v394 = vld [vmem:[%s1 + $0xc] sm:$0xf]
      %v395 = vld [vmem:[%s2] sm:$0xff]
      %v396 = vld [vmem:[%s2 + $0x8] sm:$0xff]
      %v397 = vld [vmem:[%s2 + $0x10] sm:$0xff]
      %v398 = vld [vmem:[%s2 + $0x18] sm:$0xff]
      %400 = vset.pattern.permute.xlu0 0
      %401 = vperm.xlu0 %400, %v395
      %v402 = vpop.permute.xlu0 %401
      %405 = vset.pattern.permute.xlu0 0
      %406 = vperm.xlu0 %405, %v396
      %v407 = vpop.permute.xlu0 %406
      %410 = vset.pattern.permute.xlu0 0
      %411 = vperm.xlu0 %410, %v397
      %v412 = vpop.permute.xlu0 %411
      %415 = vset.pattern.permute.xlu0 0
      %416 = vperm.xlu0 %415, %v398
      %v417 = vpop.permute.xlu0 %416
      %v423 = vunpack.c.l.b16 %v391
      %v424 = vunpack.c.l.b16 %v392
      %v425 = vunpack.c.l.b16 %v393
      %v426 = vunpack.c.l.b16 %v394
      %v427 = vpack.c.b16 %v424, %v423
      %v428 = vpack.c.b16 %v426, %v425
      %431 = vmatprep.subr.bf16.mxu0 0
      %432 = vmatpush1.bf16.xpose.msra.mxu0 0
      %433 = vmatprep.subr.bf16.mxu0 0
      %434 = vmatpush1.bf16.xpose.msra.mxu0 0
      %435 = vmatprep.subr.bf16.mxu0 0
      %436 = vmatpush1.bf16.xpose.msra.mxu0 0
      %437 = vmatprep.subr.bf16.mxu0 0
      %438 = vmatpush1.bf16.xpose.msra.mxu0 0
      %439 = vmatprep.subr.bf16.mxu0 0
      %440 = vmatpush1.bf16.xpose.msra.mxu0 0
      %441 = vmatprep.subr.bf16.mxu0 0
      %442 = vmatpush1.bf16.xpose.msra.mxu0 0
      %443 = vmatprep.subr.bf16.mxu0 0
      %444 = vmatpush1.bf16.xpose.msra.mxu0 0
      %445 = vmatprep.subr.bf16.mxu0 0
      %446 = vmatpush1.bf16.xpose.msra.mxu0 %v390
      %447 = vmatprep.subr.bf16.mxu0 0
      %448 = vmatpush2.bf16.xpose.msra.mxu0 0
      %449 = vmatprep.subr.bf16.mxu0 0
      %450 = vmatpush2.bf16.xpose.msra.mxu0 0
      %451 = vmatprep.subr.bf16.mxu0 0
      %452 = vmatpush2.bf16.xpose.msra.mxu0 0
      %453 = vmatprep.subr.bf16.mxu0 0
      %454 = vmatpush2.bf16.xpose.msra.mxu0 0
      %455 = vmatprep.subr.bf16.mxu0 0
      %456 = vmatpush2.bf16.xpose.msra.mxu0 0
      %457 = vmatprep.subr.bf16.mxu0 0
      %458 = vmatpush2.bf16.xpose.msra.mxu0 0
      %459 = vmatprep.subr.bf16.mxu0 0
      %460 = vmatpush2.bf16.xpose.msra.mxu0 0
      %461 = vmatprep.subr.bf16.mxu0 0
      %462 = vmatpush2.bf16.xpose.msra.mxu0 0
      %463 = vmatprep.mubr.bf16.mxu0 0
      %464 = vmatmul.mubr.bf16.gmra.mxu0 %v427
      %v465 = vpop.f32.mrf.mxu0
      %v466 = vadd.f32 %v402, %v465
      %v467 = vpop.f32.mrf.mxu0
      %v468 = vpop.f32.mrf.mxu0
      %v469 = vadd.f32 %v407, %v468
      %v470 = vpop.f32.mrf.mxu0
      %471 = vmatprep.mubr.bf16.mxu0 0
      %472 = vmatmul.mubr.bf16.gmra.mxu0 %v428
      %v473 = vpop.f32.mrf.mxu0
      %v474 = vadd.f32 %v412, %v473
      %v475 = vpop.f32.mrf.mxu0
      %v476 = vpop.f32.mrf.mxu0
      %v477 = vadd.f32 %v417, %v476
      %v478 = vpop.f32.mrf.mxu0
      %479 = vdwg.mxu0
      %v480 = vpack.c.bf16 %v469, %v466
      %v481 = vpack.c.bf16 %v477, %v474
      %v482 = vld [vmem:[%s4] sm:$0xf]
      %v483 = vld [vmem:[%s4 + $0x4] sm:$0xf]
      %v486 = vunpack.c.l.b16 %v482
      %v487 = vunpack.c.l.b16 %v483
      %v488 = vpack.c.b16 %v487, %v486
      %v490 = vsel %vm325, %v480, 0
      %v493 = vsel %vm325, %v481, 0
      %v496 = vsel %vm325, %v488, 0
      %498 = vmatprep.subr.bf16.mxu0 0
      %499 = vmatpush1.bf16.xpose.msra.mxu0 0
      %500 = vmatprep.subr.bf16.mxu0 0
      %501 = vmatpush1.bf16.xpose.msra.mxu0 0
      %502 = vmatprep.subr.bf16.mxu0 0
      %503 = vmatpush1.bf16.xpose.msra.mxu0 0
      %504 = vmatprep.subr.bf16.mxu0 0
      %505 = vmatpush1.bf16.xpose.msra.mxu0 0
      %506 = vmatprep.subr.bf16.mxu0 0
      %507 = vmatpush1.bf16.xpose.msra.mxu0 0
      %508 = vmatprep.subr.bf16.mxu0 0
      %509 = vmatpush1.bf16.xpose.msra.mxu0 0
      %510 = vmatprep.subr.bf16.mxu0 0
      %511 = vmatpush1.bf16.xpose.msra.mxu0 0
      %512 = vmatprep.subr.bf16.mxu0 0
      %513 = vmatpush1.bf16.xpose.msra.mxu0 %v496
      %514 = vmatprep.subr.bf16.mxu0 0
      %515 = vmatpush2.bf16.xpose.msra.mxu0 0
      %516 = vmatprep.subr.bf16.mxu0 0
      %517 = vmatpush2.bf16.xpose.msra.mxu0 0
      %518 = vmatprep.subr.bf16.mxu0 0
      %519 = vmatpush2.bf16.xpose.msra.mxu0 0
      %520 = vmatprep.subr.bf16.mxu0 0
      %521 = vmatpush2.bf16.xpose.msra.mxu0 0
      %522 = vmatprep.subr.bf16.mxu0 0
      %523 = vmatpush2.bf16.xpose.msra.mxu0 0
      %524 = vmatprep.subr.bf16.mxu0 0
      %525 = vmatpush2.bf16.xpose.msra.mxu0 0
      %526 = vmatprep.subr.bf16.mxu0 0
      %527 = vmatpush2.bf16.xpose.msra.mxu0 0
      %528 = vmatprep.subr.bf16.mxu0 0
      %529 = vmatpush2.bf16.xpose.msra.mxu0 0
      %530 = vmatprep.mubr.bf16.mxu0 0
      %531 = vmatmul.mubr.bf16.gmra.mxu0 %v490
      %v532 = vpop.f32.mrf.mxu0
      %v533 = vadd.f32 0.0, %v532
      %v534 = vpop.f32.mrf.mxu0
      %v535 = vpop.f32.mrf.mxu0
      %v536 = vadd.f32 0.0, %v535
      %v537 = vpop.f32.mrf.mxu0
      %538 = vmatprep.mubr.bf16.mxu0 0
      %539 = vmatmul.mubr.bf16.gmra.mxu0 %v493
      %v540 = vpop.f32.mrf.mxu0
      %v541 = vadd.f32 0.0, %v540
      %v542 = vpop.f32.mrf.mxu0
      %v543 = vpop.f32.mrf.mxu0
      %v544 = vadd.f32 0.0, %v543
      %v545 = vpop.f32.mrf.mxu0
      %546 = vdwg.mxu0
      %s547 = scalar_lea.vmem [#allocation2], 32
      %548 = vst.msk [vmem:[%s547] sm:$0xff] %vm384, %v533
      %549 = vst.msk [vmem:[%s547 + $0x8] sm:$0xff] %vm384, %v536
      %550 = vst.msk [vmem:[%s547 + $0x10] sm:$0xff] %vm384, %v541
      %551 = vst.msk [vmem:[%s547 + $0x18] sm:$0xff] %vm384, %v544
      %s552 = scalar_lea.vmem %s219, 4
      %v553 = vld [vmem:[%s552] sm:$0x3]
      %v554 = vld [vmem:[%s1] sm:$0xf]
      %v555 = vld [vmem:[%s1 + $0x4] sm:$0xf]
      %v556 = vld [vmem:[%s1 + $0x8] sm:$0xf]
      %v557 = vld [vmem:[%s1 + $0xc] sm:$0xf]
      %v558 = vld [vmem:[%s2] sm:$0xff]
      %v559 = vld [vmem:[%s2 + $0x8] sm:$0xff]
      %v560 = vld [vmem:[%s2 + $0x10] sm:$0xff]
      %v561 = vld [vmem:[%s2 + $0x18] sm:$0xff]
      %563 = vset.pattern.permute.xlu0 0
      %564 = vperm.xlu0 %563, %v558
      %v565 = vpop.permute.xlu0 %564
      %568 = vset.pattern.permute.xlu0 0
      %569 = vperm.xlu0 %568, %v559
      %v570 = vpop.permute.xlu0 %569
      %573 = vset.pattern.permute.xlu0 0
      %574 = vperm.xlu0 %573, %v560
      %v575 = vpop.permute.xlu0 %574
      %578 = vset.pattern.permute.xlu0 0
      %579 = vperm.xlu0 %578, %v561
      %v580 = vpop.permute.xlu0 %579
      %v586 = vunpack.c.l.b16 %v554
      %v587 = vunpack.c.l.b16 %v555
      %v588 = vunpack.c.l.b16 %v556
      %v589 = vunpack.c.l.b16 %v557
      %v590 = vpack.c.b16 %v587, %v586
      %v591 = vpack.c.b16 %v589, %v588
      %594 = vmatprep.subr.bf16.mxu0 0
      %595 = vmatpush1.bf16.xpose.msra.mxu0 0
      %596 = vmatprep.subr.bf16.mxu0 0
      %597 = vmatpush1.bf16.xpose.msra.mxu0 0
      %598 = vmatprep.subr.bf16.mxu0 0
      %599 = vmatpush1.bf16.xpose.msra.mxu0 0
      %600 = vmatprep.subr.bf16.mxu0 0
      %601 = vmatpush1.bf16.xpose.msra.mxu0 0
      %602 = vmatprep.subr.bf16.mxu0 0
      %603 = vmatpush1.bf16.xpose.msra.mxu0 0
      %604 = vmatprep.subr.bf16.mxu0 0
      %605 = vmatpush1.bf16.xpose.msra.mxu0 0
      %606 = vmatprep.subr.bf16.mxu0 0
      %607 = vmatpush1.bf16.xpose.msra.mxu0 0
      %608 = vmatprep.subr.bf16.mxu0 0
      %609 = vmatpush1.bf16.xpose.msra.mxu0 %v553
      %610 = vmatprep.subr.bf16.mxu0 0
      %611 = vmatpush2.bf16.xpose.msra.mxu0 0
      %612 = vmatprep.subr.bf16.mxu0 0
      %613 = vmatpush2.bf16.xpose.msra.mxu0 0
      %614 = vmatprep.subr.bf16.mxu0 0
      %615 = vmatpush2.bf16.xpose.msra.mxu0 0
      %616 = vmatprep.subr.bf16.mxu0 0
      %617 = vmatpush2.bf16.xpose.msra.mxu0 0
      %618 = vmatprep.subr.bf16.mxu0 0
      %619 = vmatpush2.bf16.xpose.msra.mxu0 0
      %620 = vmatprep.subr.bf16.mxu0 0
      %621 = vmatpush2.bf16.xpose.msra.mxu0 0
      %622 = vmatprep.subr.bf16.mxu0 0
      %623 = vmatpush2.bf16.xpose.msra.mxu0 0
      %624 = vmatprep.subr.bf16.mxu0 0
      %625 = vmatpush2.bf16.xpose.msra.mxu0 0
      %626 = vmatprep.mubr.bf16.mxu0 0
      %627 = vmatmul.mubr.bf16.gmra.mxu0 %v590
      %v628 = vpop.f32.mrf.mxu0
      %v629 = vadd.f32 %v565, %v628
      %v630 = vpop.f32.mrf.mxu0
      %v631 = vpop.f32.mrf.mxu0
      %v632 = vadd.f32 %v570, %v631
      %v633 = vpop.f32.mrf.mxu0
      %634 = vmatprep.mubr.bf16.mxu0 0
      %635 = vmatmul.mubr.bf16.gmra.mxu0 %v591
      %v636 = vpop.f32.mrf.mxu0
      %v637 = vadd.f32 %v575, %v636
      %v638 = vpop.f32.mrf.mxu0
      %v639 = vpop.f32.mrf.mxu0
      %v640 = vadd.f32 %v580, %v639
      %v641 = vpop.f32.mrf.mxu0
      %642 = vdwg.mxu0
      %v643 = vpack.c.bf16 %v632, %v629
      %v644 = vpack.c.bf16 %v640, %v637
      %v645 = vld [vmem:[%s4] sm:$0xf]
      %v646 = vld [vmem:[%s4 + $0x4] sm:$0xf]
      %v649 = vunpack.c.l.b16 %v645
      %v650 = vunpack.c.l.b16 %v646
      %v651 = vpack.c.b16 %v650, %v649
      %v653 = vsel %vm325, %v643, 0
      %v656 = vsel %vm325, %v644, 0
      %v659 = vsel %vm325, %v651, 0
      %661 = vmatprep.subr.bf16.mxu0 0
      %662 = vmatpush1.bf16.xpose.msra.mxu0 0
      %663 = vmatprep.subr.bf16.mxu0 0
      %664 = vmatpush1.bf16.xpose.msra.mxu0 0
      %665 = vmatprep.subr.bf16.mxu0 0
      %666 = vmatpush1.bf16.xpose.msra.mxu0 0
      %667 = vmatprep.subr.bf16.mxu0 0
      %668 = vmatpush1.bf16.xpose.msra.mxu0 0
      %669 = vmatprep.subr.bf16.mxu0 0
      %670 = vmatpush1.bf16.xpose.msra.mxu0 0
      %671 = vmatprep.subr.bf16.mxu0 0
      %672 = vmatpush1.bf16.xpose.msra.mxu0 0
      %673 = vmatprep.subr.bf16.mxu0 0
      %674 = vmatpush1.bf16.xpose.msra.mxu0 0
      %675 = vmatprep.subr.bf16.mxu0 0
      %676 = vmatpush1.bf16.xpose.msra.mxu0 %v659
      %677 = vmatprep.subr.bf16.mxu0 0
      %678 = vmatpush2.bf16.xpose.msra.mxu0 0
      %679 = vmatprep.subr.bf16.mxu0 0
      %680 = vmatpush2.bf16.xpose.msra.mxu0 0
      %681 = vmatprep.subr.bf16.mxu0 0
      %682 = vmatpush2.bf16.xpose.msra.mxu0 0
      %683 = vmatprep.subr.bf16.mxu0 0
      %684 = vmatpush2.bf16.xpose.msra.mxu0 0
      %685 = vmatprep.subr.bf16.mxu0 0
      %686 = vmatpush2.bf16.xpose.msra.mxu0 0
      %687 = vmatprep.subr.bf16.mxu0 0
      %688 = vmatpush2.bf16.xpose.msra.mxu0 0
      %689 = vmatprep.subr.bf16.mxu0 0
      %690 = vmatpush2.bf16.xpose.msra.mxu0 0
      %691 = vmatprep.subr.bf16.mxu0 0
      %692 = vmatpush2.bf16.xpose.msra.mxu0 0
      %693 = vmatprep.mubr.bf16.mxu0 0
      %694 = vmatmul.mubr.bf16.gmra.mxu0 %v653
      %v695 = vpop.f32.mrf.mxu0
      %v696 = vadd.f32 0.0, %v695
      %v697 = vpop.f32.mrf.mxu0
      %v698 = vpop.f32.mrf.mxu0
      %v699 = vadd.f32 0.0, %v698
      %v700 = vpop.f32.mrf.mxu0
      %701 = vmatprep.mubr.bf16.mxu0 0
      %702 = vmatmul.mubr.bf16.gmra.mxu0 %v656
      %v703 = vpop.f32.mrf.mxu0
      %v704 = vadd.f32 0.0, %v703
      %v705 = vpop.f32.mrf.mxu0
      %v706 = vpop.f32.mrf.mxu0
      %v707 = vadd.f32 0.0, %v706
      %v708 = vpop.f32.mrf.mxu0
      %709 = vdwg.mxu0
      %s710 = scalar_lea.vmem [#allocation2], 64
      %711 = vst.msk [vmem:[%s710] sm:$0xff] %vm384, %v696
      %712 = vst.msk [vmem:[%s710 + $0x8] sm:$0xff] %vm384, %v699
      %713 = vst.msk [vmem:[%s710 + $0x10] sm:$0xff] %vm384, %v704
      %714 = vst.msk [vmem:[%s710 + $0x18] sm:$0xff] %vm384, %v707
      %s715 = scalar_lea.vmem %s219, 6
      %v716 = vld [vmem:[%s715] sm:$0x3]
      %v717 = vld [vmem:[%s1] sm:$0xf]
      %v718 = vld [vmem:[%s1 + $0x4] sm:$0xf]
      %v719 = vld [vmem:[%s1 + $0x8] sm:$0xf]
      %v720 = vld [vmem:[%s1 + $0xc] sm:$0xf]
      %v721 = vld [vmem:[%s2] sm:$0xff]
      %v722 = vld [vmem:[%s2 + $0x8] sm:$0xff]
      %v723 = vld [vmem:[%s2 + $0x10] sm:$0xff]
      %v724 = vld [vmem:[%s2 + $0x18] sm:$0xff]
      %726 = vset.pattern.permute.xlu0 0
      %727 = vperm.xlu0 %726, %v721
      %v728 = vpop.permute.xlu0 %727
      %731 = vset.pattern.permute.xlu0 0
      %732 = vperm.xlu0 %731, %v722
      %v733 = vpop.permute.xlu0 %732
      %736 = vset.pattern.permute.xlu0 0
      %737 = vperm.xlu0 %736, %v723
      %v738 = vpop.permute.xlu0 %737
      %741 = vset.pattern.permute.xlu0 0
      %742 = vperm.xlu0 %741, %v724
      %v743 = vpop.permute.xlu0 %742
      %v749 = vunpack.c.l.b16 %v717
      %v750 = vunpack.c.l.b16 %v718
      %v751 = vunpack.c.l.b16 %v719
      %v752 = vunpack.c.l.b16 %v720
      %v753 = vpack.c.b16 %v750, %v749
      %v754 = vpack.c.b16 %v752, %v751
      %757 = vmatprep.subr.bf16.mxu0 0
      %758 = vmatpush1.bf16.xpose.msra.mxu0 0
      %759 = vmatprep.subr.bf16.mxu0 0
      %760 = vmatpush1.bf16.xpose.msra.mxu0 0
      %761 = vmatprep.subr.bf16.mxu0 0
      %762 = vmatpush1.bf16.xpose.msra.mxu0 0
      %763 = vmatprep.subr.bf16.mxu0 0
      %764 = vmatpush1.bf16.xpose.msra.mxu0 0
      %765 = vmatprep.subr.bf16.mxu0 0
      %766 = vmatpush1.bf16.xpose.msra.mxu0 0
      %767 = vmatprep.subr.bf16.mxu0 0
      %768 = vmatpush1.bf16.xpose.msra.mxu0 0
      %769 = vmatprep.subr.bf16.mxu0 0
      %770 = vmatpush1.bf16.xpose.msra.mxu0 0
      %771 = vmatprep.subr.bf16.mxu0 0
      %772 = vmatpush1.bf16.xpose.msra.mxu0 %v716
      %773 = vmatprep.subr.bf16.mxu0 0
      %774 = vmatpush2.bf16.xpose.msra.mxu0 0
      %775 = vmatprep.subr.bf16.mxu0 0
      %776 = vmatpush2.bf16.xpose.msra.mxu0 0
      %777 = vmatprep.subr.bf16.mxu0 0
      %778 = vmatpush2.bf16.xpose.msra.mxu0 0
      %779 = vmatprep.subr.bf16.mxu0 0
      %780 = vmatpush2.bf16.xpose.msra.mxu0 0
      %781 = vmatprep.subr.bf16.mxu0 0
      %782 = vmatpush2.bf16.xpose.msra.mxu0 0
      %783 = vmatprep.subr.bf16.mxu0 0
      %784 = vmatpush2.bf16.xpose.msra.mxu0 0
      %785 = vmatprep.subr.bf16.mxu0 0
      %786 = vmatpush2.bf16.xpose.msra.mxu0 0
      %787 = vmatprep.subr.bf16.mxu0 0
      %788 = vmatpush2.bf16.xpose.msra.mxu0 0
      %789 = vmatprep.mubr.bf16.mxu0 0
      %790 = vmatmul.mubr.bf16.gmra.mxu0 %v753
      %v791 = vpop.f32.mrf.mxu0
      %v792 = vadd.f32 %v728, %v791
      %v793 = vpop.f32.mrf.mxu0
      %v794 = vpop.f32.mrf.mxu0
      %v795 = vadd.f32 %v733, %v794
      %v796 = vpop.f32.mrf.mxu0
      %797 = vmatprep.mubr.bf16.mxu0 0
      %798 = vmatmul.mubr.bf16.gmra.mxu0 %v754
      %v799 = vpop.f32.mrf.mxu0
      %v800 = vadd.f32 %v738, %v799
      %v801 = vpop.f32.mrf.mxu0
      %v802 = vpop.f32.mrf.mxu0
      %v803 = vadd.f32 %v743, %v802
      %v804 = vpop.f32.mrf.mxu0
      %805 = vdwg.mxu0
      %v806 = vpack.c.bf16 %v795, %v792
      %v807 = vpack.c.bf16 %v803, %v800
      %v808 = vld [vmem:[%s4] sm:$0xf]
      %v809 = vld [vmem:[%s4 + $0x4] sm:$0xf]
      %v812 = vunpack.c.l.b16 %v808
      %v813 = vunpack.c.l.b16 %v809
      %v814 = vpack.c.b16 %v813, %v812
      %v816 = vsel %vm325, %v806, 0
      %v819 = vsel %vm325, %v807, 0
      %v822 = vsel %vm325, %v814, 0
      %824 = vmatprep.subr.bf16.mxu0 0
      %825 = vmatpush1.bf16.xpose.msra.mxu0 0
      %826 = vmatprep.subr.bf16.mxu0 0
      %827 = vmatpush1.bf16.xpose.msra.mxu0 0
      %828 = vmatprep.subr.bf16.mxu0 0
      %829 = vmatpush1.bf16.xpose.msra.mxu0 0
      %830 = vmatprep.subr.bf16.mxu0 0
      %831 = vmatpush1.bf16.xpose.msra.mxu0 0
      %832 = vmatprep.subr.bf16.mxu0 0
      %833 = vmatpush1.bf16.xpose.msra.mxu0 0
      %834 = vmatprep.subr.bf16.mxu0 0
      %835 = vmatpush1.bf16.xpose.msra.mxu0 0
      %836 = vmatprep.subr.bf16.mxu0 0
      %837 = vmatpush1.bf16.xpose.msra.mxu0 0
      %838 = vmatprep.subr.bf16.mxu0 0
      %839 = vmatpush1.bf16.xpose.msra.mxu0 %v822
      %840 = vmatprep.subr.bf16.mxu0 0
      %841 = vmatpush2.bf16.xpose.msra.mxu0 0
      %842 = vmatprep.subr.bf16.mxu0 0
      %843 = vmatpush2.bf16.xpose.msra.mxu0 0
      %844 = vmatprep.subr.bf16.mxu0 0
      %845 = vmatpush2.bf16.xpose.msra.mxu0 0
      %846 = vmatprep.subr.bf16.mxu0 0
      %847 = vmatpush2.bf16.xpose.msra.mxu0 0
      %848 = vmatprep.subr.bf16.mxu0 0
      %849 = vmatpush2.bf16.xpose.msra.mxu0 0
      %850 = vmatprep.subr.bf16.mxu0 0
      %851 = vmatpush2.bf16.xpose.msra.mxu0 0
      %852 = vmatprep.subr.bf16.mxu0 0
      %853 = vmatpush2.bf16.xpose.msra.mxu0 0
      %854 = vmatprep.subr.bf16.mxu0 0
      %855 = vmatpush2.bf16.xpose.msra.mxu0 0
      %856 = vmatprep.mubr.bf16.mxu0 0
      %857 = vmatmul.mubr.bf16.gmra.mxu0 %v816
      %v858 = vpop.f32.mrf.mxu0
      %v859 = vadd.f32 0.0, %v858
      %v860 = vpop.f32.mrf.mxu0
      %v861 = vpop.f32.mrf.mxu0
      %v862 = vadd.f32 0.0, %v861
      %v863 = vpop.f32.mrf.mxu0
      %864 = vmatprep.mubr.bf16.mxu0 0
      %865 = vmatmul.mubr.bf16.gmra.mxu0 %v819
      %v866 = vpop.f32.mrf.mxu0
      %v867 = vadd.f32 0.0, %v866
      %v868 = vpop.f32.mrf.mxu0
      %v869 = vpop.f32.mrf.mxu0
      %v870 = vadd.f32 0.0, %v869
      %v871 = vpop.f32.mrf.mxu0
      %872 = vdwg.mxu0
      %s873 = scalar_lea.vmem [#allocation2], 96
      %874 = vst.msk [vmem:[%s873] sm:$0xff] %vm384, %v859
      %875 = vst.msk [vmem:[%s873 + $0x8] sm:$0xff] %vm384, %v862
      %876 = vst.msk [vmem:[%s873 + $0x10] sm:$0xff] %vm384, %v867
      %877 = vst.msk [vmem:[%s873 + $0x18] sm:$0xff] %vm384, %v870
      %v878 = vld [vmem:[%s3] sm:$0xf]
      %v879 = vld [vmem:[%s3 + $0x4] sm:$0xf]
      %v880 = vld [vmem:[#allocation2] sm:$0x1]
      %v881 = vld [vmem:[#allocation2 + $0x20] sm:$0x1]
      %v882 = vld [vmem:[#allocation2 + $0x40] sm:$0x1]
      %v883 = vld [vmem:[#allocation2 + $0x60] sm:$0x1]
      %v884 = vpack.c.bf16 %v880, %v880
      %v885 = vpack.c.bf16 %v881, %v881
      %v886 = vpack.c.bf16 %v882, %v882
      %v887 = vpack.c.bf16 %v883, %v883
      %v890 = vunpack.c.l.b16 %v878
      %v891 = vunpack.c.l.b16 %v879
      %v892 = vpack.c.b16 %v891, %v890
      %v897 = vunpack.c.l.b16 %v884
      %v898 = vunpack.c.l.b16 %v885
      %v899 = vunpack.c.l.b16 %v886
      %v900 = vunpack.c.l.b16 %v887
      %v901 = vrot.slane %v898, 7
      %vm902 = vcmask 1041409
      %v903 = vsel %vm902, %v901, %v897
      %v904 = vrot.slane %v899, 6
      %vm905 = vcmask 1042434
      %v906 = vsel %vm905, %v904, %v903
      %v907 = vrot.slane %v900, 5
      %vm908 = vcmask 1043459
      %v909 = vsel %vm908, %v907, %v906
      %v910 = vpack.c.b16 %v909, %v909
      %v912 = vsel %vm325, %v892, 0
      %vm914 = vcmask 1041408
      %v916 = vsel %vm914, %v910, 0
      %918 = vmatprep.subr.bf16.mxu0 0
      %919 = vmatpush1.bf16.msra.mxu0 0
      %920 = vmatprep.subr.bf16.mxu0 0
      %921 = vmatpush1.bf16.msra.mxu0 0
      %922 = vmatprep.subr.bf16.mxu0 0
      %923 = vmatpush1.bf16.msra.mxu0 0
      %924 = vmatprep.subr.bf16.mxu0 0
      %925 = vmatpush1.bf16.msra.mxu0 0
      %926 = vmatprep.subr.bf16.mxu0 0
      %927 = vmatpush1.bf16.msra.mxu0 0
      %928 = vmatprep.subr.bf16.mxu0 0
      %929 = vmatpush1.bf16.msra.mxu0 0
      %930 = vmatprep.subr.bf16.mxu0 0
      %931 = vmatpush1.bf16.msra.mxu0 0
      %932 = vmatprep.subr.bf16.mxu0 0
      %933 = vmatpush1.bf16.msra.mxu0 %v916
      %934 = vmatprep.subr.bf16.mxu0 0
      %935 = vmatpush2.bf16.msra.mxu0 0
      %936 = vmatprep.subr.bf16.mxu0 0
      %937 = vmatpush2.bf16.msra.mxu0 0
      %938 = vmatprep.subr.bf16.mxu0 0
      %939 = vmatpush2.bf16.msra.mxu0 0
      %940 = vmatprep.subr.bf16.mxu0 0
      %941 = vmatpush2.bf16.msra.mxu0 0
      %942 = vmatprep.subr.bf16.mxu0 0
      %943 = vmatpush2.bf16.msra.mxu0 0
      %944 = vmatprep.subr.bf16.mxu0 0
      %945 = vmatpush2.bf16.msra.mxu0 0
      %946 = vmatprep.subr.bf16.mxu0 0
      %947 = vmatpush2.bf16.msra.mxu0 0
      %948 = vmatprep.subr.bf16.mxu0 0
      %949 = vmatpush2.bf16.msra.mxu0 0
      %950 = vmatprep.mubr.bf16.mxu0 0
      %951 = vmatmul.mubr.bf16.gmra.mxu0 %v912
      %v952 = vpop.f32.mrf.mxu0
      %v953 = vadd.f32 0.0, %v952
      %v954 = vpop.f32.mrf.mxu0
      %v955 = vpop.f32.mrf.mxu0
      %v956 = vadd.f32 0.0, %v955
      %v957 = vpop.f32.mrf.mxu0
      %958 = vdwg.mxu0
      %959 = vst.msk [vmem:[%s224] sm:$0xff] %vm384, %v953
      %960 = vst.msk [vmem:[%s224 + $0x8] sm:$0xff] %vm384, %v956
      %v961 = vld [vmem:[%s3] sm:$0xf]
      %v962 = vld [vmem:[%s3 + $0x4] sm:$0xf]
      %v963 = vld [vmem:[#allocation2 + $0x1] sm:$0x1]
      %v964 = vld [vmem:[#allocation2 + $0x21] sm:$0x1]
      %v965 = vld [vmem:[#allocation2 + $0x41] sm:$0x1]
      %v966 = vld [vmem:[#allocation2 + $0x61] sm:$0x1]
      %v967 = vpack.c.bf16 %v963, %v963
      %v968 = vpack.c.bf16 %v964, %v964
      %v969 = vpack.c.bf16 %v965, %v965
      %v970 = vpack.c.bf16 %v966, %v966
      %v973 = vunpack.c.l.b16 %v961
      %v974 = vunpack.c.l.b16 %v962
      %v975 = vpack.c.b16 %v974, %v973
      %v980 = vunpack.c.l.b16 %v967
      %v981 = vunpack.c.l.b16 %v968
      %v982 = vunpack.c.l.b16 %v969
      %v983 = vunpack.c.l.b16 %v970
      %v984 = vrot.slane %v981, 7
      %v985 = vsel %vm902, %v984, %v980
      %v986 = vrot.slane %v982, 6
      %v987 = vsel %vm905, %v986, %v985
      %v988 = vrot.slane %v983, 5
      %v989 = vsel %vm908, %v988, %v987
      %v990 = vpack.c.b16 %v989, %v989
      %v992 = vsel %vm325, %v975, 0
      %v995 = vsel %vm914, %v990, 0
      %997 = vmatprep.subr.bf16.mxu0 0
      %998 = vmatpush1.bf16.msra.mxu0 0
      %999 = vmatprep.subr.bf16.mxu0 0
      %1000 = vmatpush1.bf16.msra.mxu0 0
      %1001 = vmatprep.subr.bf16.mxu0 0
      %1002 = vmatpush1.bf16.msra.mxu0 0
      %1003 = vmatprep.subr.bf16.mxu0 0
      %1004 = vmatpush1.bf16.msra.mxu0 0
      %1005 = vmatprep.subr.bf16.mxu0 0
      %1006 = vmatpush1.bf16.msra.mxu0 0
      %1007 = vmatprep.subr.bf16.mxu0 0
      %1008 = vmatpush1.bf16.msra.mxu0 0
      %1009 = vmatprep.subr.bf16.mxu0 0
      %1010 = vmatpush1.bf16.msra.mxu0 0
      %1011 = vmatprep.subr.bf16.mxu0 0
      %1012 = vmatpush1.bf16.msra.mxu0 %v995
      %1013 = vmatprep.subr.bf16.mxu0 0
      %1014 = vmatpush2.bf16.msra.mxu0 0
      %1015 = vmatprep.subr.bf16.mxu0 0
      %1016 = vmatpush2.bf16.msra.mxu0 0
      %1017 = vmatprep.subr.bf16.mxu0 0
      %1018 = vmatpush2.bf16.msra.mxu0 0
      %1019 = vmatprep.subr.bf16.mxu0 0
      %1020 = vmatpush2.bf16.msra.mxu0 0
      %1021 = vmatprep.subr.bf16.mxu0 0
      %1022 = vmatpush2.bf16.msra.mxu0 0
      %1023 = vmatprep.subr.bf16.mxu0 0
      %1024 = vmatpush2.bf16.msra.mxu0 0
      %1025 = vmatprep.subr.bf16.mxu0 0
      %1026 = vmatpush2.bf16.msra.mxu0 0
      %1027 = vmatprep.subr.bf16.mxu0 0
      %1028 = vmatpush2.bf16.msra.mxu0 0
      %1029 = vmatprep.mubr.bf16.mxu0 0
      %1030 = vmatmul.mubr.bf16.gmra.mxu0 %v992
      %v1031 = vpop.f32.mrf.mxu0
      %v1032 = vadd.f32 0.0, %v1031
      %v1033 = vpop.f32.mrf.mxu0
      %v1034 = vpop.f32.mrf.mxu0
      %v1035 = vadd.f32 0.0, %v1034
      %v1036 = vpop.f32.mrf.mxu0
      %1037 = vdwg.mxu0
      %s1038 = scalar_lea.vmem %s224, 16
      %1039 = vst.msk [vmem:[%s1038] sm:$0xff] %vm384, %v1032
      %1040 = vst.msk [vmem:[%s1038 + $0x8] sm:$0xff] %vm384, %v1035
      %v1041 = vld [vmem:[%s3] sm:$0xf]
      %v1042 = vld [vmem:[%s3 + $0x4] sm:$0xf]
      %v1043 = vld [vmem:[#allocation2 + $0x2] sm:$0x1]
      %v1044 = vld [vmem:[#allocation2 + $0x22] sm:$0x1]
      %v1045 = vld [vmem:[#allocation2 + $0x42] sm:$0x1]
      %v1046 = vld [vmem:[#allocation2 + $0x62] sm:$0x1]
      %v1047 = vpack.c.bf16 %v1043, %v1043
      %v1048 = vpack.c.bf16 %v1044, %v1044
      %v1049 = vpack.c.bf16 %v1045, %v1045
      %v1050 = vpack.c.bf16 %v1046, %v1046
      %v1053 = vunpack.c.l.b16 %v1041
      %v1054 = vunpack.c.l.b16 %v1042
      %v1055 = vpack.c.b16 %v1054, %v1053
      %v1060 = vunpack.c.l.b16 %v1047
      %v1061 = vunpack.c.l.b16 %v1048
      %v1062 = vunpack.c.l.b16 %v1049
      %v1063 = vunpack.c.l.b16 %v1050
      %v1064 = vrot.slane %v1061, 7
      %v1065 = vsel %vm902, %v1064, %v1060
      %v1066 = vrot.slane %v1062, 6
      %v1067 = vsel %vm905, %v1066, %v1065
      %v1068 = vrot.slane %v1063, 5
      %v1069 = vsel %vm908, %v1068, %v1067
      %v1070 = vpack.c.b16 %v1069, %v1069
      %v1072 = vsel %vm325, %v1055, 0
      %v1075 = vsel %vm914, %v1070, 0
      %1077 = vmatprep.subr.bf16.mxu0 0
      %1078 = vmatpush1.bf16.msra.mxu0 0
      %1079 = vmatprep.subr.bf16.mxu0 0
      %1080 = vmatpush1.bf16.msra.mxu0 0
      %1081 = vmatprep.subr.bf16.mxu0 0
      %1082 = vmatpush1.bf16.msra.mxu0 0
      %1083 = vmatprep.subr.bf16.mxu0 0
      %1084 = vmatpush1.bf16.msra.mxu0 0
      %1085 = vmatprep.subr.bf16.mxu0 0
      %1086 = vmatpush1.bf16.msra.mxu0 0
      %1087 = vmatprep.subr.bf16.mxu0 0
      %1088 = vmatpush1.bf16.msra.mxu0 0
      %1089 = vmatprep.subr.bf16.mxu0 0
      %1090 = vmatpush1.bf16.msra.mxu0 0
      %1091 = vmatprep.subr.bf16.mxu0 0
      %1092 = vmatpush1.bf16.msra.mxu0 %v1075
      %1093 = vmatprep.subr.bf16.mxu0 0
      %1094 = vmatpush2.bf16.msra.mxu0 0
      %1095 = vmatprep.subr.bf16.mxu0 0
      %1096 = vmatpush2.bf16.msra.mxu0 0
      %1097 = vmatprep.subr.bf16.mxu0 0
      %1098 = vmatpush2.bf16.msra.mxu0 0
      %1099 = vmatprep.subr.bf16.mxu0 0
      %1100 = vmatpush2.bf16.msra.mxu0 0
      %1101 = vmatprep.subr.bf16.mxu0 0
      %1102 = vmatpush2.bf16.msra.mxu0 0
      %1103 = vmatprep.subr.bf16.mxu0 0
      %1104 = vmatpush2.bf16.msra.mxu0 0
      %1105 = vmatprep.subr.bf16.mxu0 0
      %1106 = vmatpush2.bf16.msra.mxu0 0
      %1107 = vmatprep.subr.bf16.mxu0 0
      %1108 = vmatpush2.bf16.msra.mxu0 0
      %1109 = vmatprep.mubr.bf16.mxu0 0
      %1110 = vmatmul.mubr.bf16.gmra.mxu0 %v1072
      %v1111 = vpop.f32.mrf.mxu0
      %v1112 = vadd.f32 0.0, %v1111
      %v1113 = vpop.f32.mrf.mxu0
      %v1114 = vpop.f32.mrf.mxu0
      %v1115 = vadd.f32 0.0, %v1114
      %v1116 = vpop.f32.mrf.mxu0
      %1117 = vdwg.mxu0
      %s1118 = scalar_lea.vmem %s224, 32
      %1119 = vst.msk [vmem:[%s1118] sm:$0xff] %vm384, %v1112
      %1120 = vst.msk [vmem:[%s1118 + $0x8] sm:$0xff] %vm384, %v1115
      %v1121 = vld [vmem:[%s3] sm:$0xf]
      %v1122 = vld [vmem:[%s3 + $0x4] sm:$0xf]
      %v1123 = vld [vmem:[#allocation2 + $0x3] sm:$0x1]
      %v1124 = vld [vmem:[#allocation2 + $0x23] sm:$0x1]
      %v1125 = vld [vmem:[#allocation2 + $0x43] sm:$0x1]
      %v1126 = vld [vmem:[#allocation2 + $0x63] sm:$0x1]
      %v1127 = vpack.c.bf16 %v1123, %v1123
      %v1128 = vpack.c.bf16 %v1124, %v1124
      %v1129 = vpack.c.bf16 %v1125, %v1125
      %v1130 = vpack.c.bf16 %v1126, %v1126
      %v1133 = vunpack.c.l.b16 %v1121
      %v1134 = vunpack.c.l.b16 %v1122
      %v1135 = vpack.c.b16 %v1134, %v1133
      %v1140 = vunpack.c.l.b16 %v1127
      %v1141 = vunpack.c.l.b16 %v1128
      %v1142 = vunpack.c.l.b16 %v1129
      %v1143 = vunpack.c.l.b16 %v1130
      %v1144 = vrot.slane %v1141, 7
      %v1145 = vsel %vm902, %v1144, %v1140
      %v1146 = vrot.slane %v1142, 6
      %v1147 = vsel %vm905, %v1146, %v1145
      %v1148 = vrot.slane %v1143, 5
      %v1149 = vsel %vm908, %v1148, %v1147
      %v1150 = vpack.c.b16 %v1149, %v1149
      %v1152 = vsel %vm325, %v1135, 0
      %v1155 = vsel %vm914, %v1150, 0
      %1157 = vmatprep.subr.bf16.mxu0 0
      %1158 = vmatpush1.bf16.msra.mxu0 0
      %1159 = vmatprep.subr.bf16.mxu0 0
      %1160 = vmatpush1.bf16.msra.mxu0 0
      %1161 = vmatprep.subr.bf16.mxu0 0
      %1162 = vmatpush1.bf16.msra.mxu0 0
      %1163 = vmatprep.subr.bf16.mxu0 0
      %1164 = vmatpush1.bf16.msra.mxu0 0
      %1165 = vmatprep.subr.bf16.mxu0 0
      %1166 = vmatpush1.bf16.msra.mxu0 0
      %1167 = vmatprep.subr.bf16.mxu0 0
      %1168 = vmatpush1.bf16.msra.mxu0 0
      %1169 = vmatprep.subr.bf16.mxu0 0
      %1170 = vmatpush1.bf16.msra.mxu0 0
      %1171 = vmatprep.subr.bf16.mxu0 0
      %1172 = vmatpush1.bf16.msra.mxu0 %v1155
      %1173 = vmatprep.subr.bf16.mxu0 0
      %1174 = vmatpush2.bf16.msra.mxu0 0
      %1175 = vmatprep.subr.bf16.mxu0 0
      %1176 = vmatpush2.bf16.msra.mxu0 0
      %1177 = vmatprep.subr.bf16.mxu0 0
      %1178 = vmatpush2.bf16.msra.mxu0 0
      %1179 = vmatprep.subr.bf16.mxu0 0
      %1180 = vmatpush2.bf16.msra.mxu0 0
      %1181 = vmatprep.subr.bf16.mxu0 0
      %1182 = vmatpush2.bf16.msra.mxu0 0
      %1183 = vmatprep.subr.bf16.mxu0 0
      %1184 = vmatpush2.bf16.msra.mxu0 0
      %1185 = vmatprep.subr.bf16.mxu0 0
      %1186 = vmatpush2.bf16.msra.mxu0 0
      %1187 = vmatprep.subr.bf16.mxu0 0
      %1188 = vmatpush2.bf16.msra.mxu0 0
      %1189 = vmatprep.mubr.bf16.mxu0 0
      %1190 = vmatmul.mubr.bf16.gmra.mxu0 %v1152
      %v1191 = vpop.f32.mrf.mxu0
      %v1192 = vadd.f32 0.0, %v1191
      %v1193 = vpop.f32.mrf.mxu0
      %v1194 = vpop.f32.mrf.mxu0
      %v1195 = vadd.f32 0.0, %v1194
      %v1196 = vpop.f32.mrf.mxu0
      %1197 = vdwg.mxu0
      %s1198 = scalar_lea.vmem %s224, 48
      %1199 = vst.msk [vmem:[%s1198] sm:$0xff] %vm384, %v1192
      %1200 = vst.msk [vmem:[%s1198 + $0x8] sm:$0xff] %vm384, %v1195
      %v1201 = vld [vmem:[%s3] sm:$0xf]
      %v1202 = vld [vmem:[%s3 + $0x4] sm:$0xf]
      %v1203 = vld [vmem:[#allocation2 + $0x4] sm:$0x1]
      %v1204 = vld [vmem:[#allocation2 + $0x24] sm:$0x1]
      %v1205 = vld [vmem:[#allocation2 + $0x44] sm:$0x1]
      %v1206 = vld [vmem:[#allocation2 + $0x64] sm:$0x1]
      %v1207 = vpack.c.bf16 %v1203, %v1203
      %v1208 = vpack.c.bf16 %v1204, %v1204
      %v1209 = vpack.c.bf16 %v1205, %v1205
      %v1210 = vpack.c.bf16 %v1206, %v1206
      %v1213 = vunpack.c.l.b16 %v1201
      %v1214 = vunpack.c.l.b16 %v1202
      %v1215 = vpack.c.b16 %v1214, %v1213
      %v1220 = vunpack.c.l.b16 %v1207
      %v1221 = vunpack.c.l.b16 %v1208
      %v1222 = vunpack.c.l.b16 %v1209
      %v1223 = vunpack.c.l.b16 %v1210
      %v1224 = vrot.slane %v1221, 7
      %v1225 = vsel %vm902, %v1224, %v1220
      %v1226 = vrot.slane %v1222, 6
      %v1227 = vsel %vm905, %v1226, %v1225
      %v1228 = vrot.slane %v1223, 5
      %v1229 = vsel %vm908, %v1228, %v1227
      %v1230 = vpack.c.b16 %v1229, %v1229
      %v1232 = vsel %vm325, %v1215, 0
      %v1235 = vsel %vm914, %v1230, 0
      %1237 = vmatprep.subr.bf16.mxu0 0
      %1238 = vmatpush1.bf16.msra.mxu0 0
      %1239 = vmatprep.subr.bf16.mxu0 0
      %1240 = vmatpush1.bf16.msra.mxu0 0
      %1241 = vmatprep.subr.bf16.mxu0 0
      %1242 = vmatpush1.bf16.msra.mxu0 0
      %1243 = vmatprep.subr.bf16.mxu0 0
      %1244 = vmatpush1.bf16.msra.mxu0 0
      %1245 = vmatprep.subr.bf16.mxu0 0
      %1246 = vmatpush1.bf16.msra.mxu0 0
      %1247 = vmatprep.subr.bf16.mxu0 0
      %1248 = vmatpush1.bf16.msra.mxu0 0
      %1249 = vmatprep.subr.bf16.mxu0 0
      %1250 = vmatpush1.bf16.msra.mxu0 0
      %1251 = vmatprep.subr.bf16.mxu0 0
      %1252 = vmatpush1.bf16.msra.mxu0 %v1235
      %1253 = vmatprep.subr.bf16.mxu0 0
      %1254 = vmatpush2.bf16.msra.mxu0 0
      %1255 = vmatprep.subr.bf16.mxu0 0
      %1256 = vmatpush2.bf16.msra.mxu0 0
      %1257 = vmatprep.subr.bf16.mxu0 0
      %1258 = vmatpush2.bf16.msra.mxu0 0
      %1259 = vmatprep.subr.bf16.mxu0 0
      %1260 = vmatpush2.bf16.msra.mxu0 0
      %1261 = vmatprep.subr.bf16.mxu0 0
      %1262 = vmatpush2.bf16.msra.mxu0 0
      %1263 = vmatprep.subr.bf16.mxu0 0
      %1264 = vmatpush2.bf16.msra.mxu0 0
      %1265 = vmatprep.subr.bf16.mxu0 0
      %1266 = vmatpush2.bf16.msra.mxu0 0
      %1267 = vmatprep.subr.bf16.mxu0 0
      %1268 = vmatpush2.bf16.msra.mxu0 0
      %1269 = vmatprep.mubr.bf16.mxu0 0
      %1270 = vmatmul.mubr.bf16.gmra.mxu0 %v1232
      %v1271 = vpop.f32.mrf.mxu0
      %v1272 = vadd.f32 0.0, %v1271
      %v1273 = vpop.f32.mrf.mxu0
      %v1274 = vpop.f32.mrf.mxu0
      %v1275 = vadd.f32 0.0, %v1274
      %v1276 = vpop.f32.mrf.mxu0
      %1277 = vdwg.mxu0
      %s1278 = scalar_lea.vmem %s224, 64
      %1279 = vst.msk [vmem:[%s1278] sm:$0xff] %vm384, %v1272
      %1280 = vst.msk [vmem:[%s1278 + $0x8] sm:$0xff] %vm384, %v1275
      %v1281 = vld [vmem:[%s3] sm:$0xf]
      %v1282 = vld [vmem:[%s3 + $0x4] sm:$0xf]
      %v1283 = vld [vmem:[#allocation2 + $0x5] sm:$0x1]
      %v1284 = vld [vmem:[#allocation2 + $0x25] sm:$0x1]
      %v1285 = vld [vmem:[#allocation2 + $0x45] sm:$0x1]
      %v1286 = vld [vmem:[#allocation2 + $0x65] sm:$0x1]
      %v1287 = vpack.c.bf16 %v1283, %v1283
      %v1288 = vpack.c.bf16 %v1284, %v1284
      %v1289 = vpack.c.bf16 %v1285, %v1285
      %v1290 = vpack.c.bf16 %v1286, %v1286
      %v1293 = vunpack.c.l.b16 %v1281
      %v1294 = vunpack.c.l.b16 %v1282
      %v1295 = vpack.c.b16 %v1294, %v1293
      %v1300 = vunpack.c.l.b16 %v1287
      %v1301 = vunpack.c.l.b16 %v1288
      %v1302 = vunpack.c.l.b16 %v1289
      %v1303 = vunpack.c.l.b16 %v1290
      %v1304 = vrot.slane %v1301, 7
      %v1305 = vsel %vm902, %v1304, %v1300
      %v1306 = vrot.slane %v1302, 6
      %v1307 = vsel %vm905, %v1306, %v1305
      %v1308 = vrot.slane %v1303, 5
      %v1309 = vsel %vm908, %v1308, %v1307
      %v1310 = vpack.c.b16 %v1309, %v1309
      %v1312 = vsel %vm325, %v1295, 0
      %v1315 = vsel %vm914, %v1310, 0
      %1317 = vmatprep.subr.bf16.mxu0 0
      %1318 = vmatpush1.bf16.msra.mxu0 0
      %1319 = vmatprep.subr.bf16.mxu0 0
      %1320 = vmatpush1.bf16.msra.mxu0 0
      %1321 = vmatprep.subr.bf16.mxu0 0
      %1322 = vmatpush1.bf16.msra.mxu0 0
      %1323 = vmatprep.subr.bf16.mxu0 0
      %1324 = vmatpush1.bf16.msra.mxu0 0
      %1325 = vmatprep.subr.bf16.mxu0 0
      %1326 = vmatpush1.bf16.msra.mxu0 0
      %1327 = vmatprep.subr.bf16.mxu0 0
      %1328 = vmatpush1.bf16.msra.mxu0 0
      %1329 = vmatprep.subr.bf16.mxu0 0
      %1330 = vmatpush1.bf16.msra.mxu0 0
      %1331 = vmatprep.subr.bf16.mxu0 0
      %1332 = vmatpush1.bf16.msra.mxu0 %v1315
      %1333 = vmatprep.subr.bf16.mxu0 0
      %1334 = vmatpush2.bf16.msra.mxu0 0
      %1335 = vmatprep.subr.bf16.mxu0 0
      %1336 = vmatpush2.bf16.msra.mxu0 0
      %1337 = vmatprep.subr.bf16.mxu0 0
      %1338 = vmatpush2.bf16.msra.mxu0 0
      %1339 = vmatprep.subr.bf16.mxu0 0
      %1340 = vmatpush2.bf16.msra.mxu0 0
      %1341 = vmatprep.subr.bf16.mxu0 0
      %1342 = vmatpush2.bf16.msra.mxu0 0
      %1343 = vmatprep.subr.bf16.mxu0 0
      %1344 = vmatpush2.bf16.msra.mxu0 0
      %1345 = vmatprep.subr.bf16.mxu0 0
      %1346 = vmatpush2.bf16.msra.mxu0 0
      %1347 = vmatprep.subr.bf16.mxu0 0
      %1348 = vmatpush2.bf16.msra.mxu0 0
      %1349 = vmatprep.mubr.bf16.mxu0 0
      %1350 = vmatmul.mubr.bf16.gmra.mxu0 %v1312
      %v1351 = vpop.f32.mrf.mxu0
      %v1352 = vadd.f32 0.0, %v1351
      %v1353 = vpop.f32.mrf.mxu0
      %v1354 = vpop.f32.mrf.mxu0
      %v1355 = vadd.f32 0.0, %v1354
      %v1356 = vpop.f32.mrf.mxu0
      %1357 = vdwg.mxu0
      %s1358 = scalar_lea.vmem %s224, 80
      %1359 = vst.msk [vmem:[%s1358] sm:$0xff] %vm384, %v1352
      %1360 = vst.msk [vmem:[%s1358 + $0x8] sm:$0xff] %vm384, %v1355
      %v1361 = vld [vmem:[%s3] sm:$0xf]
      %v1362 = vld [vmem:[%s3 + $0x4] sm:$0xf]
      %v1363 = vld [vmem:[#allocation2 + $0x6] sm:$0x1]
      %v1364 = vld [vmem:[#allocation2 + $0x26] sm:$0x1]
      %v1365 = vld [vmem:[#allocation2 + $0x46] sm:$0x1]
      %v1366 = vld [vmem:[#allocation2 + $0x66] sm:$0x1]
      %v1367 = vpack.c.bf16 %v1363, %v1363
      %v1368 = vpack.c.bf16 %v1364, %v1364
      %v1369 = vpack.c.bf16 %v1365, %v1365
      %v1370 = vpack.c.bf16 %v1366, %v1366
      %v1373 = vunpack.c.l.b16 %v1361
      %v1374 = vunpack.c.l.b16 %v1362
      %v1375 = vpack.c.b16 %v1374, %v1373
      %v1380 = vunpack.c.l.b16 %v1367
      %v1381 = vunpack.c.l.b16 %v1368
      %v1382 = vunpack.c.l.b16 %v1369
      %v1383 = vunpack.c.l.b16 %v1370
      %v1384 = vrot.slane %v1381, 7
      %v1385 = vsel %vm902, %v1384, %v1380
      %v1386 = vrot.slane %v1382, 6
      %v1387 = vsel %vm905, %v1386, %v1385
      %v1388 = vrot.slane %v1383, 5
      %v1389 = vsel %vm908, %v1388, %v1387
      %v1390 = vpack.c.b16 %v1389, %v1389
      %v1392 = vsel %vm325, %v1375, 0
      %v1395 = vsel %vm914, %v1390, 0
      %1397 = vmatprep.subr.bf16.mxu0 0
      %1398 = vmatpush1.bf16.msra.mxu0 0
      %1399 = vmatprep.subr.bf16.mxu0 0
      %1400 = vmatpush1.bf16.msra.mxu0 0
      %1401 = vmatprep.subr.bf16.mxu0 0
      %1402 = vmatpush1.bf16.msra.mxu0 0
      %1403 = vmatprep.subr.bf16.mxu0 0
      %1404 = vmatpush1.bf16.msra.mxu0 0
      %1405 = vmatprep.subr.bf16.mxu0 0
      %1406 = vmatpush1.bf16.msra.mxu0 0
      %1407 = vmatprep.subr.bf16.mxu0 0
      %1408 = vmatpush1.bf16.msra.mxu0 0
      %1409 = vmatprep.subr.bf16.mxu0 0
      %1410 = vmatpush1.bf16.msra.mxu0 0
      %1411 = vmatprep.subr.bf16.mxu0 0
      %1412 = vmatpush1.bf16.msra.mxu0 %v1395
      %1413 = vmatprep.subr.bf16.mxu0 0
      %1414 = vmatpush2.bf16.msra.mxu0 0
      %1415 = vmatprep.subr.bf16.mxu0 0
      %1416 = vmatpush2.bf16.msra.mxu0 0
      %1417 = vmatprep.subr.bf16.mxu0 0
      %1418 = vmatpush2.bf16.msra.mxu0 0
      %1419 = vmatprep.subr.bf16.mxu0 0
      %1420 = vmatpush2.bf16.msra.mxu0 0
      %1421 = vmatprep.subr.bf16.mxu0 0
      %1422 = vmatpush2.bf16.msra.mxu0 0
      %1423 = vmatprep.subr.bf16.mxu0 0
      %1424 = vmatpush2.bf16.msra.mxu0 0
      %1425 = vmatprep.subr.bf16.mxu0 0
      %1426 = vmatpush2.bf16.msra.mxu0 0
      %1427 = vmatprep.subr.bf16.mxu0 0
      %1428 = vmatpush2.bf16.msra.mxu0 0
      %1429 = vmatprep.mubr.bf16.mxu0 0
      %1430 = vmatmul.mubr.bf16.gmra.mxu0 %v1392
      %v1431 = vpop.f32.mrf.mxu0
      %v1432 = vadd.f32 0.0, %v1431
      %v1433 = vpop.f32.mrf.mxu0
      %v1434 = vpop.f32.mrf.mxu0
      %v1435 = vadd.f32 0.0, %v1434
      %v1436 = vpop.f32.mrf.mxu0
      %1437 = vdwg.mxu0
      %s1438 = scalar_lea.vmem %s224, 96
      %1439 = vst.msk [vmem:[%s1438] sm:$0xff] %vm384, %v1432
      %1440 = vst.msk [vmem:[%s1438 + $0x8] sm:$0xff] %vm384, %v1435
      %v1441 = vld [vmem:[%s3] sm:$0xf]
      %v1442 = vld [vmem:[%s3 + $0x4] sm:$0xf]
      %v1443 = vld [vmem:[#allocation2 + $0x7] sm:$0x1]
      %v1444 = vld [vmem:[#allocation2 + $0x27] sm:$0x1]
      %v1445 = vld [vmem:[#allocation2 + $0x47] sm:$0x1]
      %v1446 = vld [vmem:[#allocation2 + $0x67] sm:$0x1]
      %v1447 = vpack.c.bf16 %v1443, %v1443
      %v1448 = vpack.c.bf16 %v1444, %v1444
      %v1449 = vpack.c.bf16 %v1445, %v1445
      %v1450 = vpack.c.bf16 %v1446, %v1446
      %v1453 = vunpack.c.l.b16 %v1441
      %v1454 = vunpack.c.l.b16 %v1442
      %v1455 = vpack.c.b16 %v1454, %v1453
      %v1460 = vunpack.c.l.b16 %v1447
      %v1461 = vunpack.c.l.b16 %v1448
      %v1462 = vunpack.c.l.b16 %v1449
      %v1463 = vunpack.c.l.b16 %v1450
      %v1464 = vrot.slane %v1461, 7
      %v1465 = vsel %vm902, %v1464, %v1460
      %v1466 = vrot.slane %v1462, 6
      %v1467 = vsel %vm905, %v1466, %v1465
      %v1468 = vrot.slane %v1463, 5
      %v1469 = vsel %vm908, %v1468, %v1467
      %v1470 = vpack.c.b16 %v1469, %v1469
      %v1472 = vsel %vm325, %v1455, 0
      %v1475 = vsel %vm914, %v1470, 0
      %1477 = vmatprep.subr.bf16.mxu0 0
      %1478 = vmatpush1.bf16.msra.mxu0 0
      %1479 = vmatprep.subr.bf16.mxu0 0
      %1480 = vmatpush1.bf16.msra.mxu0 0
      %1481 = vmatprep.subr.bf16.mxu0 0
      %1482 = vmatpush1.bf16.msra.mxu0 0
      %1483 = vmatprep.subr.bf16.mxu0 0
      %1484 = vmatpush1.bf16.msra.mxu0 0
      %1485 = vmatprep.subr.bf16.mxu0 0
      %1486 = vmatpush1.bf16.msra.mxu0 0
      %1487 = vmatprep.subr.bf16.mxu0 0
      %1488 = vmatpush1.bf16.msra.mxu0 0
      %1489 = vmatprep.subr.bf16.mxu0 0
      %1490 = vmatpush1.bf16.msra.mxu0 0
      %1491 = vmatprep.subr.bf16.mxu0 0
      %1492 = vmatpush1.bf16.msra.mxu0 %v1475
      %1493 = vmatprep.subr.bf16.mxu0 0
      %1494 = vmatpush2.bf16.msra.mxu0 0
      %1495 = vmatprep.subr.bf16.mxu0 0
      %1496 = vmatpush2.bf16.msra.mxu0 0
      %1497 = vmatprep.subr.bf16.mxu0 0
      %1498 = vmatpush2.bf16.msra.mxu0 0
      %1499 = vmatprep.subr.bf16.mxu0 0
      %1500 = vmatpush2.bf16.msra.mxu0 0
      %1501 = vmatprep.subr.bf16.mxu0 0
      %1502 = vmatpush2.bf16.msra.mxu0 0
      %1503 = vmatprep.subr.bf16.mxu0 0
      %1504 = vmatpush2.bf16.msra.mxu0 0
      %1505 = vmatprep.subr.bf16.mxu0 0
      %1506 = vmatpush2.bf16.msra.mxu0 0
      %1507 = vmatprep.subr.bf16.mxu0 0
      %1508 = vmatpush2.bf16.msra.mxu0 0
      %1509 = vmatprep.mubr.bf16.mxu0 0
      %1510 = vmatmul.mubr.bf16.gmra.mxu0 %v1472
      %v1511 = vpop.f32.mrf.mxu0
      %v1512 = vadd.f32 0.0, %v1511
      %v1513 = vpop.f32.mrf.mxu0
      %v1514 = vpop.f32.mrf.mxu0
      %v1515 = vadd.f32 0.0, %v1514
      %v1516 = vpop.f32.mrf.mxu0
      %1517 = vdwg.mxu0
      %s1518 = scalar_lea.vmem %s224, 112
      %1519 = vst.msk [vmem:[%s1518] sm:$0xff] %vm384, %v1512
      %1520 = vst.msk [vmem:[%s1518 + $0x8] sm:$0xff] %vm384, %v1515
      %v1521 = vld [vmem:[%s3] sm:$0xf]
      %v1522 = vld [vmem:[%s3 + $0x4] sm:$0xf]
      %v1523 = vld [vmem:[#allocation2 + $0x8] sm:$0x1]
      %v1524 = vld [vmem:[#allocation2 + $0x28] sm:$0x1]
      %v1525 = vld [vmem:[#allocation2 + $0x48] sm:$0x1]
      %v1526 = vld [vmem:[#allocation2 + $0x68] sm:$0x1]
      %v1527 = vpack.c.bf16 %v1523, %v1523
      %v1528 = vpack.c.bf16 %v1524, %v1524
      %v1529 = vpack.c.bf16 %v1525, %v1525
      %v1530 = vpack.c.bf16 %v1526, %v1526
      %v1533 = vunpack.c.l.b16 %v1521
      %v1534 = vunpack.c.l.b16 %v1522
      %v1535 = vpack.c.b16 %v1534, %v1533
      %v1540 = vunpack.c.l.b16 %v1527
      %v1541 = vunpack.c.l.b16 %v1528
      %v1542 = vunpack.c.l.b16 %v1529
      %v1543 = vunpack.c.l.b16 %v1530
      %v1544 = vrot.slane %v1541, 7
      %v1545 = vsel %vm902, %v1544, %v1540
      %v1546 = vrot.slane %v1542, 6
      %v1547 = vsel %vm905, %v1546, %v1545
      %v1548 = vrot.slane %v1543, 5
      %v1549 = vsel %vm908, %v1548, %v1547
      %v1550 = vpack.c.b16 %v1549, %v1549
      %v1552 = vsel %vm325, %v1535, 0
      %v1555 = vsel %vm914, %v1550, 0
      %1557 = vmatprep.subr.bf16.mxu0 0
      %1558 = vmatpush1.bf16.msra.mxu0 0
      %1559 = vmatprep.subr.bf16.mxu0 0
      %1560 = vmatpush1.bf16.msra.mxu0 0
      %1561 = vmatprep.subr.bf16.mxu0 0
      %1562 = vmatpush1.bf16.msra.mxu0 0
      %1563 = vmatprep.subr.bf16.mxu0 0
      %1564 = vmatpush1.bf16.msra.mxu0 0
      %1565 = vmatprep.subr.bf16.mxu0 0
      %1566 = vmatpush1.bf16.msra.mxu0 0
      %1567 = vmatprep.subr.bf16.mxu0 0
      %1568 = vmatpush1.bf16.msra.mxu0 0
      %1569 = vmatprep.subr.bf16.mxu0 0
      %1570 = vmatpush1.bf16.msra.mxu0 0
      %1571 = vmatprep.subr.bf16.mxu0 0
      %1572 = vmatpush1.bf16.msra.mxu0 %v1555
      %1573 = vmatprep.subr.bf16.mxu0 0
      %1574 = vmatpush2.bf16.msra.mxu0 0
      %1575 = vmatprep.subr.bf16.mxu0 0
      %1576 = vmatpush2.bf16.msra.mxu0 0
      %1577 = vmatprep.subr.bf16.mxu0 0
      %1578 = vmatpush2.bf16.msra.mxu0 0
      %1579 = vmatprep.subr.bf16.mxu0 0
      %1580 = vmatpush2.bf16.msra.mxu0 0
      %1581 = vmatprep.subr.bf16.mxu0 0
      %1582 = vmatpush2.bf16.msra.mxu0 0
      %1583 = vmatprep.subr.bf16.mxu0 0
      %1584 = vmatpush2.bf16.msra.mxu0 0
      %1585 = vmatprep.subr.bf16.mxu0 0
      %1586 = vmatpush2.bf16.msra.mxu0 0
      %1587 = vmatprep.subr.bf16.mxu0 0
      %1588 = vmatpush2.bf16.msra.mxu0 0
      %1589 = vmatprep.mubr.bf16.mxu0 0
      %1590 = vmatmul.mubr.bf16.gmra.mxu0 %v1552
      %v1591 = vpop.f32.mrf.mxu0
      %v1592 = vadd.f32 0.0, %v1591
      %v1593 = vpop.f32.mrf.mxu0
      %v1594 = vpop.f32.mrf.mxu0
      %v1595 = vadd.f32 0.0, %v1594
      %v1596 = vpop.f32.mrf.mxu0
      %1597 = vdwg.mxu0
      %s1598 = scalar_lea.vmem %s224, 128
      %1599 = vst.msk [vmem:[%s1598] sm:$0xff] %vm384, %v1592
      %1600 = vst.msk [vmem:[%s1598 + $0x8] sm:$0xff] %vm384, %v1595
      %v1601 = vld [vmem:[%s3] sm:$0xf]
      %v1602 = vld [vmem:[%s3 + $0x4] sm:$0xf]
      %v1603 = vld [vmem:[#allocation2 + $0x9] sm:$0x1]
      %v1604 = vld [vmem:[#allocation2 + $0x29] sm:$0x1]
      %v1605 = vld [vmem:[#allocation2 + $0x49] sm:$0x1]
      %v1606 = vld [vmem:[#allocation2 + $0x69] sm:$0x1]
      %v1607 = vpack.c.bf16 %v1603, %v1603
      %v1608 = vpack.c.bf16 %v1604, %v1604
      %v1609 = vpack.c.bf16 %v1605, %v1605
      %v1610 = vpack.c.bf16 %v1606, %v1606
      %v1613 = vunpack.c.l.b16 %v1601
      %v1614 = vunpack.c.l.b16 %v1602
      %v1615 = vpack.c.b16 %v1614, %v1613
      %v1620 = vunpack.c.l.b16 %v1607
      %v1621 = vunpack.c.l.b16 %v1608
      %v1622 = vunpack.c.l.b16 %v1609
      %v1623 = vunpack.c.l.b16 %v1610
      %v1624 = vrot.slane %v1621, 7
      %v1625 = vsel %vm902, %v1624, %v1620
      %v1626 = vrot.slane %v1622, 6
      %v1627 = vsel %vm905, %v1626, %v1625
      %v1628 = vrot.slane %v1623, 5
      %v1629 = vsel %vm908, %v1628, %v1627
      %v1630 = vpack.c.b16 %v1629, %v1629
      %v1632 = vsel %vm325, %v1615, 0
      %v1635 = vsel %vm914, %v1630, 0
      %1637 = vmatprep.subr.bf16.mxu0 0
      %1638 = vmatpush1.bf16.msra.mxu0 0
      %1639 = vmatprep.subr.bf16.mxu0 0
      %1640 = vmatpush1.bf16.msra.mxu0 0
      %1641 = vmatprep.subr.bf16.mxu0 0
      %1642 = vmatpush1.bf16.msra.mxu0 0
      %1643 = vmatprep.subr.bf16.mxu0 0
      %1644 = vmatpush1.bf16.msra.mxu0 0
      %1645 = vmatprep.subr.bf16.mxu0 0
      %1646 = vmatpush1.bf16.msra.mxu0 0
      %1647 = vmatprep.subr.bf16.mxu0 0
      %1648 = vmatpush1.bf16.msra.mxu0 0
      %1649 = vmatprep.subr.bf16.mxu0 0
      %1650 = vmatpush1.bf16.msra.mxu0 0
      %1651 = vmatprep.subr.bf16.mxu0 0
      %1652 = vmatpush1.bf16.msra.mxu0 %v1635
      %1653 = vmatprep.subr.bf16.mxu0 0
      %1654 = vmatpush2.bf16.msra.mxu0 0
      %1655 = vmatprep.subr.bf16.mxu0 0
      %1656 = vmatpush2.bf16.msra.mxu0 0
      %1657 = vmatprep.subr.bf16.mxu0 0
      %1658 = vmatpush2.bf16.msra.mxu0 0
      %1659 = vmatprep.subr.bf16.mxu0 0
      %1660 = vmatpush2.bf16.msra.mxu0 0
      %1661 = vmatprep.subr.bf16.mxu0 0
      %1662 = vmatpush2.bf16.msra.mxu0 0
      %1663 = vmatprep.subr.bf16.mxu0 0
      %1664 = vmatpush2.bf16.msra.mxu0 0
      %1665 = vmatprep.subr.bf16.mxu0 0
      %1666 = vmatpush2.bf16.msra.mxu0 0
      %1667 = vmatprep.subr.bf16.mxu0 0
      %1668 = vmatpush2.bf16.msra.mxu0 0
      %1669 = vmatprep.mubr.bf16.mxu0 0
      %1670 = vmatmul.mubr.bf16.gmra.mxu0 %v1632
      %v1671 = vpop.f32.mrf.mxu0
      %v1672 = vadd.f32 0.0, %v1671
      %v1673 = vpop.f32.mrf.mxu0
      %v1674 = vpop.f32.mrf.mxu0
      %v1675 = vadd.f32 0.0, %v1674
      %v1676 = vpop.f32.mrf.mxu0
      %1677 = vdwg.mxu0
      %s1678 = scalar_lea.vmem %s224, 144
      %1679 = vst.msk [vmem:[%s1678] sm:$0xff] %vm384, %v1672
      %1680 = vst.msk [vmem:[%s1678 + $0x8] sm:$0xff] %vm384, %v1675
      %v1681 = vld [vmem:[%s3] sm:$0xf]
      %v1682 = vld [vmem:[%s3 + $0x4] sm:$0xf]
      %v1683 = vld [vmem:[#allocation2 + $0xa] sm:$0x1]
      %v1684 = vld [vmem:[#allocation2 + $0x2a] sm:$0x1]
      %v1685 = vld [vmem:[#allocation2 + $0x4a] sm:$0x1]
      %v1686 = vld [vmem:[#allocation2 + $0x6a] sm:$0x1]
      %v1687 = vpack.c.bf16 %v1683, %v1683
      %v1688 = vpack.c.bf16 %v1684, %v1684
      %v1689 = vpack.c.bf16 %v1685, %v1685
      %v1690 = vpack.c.bf16 %v1686, %v1686
      %v1693 = vunpack.c.l.b16 %v1681
      %v1694 = vunpack.c.l.b16 %v1682
      %v1695 = vpack.c.b16 %v1694, %v1693
      %v1700 = vunpack.c.l.b16 %v1687
      %v1701 = vunpack.c.l.b16 %v1688
      %v1702 = vunpack.c.l.b16 %v1689
      %v1703 = vunpack.c.l.b16 %v1690
      %v1704 = vrot.slane %v1701, 7
      %v1705 = vsel %vm902, %v1704, %v1700
      %v1706 = vrot.slane %v1702, 6
      %v1707 = vsel %vm905, %v1706, %v1705
      %v1708 = vrot.slane %v1703, 5
      %v1709 = vsel %vm908, %v1708, %v1707
      %v1710 = vpack.c.b16 %v1709, %v1709
      %v1712 = vsel %vm325, %v1695, 0
      %v1715 = vsel %vm914, %v1710, 0
      %1717 = vmatprep.subr.bf16.mxu0 0
      %1718 = vmatpush1.bf16.msra.mxu0 0
      %1719 = vmatprep.subr.bf16.mxu0 0
      %1720 = vmatpush1.bf16.msra.mxu0 0
      %1721 = vmatprep.subr.bf16.mxu0 0
      %1722 = vmatpush1.bf16.msra.mxu0 0
      %1723 = vmatprep.subr.bf16.mxu0 0
      %1724 = vmatpush1.bf16.msra.mxu0 0
      %1725 = vmatprep.subr.bf16.mxu0 0
      %1726 = vmatpush1.bf16.msra.mxu0 0
      %1727 = vmatprep.subr.bf16.mxu0 0
      %1728 = vmatpush1.bf16.msra.mxu0 0
      %1729 = vmatprep.subr.bf16.mxu0 0
      %1730 = vmatpush1.bf16.msra.mxu0 0
      %1731 = vmatprep.subr.bf16.mxu0 0
      %1732 = vmatpush1.bf16.msra.mxu0 %v1715
      %1733 = vmatprep.subr.bf16.mxu0 0
      %1734 = vmatpush2.bf16.msra.mxu0 0
      %1735 = vmatprep.subr.bf16.mxu0 0
      %1736 = vmatpush2.bf16.msra.mxu0 0
      %1737 = vmatprep.subr.bf16.mxu0 0
      %1738 = vmatpush2.bf16.msra.mxu0 0
      %1739 = vmatprep.subr.bf16.mxu0 0
      %1740 = vmatpush2.bf16.msra.mxu0 0
      %1741 = vmatprep.subr.bf16.mxu0 0
      %1742 = vmatpush2.bf16.msra.mxu0 0
      %1743 = vmatprep.subr.bf16.mxu0 0
      %1744 = vmatpush2.bf16.msra.mxu0 0
      %1745 = vmatprep.subr.bf16.mxu0 0
      %1746 = vmatpush2.bf16.msra.mxu0 0
      %1747 = vmatprep.subr.bf16.mxu0 0
      %1748 = vmatpush2.bf16.msra.mxu0 0
      %1749 = vmatprep.mubr.bf16.mxu0 0
      %1750 = vmatmul.mubr.bf16.gmra.mxu0 %v1712
      %v1751 = vpop.f32.mrf.mxu0
      %v1752 = vadd.f32 0.0, %v1751
      %v1753 = vpop.f32.mrf.mxu0
      %v1754 = vpop.f32.mrf.mxu0
      %v1755 = vadd.f32 0.0, %v1754
      %v1756 = vpop.f32.mrf.mxu0
      %1757 = vdwg.mxu0
      %s1758 = scalar_lea.vmem %s224, 160
      %1759 = vst.msk [vmem:[%s1758] sm:$0xff] %vm384, %v1752
      %1760 = vst.msk [vmem:[%s1758 + $0x8] sm:$0xff] %vm384, %v1755
      %v1761 = vld [vmem:[%s3] sm:$0xf]
      %v1762 = vld [vmem:[%s3 + $0x4] sm:$0xf]
      %v1763 = vld [vmem:[#allocation2 + $0xb] sm:$0x1]
      %v1764 = vld [vmem:[#allocation2 + $0x2b] sm:$0x1]
      %v1765 = vld [vmem:[#allocation2 + $0x4b] sm:$0x1]
      %v1766 = vld [vmem:[#allocation2 + $0x6b] sm:$0x1]
      %v1767 = vpack.c.bf16 %v1763, %v1763
      %v1768 = vpack.c.bf16 %v1764, %v1764
      %v1769 = vpack.c.bf16 %v1765, %v1765
      %v1770 = vpack.c.bf16 %v1766, %v1766
      %v1773 = vunpack.c.l.b16 %v1761
      %v1774 = vunpack.c.l.b16 %v1762
      %v1775 = vpack.c.b16 %v1774, %v1773
      %v1780 = vunpack.c.l.b16 %v1767
      %v1781 = vunpack.c.l.b16 %v1768
      %v1782 = vunpack.c.l.b16 %v1769
      %v1783 = vunpack.c.l.b16 %v1770
      %v1784 = vrot.slane %v1781, 7
      %v1785 = vsel %vm902, %v1784, %v1780
      %v1786 = vrot.slane %v1782, 6
      %v1787 = vsel %vm905, %v1786, %v1785
      %v1788 = vrot.slane %v1783, 5
      %v1789 = vsel %vm908, %v1788, %v1787
      %v1790 = vpack.c.b16 %v1789, %v1789
      %v1792 = vsel %vm325, %v1775, 0
      %v1795 = vsel %vm914, %v1790, 0
      %1797 = vmatprep.subr.bf16.mxu0 0
      %1798 = vmatpush1.bf16.msra.mxu0 0
      %1799 = vmatprep.subr.bf16.mxu0 0
      %1800 = vmatpush1.bf16.msra.mxu0 0
      %1801 = vmatprep.subr.bf16.mxu0 0
      %1802 = vmatpush1.bf16.msra.mxu0 0
      %1803 = vmatprep.subr.bf16.mxu0 0
      %1804 = vmatpush1.bf16.msra.mxu0 0
      %1805 = vmatprep.subr.bf16.mxu0 0
      %1806 = vmatpush1.bf16.msra.mxu0 0
      %1807 = vmatprep.subr.bf16.mxu0 0
      %1808 = vmatpush1.bf16.msra.mxu0 0
      %1809 = vmatprep.subr.bf16.mxu0 0
      %1810 = vmatpush1.bf16.msra.mxu0 0
      %1811 = vmatprep.subr.bf16.mxu0 0
      %1812 = vmatpush1.bf16.msra.mxu0 %v1795
      %1813 = vmatprep.subr.bf16.mxu0 0
      %1814 = vmatpush2.bf16.msra.mxu0 0
      %1815 = vmatprep.subr.bf16.mxu0 0
      %1816 = vmatpush2.bf16.msra.mxu0 0
      %1817 = vmatprep.subr.bf16.mxu0 0
      %1818 = vmatpush2.bf16.msra.mxu0 0
      %1819 = vmatprep.subr.bf16.mxu0 0
      %1820 = vmatpush2.bf16.msra.mxu0 0
      %1821 = vmatprep.subr.bf16.mxu0 0
      %1822 = vmatpush2.bf16.msra.mxu0 0
      %1823 = vmatprep.subr.bf16.mxu0 0
      %1824 = vmatpush2.bf16.msra.mxu0 0
      %1825 = vmatprep.subr.bf16.mxu0 0
      %1826 = vmatpush2.bf16.msra.mxu0 0
      %1827 = vmatprep.subr.bf16.mxu0 0
      %1828 = vmatpush2.bf16.msra.mxu0 0
      %1829 = vmatprep.mubr.bf16.mxu0 0
      %1830 = vmatmul.mubr.bf16.gmra.mxu0 %v1792
      %v1831 = vpop.f32.mrf.mxu0
      %v1832 = vadd.f32 0.0, %v1831
      %v1833 = vpop.f32.mrf.mxu0
      %v1834 = vpop.f32.mrf.mxu0
      %v1835 = vadd.f32 0.0, %v1834
      %v1836 = vpop.f32.mrf.mxu0
      %1837 = vdwg.mxu0
      %s1838 = scalar_lea.vmem %s224, 176
      %1839 = vst.msk [vmem:[%s1838] sm:$0xff] %vm384, %v1832
      %1840 = vst.msk [vmem:[%s1838 + $0x8] sm:$0xff] %vm384, %v1835
      %v1841 = vld [vmem:[%s3] sm:$0xf]
      %v1842 = vld [vmem:[%s3 + $0x4] sm:$0xf]
      %v1843 = vld [vmem:[#allocation2 + $0xc] sm:$0x1]
      %v1844 = vld [vmem:[#allocation2 + $0x2c] sm:$0x1]
      %v1845 = vld [vmem:[#allocation2 + $0x4c] sm:$0x1]
      %v1846 = vld [vmem:[#allocation2 + $0x6c] sm:$0x1]
      %v1847 = vpack.c.bf16 %v1843, %v1843
      %v1848 = vpack.c.bf16 %v1844, %v1844
      %v1849 = vpack.c.bf16 %v1845, %v1845
      %v1850 = vpack.c.bf16 %v1846, %v1846
      %v1853 = vunpack.c.l.b16 %v1841
      %v1854 = vunpack.c.l.b16 %v1842
      %v1855 = vpack.c.b16 %v1854, %v1853
      %v1860 = vunpack.c.l.b16 %v1847
      %v1861 = vunpack.c.l.b16 %v1848
      %v1862 = vunpack.c.l.b16 %v1849
      %v1863 = vunpack.c.l.b16 %v1850
      %v1864 = vrot.slane %v1861, 7
      %v1865 = vsel %vm902, %v1864, %v1860
      %v1866 = vrot.slane %v1862, 6
      %v1867 = vsel %vm905, %v1866, %v1865
      %v1868 = vrot.slane %v1863, 5
      %v1869 = vsel %vm908, %v1868, %v1867
      %v1870 = vpack.c.b16 %v1869, %v1869
      %v1872 = vsel %vm325, %v1855, 0
      %v1875 = vsel %vm914, %v1870, 0
      %1877 = vmatprep.subr.bf16.mxu0 0
      %1878 = vmatpush1.bf16.msra.mxu0 0
      %1879 = vmatprep.subr.bf16.mxu0 0
      %1880 = vmatpush1.bf16.msra.mxu0 0
      %1881 = vmatprep.subr.bf16.mxu0 0
      %1882 = vmatpush1.bf16.msra.mxu0 0
      %1883 = vmatprep.subr.bf16.mxu0 0
      %1884 = vmatpush1.bf16.msra.mxu0 0
      %1885 = vmatprep.subr.bf16.mxu0 0
      %1886 = vmatpush1.bf16.msra.mxu0 0
      %1887 = vmatprep.subr.bf16.mxu0 0
      %1888 = vmatpush1.bf16.msra.mxu0 0
      %1889 = vmatprep.subr.bf16.mxu0 0
      %1890 = vmatpush1.bf16.msra.mxu0 0
      %1891 = vmatprep.subr.bf16.mxu0 0
      %1892 = vmatpush1.bf16.msra.mxu0 %v1875
      %1893 = vmatprep.subr.bf16.mxu0 0
      %1894 = vmatpush2.bf16.msra.mxu0 0
      %1895 = vmatprep.subr.bf16.mxu0 0
      %1896 = vmatpush2.bf16.msra.mxu0 0
      %1897 = vmatprep.subr.bf16.mxu0 0
      %1898 = vmatpush2.bf16.msra.mxu0 0
      %1899 = vmatprep.subr.bf16.mxu0 0
      %1900 = vmatpush2.bf16.msra.mxu0 0
      %1901 = vmatprep.subr.bf16.mxu0 0
      %1902 = vmatpush2.bf16.msra.mxu0 0
      %1903 = vmatprep.subr.bf16.mxu0 0
      %1904 = vmatpush2.bf16.msra.mxu0 0
      %1905 = vmatprep.subr.bf16.mxu0 0
      %1906 = vmatpush2.bf16.msra.mxu0 0
      %1907 = vmatprep.subr.bf16.mxu0 0
      %1908 = vmatpush2.bf16.msra.mxu0 0
      %1909 = vmatprep.mubr.bf16.mxu0 0
      %1910 = vmatmul.mubr.bf16.gmra.mxu0 %v1872
      %v1911 = vpop.f32.mrf.mxu0
      %v1912 = vadd.f32 0.0, %v1911
      %v1913 = vpop.f32.mrf.mxu0
      %v1914 = vpop.f32.mrf.mxu0
      %v1915 = vadd.f32 0.0, %v1914
      %v1916 = vpop.f32.mrf.mxu0
      %1917 = vdwg.mxu0
      %s1918 = scalar_lea.vmem %s224, 192
      %1919 = vst.msk [vmem:[%s1918] sm:$0xff] %vm384, %v1912
      %1920 = vst.msk [vmem:[%s1918 + $0x8] sm:$0xff] %vm384, %v1915
      %v1921 = vld [vmem:[%s3] sm:$0xf]
      %v1922 = vld [vmem:[%s3 + $0x4] sm:$0xf]
      %v1923 = vld [vmem:[#allocation2 + $0xd] sm:$0x1]
      %v1924 = vld [vmem:[#allocation2 + $0x2d] sm:$0x1]
      %v1925 = vld [vmem:[#allocation2 + $0x4d] sm:$0x1]
      %v1926 = vld [vmem:[#allocation2 + $0x6d] sm:$0x1]
      %v1927 = vpack.c.bf16 %v1923, %v1923
      %v1928 = vpack.c.bf16 %v1924, %v1924
      %v1929 = vpack.c.bf16 %v1925, %v1925
      %v1930 = vpack.c.bf16 %v1926, %v1926
      %v1933 = vunpack.c.l.b16 %v1921
      %v1934 = vunpack.c.l.b16 %v1922
      %v1935 = vpack.c.b16 %v1934, %v1933
      %v1940 = vunpack.c.l.b16 %v1927
      %v1941 = vunpack.c.l.b16 %v1928
      %v1942 = vunpack.c.l.b16 %v1929
      %v1943 = vunpack.c.l.b16 %v1930
      %v1944 = vrot.slane %v1941, 7
      %v1945 = vsel %vm902, %v1944, %v1940
      %v1946 = vrot.slane %v1942, 6
      %v1947 = vsel %vm905, %v1946, %v1945
      %v1948 = vrot.slane %v1943, 5
      %v1949 = vsel %vm908, %v1948, %v1947
      %v1950 = vpack.c.b16 %v1949, %v1949
      %v1952 = vsel %vm325, %v1935, 0
      %v1955 = vsel %vm914, %v1950, 0
      %1957 = vmatprep.subr.bf16.mxu0 0
      %1958 = vmatpush1.bf16.msra.mxu0 0
      %1959 = vmatprep.subr.bf16.mxu0 0
      %1960 = vmatpush1.bf16.msra.mxu0 0
      %1961 = vmatprep.subr.bf16.mxu0 0
      %1962 = vmatpush1.bf16.msra.mxu0 0
      %1963 = vmatprep.subr.bf16.mxu0 0
      %1964 = vmatpush1.bf16.msra.mxu0 0
      %1965 = vmatprep.subr.bf16.mxu0 0
      %1966 = vmatpush1.bf16.msra.mxu0 0
      %1967 = vmatprep.subr.bf16.mxu0 0
      %1968 = vmatpush1.bf16.msra.mxu0 0
      %1969 = vmatprep.subr.bf16.mxu0 0
      %1970 = vmatpush1.bf16.msra.mxu0 0
      %1971 = vmatprep.subr.bf16.mxu0 0
      %1972 = vmatpush1.bf16.msra.mxu0 %v1955
      %1973 = vmatprep.subr.bf16.mxu0 0
      %1974 = vmatpush2.bf16.msra.mxu0 0
      %1975 = vmatprep.subr.bf16.mxu0 0
      %1976 = vmatpush2.bf16.msra.mxu0 0
      %1977 = vmatprep.subr.bf16.mxu0 0
      %1978 = vmatpush2.bf16.msra.mxu0 0
      %1979 = vmatprep.subr.bf16.mxu0 0
      %1980 = vmatpush2.bf16.msra.mxu0 0
      %1981 = vmatprep.subr.bf16.mxu0 0
      %1982 = vmatpush2.bf16.msra.mxu0 0
      %1983 = vmatprep.subr.bf16.mxu0 0
      %1984 = vmatpush2.bf16.msra.mxu0 0
      %1985 = vmatprep.subr.bf16.mxu0 0
      %1986 = vmatpush2.bf16.msra.mxu0 0
      %1987 = vmatprep.subr.bf16.mxu0 0
      %1988 = vmatpush2.bf16.msra.mxu0 0
      %1989 = vmatprep.mubr.bf16.mxu0 0
      %1990 = vmatmul.mubr.bf16.gmra.mxu0 %v1952
      %v1991 = vpop.f32.mrf.mxu0
      %v1992 = vadd.f32 0.0, %v1991
      %v1993 = vpop.f32.mrf.mxu0
      %v1994 = vpop.f32.mrf.mxu0
      %v1995 = vadd.f32 0.0, %v1994
      %v1996 = vpop.f32.mrf.mxu0
      %1997 = vdwg.mxu0
      %s1998 = scalar_lea.vmem %s224, 208
      %1999 = vst.msk [vmem:[%s1998] sm:$0xff] %vm384, %v1992
      %2000 = vst.msk [vmem:[%s1998 + $0x8] sm:$0xff] %vm384, %v1995
      %v2001 = vld [vmem:[%s3] sm:$0xf]
      %v2002 = vld [vmem:[%s3 + $0x4] sm:$0xf]
      %v2003 = vld [vmem:[#allocation2 + $0xe] sm:$0x1]
      %v2004 = vld [vmem:[#allocation2 + $0x2e] sm:$0x1]
      %v2005 = vld [vmem:[#allocation2 + $0x4e] sm:$0x1]
      %v2006 = vld [vmem:[#allocation2 + $0x6e] sm:$0x1]
      %v2007 = vpack.c.bf16 %v2003, %v2003
      %v2008 = vpack.c.bf16 %v2004, %v2004
      %v2009 = vpack.c.bf16 %v2005, %v2005
      %v2010 = vpack.c.bf16 %v2006, %v2006
      %v2013 = vunpack.c.l.b16 %v2001
      %v2014 = vunpack.c.l.b16 %v2002
      %v2015 = vpack.c.b16 %v2014, %v2013
      %v2020 = vunpack.c.l.b16 %v2007
      %v2021 = vunpack.c.l.b16 %v2008
      %v2022 = vunpack.c.l.b16 %v2009
      %v2023 = vunpack.c.l.b16 %v2010
      %v2024 = vrot.slane %v2021, 7
      %v2025 = vsel %vm902, %v2024, %v2020
      %v2026 = vrot.slane %v2022, 6
      %v2027 = vsel %vm905, %v2026, %v2025
      %v2028 = vrot.slane %v2023, 5
      %v2029 = vsel %vm908, %v2028, %v2027
      %v2030 = vpack.c.b16 %v2029, %v2029
      %v2032 = vsel %vm325, %v2015, 0
      %v2035 = vsel %vm914, %v2030, 0
      %2037 = vmatprep.subr.bf16.mxu0 0
      %2038 = vmatpush1.bf16.msra.mxu0 0
      %2039 = vmatprep.subr.bf16.mxu0 0
      %2040 = vmatpush1.bf16.msra.mxu0 0
      %2041 = vmatprep.subr.bf16.mxu0 0
      %2042 = vmatpush1.bf16.msra.mxu0 0
      %2043 = vmatprep.subr.bf16.mxu0 0
      %2044 = vmatpush1.bf16.msra.mxu0 0
      %2045 = vmatprep.subr.bf16.mxu0 0
      %2046 = vmatpush1.bf16.msra.mxu0 0
      %2047 = vmatprep.subr.bf16.mxu0 0
      %2048 = vmatpush1.bf16.msra.mxu0 0
      %2049 = vmatprep.subr.bf16.mxu0 0
      %2050 = vmatpush1.bf16.msra.mxu0 0
      %2051 = vmatprep.subr.bf16.mxu0 0
      %2052 = vmatpush1.bf16.msra.mxu0 %v2035
      %2053 = vmatprep.subr.bf16.mxu0 0
      %2054 = vmatpush2.bf16.msra.mxu0 0
      %2055 = vmatprep.subr.bf16.mxu0 0
      %2056 = vmatpush2.bf16.msra.mxu0 0
      %2057 = vmatprep.subr.bf16.mxu0 0
      %2058 = vmatpush2.bf16.msra.mxu0 0
      %2059 = vmatprep.subr.bf16.mxu0 0
      %2060 = vmatpush2.bf16.msra.mxu0 0
      %2061 = vmatprep.subr.bf16.mxu0 0
      %2062 = vmatpush2.bf16.msra.mxu0 0
      %2063 = vmatprep.subr.bf16.mxu0 0
      %2064 = vmatpush2.bf16.msra.mxu0 0
      %2065 = vmatprep.subr.bf16.mxu0 0
      %2066 = vmatpush2.bf16.msra.mxu0 0
      %2067 = vmatprep.subr.bf16.mxu0 0
      %2068 = vmatpush2.bf16.msra.mxu0 0
      %2069 = vmatprep.mubr.bf16.mxu0 0
      %2070 = vmatmul.mubr.bf16.gmra.mxu0 %v2032
      %v2071 = vpop.f32.mrf.mxu0
      %v2072 = vadd.f32 0.0, %v2071
      %v2073 = vpop.f32.mrf.mxu0
      %v2074 = vpop.f32.mrf.mxu0
      %v2075 = vadd.f32 0.0, %v2074
      %v2076 = vpop.f32.mrf.mxu0
      %2077 = vdwg.mxu0
      %s2078 = scalar_lea.vmem %s224, 224
      %2079 = vst.msk [vmem:[%s2078] sm:$0xff] %vm384, %v2072
      %2080 = vst.msk [vmem:[%s2078 + $0x8] sm:$0xff] %vm384, %v2075
      %v2081 = vld [vmem:[%s3] sm:$0xf]
      %v2082 = vld [vmem:[%s3 + $0x4] sm:$0xf]
      %v2083 = vld [vmem:[#allocation2 + $0xf] sm:$0x1]
      %v2084 = vld [vmem:[#allocation2 + $0x2f] sm:$0x1]
      %v2085 = vld [vmem:[#allocation2 + $0x4f] sm:$0x1]
      %v2086 = vld [vmem:[#allocation2 + $0x6f] sm:$0x1]
      %v2087 = vpack.c.bf16 %v2083, %v2083
      %v2088 = vpack.c.bf16 %v2084, %v2084
      %v2089 = vpack.c.bf16 %v2085, %v2085
      %v2090 = vpack.c.bf16 %v2086, %v2086
      %v2093 = vunpack.c.l.b16 %v2081
      %v2094 = vunpack.c.l.b16 %v2082
      %v2095 = vpack.c.b16 %v2094, %v2093
      %v2100 = vunpack.c.l.b16 %v2087
      %v2101 = vunpack.c.l.b16 %v2088
      %v2102 = vunpack.c.l.b16 %v2089
      %v2103 = vunpack.c.l.b16 %v2090
      %v2104 = vrot.slane %v2101, 7
      %v2105 = vsel %vm902, %v2104, %v2100
      %v2106 = vrot.slane %v2102, 6
      %v2107 = vsel %vm905, %v2106, %v2105
      %v2108 = vrot.slane %v2103, 5
      %v2109 = vsel %vm908, %v2108, %v2107
      %v2110 = vpack.c.b16 %v2109, %v2109
      %v2112 = vsel %vm325, %v2095, 0
      %v2115 = vsel %vm914, %v2110, 0
      %2117 = vmatprep.subr.bf16.mxu0 0
      %2118 = vmatpush1.bf16.msra.mxu0 0
      %2119 = vmatprep.subr.bf16.mxu0 0
      %2120 = vmatpush1.bf16.msra.mxu0 0
      %2121 = vmatprep.subr.bf16.mxu0 0
      %2122 = vmatpush1.bf16.msra.mxu0 0
      %2123 = vmatprep.subr.bf16.mxu0 0
      %2124 = vmatpush1.bf16.msra.mxu0 0
      %2125 = vmatprep.subr.bf16.mxu0 0
      %2126 = vmatpush1.bf16.msra.mxu0 0
      %2127 = vmatprep.subr.bf16.mxu0 0
      %2128 = vmatpush1.bf16.msra.mxu0 0
      %2129 = vmatprep.subr.bf16.mxu0 0
      %2130 = vmatpush1.bf16.msra.mxu0 0
      %2131 = vmatprep.subr.bf16.mxu0 0
      %2132 = vmatpush1.bf16.msra.mxu0 %v2115
      %2133 = vmatprep.subr.bf16.mxu0 0
      %2134 = vmatpush2.bf16.msra.mxu0 0
      %2135 = vmatprep.subr.bf16.mxu0 0
      %2136 = vmatpush2.bf16.msra.mxu0 0
      %2137 = vmatprep.subr.bf16.mxu0 0
      %2138 = vmatpush2.bf16.msra.mxu0 0
      %2139 = vmatprep.subr.bf16.mxu0 0
      %2140 = vmatpush2.bf16.msra.mxu0 0
      %2141 = vmatprep.subr.bf16.mxu0 0
      %2142 = vmatpush2.bf16.msra.mxu0 0
      %2143 = vmatprep.subr.bf16.mxu0 0
      %2144 = vmatpush2.bf16.msra.mxu0 0
      %2145 = vmatprep.subr.bf16.mxu0 0
      %2146 = vmatpush2.bf16.msra.mxu0 0
      %2147 = vmatprep.subr.bf16.mxu0 0
      %2148 = vmatpush2.bf16.msra.mxu0 0
      %2149 = vmatprep.mubr.bf16.mxu0 0
      %2150 = vmatmul.mubr.bf16.gmra.mxu0 %v2112
      %v2151 = vpop.f32.mrf.mxu0
      %v2152 = vadd.f32 0.0, %v2151
      %v2153 = vpop.f32.mrf.mxu0
      %v2154 = vpop.f32.mrf.mxu0
      %v2155 = vadd.f32 0.0, %v2154
      %v2156 = vpop.f32.mrf.mxu0
      %2157 = vdwg.mxu0
      %s2158 = scalar_lea.vmem %s224, 240
      %2159 = vst.msk [vmem:[%s2158] sm:$0xff] %vm384, %v2152
      %2160 = vst.msk [vmem:[%s2158 + $0x8] sm:$0xff] %vm384, %v2155
      %v2161 = vld [vmem:[%s3] sm:$0xf]
      %v2162 = vld [vmem:[%s3 + $0x4] sm:$0xf]
      %v2163 = vld [vmem:[#allocation2 + $0x10] sm:$0x1]
      %v2164 = vld [vmem:[#allocation2 + $0x30] sm:$0x1]
      %v2165 = vld [vmem:[#allocation2 + $0x50] sm:$0x1]
      %v2166 = vld [vmem:[#allocation2 + $0x70] sm:$0x1]
      %v2167 = vpack.c.bf16 %v2163, %v2163
      %v2168 = vpack.c.bf16 %v2164, %v2164
      %v2169 = vpack.c.bf16 %v2165, %v2165
      %v2170 = vpack.c.bf16 %v2166, %v2166
      %v2173 = vunpack.c.l.b16 %v2161
      %v2174 = vunpack.c.l.b16 %v2162
      %v2175 = vpack.c.b16 %v2174, %v2173
      %v2180 = vunpack.c.l.b16 %v2167
      %v2181 = vunpack.c.l.b16 %v2168
      %v2182 = vunpack.c.l.b16 %v2169
      %v2183 = vunpack.c.l.b16 %v2170
      %v2184 = vrot.slane %v2181, 7
      %v2185 = vsel %vm902, %v2184, %v2180
      %v2186 = vrot.slane %v2182, 6
      %v2187 = vsel %vm905, %v2186, %v2185
      %v2188 = vrot.slane %v2183, 5
      %v2189 = vsel %vm908, %v2188, %v2187
      %v2190 = vpack.c.b16 %v2189, %v2189
      %v2192 = vsel %vm325, %v2175, 0
      %v2195 = vsel %vm914, %v2190, 0
      %2197 = vmatprep.subr.bf16.mxu0 0
      %2198 = vmatpush1.bf16.msra.mxu0 0
      %2199 = vmatprep.subr.bf16.mxu0 0
      %2200 = vmatpush1.bf16.msra.mxu0 0
      %2201 = vmatprep.subr.bf16.mxu0 0
      %2202 = vmatpush1.bf16.msra.mxu0 0
      %2203 = vmatprep.subr.bf16.mxu0 0
      %2204 = vmatpush1.bf16.msra.mxu0 0
      %2205 = vmatprep.subr.bf16.mxu0 0
      %2206 = vmatpush1.bf16.msra.mxu0 0
      %2207 = vmatprep.subr.bf16.mxu0 0
      %2208 = vmatpush1.bf16.msra.mxu0 0
      %2209 = vmatprep.subr.bf16.mxu0 0
      %2210 = vmatpush1.bf16.msra.mxu0 0
      %2211 = vmatprep.subr.bf16.mxu0 0
      %2212 = vmatpush1.bf16.msra.mxu0 %v2195
      %2213 = vmatprep.subr.bf16.mxu0 0
      %2214 = vmatpush2.bf16.msra.mxu0 0
      %2215 = vmatprep.subr.bf16.mxu0 0
      %2216 = vmatpush2.bf16.msra.mxu0 0
      %2217 = vmatprep.subr.bf16.mxu0 0
      %2218 = vmatpush2.bf16.msra.mxu0 0
      %2219 = vmatprep.subr.bf16.mxu0 0
      %2220 = vmatpush2.bf16.msra.mxu0 0
      %2221 = vmatprep.subr.bf16.mxu0 0
      %2222 = vmatpush2.bf16.msra.mxu0 0
      %2223 = vmatprep.subr.bf16.mxu0 0
      %2224 = vmatpush2.bf16.msra.mxu0 0
      %2225 = vmatprep.subr.bf16.mxu0 0
      %2226 = vmatpush2.bf16.msra.mxu0 0
      %2227 = vmatprep.subr.bf16.mxu0 0
      %2228 = vmatpush2.bf16.msra.mxu0 0
      %2229 = vmatprep.mubr.bf16.mxu0 0
      %2230 = vmatmul.mubr.bf16.gmra.mxu0 %v2192
      %v2231 = vpop.f32.mrf.mxu0
      %v2232 = vadd.f32 0.0, %v2231
      %v2233 = vpop.f32.mrf.mxu0
      %v2234 = vpop.f32.mrf.mxu0
      %v2235 = vadd.f32 0.0, %v2234
      %v2236 = vpop.f32.mrf.mxu0
      %2237 = vdwg.mxu0
      %s2238 = scalar_lea.vmem %s224, 256
      %2239 = vst.msk [vmem:[%s2238] sm:$0xff] %vm384, %v2232
      %2240 = vst.msk [vmem:[%s2238 + $0x8] sm:$0xff] %vm384, %v2235
      %v2241 = vld [vmem:[%s3] sm:$0xf]
      %v2242 = vld [vmem:[%s3 + $0x4] sm:$0xf]
      %v2243 = vld [vmem:[#allocation2 + $0x11] sm:$0x1]
      %v2244 = vld [vmem:[#allocation2 + $0x31] sm:$0x1]
      %v2245 = vld [vmem:[#allocation2 + $0x51] sm:$0x1]
      %v2246 = vld [vmem:[#allocation2 + $0x71] sm:$0x1]
      %v2247 = vpack.c.bf16 %v2243, %v2243
      %v2248 = vpack.c.bf16 %v2244, %v2244
      %v2249 = vpack.c.bf16 %v2245, %v2245
      %v2250 = vpack.c.bf16 %v2246, %v2246
      %v2253 = vunpack.c.l.b16 %v2241
      %v2254 = vunpack.c.l.b16 %v2242
      %v2255 = vpack.c.b16 %v2254, %v2253
      %v2260 = vunpack.c.l.b16 %v2247
      %v2261 = vunpack.c.l.b16 %v2248
      %v2262 = vunpack.c.l.b16 %v2249
      %v2263 = vunpack.c.l.b16 %v2250
      %v2264 = vrot.slane %v2261, 7
      %v2265 = vsel %vm902, %v2264, %v2260
      %v2266 = vrot.slane %v2262, 6
      %v2267 = vsel %vm905, %v2266, %v2265
      %v2268 = vrot.slane %v2263, 5
      %v2269 = vsel %vm908, %v2268, %v2267
      %v2270 = vpack.c.b16 %v2269, %v2269
      %v2272 = vsel %vm325, %v2255, 0
      %v2275 = vsel %vm914, %v2270, 0
      %2277 = vmatprep.subr.bf16.mxu0 0
      %2278 = vmatpush1.bf16.msra.mxu0 0
      %2279 = vmatprep.subr.bf16.mxu0 0
      %2280 = vmatpush1.bf16.msra.mxu0 0
      %2281 = vmatprep.subr.bf16.mxu0 0
      %2282 = vmatpush1.bf16.msra.mxu0 0
      %2283 = vmatprep.subr.bf16.mxu0 0
      %2284 = vmatpush1.bf16.msra.mxu0 0
      %2285 = vmatprep.subr.bf16.mxu0 0
      %2286 = vmatpush1.bf16.msra.mxu0 0
      %2287 = vmatprep.subr.bf16.mxu0 0
      %2288 = vmatpush1.bf16.msra.mxu0 0
      %2289 = vmatprep.subr.bf16.mxu0 0
      %2290 = vmatpush1.bf16.msra.mxu0 0
      %2291 = vmatprep.subr.bf16.mxu0 0
      %2292 = vmatpush1.bf16.msra.mxu0 %v2275
      %2293 = vmatprep.subr.bf16.mxu0 0
      %2294 = vmatpush2.bf16.msra.mxu0 0
      %2295 = vmatprep.subr.bf16.mxu0 0
      %2296 = vmatpush2.bf16.msra.mxu0 0
      %2297 = vmatprep.subr.bf16.mxu0 0
      %2298 = vmatpush2.bf16.msra.mxu0 0
      %2299 = vmatprep.subr.bf16.mxu0 0
      %2300 = vmatpush2.bf16.msra.mxu0 0
      %2301 = vmatprep.subr.bf16.mxu0 0
      %2302 = vmatpush2.bf16.msra.mxu0 0
      %2303 = vmatprep.subr.bf16.mxu0 0
      %2304 = vmatpush2.bf16.msra.mxu0 0
      %2305 = vmatprep.subr.bf16.mxu0 0
      %2306 = vmatpush2.bf16.msra.mxu0 0
      %2307 = vmatprep.subr.bf16.mxu0 0
      %2308 = vmatpush2.bf16.msra.mxu0 0
      %2309 = vmatprep.mubr.bf16.mxu0 0
      %2310 = vmatmul.mubr.bf16.gmra.mxu0 %v2272
      %v2311 = vpop.f32.mrf.mxu0
      %v2312 = vadd.f32 0.0, %v2311
      %v2313 = vpop.f32.mrf.mxu0
      %v2314 = vpop.f32.mrf.mxu0
      %v2315 = vadd.f32 0.0, %v2314
      %v2316 = vpop.f32.mrf.mxu0
      %2317 = vdwg.mxu0
      %s2318 = scalar_lea.vmem %s224, 272
      %2319 = vst.msk [vmem:[%s2318] sm:$0xff] %vm384, %v2312
      %2320 = vst.msk [vmem:[%s2318 + $0x8] sm:$0xff] %vm384, %v2315
      %v2321 = vld [vmem:[%s3] sm:$0xf]
      %v2322 = vld [vmem:[%s3 + $0x4] sm:$0xf]
      %v2323 = vld [vmem:[#allocation2 + $0x12] sm:$0x1]
      %v2324 = vld [vmem:[#allocation2 + $0x32] sm:$0x1]
      %v2325 = vld [vmem:[#allocation2 + $0x52] sm:$0x1]
      %v2326 = vld [vmem:[#allocation2 + $0x72] sm:$0x1]
      %v2327 = vpack.c.bf16 %v2323, %v2323
      %v2328 = vpack.c.bf16 %v2324, %v2324
      %v2329 = vpack.c.bf16 %v2325, %v2325
      %v2330 = vpack.c.bf16 %v2326, %v2326
      %v2333 = vunpack.c.l.b16 %v2321
      %v2334 = vunpack.c.l.b16 %v2322
      %v2335 = vpack.c.b16 %v2334, %v2333
      %v2340 = vunpack.c.l.b16 %v2327
      %v2341 = vunpack.c.l.b16 %v2328
      %v2342 = vunpack.c.l.b16 %v2329
      %v2343 = vunpack.c.l.b16 %v2330
      %v2344 = vrot.slane %v2341, 7
      %v2345 = vsel %vm902, %v2344, %v2340
      %v2346 = vrot.slane %v2342, 6
      %v2347 = vsel %vm905, %v2346, %v2345
      %v2348 = vrot.slane %v2343, 5
      %v2349 = vsel %vm908, %v2348, %v2347
      %v2350 = vpack.c.b16 %v2349, %v2349
      %v2352 = vsel %vm325, %v2335, 0
      %v2355 = vsel %vm914, %v2350, 0
      %2357 = vmatprep.subr.bf16.mxu0 0
      %2358 = vmatpush1.bf16.msra.mxu0 0
      %2359 = vmatprep.subr.bf16.mxu0 0
      %2360 = vmatpush1.bf16.msra.mxu0 0
      %2361 = vmatprep.subr.bf16.mxu0 0
      %2362 = vmatpush1.bf16.msra.mxu0 0
      %2363 = vmatprep.subr.bf16.mxu0 0
      %2364 = vmatpush1.bf16.msra.mxu0 0
      %2365 = vmatprep.subr.bf16.mxu0 0
      %2366 = vmatpush1.bf16.msra.mxu0 0
      %2367 = vmatprep.subr.bf16.mxu0 0
      %2368 = vmatpush1.bf16.msra.mxu0 0
      %2369 = vmatprep.subr.bf16.mxu0 0
      %2370 = vmatpush1.bf16.msra.mxu0 0
      %2371 = vmatprep.subr.bf16.mxu0 0
      %2372 = vmatpush1.bf16.msra.mxu0 %v2355
      %2373 = vmatprep.subr.bf16.mxu0 0
      %2374 = vmatpush2.bf16.msra.mxu0 0
      %2375 = vmatprep.subr.bf16.mxu0 0
      %2376 = vmatpush2.bf16.msra.mxu0 0
      %2377 = vmatprep.subr.bf16.mxu0 0
      %2378 = vmatpush2.bf16.msra.mxu0 0
      %2379 = vmatprep.subr.bf16.mxu0 0
      %2380 = vmatpush2.bf16.msra.mxu0 0
      %2381 = vmatprep.subr.bf16.mxu0 0
      %2382 = vmatpush2.bf16.msra.mxu0 0
      %2383 = vmatprep.subr.bf16.mxu0 0
      %2384 = vmatpush2.bf16.msra.mxu0 0
      %2385 = vmatprep.subr.bf16.mxu0 0
      %2386 = vmatpush2.bf16.msra.mxu0 0
      %2387 = vmatprep.subr.bf16.mxu0 0
      %2388 = vmatpush2.bf16.msra.mxu0 0
      %2389 = vmatprep.mubr.bf16.mxu0 0
      %2390 = vmatmul.mubr.bf16.gmra.mxu0 %v2352
      %v2391 = vpop.f32.mrf.mxu0
      %v2392 = vadd.f32 0.0, %v2391
      %v2393 = vpop.f32.mrf.mxu0
      %v2394 = vpop.f32.mrf.mxu0
      %v2395 = vadd.f32 0.0, %v2394
      %v2396 = vpop.f32.mrf.mxu0
      %2397 = vdwg.mxu0
      %s2398 = scalar_lea.vmem %s224, 288
      %2399 = vst.msk [vmem:[%s2398] sm:$0xff] %vm384, %v2392
      %2400 = vst.msk [vmem:[%s2398 + $0x8] sm:$0xff] %vm384, %v2395
      %v2401 = vld [vmem:[%s3] sm:$0xf]
      %v2402 = vld [vmem:[%s3 + $0x4] sm:$0xf]
      %v2403 = vld [vmem:[#allocation2 + $0x13] sm:$0x1]
      %v2404 = vld [vmem:[#allocation2 + $0x33] sm:$0x1]
      %v2405 = vld [vmem:[#allocation2 + $0x53] sm:$0x1]
      %v2406 = vld [vmem:[#allocation2 + $0x73] sm:$0x1]
      %v2407 = vpack.c.bf16 %v2403, %v2403
      %v2408 = vpack.c.bf16 %v2404, %v2404
      %v2409 = vpack.c.bf16 %v2405, %v2405
      %v2410 = vpack.c.bf16 %v2406, %v2406
      %v2413 = vunpack.c.l.b16 %v2401
      %v2414 = vunpack.c.l.b16 %v2402
      %v2415 = vpack.c.b16 %v2414, %v2413
      %v2420 = vunpack.c.l.b16 %v2407
      %v2421 = vunpack.c.l.b16 %v2408
      %v2422 = vunpack.c.l.b16 %v2409
      %v2423 = vunpack.c.l.b16 %v2410
      %v2424 = vrot.slane %v2421, 7
      %v2425 = vsel %vm902, %v2424, %v2420
      %v2426 = vrot.slane %v2422, 6
      %v2427 = vsel %vm905, %v2426, %v2425
      %v2428 = vrot.slane %v2423, 5
      %v2429 = vsel %vm908, %v2428, %v2427
      %v2430 = vpack.c.b16 %v2429, %v2429
      %v2432 = vsel %vm325, %v2415, 0
      %v2435 = vsel %vm914, %v2430, 0
      %2437 = vmatprep.subr.bf16.mxu0 0
      %2438 = vmatpush1.bf16.msra.mxu0 0
      %2439 = vmatprep.subr.bf16.mxu0 0
      %2440 = vmatpush1.bf16.msra.mxu0 0
      %2441 = vmatprep.subr.bf16.mxu0 0
      %2442 = vmatpush1.bf16.msra.mxu0 0
      %2443 = vmatprep.subr.bf16.mxu0 0
      %2444 = vmatpush1.bf16.msra.mxu0 0
      %2445 = vmatprep.subr.bf16.mxu0 0
      %2446 = vmatpush1.bf16.msra.mxu0 0
      %2447 = vmatprep.subr.bf16.mxu0 0
      %2448 = vmatpush1.bf16.msra.mxu0 0
      %2449 = vmatprep.subr.bf16.mxu0 0
      %2450 = vmatpush1.bf16.msra.mxu0 0
      %2451 = vmatprep.subr.bf16.mxu0 0
      %2452 = vmatpush1.bf16.msra.mxu0 %v2435
      %2453 = vmatprep.subr.bf16.mxu0 0
      %2454 = vmatpush2.bf16.msra.mxu0 0
      %2455 = vmatprep.subr.bf16.mxu0 0
      %2456 = vmatpush2.bf16.msra.mxu0 0
      %2457 = vmatprep.subr.bf16.mxu0 0
      %2458 = vmatpush2.bf16.msra.mxu0 0
      %2459 = vmatprep.subr.bf16.mxu0 0
      %2460 = vmatpush2.bf16.msra.mxu0 0
      %2461 = vmatprep.subr.bf16.mxu0 0
      %2462 = vmatpush2.bf16.msra.mxu0 0
      %2463 = vmatprep.subr.bf16.mxu0 0
      %2464 = vmatpush2.bf16.msra.mxu0 0
      %2465 = vmatprep.subr.bf16.mxu0 0
      %2466 = vmatpush2.bf16.msra.mxu0 0
      %2467 = vmatprep.subr.bf16.mxu0 0
      %2468 = vmatpush2.bf16.msra.mxu0 0
      %2469 = vmatprep.mubr.bf16.mxu0 0
      %2470 = vmatmul.mubr.bf16.gmra.mxu0 %v2432
      %v2471 = vpop.f32.mrf.mxu0
      %v2472 = vadd.f32 0.0, %v2471
      %v2473 = vpop.f32.mrf.mxu0
      %v2474 = vpop.f32.mrf.mxu0
      %v2475 = vadd.f32 0.0, %v2474
      %v2476 = vpop.f32.mrf.mxu0
      %2477 = vdwg.mxu0
      %s2478 = scalar_lea.vmem %s224, 304
      %2479 = vst.msk [vmem:[%s2478] sm:$0xff] %vm384, %v2472
      %2480 = vst.msk [vmem:[%s2478 + $0x8] sm:$0xff] %vm384, %v2475
      %v2481 = vld [vmem:[%s3] sm:$0xf]
      %v2482 = vld [vmem:[%s3 + $0x4] sm:$0xf]
      %v2483 = vld [vmem:[#allocation2 + $0x14] sm:$0x1]
      %v2484 = vld [vmem:[#allocation2 + $0x34] sm:$0x1]
      %v2485 = vld [vmem:[#allocation2 + $0x54] sm:$0x1]
      %v2486 = vld [vmem:[#allocation2 + $0x74] sm:$0x1]
      %v2487 = vpack.c.bf16 %v2483, %v2483
      %v2488 = vpack.c.bf16 %v2484, %v2484
      %v2489 = vpack.c.bf16 %v2485, %v2485
      %v2490 = vpack.c.bf16 %v2486, %v2486
      %v2493 = vunpack.c.l.b16 %v2481
      %v2494 = vunpack.c.l.b16 %v2482
      %v2495 = vpack.c.b16 %v2494, %v2493
      %v2500 = vunpack.c.l.b16 %v2487
      %v2501 = vunpack.c.l.b16 %v2488
      %v2502 = vunpack.c.l.b16 %v2489
      %v2503 = vunpack.c.l.b16 %v2490
      %v2504 = vrot.slane %v2501, 7
      %v2505 = vsel %vm902, %v2504, %v2500
      %v2506 = vrot.slane %v2502, 6
      %v2507 = vsel %vm905, %v2506, %v2505
      %v2508 = vrot.slane %v2503, 5
      %v2509 = vsel %vm908, %v2508, %v2507
      %v2510 = vpack.c.b16 %v2509, %v2509
      %v2512 = vsel %vm325, %v2495, 0
      %v2515 = vsel %vm914, %v2510, 0
      %2517 = vmatprep.subr.bf16.mxu0 0
      %2518 = vmatpush1.bf16.msra.mxu0 0
      %2519 = vmatprep.subr.bf16.mxu0 0
      %2520 = vmatpush1.bf16.msra.mxu0 0
      %2521 = vmatprep.subr.bf16.mxu0 0
      %2522 = vmatpush1.bf16.msra.mxu0 0
      %2523 = vmatprep.subr.bf16.mxu0 0
      %2524 = vmatpush1.bf16.msra.mxu0 0
      %2525 = vmatprep.subr.bf16.mxu0 0
      %2526 = vmatpush1.bf16.msra.mxu0 0
      %2527 = vmatprep.subr.bf16.mxu0 0
      %2528 = vmatpush1.bf16.msra.mxu0 0
      %2529 = vmatprep.subr.bf16.mxu0 0
      %2530 = vmatpush1.bf16.msra.mxu0 0
      %2531 = vmatprep.subr.bf16.mxu0 0
      %2532 = vmatpush1.bf16.msra.mxu0 %v2515
      %2533 = vmatprep.subr.bf16.mxu0 0
      %2534 = vmatpush2.bf16.msra.mxu0 0
      %2535 = vmatprep.subr.bf16.mxu0 0
      %2536 = vmatpush2.bf16.msra.mxu0 0
      %2537 = vmatprep.subr.bf16.mxu0 0
      %2538 = vmatpush2.bf16.msra.mxu0 0
      %2539 = vmatprep.subr.bf16.mxu0 0
      %2540 = vmatpush2.bf16.msra.mxu0 0
      %2541 = vmatprep.subr.bf16.mxu0 0
      %2542 = vmatpush2.bf16.msra.mxu0 0
      %2543 = vmatprep.subr.bf16.mxu0 0
      %2544 = vmatpush2.bf16.msra.mxu0 0
      %2545 = vmatprep.subr.bf16.mxu0 0
      %2546 = vmatpush2.bf16.msra.mxu0 0
      %2547 = vmatprep.subr.bf16.mxu0 0
      %2548 = vmatpush2.bf16.msra.mxu0 0
      %2549 = vmatprep.mubr.bf16.mxu0 0
      %2550 = vmatmul.mubr.bf16.gmra.mxu0 %v2512
      %v2551 = vpop.f32.mrf.mxu0
      %v2552 = vadd.f32 0.0, %v2551
      %v2553 = vpop.f32.mrf.mxu0
      %v2554 = vpop.f32.mrf.mxu0
      %v2555 = vadd.f32 0.0, %v2554
      %v2556 = vpop.f32.mrf.mxu0
      %2557 = vdwg.mxu0
      %s2558 = scalar_lea.vmem %s224, 320
      %2559 = vst.msk [vmem:[%s2558] sm:$0xff] %vm384, %v2552
      %2560 = vst.msk [vmem:[%s2558 + $0x8] sm:$0xff] %vm384, %v2555
      %v2561 = vld [vmem:[%s3] sm:$0xf]
      %v2562 = vld [vmem:[%s3 + $0x4] sm:$0xf]
      %v2563 = vld [vmem:[#allocation2 + $0x15] sm:$0x1]
      %v2564 = vld [vmem:[#allocation2 + $0x35] sm:$0x1]
      %v2565 = vld [vmem:[#allocation2 + $0x55] sm:$0x1]
      %v2566 = vld [vmem:[#allocation2 + $0x75] sm:$0x1]
      %v2567 = vpack.c.bf16 %v2563, %v2563
      %v2568 = vpack.c.bf16 %v2564, %v2564
      %v2569 = vpack.c.bf16 %v2565, %v2565
      %v2570 = vpack.c.bf16 %v2566, %v2566
      %v2573 = vunpack.c.l.b16 %v2561
      %v2574 = vunpack.c.l.b16 %v2562
      %v2575 = vpack.c.b16 %v2574, %v2573
      %v2580 = vunpack.c.l.b16 %v2567
      %v2581 = vunpack.c.l.b16 %v2568
      %v2582 = vunpack.c.l.b16 %v2569
      %v2583 = vunpack.c.l.b16 %v2570
      %v2584 = vrot.slane %v2581, 7
      %v2585 = vsel %vm902, %v2584, %v2580
      %v2586 = vrot.slane %v2582, 6
      %v2587 = vsel %vm905, %v2586, %v2585
      %v2588 = vrot.slane %v2583, 5
      %v2589 = vsel %vm908, %v2588, %v2587
      %v2590 = vpack.c.b16 %v2589, %v2589
      %v2592 = vsel %vm325, %v2575, 0
      %v2595 = vsel %vm914, %v2590, 0
      %2597 = vmatprep.subr.bf16.mxu0 0
      %2598 = vmatpush1.bf16.msra.mxu0 0
      %2599 = vmatprep.subr.bf16.mxu0 0
      %2600 = vmatpush1.bf16.msra.mxu0 0
      %2601 = vmatprep.subr.bf16.mxu0 0
      %2602 = vmatpush1.bf16.msra.mxu0 0
      %2603 = vmatprep.subr.bf16.mxu0 0
      %2604 = vmatpush1.bf16.msra.mxu0 0
      %2605 = vmatprep.subr.bf16.mxu0 0
      %2606 = vmatpush1.bf16.msra.mxu0 0
      %2607 = vmatprep.subr.bf16.mxu0 0
      %2608 = vmatpush1.bf16.msra.mxu0 0
      %2609 = vmatprep.subr.bf16.mxu0 0
      %2610 = vmatpush1.bf16.msra.mxu0 0
      %2611 = vmatprep.subr.bf16.mxu0 0
      %2612 = vmatpush1.bf16.msra.mxu0 %v2595
      %2613 = vmatprep.subr.bf16.mxu0 0
      %2614 = vmatpush2.bf16.msra.mxu0 0
      %2615 = vmatprep.subr.bf16.mxu0 0
      %2616 = vmatpush2.bf16.msra.mxu0 0
      %2617 = vmatprep.subr.bf16.mxu0 0
      %2618 = vmatpush2.bf16.msra.mxu0 0
      %2619 = vmatprep.subr.bf16.mxu0 0
      %2620 = vmatpush2.bf16.msra.mxu0 0
      %2621 = vmatprep.subr.bf16.mxu0 0
      %2622 = vmatpush2.bf16.msra.mxu0 0
      %2623 = vmatprep.subr.bf16.mxu0 0
      %2624 = vmatpush2.bf16.msra.mxu0 0
      %2625 = vmatprep.subr.bf16.mxu0 0
      %2626 = vmatpush2.bf16.msra.mxu0 0
      %2627 = vmatprep.subr.bf16.mxu0 0
      %2628 = vmatpush2.bf16.msra.mxu0 0
      %2629 = vmatprep.mubr.bf16.mxu0 0
      %2630 = vmatmul.mubr.bf16.gmra.mxu0 %v2592
      %v2631 = vpop.f32.mrf.mxu0
      %v2632 = vadd.f32 0.0, %v2631
      %v2633 = vpop.f32.mrf.mxu0
      %v2634 = vpop.f32.mrf.mxu0
      %v2635 = vadd.f32 0.0, %v2634
      %v2636 = vpop.f32.mrf.mxu0
      %2637 = vdwg.mxu0
      %s2638 = scalar_lea.vmem %s224, 336
      %2639 = vst.msk [vmem:[%s2638] sm:$0xff] %vm384, %v2632
      %2640 = vst.msk [vmem:[%s2638 + $0x8] sm:$0xff] %vm384, %v2635
      %v2641 = vld [vmem:[%s3] sm:$0xf]
      %v2642 = vld [vmem:[%s3 + $0x4] sm:$0xf]
      %v2643 = vld [vmem:[#allocation2 + $0x16] sm:$0x1]
      %v2644 = vld [vmem:[#allocation2 + $0x36] sm:$0x1]
      %v2645 = vld [vmem:[#allocation2 + $0x56] sm:$0x1]
      %v2646 = vld [vmem:[#allocation2 + $0x76] sm:$0x1]
      %v2647 = vpack.c.bf16 %v2643, %v2643
      %v2648 = vpack.c.bf16 %v2644, %v2644
      %v2649 = vpack.c.bf16 %v2645, %v2645
      %v2650 = vpack.c.bf16 %v2646, %v2646
      %v2653 = vunpack.c.l.b16 %v2641
      %v2654 = vunpack.c.l.b16 %v2642
      %v2655 = vpack.c.b16 %v2654, %v2653
      %v2660 = vunpack.c.l.b16 %v2647
      %v2661 = vunpack.c.l.b16 %v2648
      %v2662 = vunpack.c.l.b16 %v2649
      %v2663 = vunpack.c.l.b16 %v2650
      %v2664 = vrot.slane %v2661, 7
      %v2665 = vsel %vm902, %v2664, %v2660
      %v2666 = vrot.slane %v2662, 6
      %v2667 = vsel %vm905, %v2666, %v2665
      %v2668 = vrot.slane %v2663, 5
      %v2669 = vsel %vm908, %v2668, %v2667
      %v2670 = vpack.c.b16 %v2669, %v2669
      %v2672 = vsel %vm325, %v2655, 0
      %v2675 = vsel %vm914, %v2670, 0
      %2677 = vmatprep.subr.bf16.mxu0 0
      %2678 = vmatpush1.bf16.msra.mxu0 0
      %2679 = vmatprep.subr.bf16.mxu0 0
      %2680 = vmatpush1.bf16.msra.mxu0 0
      %2681 = vmatprep.subr.bf16.mxu0 0
      %2682 = vmatpush1.bf16.msra.mxu0 0
      %2683 = vmatprep.subr.bf16.mxu0 0
      %2684 = vmatpush1.bf16.msra.mxu0 0
      %2685 = vmatprep.subr.bf16.mxu0 0
      %2686 = vmatpush1.bf16.msra.mxu0 0
      %2687 = vmatprep.subr.bf16.mxu0 0
      %2688 = vmatpush1.bf16.msra.mxu0 0
      %2689 = vmatprep.subr.bf16.mxu0 0
      %2690 = vmatpush1.bf16.msra.mxu0 0
      %2691 = vmatprep.subr.bf16.mxu0 0
      %2692 = vmatpush1.bf16.msra.mxu0 %v2675
      %2693 = vmatprep.subr.bf16.mxu0 0
      %2694 = vmatpush2.bf16.msra.mxu0 0
      %2695 = vmatprep.subr.bf16.mxu0 0
      %2696 = vmatpush2.bf16.msra.mxu0 0
      %2697 = vmatprep.subr.bf16.mxu0 0
      %2698 = vmatpush2.bf16.msra.mxu0 0
      %2699 = vmatprep.subr.bf16.mxu0 0
      %2700 = vmatpush2.bf16.msra.mxu0 0
      %2701 = vmatprep.subr.bf16.mxu0 0
      %2702 = vmatpush2.bf16.msra.mxu0 0
      %2703 = vmatprep.subr.bf16.mxu0 0
      %2704 = vmatpush2.bf16.msra.mxu0 0
      %2705 = vmatprep.subr.bf16.mxu0 0
      %2706 = vmatpush2.bf16.msra.mxu0 0
      %2707 = vmatprep.subr.bf16.mxu0 0
      %2708 = vmatpush2.bf16.msra.mxu0 0
      %2709 = vmatprep.mubr.bf16.mxu0 0
      %2710 = vmatmul.mubr.bf16.gmra.mxu0 %v2672
      %v2711 = vpop.f32.mrf.mxu0
      %v2712 = vadd.f32 0.0, %v2711
      %v2713 = vpop.f32.mrf.mxu0
      %v2714 = vpop.f32.mrf.mxu0
      %v2715 = vadd.f32 0.0, %v2714
      %v2716 = vpop.f32.mrf.mxu0
      %2717 = vdwg.mxu0
      %s2718 = scalar_lea.vmem %s224, 352
      %2719 = vst.msk [vmem:[%s2718] sm:$0xff] %vm384, %v2712
      %2720 = vst.msk [vmem:[%s2718 + $0x8] sm:$0xff] %vm384, %v2715
      %v2721 = vld [vmem:[%s3] sm:$0xf]
      %v2722 = vld [vmem:[%s3 + $0x4] sm:$0xf]
      %v2723 = vld [vmem:[#allocation2 + $0x17] sm:$0x1]
      %v2724 = vld [vmem:[#allocation2 + $0x37] sm:$0x1]
      %v2725 = vld [vmem:[#allocation2 + $0x57] sm:$0x1]
      %v2726 = vld [vmem:[#allocation2 + $0x77] sm:$0x1]
      %v2727 = vpack.c.bf16 %v2723, %v2723
      %v2728 = vpack.c.bf16 %v2724, %v2724
      %v2729 = vpack.c.bf16 %v2725, %v2725
      %v2730 = vpack.c.bf16 %v2726, %v2726
      %v2733 = vunpack.c.l.b16 %v2721
      %v2734 = vunpack.c.l.b16 %v2722
      %v2735 = vpack.c.b16 %v2734, %v2733
      %v2740 = vunpack.c.l.b16 %v2727
      %v2741 = vunpack.c.l.b16 %v2728
      %v2742 = vunpack.c.l.b16 %v2729
      %v2743 = vunpack.c.l.b16 %v2730
      %v2744 = vrot.slane %v2741, 7
      %v2745 = vsel %vm902, %v2744, %v2740
      %v2746 = vrot.slane %v2742, 6
      %v2747 = vsel %vm905, %v2746, %v2745
      %v2748 = vrot.slane %v2743, 5
      %v2749 = vsel %vm908, %v2748, %v2747
      %v2750 = vpack.c.b16 %v2749, %v2749
      %v2752 = vsel %vm325, %v2735, 0
      %v2755 = vsel %vm914, %v2750, 0
      %2757 = vmatprep.subr.bf16.mxu0 0
      %2758 = vmatpush1.bf16.msra.mxu0 0
      %2759 = vmatprep.subr.bf16.mxu0 0
      %2760 = vmatpush1.bf16.msra.mxu0 0
      %2761 = vmatprep.subr.bf16.mxu0 0
      %2762 = vmatpush1.bf16.msra.mxu0 0
      %2763 = vmatprep.subr.bf16.mxu0 0
      %2764 = vmatpush1.bf16.msra.mxu0 0
      %2765 = vmatprep.subr.bf16.mxu0 0
      %2766 = vmatpush1.bf16.msra.mxu0 0
      %2767 = vmatprep.subr.bf16.mxu0 0
      %2768 = vmatpush1.bf16.msra.mxu0 0
      %2769 = vmatprep.subr.bf16.mxu0 0
      %2770 = vmatpush1.bf16.msra.mxu0 0
      %2771 = vmatprep.subr.bf16.mxu0 0
      %2772 = vmatpush1.bf16.msra.mxu0 %v2755
      %2773 = vmatprep.subr.bf16.mxu0 0
      %2774 = vmatpush2.bf16.msra.mxu0 0
      %2775 = vmatprep.subr.bf16.mxu0 0
      %2776 = vmatpush2.bf16.msra.mxu0 0
      %2777 = vmatprep.subr.bf16.mxu0 0
      %2778 = vmatpush2.bf16.msra.mxu0 0
      %2779 = vmatprep.subr.bf16.mxu0 0
      %2780 = vmatpush2.bf16.msra.mxu0 0
      %2781 = vmatprep.subr.bf16.mxu0 0
      %2782 = vmatpush2.bf16.msra.mxu0 0
      %2783 = vmatprep.subr.bf16.mxu0 0
      %2784 = vmatpush2.bf16.msra.mxu0 0
      %2785 = vmatprep.subr.bf16.mxu0 0
      %2786 = vmatpush2.bf16.msra.mxu0 0
      %2787 = vmatprep.subr.bf16.mxu0 0
      %2788 = vmatpush2.bf16.msra.mxu0 0
      %2789 = vmatprep.mubr.bf16.mxu0 0
      %2790 = vmatmul.mubr.bf16.gmra.mxu0 %v2752
      %v2791 = vpop.f32.mrf.mxu0
      %v2792 = vadd.f32 0.0, %v2791
      %v2793 = vpop.f32.mrf.mxu0
      %v2794 = vpop.f32.mrf.mxu0
      %v2795 = vadd.f32 0.0, %v2794
      %v2796 = vpop.f32.mrf.mxu0
      %2797 = vdwg.mxu0
      %s2798 = scalar_lea.vmem %s224, 368
      %2799 = vst.msk [vmem:[%s2798] sm:$0xff] %vm384, %v2792
      %2800 = vst.msk [vmem:[%s2798 + $0x8] sm:$0xff] %vm384, %v2795
      %v2801 = vld [vmem:[%s3] sm:$0xf]
      %v2802 = vld [vmem:[%s3 + $0x4] sm:$0xf]
      %v2803 = vld [vmem:[#allocation2 + $0x18] sm:$0x1]
      %v2804 = vld [vmem:[#allocation2 + $0x38] sm:$0x1]
      %v2805 = vld [vmem:[#allocation2 + $0x58] sm:$0x1]
      %v2806 = vld [vmem:[#allocation2 + $0x78] sm:$0x1]
      %v2807 = vpack.c.bf16 %v2803, %v2803
      %v2808 = vpack.c.bf16 %v2804, %v2804
      %v2809 = vpack.c.bf16 %v2805, %v2805
      %v2810 = vpack.c.bf16 %v2806, %v2806
      %v2813 = vunpack.c.l.b16 %v2801
      %v2814 = vunpack.c.l.b16 %v2802
      %v2815 = vpack.c.b16 %v2814, %v2813
      %v2820 = vunpack.c.l.b16 %v2807
      %v2821 = vunpack.c.l.b16 %v2808
      %v2822 = vunpack.c.l.b16 %v2809
      %v2823 = vunpack.c.l.b16 %v2810
      %v2824 = vrot.slane %v2821, 7
      %v2825 = vsel %vm902, %v2824, %v2820
      %v2826 = vrot.slane %v2822, 6
      %v2827 = vsel %vm905, %v2826, %v2825
      %v2828 = vrot.slane %v2823, 5
      %v2829 = vsel %vm908, %v2828, %v2827
      %v2830 = vpack.c.b16 %v2829, %v2829
      %v2832 = vsel %vm325, %v2815, 0
      %v2835 = vsel %vm914, %v2830, 0
      %2837 = vmatprep.subr.bf16.mxu0 0
      %2838 = vmatpush1.bf16.msra.mxu0 0
      %2839 = vmatprep.subr.bf16.mxu0 0
      %2840 = vmatpush1.bf16.msra.mxu0 0
      %2841 = vmatprep.subr.bf16.mxu0 0
      %2842 = vmatpush1.bf16.msra.mxu0 0
      %2843 = vmatprep.subr.bf16.mxu0 0
      %2844 = vmatpush1.bf16.msra.mxu0 0
      %2845 = vmatprep.subr.bf16.mxu0 0
      %2846 = vmatpush1.bf16.msra.mxu0 0
      %2847 = vmatprep.subr.bf16.mxu0 0
      %2848 = vmatpush1.bf16.msra.mxu0 0
      %2849 = vmatprep.subr.bf16.mxu0 0
      %2850 = vmatpush1.bf16.msra.mxu0 0
      %2851 = vmatprep.subr.bf16.mxu0 0
      %2852 = vmatpush1.bf16.msra.mxu0 %v2835
      %2853 = vmatprep.subr.bf16.mxu0 0
      %2854 = vmatpush2.bf16.msra.mxu0 0
      %2855 = vmatprep.subr.bf16.mxu0 0
      %2856 = vmatpush2.bf16.msra.mxu0 0
      %2857 = vmatprep.subr.bf16.mxu0 0
      %2858 = vmatpush2.bf16.msra.mxu0 0
      %2859 = vmatprep.subr.bf16.mxu0 0
      %2860 = vmatpush2.bf16.msra.mxu0 0
      %2861 = vmatprep.subr.bf16.mxu0 0
      %2862 = vmatpush2.bf16.msra.mxu0 0
      %2863 = vmatprep.subr.bf16.mxu0 0
      %2864 = vmatpush2.bf16.msra.mxu0 0
      %2865 = vmatprep.subr.bf16.mxu0 0
      %2866 = vmatpush2.bf16.msra.mxu0 0
      %2867 = vmatprep.subr.bf16.mxu0 0
      %2868 = vmatpush2.bf16.msra.mxu0 0
      %2869 = vmatprep.mubr.bf16.mxu0 0
      %2870 = vmatmul.mubr.bf16.gmra.mxu0 %v2832
      %v2871 = vpop.f32.mrf.mxu0
      %v2872 = vadd.f32 0.0, %v2871
      %v2873 = vpop.f32.mrf.mxu0
      %v2874 = vpop.f32.mrf.mxu0
      %v2875 = vadd.f32 0.0, %v2874
      %v2876 = vpop.f32.mrf.mxu0
      %2877 = vdwg.mxu0
      %s2878 = scalar_lea.vmem %s224, 384
      %2879 = vst.msk [vmem:[%s2878] sm:$0xff] %vm384, %v2872
      %2880 = vst.msk [vmem:[%s2878 + $0x8] sm:$0xff] %vm384, %v2875
      %v2881 = vld [vmem:[%s3] sm:$0xf]
      %v2882 = vld [vmem:[%s3 + $0x4] sm:$0xf]
      %v2883 = vld [vmem:[#allocation2 + $0x19] sm:$0x1]
      %v2884 = vld [vmem:[#allocation2 + $0x39] sm:$0x1]
      %v2885 = vld [vmem:[#allocation2 + $0x59] sm:$0x1]
      %v2886 = vld [vmem:[#allocation2 + $0x79] sm:$0x1]
      %v2887 = vpack.c.bf16 %v2883, %v2883
      %v2888 = vpack.c.bf16 %v2884, %v2884
      %v2889 = vpack.c.bf16 %v2885, %v2885
      %v2890 = vpack.c.bf16 %v2886, %v2886
      %v2893 = vunpack.c.l.b16 %v2881
      %v2894 = vunpack.c.l.b16 %v2882
      %v2895 = vpack.c.b16 %v2894, %v2893
      %v2900 = vunpack.c.l.b16 %v2887
      %v2901 = vunpack.c.l.b16 %v2888
      %v2902 = vunpack.c.l.b16 %v2889
      %v2903 = vunpack.c.l.b16 %v2890
      %v2904 = vrot.slane %v2901, 7
      %v2905 = vsel %vm902, %v2904, %v2900
      %v2906 = vrot.slane %v2902, 6
      %v2907 = vsel %vm905, %v2906, %v2905
      %v2908 = vrot.slane %v2903, 5
      %v2909 = vsel %vm908, %v2908, %v2907
      %v2910 = vpack.c.b16 %v2909, %v2909
      %v2912 = vsel %vm325, %v2895, 0
      %v2915 = vsel %vm914, %v2910, 0
      %2917 = vmatprep.subr.bf16.mxu0 0
      %2918 = vmatpush1.bf16.msra.mxu0 0
      %2919 = vmatprep.subr.bf16.mxu0 0
      %2920 = vmatpush1.bf16.msra.mxu0 0
      %2921 = vmatprep.subr.bf16.mxu0 0
      %2922 = vmatpush1.bf16.msra.mxu0 0
      %2923 = vmatprep.subr.bf16.mxu0 0
      %2924 = vmatpush1.bf16.msra.mxu0 0
      %2925 = vmatprep.subr.bf16.mxu0 0
      %2926 = vmatpush1.bf16.msra.mxu0 0
      %2927 = vmatprep.subr.bf16.mxu0 0
      %2928 = vmatpush1.bf16.msra.mxu0 0
      %2929 = vmatprep.subr.bf16.mxu0 0
      %2930 = vmatpush1.bf16.msra.mxu0 0
      %2931 = vmatprep.subr.bf16.mxu0 0
      %2932 = vmatpush1.bf16.msra.mxu0 %v2915
      %2933 = vmatprep.subr.bf16.mxu0 0
      %2934 = vmatpush2.bf16.msra.mxu0 0
      %2935 = vmatprep.subr.bf16.mxu0 0
      %2936 = vmatpush2.bf16.msra.mxu0 0
      %2937 = vmatprep.subr.bf16.mxu0 0
      %2938 = vmatpush2.bf16.msra.mxu0 0
      %2939 = vmatprep.subr.bf16.mxu0 0
      %2940 = vmatpush2.bf16.msra.mxu0 0
      %2941 = vmatprep.subr.bf16.mxu0 0
      %2942 = vmatpush2.bf16.msra.mxu0 0
      %2943 = vmatprep.subr.bf16.mxu0 0
      %2944 = vmatpush2.bf16.msra.mxu0 0
      %2945 = vmatprep.subr.bf16.mxu0 0
      %2946 = vmatpush2.bf16.msra.mxu0 0
      %2947 = vmatprep.subr.bf16.mxu0 0
      %2948 = vmatpush2.bf16.msra.mxu0 0
      %2949 = vmatprep.mubr.bf16.mxu0 0
      %2950 = vmatmul.mubr.bf16.gmra.mxu0 %v2912
      %v2951 = vpop.f32.mrf.mxu0
      %v2952 = vadd.f32 0.0, %v2951
      %v2953 = vpop.f32.mrf.mxu0
      %v2954 = vpop.f32.mrf.mxu0
      %v2955 = vadd.f32 0.0, %v2954
      %v2956 = vpop.f32.mrf.mxu0
      %2957 = vdwg.mxu0
      %s2958 = scalar_lea.vmem %s224, 400
      %2959 = vst.msk [vmem:[%s2958] sm:$0xff] %vm384, %v2952
      %2960 = vst.msk [vmem:[%s2958 + $0x8] sm:$0xff] %vm384, %v2955
      %v2961 = vld [vmem:[%s3] sm:$0xf]
      %v2962 = vld [vmem:[%s3 + $0x4] sm:$0xf]
      %v2963 = vld [vmem:[#allocation2 + $0x1a] sm:$0x1]
      %v2964 = vld [vmem:[#allocation2 + $0x3a] sm:$0x1]
      %v2965 = vld [vmem:[#allocation2 + $0x5a] sm:$0x1]
      %v2966 = vld [vmem:[#allocation2 + $0x7a] sm:$0x1]
      %v2967 = vpack.c.bf16 %v2963, %v2963
      %v2968 = vpack.c.bf16 %v2964, %v2964
      %v2969 = vpack.c.bf16 %v2965, %v2965
      %v2970 = vpack.c.bf16 %v2966, %v2966
      %v2973 = vunpack.c.l.b16 %v2961
      %v2974 = vunpack.c.l.b16 %v2962
      %v2975 = vpack.c.b16 %v2974, %v2973
      %v2980 = vunpack.c.l.b16 %v2967
      %v2981 = vunpack.c.l.b16 %v2968
      %v2982 = vunpack.c.l.b16 %v2969
      %v2983 = vunpack.c.l.b16 %v2970
      %v2984 = vrot.slane %v2981, 7
      %v2985 = vsel %vm902, %v2984, %v2980
      %v2986 = vrot.slane %v2982, 6
      %v2987 = vsel %vm905, %v2986, %v2985
      %v2988 = vrot.slane %v2983, 5
      %v2989 = vsel %vm908, %v2988, %v2987
      %v2990 = vpack.c.b16 %v2989, %v2989
      %v2992 = vsel %vm325, %v2975, 0
      %v2995 = vsel %vm914, %v2990, 0
      %2997 = vmatprep.subr.bf16.mxu0 0
      %2998 = vmatpush1.bf16.msra.mxu0 0
      %2999 = vmatprep.subr.bf16.mxu0 0
      %3000 = vmatpush1.bf16.msra.mxu0 0
      %3001 = vmatprep.subr.bf16.mxu0 0
      %3002 = vmatpush1.bf16.msra.mxu0 0
      %3003 = vmatprep.subr.bf16.mxu0 0
      %3004 = vmatpush1.bf16.msra.mxu0 0
      %3005 = vmatprep.subr.bf16.mxu0 0
      %3006 = vmatpush1.bf16.msra.mxu0 0
      %3007 = vmatprep.subr.bf16.mxu0 0
      %3008 = vmatpush1.bf16.msra.mxu0 0
      %3009 = vmatprep.subr.bf16.mxu0 0
      %3010 = vmatpush1.bf16.msra.mxu0 0
      %3011 = vmatprep.subr.bf16.mxu0 0
      %3012 = vmatpush1.bf16.msra.mxu0 %v2995
      %3013 = vmatprep.subr.bf16.mxu0 0
      %3014 = vmatpush2.bf16.msra.mxu0 0
      %3015 = vmatprep.subr.bf16.mxu0 0
      %3016 = vmatpush2.bf16.msra.mxu0 0
      %3017 = vmatprep.subr.bf16.mxu0 0
      %3018 = vmatpush2.bf16.msra.mxu0 0
      %3019 = vmatprep.subr.bf16.mxu0 0
      %3020 = vmatpush2.bf16.msra.mxu0 0
      %3021 = vmatprep.subr.bf16.mxu0 0
      %3022 = vmatpush2.bf16.msra.mxu0 0
      %3023 = vmatprep.subr.bf16.mxu0 0
      %3024 = vmatpush2.bf16.msra.mxu0 0
      %3025 = vmatprep.subr.bf16.mxu0 0
      %3026 = vmatpush2.bf16.msra.mxu0 0
      %3027 = vmatprep.subr.bf16.mxu0 0
      %3028 = vmatpush2.bf16.msra.mxu0 0
      %3029 = vmatprep.mubr.bf16.mxu0 0
      %3030 = vmatmul.mubr.bf16.gmra.mxu0 %v2992
      %v3031 = vpop.f32.mrf.mxu0
      %v3032 = vadd.f32 0.0, %v3031
      %v3033 = vpop.f32.mrf.mxu0
      %v3034 = vpop.f32.mrf.mxu0
      %v3035 = vadd.f32 0.0, %v3034
      %v3036 = vpop.f32.mrf.mxu0
      %3037 = vdwg.mxu0
      %s3038 = scalar_lea.vmem %s224, 416
      %3039 = vst.msk [vmem:[%s3038] sm:$0xff] %vm384, %v3032
      %3040 = vst.msk [vmem:[%s3038 + $0x8] sm:$0xff] %vm384, %v3035
      %v3041 = vld [vmem:[%s3] sm:$0xf]
      %v3042 = vld [vmem:[%s3 + $0x4] sm:$0xf]
      %v3043 = vld [vmem:[#allocation2 + $0x1b] sm:$0x1]
      %v3044 = vld [vmem:[#allocation2 + $0x3b] sm:$0x1]
      %v3045 = vld [vmem:[#allocation2 + $0x5b] sm:$0x1]
      %v3046 = vld [vmem:[#allocation2 + $0x7b] sm:$0x1]
      %v3047 = vpack.c.bf16 %v3043, %v3043
      %v3048 = vpack.c.bf16 %v3044, %v3044
      %v3049 = vpack.c.bf16 %v3045, %v3045
      %v3050 = vpack.c.bf16 %v3046, %v3046
      %v3053 = vunpack.c.l.b16 %v3041
      %v3054 = vunpack.c.l.b16 %v3042
      %v3055 = vpack.c.b16 %v3054, %v3053
      %v3060 = vunpack.c.l.b16 %v3047
      %v3061 = vunpack.c.l.b16 %v3048
      %v3062 = vunpack.c.l.b16 %v3049
      %v3063 = vunpack.c.l.b16 %v3050
      %v3064 = vrot.slane %v3061, 7
      %v3065 = vsel %vm902, %v3064, %v3060
      %v3066 = vrot.slane %v3062, 6
      %v3067 = vsel %vm905, %v3066, %v3065
      %v3068 = vrot.slane %v3063, 5
      %v3069 = vsel %vm908, %v3068, %v3067
      %v3070 = vpack.c.b16 %v3069, %v3069
      %v3072 = vsel %vm325, %v3055, 0
      %v3075 = vsel %vm914, %v3070, 0
      %3077 = vmatprep.subr.bf16.mxu0 0
      %3078 = vmatpush1.bf16.msra.mxu0 0
      %3079 = vmatprep.subr.bf16.mxu0 0
      %3080 = vmatpush1.bf16.msra.mxu0 0
      %3081 = vmatprep.subr.bf16.mxu0 0
      %3082 = vmatpush1.bf16.msra.mxu0 0
      %3083 = vmatprep.subr.bf16.mxu0 0
      %3084 = vmatpush1.bf16.msra.mxu0 0
      %3085 = vmatprep.subr.bf16.mxu0 0
      %3086 = vmatpush1.bf16.msra.mxu0 0
      %3087 = vmatprep.subr.bf16.mxu0 0
      %3088 = vmatpush1.bf16.msra.mxu0 0
      %3089 = vmatprep.subr.bf16.mxu0 0
      %3090 = vmatpush1.bf16.msra.mxu0 0
      %3091 = vmatprep.subr.bf16.mxu0 0
      %3092 = vmatpush1.bf16.msra.mxu0 %v3075
      %3093 = vmatprep.subr.bf16.mxu0 0
      %3094 = vmatpush2.bf16.msra.mxu0 0
      %3095 = vmatprep.subr.bf16.mxu0 0
      %3096 = vmatpush2.bf16.msra.mxu0 0
      %3097 = vmatprep.subr.bf16.mxu0 0
      %3098 = vmatpush2.bf16.msra.mxu0 0
      %3099 = vmatprep.subr.bf16.mxu0 0
      %3100 = vmatpush2.bf16.msra.mxu0 0
      %3101 = vmatprep.subr.bf16.mxu0 0
      %3102 = vmatpush2.bf16.msra.mxu0 0
      %3103 = vmatprep.subr.bf16.mxu0 0
      %3104 = vmatpush2.bf16.msra.mxu0 0
      %3105 = vmatprep.subr.bf16.mxu0 0
      %3106 = vmatpush2.bf16.msra.mxu0 0
      %3107 = vmatprep.subr.bf16.mxu0 0
      %3108 = vmatpush2.bf16.msra.mxu0 0
      %3109 = vmatprep.mubr.bf16.mxu0 0
      %3110 = vmatmul.mubr.bf16.gmra.mxu0 %v3072
      %v3111 = vpop.f32.mrf.mxu0
      %v3112 = vadd.f32 0.0, %v3111
      %v3113 = vpop.f32.mrf.mxu0
      %v3114 = vpop.f32.mrf.mxu0
      %v3115 = vadd.f32 0.0, %v3114
      %v3116 = vpop.f32.mrf.mxu0
      %3117 = vdwg.mxu0
      %s3118 = scalar_lea.vmem %s224, 432
      %3119 = vst.msk [vmem:[%s3118] sm:$0xff] %vm384, %v3112
      %3120 = vst.msk [vmem:[%s3118 + $0x8] sm:$0xff] %vm384, %v3115
      %v3121 = vld [vmem:[%s3] sm:$0xf]
      %v3122 = vld [vmem:[%s3 + $0x4] sm:$0xf]
      %v3123 = vld [vmem:[#allocation2 + $0x1c] sm:$0x1]
      %v3124 = vld [vmem:[#allocation2 + $0x3c] sm:$0x1]
      %v3125 = vld [vmem:[#allocation2 + $0x5c] sm:$0x1]
      %v3126 = vld [vmem:[#allocation2 + $0x7c] sm:$0x1]
      %v3127 = vpack.c.bf16 %v3123, %v3123
      %v3128 = vpack.c.bf16 %v3124, %v3124
      %v3129 = vpack.c.bf16 %v3125, %v3125
      %v3130 = vpack.c.bf16 %v3126, %v3126
      %v3133 = vunpack.c.l.b16 %v3121
      %v3134 = vunpack.c.l.b16 %v3122
      %v3135 = vpack.c.b16 %v3134, %v3133
      %v3140 = vunpack.c.l.b16 %v3127
      %v3141 = vunpack.c.l.b16 %v3128
      %v3142 = vunpack.c.l.b16 %v3129
      %v3143 = vunpack.c.l.b16 %v3130
      %v3144 = vrot.slane %v3141, 7
      %v3145 = vsel %vm902, %v3144, %v3140
      %v3146 = vrot.slane %v3142, 6
      %v3147 = vsel %vm905, %v3146, %v3145
      %v3148 = vrot.slane %v3143, 5
      %v3149 = vsel %vm908, %v3148, %v3147
      %v3150 = vpack.c.b16 %v3149, %v3149
      %v3152 = vsel %vm325, %v3135, 0
      %v3155 = vsel %vm914, %v3150, 0
      %3157 = vmatprep.subr.bf16.mxu0 0
      %3158 = vmatpush1.bf16.msra.mxu0 0
      %3159 = vmatprep.subr.bf16.mxu0 0
      %3160 = vmatpush1.bf16.msra.mxu0 0
      %3161 = vmatprep.subr.bf16.mxu0 0
      %3162 = vmatpush1.bf16.msra.mxu0 0
      %3163 = vmatprep.subr.bf16.mxu0 0
      %3164 = vmatpush1.bf16.msra.mxu0 0
      %3165 = vmatprep.subr.bf16.mxu0 0
      %3166 = vmatpush1.bf16.msra.mxu0 0
      %3167 = vmatprep.subr.bf16.mxu0 0
      %3168 = vmatpush1.bf16.msra.mxu0 0
      %3169 = vmatprep.subr.bf16.mxu0 0
      %3170 = vmatpush1.bf16.msra.mxu0 0
      %3171 = vmatprep.subr.bf16.mxu0 0
      %3172 = vmatpush1.bf16.msra.mxu0 %v3155
      %3173 = vmatprep.subr.bf16.mxu0 0
      %3174 = vmatpush2.bf16.msra.mxu0 0
      %3175 = vmatprep.subr.bf16.mxu0 0
      %3176 = vmatpush2.bf16.msra.mxu0 0
      %3177 = vmatprep.subr.bf16.mxu0 0
      %3178 = vmatpush2.bf16.msra.mxu0 0
      %3179 = vmatprep.subr.bf16.mxu0 0
      %3180 = vmatpush2.bf16.msra.mxu0 0
      %3181 = vmatprep.subr.bf16.mxu0 0
      %3182 = vmatpush2.bf16.msra.mxu0 0
      %3183 = vmatprep.subr.bf16.mxu0 0
      %3184 = vmatpush2.bf16.msra.mxu0 0
      %3185 = vmatprep.subr.bf16.mxu0 0
      %3186 = vmatpush2.bf16.msra.mxu0 0
      %3187 = vmatprep.subr.bf16.mxu0 0
      %3188 = vmatpush2.bf16.msra.mxu0 0
      %3189 = vmatprep.mubr.bf16.mxu0 0
      %3190 = vmatmul.mubr.bf16.gmra.mxu0 %v3152
      %v3191 = vpop.f32.mrf.mxu0
      %v3192 = vadd.f32 0.0, %v3191
      %v3193 = vpop.f32.mrf.mxu0
      %v3194 = vpop.f32.mrf.mxu0
      %v3195 = vadd.f32 0.0, %v3194
      %v3196 = vpop.f32.mrf.mxu0
      %3197 = vdwg.mxu0
      %s3198 = scalar_lea.vmem %s224, 448
      %3199 = vst.msk [vmem:[%s3198] sm:$0xff] %vm384, %v3192
      %3200 = vst.msk [vmem:[%s3198 + $0x8] sm:$0xff] %vm384, %v3195
      %v3201 = vld [vmem:[%s3] sm:$0xf]
      %v3202 = vld [vmem:[%s3 + $0x4] sm:$0xf]
      %v3203 = vld [vmem:[#allocation2 + $0x1d] sm:$0x1]
      %v3204 = vld [vmem:[#allocation2 + $0x3d] sm:$0x1]
      %v3205 = vld [vmem:[#allocation2 + $0x5d] sm:$0x1]
      %v3206 = vld [vmem:[#allocation2 + $0x7d] sm:$0x1]
      %v3207 = vpack.c.bf16 %v3203, %v3203
      %v3208 = vpack.c.bf16 %v3204, %v3204
      %v3209 = vpack.c.bf16 %v3205, %v3205
      %v3210 = vpack.c.bf16 %v3206, %v3206
      %v3213 = vunpack.c.l.b16 %v3201
      %v3214 = vunpack.c.l.b16 %v3202
      %v3215 = vpack.c.b16 %v3214, %v3213
      %v3220 = vunpack.c.l.b16 %v3207
      %v3221 = vunpack.c.l.b16 %v3208
      %v3222 = vunpack.c.l.b16 %v3209
      %v3223 = vunpack.c.l.b16 %v3210
      %v3224 = vrot.slane %v3221, 7
      %v3225 = vsel %vm902, %v3224, %v3220
      %v3226 = vrot.slane %v3222, 6
      %v3227 = vsel %vm905, %v3226, %v3225
      %v3228 = vrot.slane %v3223, 5
      %v3229 = vsel %vm908, %v3228, %v3227
      %v3230 = vpack.c.b16 %v3229, %v3229
      %v3232 = vsel %vm325, %v3215, 0
      %v3235 = vsel %vm914, %v3230, 0
      %3237 = vmatprep.subr.bf16.mxu0 0
      %3238 = vmatpush1.bf16.msra.mxu0 0
      %3239 = vmatprep.subr.bf16.mxu0 0
      %3240 = vmatpush1.bf16.msra.mxu0 0
      %3241 = vmatprep.subr.bf16.mxu0 0
      %3242 = vmatpush1.bf16.msra.mxu0 0
      %3243 = vmatprep.subr.bf16.mxu0 0
      %3244 = vmatpush1.bf16.msra.mxu0 0
      %3245 = vmatprep.subr.bf16.mxu0 0
      %3246 = vmatpush1.bf16.msra.mxu0 0
      %3247 = vmatprep.subr.bf16.mxu0 0
      %3248 = vmatpush1.bf16.msra.mxu0 0
      %3249 = vmatprep.subr.bf16.mxu0 0
      %3250 = vmatpush1.bf16.msra.mxu0 0
      %3251 = vmatprep.subr.bf16.mxu0 0
      %3252 = vmatpush1.bf16.msra.mxu0 %v3235
      %3253 = vmatprep.subr.bf16.mxu0 0
      %3254 = vmatpush2.bf16.msra.mxu0 0
      %3255 = vmatprep.subr.bf16.mxu0 0
      %3256 = vmatpush2.bf16.msra.mxu0 0
      %3257 = vmatprep.subr.bf16.mxu0 0
      %3258 = vmatpush2.bf16.msra.mxu0 0
      %3259 = vmatprep.subr.bf16.mxu0 0
      %3260 = vmatpush2.bf16.msra.mxu0 0
      %3261 = vmatprep.subr.bf16.mxu0 0
      %3262 = vmatpush2.bf16.msra.mxu0 0
      %3263 = vmatprep.subr.bf16.mxu0 0
      %3264 = vmatpush2.bf16.msra.mxu0 0
      %3265 = vmatprep.subr.bf16.mxu0 0
      %3266 = vmatpush2.bf16.msra.mxu0 0
      %3267 = vmatprep.subr.bf16.mxu0 0
      %3268 = vmatpush2.bf16.msra.mxu0 0
      %3269 = vmatprep.mubr.bf16.mxu0 0
      %3270 = vmatmul.mubr.bf16.gmra.mxu0 %v3232
      %v3271 = vpop.f32.mrf.mxu0
      %v3272 = vadd.f32 0.0, %v3271
      %v3273 = vpop.f32.mrf.mxu0
      %v3274 = vpop.f32.mrf.mxu0
      %v3275 = vadd.f32 0.0, %v3274
      %v3276 = vpop.f32.mrf.mxu0
      %3277 = vdwg.mxu0
      %s3278 = scalar_lea.vmem %s224, 464
      %3279 = vst.msk [vmem:[%s3278] sm:$0xff] %vm384, %v3272
      %3280 = vst.msk [vmem:[%s3278 + $0x8] sm:$0xff] %vm384, %v3275
      %v3281 = vld [vmem:[%s3] sm:$0xf]
      %v3282 = vld [vmem:[%s3 + $0x4] sm:$0xf]
      %v3283 = vld [vmem:[#allocation2 + $0x1e] sm:$0x1]
      %v3284 = vld [vmem:[#allocation2 + $0x3e] sm:$0x1]
      %v3285 = vld [vmem:[#allocation2 + $0x5e] sm:$0x1]
      %v3286 = vld [vmem:[#allocation2 + $0x7e] sm:$0x1]
      %v3287 = vpack.c.bf16 %v3283, %v3283
      %v3288 = vpack.c.bf16 %v3284, %v3284
      %v3289 = vpack.c.bf16 %v3285, %v3285
      %v3290 = vpack.c.bf16 %v3286, %v3286
      %v3293 = vunpack.c.l.b16 %v3281
      %v3294 = vunpack.c.l.b16 %v3282
      %v3295 = vpack.c.b16 %v3294, %v3293
      %v3300 = vunpack.c.l.b16 %v3287
      %v3301 = vunpack.c.l.b16 %v3288
      %v3302 = vunpack.c.l.b16 %v3289
      %v3303 = vunpack.c.l.b16 %v3290
      %v3304 = vrot.slane %v3301, 7
      %v3305 = vsel %vm902, %v3304, %v3300
      %v3306 = vrot.slane %v3302, 6
      %v3307 = vsel %vm905, %v3306, %v3305
      %v3308 = vrot.slane %v3303, 5
      %v3309 = vsel %vm908, %v3308, %v3307
      %v3310 = vpack.c.b16 %v3309, %v3309
      %v3312 = vsel %vm325, %v3295, 0
      %v3315 = vsel %vm914, %v3310, 0
      %3317 = vmatprep.subr.bf16.mxu0 0
      %3318 = vmatpush1.bf16.msra.mxu0 0
      %3319 = vmatprep.subr.bf16.mxu0 0
      %3320 = vmatpush1.bf16.msra.mxu0 0
      %3321 = vmatprep.subr.bf16.mxu0 0
      %3322 = vmatpush1.bf16.msra.mxu0 0
      %3323 = vmatprep.subr.bf16.mxu0 0
      %3324 = vmatpush1.bf16.msra.mxu0 0
      %3325 = vmatprep.subr.bf16.mxu0 0
      %3326 = vmatpush1.bf16.msra.mxu0 0
      %3327 = vmatprep.subr.bf16.mxu0 0
      %3328 = vmatpush1.bf16.msra.mxu0 0
      %3329 = vmatprep.subr.bf16.mxu0 0
      %3330 = vmatpush1.bf16.msra.mxu0 0
      %3331 = vmatprep.subr.bf16.mxu0 0
      %3332 = vmatpush1.bf16.msra.mxu0 %v3315
      %3333 = vmatprep.subr.bf16.mxu0 0
      %3334 = vmatpush2.bf16.msra.mxu0 0
      %3335 = vmatprep.subr.bf16.mxu0 0
      %3336 = vmatpush2.bf16.msra.mxu0 0
      %3337 = vmatprep.subr.bf16.mxu0 0
      %3338 = vmatpush2.bf16.msra.mxu0 0
      %3339 = vmatprep.subr.bf16.mxu0 0
      %3340 = vmatpush2.bf16.msra.mxu0 0
      %3341 = vmatprep.subr.bf16.mxu0 0
      %3342 = vmatpush2.bf16.msra.mxu0 0
      %3343 = vmatprep.subr.bf16.mxu0 0
      %3344 = vmatpush2.bf16.msra.mxu0 0
      %3345 = vmatprep.subr.bf16.mxu0 0
      %3346 = vmatpush2.bf16.msra.mxu0 0
      %3347 = vmatprep.subr.bf16.mxu0 0
      %3348 = vmatpush2.bf16.msra.mxu0 0
      %3349 = vmatprep.mubr.bf16.mxu0 0
      %3350 = vmatmul.mubr.bf16.gmra.mxu0 %v3312
      %v3351 = vpop.f32.mrf.mxu0
      %v3352 = vadd.f32 0.0, %v3351
      %v3353 = vpop.f32.mrf.mxu0
      %v3354 = vpop.f32.mrf.mxu0
      %v3355 = vadd.f32 0.0, %v3354
      %v3356 = vpop.f32.mrf.mxu0
      %3357 = vdwg.mxu0
      %s3358 = scalar_lea.vmem %s224, 480
      %3359 = vst.msk [vmem:[%s3358] sm:$0xff] %vm384, %v3352
      %3360 = vst.msk [vmem:[%s3358 + $0x8] sm:$0xff] %vm384, %v3355
      %v3361 = vld [vmem:[%s3] sm:$0xf]
      %v3362 = vld [vmem:[%s3 + $0x4] sm:$0xf]
      %v3363 = vld [vmem:[#allocation2 + $0x1f] sm:$0x1]
      %v3364 = vld [vmem:[#allocation2 + $0x3f] sm:$0x1]
      %v3365 = vld [vmem:[#allocation2 + $0x5f] sm:$0x1]
      %v3366 = vld [vmem:[#allocation2 + $0x7f] sm:$0x1]
      %v3367 = vpack.c.bf16 %v3363, %v3363
      %v3368 = vpack.c.bf16 %v3364, %v3364
      %v3369 = vpack.c.bf16 %v3365, %v3365
      %v3370 = vpack.c.bf16 %v3366, %v3366
      %v3373 = vunpack.c.l.b16 %v3361
      %v3374 = vunpack.c.l.b16 %v3362
      %v3375 = vpack.c.b16 %v3374, %v3373
      %v3380 = vunpack.c.l.b16 %v3367
      %v3381 = vunpack.c.l.b16 %v3368
      %v3382 = vunpack.c.l.b16 %v3369
      %v3383 = vunpack.c.l.b16 %v3370
      %v3384 = vrot.slane %v3381, 7
      %v3385 = vsel %vm902, %v3384, %v3380
      %v3386 = vrot.slane %v3382, 6
      %v3387 = vsel %vm905, %v3386, %v3385
      %v3388 = vrot.slane %v3383, 5
      %v3389 = vsel %vm908, %v3388, %v3387
      %v3390 = vpack.c.b16 %v3389, %v3389
      %v3392 = vsel %vm325, %v3375, 0
      %v3395 = vsel %vm914, %v3390, 0
      %3397 = vmatprep.subr.bf16.mxu0 0
      %3398 = vmatpush1.bf16.msra.mxu0 0
      %3399 = vmatprep.subr.bf16.mxu0 0
      %3400 = vmatpush1.bf16.msra.mxu0 0
      %3401 = vmatprep.subr.bf16.mxu0 0
      %3402 = vmatpush1.bf16.msra.mxu0 0
      %3403 = vmatprep.subr.bf16.mxu0 0
      %3404 = vmatpush1.bf16.msra.mxu0 0
      %3405 = vmatprep.subr.bf16.mxu0 0
      %3406 = vmatpush1.bf16.msra.mxu0 0
      %3407 = vmatprep.subr.bf16.mxu0 0
      %3408 = vmatpush1.bf16.msra.mxu0 0
      %3409 = vmatprep.subr.bf16.mxu0 0
      %3410 = vmatpush1.bf16.msra.mxu0 0
      %3411 = vmatprep.subr.bf16.mxu0 0
      %3412 = vmatpush1.bf16.msra.mxu0 %v3395
      %3413 = vmatprep.subr.bf16.mxu0 0
      %3414 = vmatpush2.bf16.msra.mxu0 0
      %3415 = vmatprep.subr.bf16.mxu0 0
      %3416 = vmatpush2.bf16.msra.mxu0 0
      %3417 = vmatprep.subr.bf16.mxu0 0
      %3418 = vmatpush2.bf16.msra.mxu0 0
      %3419 = vmatprep.subr.bf16.mxu0 0
      %3420 = vmatpush2.bf16.msra.mxu0 0
      %3421 = vmatprep.subr.bf16.mxu0 0
      %3422 = vmatpush2.bf16.msra.mxu0 0
      %3423 = vmatprep.subr.bf16.mxu0 0
      %3424 = vmatpush2.bf16.msra.mxu0 0
      %3425 = vmatprep.subr.bf16.mxu0 0
      %3426 = vmatpush2.bf16.msra.mxu0 0
      %3427 = vmatprep.subr.bf16.mxu0 0
      %3428 = vmatpush2.bf16.msra.mxu0 0
      %3429 = vmatprep.mubr.bf16.mxu0 0
      %3430 = vmatmul.mubr.bf16.gmra.mxu0 %v3392
      %v3431 = vpop.f32.mrf.mxu0
      %v3432 = vadd.f32 0.0, %v3431
      %v3433 = vpop.f32.mrf.mxu0
      %v3434 = vpop.f32.mrf.mxu0
      %v3435 = vadd.f32 0.0, %v3434
      %v3436 = vpop.f32.mrf.mxu0
      %3437 = vdwg.mxu0
      %s3438 = scalar_lea.vmem %s224, 496
      %3439 = vst.msk [vmem:[%s3438] sm:$0xff] %vm384, %v3432
      %3440 = vst.msk [vmem:[%s3438 + $0x8] sm:$0xff] %vm384, %v3435
      %p3441 = scmp.lt.s32.totalorder %s16, 1
      %s3442 = scalar_select %p3441, %s16, 1
      %s3443 = smul.addr %s3442, 64
      %s3444 = smul.addr %s3443, 8
      %s3445 = scalar_lea.vmem %s5, %s3444
      // Predicated region
      $region41: #{jetseg_forward.5} parent=39 // pred_check
        %p3446 = pneg %p144
      $region42: #{jetseg_forward.5} parent=39 // pred_check_branch
        %3448 = sbr.rel (%p3446) target = $region44
      $region43: #{jetseg_forward.5} parent=39 // pred_region
        _
      $region44: #{jetseg_forward.5} parent=39 // pred_fallthru
        _
    $region40: #{jetseg_forward.5} parent=5 // pred_fallthru
      _
    %p3449 = scmp.le.s32.totalorder 2, %s11
    // Predicated region
    $region45: #{jetseg_forward.5} parent=5 // pred_check
      %p3450 = pneg %p3449
    $region46: #{jetseg_forward.5} parent=5 // pred_check_branch
      %3452 = sbr.rel (%p3450) target = $region48
    $region47: #{jetseg_forward.5} parent=5 // pred_region
      %s3453 = ssub.s32 %s11, 2
      // Predicated region
      $region49: #{jetseg_forward.5} parent=47 // pred_check
        %p3454 = pneg %p150
      $region50: #{jetseg_forward.5} parent=47 // pred_check_branch
        %3456 = sbr.rel (%p3454) target = $region52
      $region51: #{jetseg_forward.5} parent=47 // pred_region
        %p3457 = scmp.lt.s32.totalorder %s17, 1
        %s3458 = scalar_select %p3457, %s17, 1
        %s3459 = smul.addr %s3458, 64
        %s3460 = smul.addr %s3459, 8
        %s3461 = scalar_lea.vmem %s5, %s3460
      $region52: #{jetseg_forward.5} parent=47 // pred_fallthru
        _
    $region48: #{jetseg_forward.5} parent=5 // pred_fallthru
      _
  $region6: #{jetseg_forward.5} parent=0 // loop_footer
    %s15 = sadd.s32 1, %s11
  $region7: #{jetseg_forward.5} parent=0 // loop_footer_branch
    %10 = sbr.rel target = $region3
  $region8: #{jetseg_forward.5} parent=0 // loop_exit
    _

</llo_original>
